<compile_context>
chip_gen: v6e
topology: v6e:2x2x1
jax: 0.10.0
libtpu: 0.0.40
codegen_flags: <defaults>
</compile_context>

<pallas_src>
import jax
import jax.numpy as jnp
from jax.experimental import pallas as pl
from jax.experimental.pallas import tpu as pltpu


# ---------------------------------------------------------------------------
# Kernel A: fused 10 x (Conv1d k=3 'same' + folded BN + ReLU) stack
# ---------------------------------------------------------------------------
def _conv3_same(x, w_ref, b_ref):
    """One conv layer on a single batch element.

    x:      (Cin, L) f32 activation tile (Cin a multiple of 8).
    w_ref:  (Cout, 3*Cin) stacked taps [k=0 | k=1 | k=2], BN scale pre-folded.
    b_ref:  (Cout, 1) folded bias (conv bias + BN shift).
    """
    cin, L = x.shape
    z = jnp.zeros((cin, 1), jnp.float32)
    xp = jnp.concatenate([z, x[:, : L - 1]], axis=1)   # x[:, l-1]
    xn = jnp.concatenate([x[:, 1:], z], axis=1)        # x[:, l+1]
    xcat = jnp.concatenate([xp, x, xn], axis=0)        # (3*Cin, L) im2col
    y = jnp.dot(w_ref[...], xcat, preferred_element_type=jnp.float32)
    return jnp.maximum(y + b_ref[...], 0.0)            # + bias, ReLU


def conv_stack_kernel(x_ref, *refs):
    o_ref = refs[-1]
    wb = refs[:-1]                                     # (w1, b1, ..., w10, b10)
    layer = lambda i, h: _conv3_same(h, wb[2 * i], wb[2 * i + 1])

    h = layer(0, x_ref[...])        # conv1 / bn1
    h = layer(1, h)                 # conv2 / bn2
    x1 = layer(2, h)                # conv3 / bn3
    h = layer(3, x1)                # conv4 / bn4
    x2 = layer(4, h)                # conv5 / bn5
    h = layer(5, x2 + x1)           # conv6(x2 + x1) / bn6
    x3 = layer(6, h)                # conv7 / bn7
    h = layer(7, x3 + x2)           # conv8(x3 + x2) / bn8
    x4 = layer(8, h)                # conv9 / bn9
    o_ref[...] = layer(9, x4 + x3)  # conv10(x4 + x3) / bn10 -> (32, L)


def conv_stack(x, conv_params):
    """x: (B, 8, L) f32 (channel dim already padded to 8).  -> (B, 32, L)."""
    B, C, L = x.shape
    cout_last = conv_params[-1][0].shape[0]
    flat_wb = [a for wb in conv_params for a in wb]

    in_specs = [pl.BlockSpec((None, C, L), lambda b: (b, 0, 0))]
    for arr in flat_wb:  # weights/biases: whole array resident in VMEM
        in_specs.append(pl.BlockSpec(arr.shape, lambda b: (0, 0)))

    return pl.pallas_call(
        conv_stack_kernel,
        out_shape=jax.ShapeDtypeStruct((B, cout_last, L), jnp.float32),
        grid=(B,),
        in_specs=in_specs,
        out_specs=pl.BlockSpec((None, cout_last, L), lambda b: (b, 0, 0)),
        compiler_params=pltpu.CompilerParams(dimension_semantics=("parallel",)),
    )(x, *flat_wb)


# ---------------------------------------------------------------------------
# Kernel B: FC1 (+folded BN) + ReLU, fused with the output Linear + ReLU
# ---------------------------------------------------------------------------
def fc_head_kernel(x_ref, w1_ref, b1_ref, w2_ref, b2_ref, o_ref, acc_ref):
    k = pl.program_id(0)

    @pl.when(k == 0)
    def _():
        acc_ref[...] = jnp.zeros_like(acc_ref)

    acc_ref[...] += jnp.dot(x_ref[...], w1_ref[...],
                            preferred_element_type=jnp.float32)

    @pl.when(k == pl.num_programs(0) - 1)
    def _():
        h = jnp.maximum(acc_ref[...] + b1_ref[...], 0.0)   # fc1 + fc1_bn + ReLU
        y = jnp.dot(h, w2_ref[...], preferred_element_type=jnp.float32)
        o_ref[...] = jnp.maximum(y + b2_ref[...], 0.0).astype(o_ref.dtype)


def fc_head(flat, w1, b1, w2, b2, tk=512):
    """flat: (B, K); w1: (K, N) BN-folded; w2: (N, Nout). -> (B, Nout)."""
    B, K = flat.shape
    N = w1.shape[1]
    Nout = w2.shape[1]
    tk = min(tk, K)
    assert K % tk == 0
    grid = (K // tk,)  # single reduction axis; N kept whole (lane-dense output)
    return pl.pallas_call(
        fc_head_kernel,
        out_shape=jax.ShapeDtypeStruct((B, Nout), jnp.float32),
        grid=grid,
        in_specs=[
            pl.BlockSpec((B, tk), lambda k: (0, k)),     # activations K-tile
            pl.BlockSpec((tk, N), lambda k: (k, 0)),     # 4 MiB weight K-tile
            pl.BlockSpec((1, N), lambda k: (0, 0)),      # folded fc1 bias
            pl.BlockSpec((N, Nout), lambda k: (0, 0)),   # output weight (VMEM-resident)
            pl.BlockSpec((1, Nout), lambda k: (0, 0)),   # output bias
        ],
        out_specs=pl.BlockSpec((B, Nout), lambda k: (0, 0)),
        scratch_shapes=[pltpu.VMEM((B, N), jnp.float32)],
        compiler_params=pltpu.CompilerParams(dimension_semantics=("arbitrary",)),
    )(flat, w1, b1, w2, b2)


# ---------------------------------------------------------------------------
# Parameter construction (deterministic; BN folded into weights/bias)
# ---------------------------------------------------------------------------
def make_conv_params(key, cin, cout, pad_cin_to=None, eps=1e-5):
    ks = jax.random.split(key, 6)
    w = jax.random.normal(ks[0], (cout, cin, 3), jnp.float32) * (cin * 3) ** -0.5
    b = 0.05 * jax.random.normal(ks[1], (cout,), jnp.float32)
    gamma = 1.0 + 0.1 * jax.random.normal(ks[2], (cout,), jnp.float32)
    beta = 0.1 * jax.random.normal(ks[3], (cout,), jnp.float32)
    mean = 0.1 * jax.random.normal(ks[4], (cout,), jnp.float32)
    var = jax.random.uniform(ks[5], (cout,), jnp.float32, minval=0.5, maxval=1.5)
    s = gamma / jnp.sqrt(var + eps)
    bias = ((b - mean) * s + beta).reshape(cout, 1)
    if pad_cin_to is not None and cin < pad_cin_to:        # bake the cin<8 pad
        w = jnp.pad(w, ((0, 0), (0, pad_cin_to - cin), (0, 0)))
    # Stack taps along Cin ([k=0 | k=1 | k=2] matches [x_{l-1}; x_l; x_{l+1}])
    w_all = jnp.concatenate([w[:, :, 0], w[:, :, 1], w[:, :, 2]], axis=1)
    w_all = w_all * s[:, None]                             # fold BN scale
    return w_all, bias


def make_fc1_params(key, din, dout, eps=1e-5):
    ks = jax.random.split(key, 6)
    w = jax.random.normal(ks[0], (din, dout), jnp.float32) * din ** -0.5
    b = 0.05 * jax.random.normal(ks[1], (dout,), jnp.float32)
    gamma = 1.0 + 0.1 * jax.random.normal(ks[2], (dout,), jnp.float32)
    beta = 0.1 * jax.random.normal(ks[3], (dout,), jnp.float32)
    mean = 0.1 * jax.random.normal(ks[4], (dout,), jnp.float32)
    var = jax.random.uniform(ks[5], (dout,), jnp.float32, minval=0.5, maxval=1.5)
    s = gamma / jnp.sqrt(var + eps)
    w = w * s[None, :]                                     # fold BN scale
    bias = ((b - mean) * s + beta).reshape(1, dout)
    return w, bias


def make_out_params(key, din, dout):
    ks = jax.random.split(key, 2)
    w = jax.random.normal(ks[0], (din, dout), jnp.float32) * din ** -0.5
    b = 0.05 * jax.random.normal(ks[1], (dout,), jnp.float32)
    return w, b.reshape(1, dout)


# ---------------------------------------------------------------------------
# Full forward pass (mirrors ConvNet10Adt2Gex.forward)
# ---------------------------------------------------------------------------
def convnet10_forward(x, conv_params, fc1_params, out_params):
    B, cin, L = x.shape
    if cin < 8:                      # one tiny pad to 8 sublanes (zero channels)
        x = jnp.pad(x, ((0, 0), (0, 8 - cin), (0, 0)))
    h = conv_stack(x, conv_params)                      # (B, 32, L)
    flat = h.reshape(B, -1)                             # == torch.flatten(x, 1)
    return fc_head(flat, *fc1_params, *out_params)      # fc1+bn+relu, output+relu


if __name__ == "__main__":
    dim_mod1, dim_mod2 = 128, 32
    B = 2
    root = jax.random.PRNGKey(0)
    keys = jax.random.split(root, 13)

    channels = [(1, 16), (16, 64), (64, 128)] + [(128, 128)] * 6 + [(128, 32)]
    conv_params = [
        make_conv_params(keys[i], cin, cout, pad_cin_to=8 if cin < 8 else None)
        for i, (cin, cout) in enumerate(channels)
    ]
    fc1_params = make_fc1_params(keys[10], 32 * dim_mod1, 16 * dim_mod1)
    out_params = make_out_params(keys[11], 16 * dim_mod1, dim_mod2)

    x = jax.random.normal(keys[12], (B, 1, dim_mod1), jnp.float32)  # NCL input

    fwd = jax.jit(convnet10_forward)
    y = fwd(x, conv_params, fc1_params, out_params)
    jax.block_until_ready(y)
    assert y.shape == (B, dim_mod2) and y.dtype == jnp.float32
    print("KERNEL_OK")
</pallas_src>

<mosaic_0001>
module attributes {stable_mosaic.version = 11 : i64} {
  func.func @fc_head_kernel(%arg0: i32, %arg1: memref<2x512xf32, #tpu.memory_space<vmem>>, %arg2: memref<512x2048xf32, #tpu.memory_space<vmem>>, %arg3: memref<1x2048xf32, #tpu.memory_space<vmem>>, %arg4: memref<2048x32xf32, #tpu.memory_space<vmem>>, %arg5: memref<1x32xf32, #tpu.memory_space<vmem>>, %arg6: memref<2x32xf32, #tpu.memory_space<vmem>>, %arg7: memref<2x2048xf32, #tpu.memory_space<vmem>>) attributes {dimension_semantics = [#tpu.dimension_semantics<arbitrary>], iteration_bounds = array<i64: 8>, scalar_prefetch = 0 : i64, scratch_operands = 1 : i64, tpu.core_type = #tpu.core_type<tc>, window_params = [{transform_indices = @transform_0, window_bounds = array<i64: 2, 512>}, {transform_indices = @transform_1, window_bounds = array<i64: 512, 2048>}, {pipeline_mode = #tpu.pipeline_mode<synchronous>, transform_indices = @transform_2, window_bounds = array<i64: 1, 2048>}, {pipeline_mode = #tpu.pipeline_mode<synchronous>, transform_indices = @transform_3, window_bounds = array<i64: 2048, 32>}, {pipeline_mode = #tpu.pipeline_mode<synchronous>, transform_indices = @transform_4, window_bounds = array<i64: 1, 32>}, {pipeline_mode = #tpu.pipeline_mode<synchronous>, transform_indices = @transform_5, window_bounds = array<i64: 2, 32>}]} {
    %c0_i32 = arith.constant 0 : i32
    %0 = arith.cmpi eq, %arg0, %c0_i32 : i32
    %1 = arith.extui %0 : i1 to i32
    %c0_i32_0 = arith.constant 0 : i32
    %2 = arith.cmpi ne, %1, %c0_i32_0 : i32
    scf.if %2 {
      %cst_9 = arith.constant 0.000000e+00 : f32
      %12 = vector.broadcast %cst_9 : f32 to vector<2x2048xf32>
      %c0_10 = arith.constant 0 : index
      %c0_11 = arith.constant 0 : index
      %13 = vector.load %arg7[%c0_10, %c0_11] : memref<2x2048xf32, #tpu.memory_space<vmem>>, vector<2x2048xf32>
      tpu.vector_store %arg7[%c0_10, %c0_11], %12 {strides = array<i32>} : memref<2x2048xf32, #tpu.memory_space<vmem>>, vector<2x2048xf32>,
    } else {
    }
    %c0 = arith.constant 0 : index
    %c0_1 = arith.constant 0 : index
    %3 = vector.load %arg7[%c0, %c0_1] : memref<2x2048xf32, #tpu.memory_space<vmem>>, vector<2x2048xf32>
    %c0_2 = arith.constant 0 : index
    %c0_3 = arith.constant 0 : index
    %4 = vector.load %arg1[%c0_2, %c0_3] : memref<2x512xf32, #tpu.memory_space<vmem>>, vector<2x512xf32>
    %c0_4 = arith.constant 0 : index
    %c0_5 = arith.constant 0 : index
    %5 = vector.load %arg2[%c0_4, %c0_5] : memref<512x2048xf32, #tpu.memory_space<vmem>>, vector<512x2048xf32>
    %cst = arith.constant dense<0.000000e+00> : vector<2x2048xf32>
    %6 = tpu.matmul %4, %5, %cst {dimension_numbers = #tpu.dot_dimension_numbers<[1], [0], [0], [1], [0, 0, 1, 1], [], []>} : vector<2x512xf32>, vector<512x2048xf32>, vector<2x2048xf32> -> vector<2x2048xf32>
    %7 = arith.addf %3, %6 : vector<2x2048xf32>
    %c0_6 = arith.constant 0 : index
    %c0_7 = arith.constant 0 : index
    %8 = vector.load %arg7[%c0_6, %c0_7] : memref<2x2048xf32, #tpu.memory_space<vmem>>, vector<2x2048xf32>
    tpu.vector_store %arg7[%c0_6, %c0_7], %7 {strides = array<i32>} : memref<2x2048xf32, #tpu.memory_space<vmem>>, vector<2x2048xf32>,
    %c7_i32 = arith.constant 7 : i32
    %9 = arith.cmpi eq, %arg0, %c7_i32 : i32
    %10 = arith.extui %9 : i1 to i32
    %c0_i32_8 = arith.constant 0 : i32
    %11 = arith.cmpi ne, %10, %c0_i32_8 : i32
    scf.if %11 {
      %c0_9 = arith.constant 0 : index
      %c0_10 = arith.constant 0 : index
      %12 = vector.load %arg7[%c0_9, %c0_10] : memref<2x2048xf32, #tpu.memory_space<vmem>>, vector<2x2048xf32>
      %c0_11 = arith.constant 0 : index
      %c0_12 = arith.constant 0 : index
      %13 = vector.load %arg3[%c0_11, %c0_12] : memref<1x2048xf32, #tpu.memory_space<vmem>>, vector<1x2048xf32>
      %14 = vector.broadcast %13 : vector<1x2048xf32> to vector<2x2048xf32>
      %15 = arith.addf %12, %14 : vector<2x2048xf32>
      %cst_13 = arith.constant 0.000000e+00 : f32
      %16 = vector.broadcast %cst_13 : f32 to vector<2x2048xf32>
      %17 = arith.maximumf %15, %16 : vector<2x2048xf32>
      %c0_14 = arith.constant 0 : index
      %c0_15 = arith.constant 0 : index
      %18 = vector.load %arg4[%c0_14, %c0_15] : memref<2048x32xf32, #tpu.memory_space<vmem>>, vector<2048x32xf32>
      %cst_16 = arith.constant dense<0.000000e+00> : vector<2x32xf32>
      %19 = tpu.matmul %17, %18, %cst_16 {dimension_numbers = #tpu.dot_dimension_numbers<[1], [0], [0], [1], [0, 0, 1, 1], [], []>} : vector<2x2048xf32>, vector<2048x32xf32>, vector<2x32xf32> -> vector<2x32xf32>
      %c0_17 = arith.constant 0 : index
      %c0_18 = arith.constant 0 : index
      %20 = vector.load %arg5[%c0_17, %c0_18] : memref<1x32xf32, #tpu.memory_space<vmem>>, vector<1x32xf32>
      %21 = vector.broadcast %20 : vector<1x32xf32> to vector<2x32xf32>
      %22 = arith.addf %19, %21 : vector<2x32xf32>
      %cst_19 = arith.constant 0.000000e+00 : f32
      %23 = vector.broadcast %cst_19 : f32 to vector<2x32xf32>
      %24 = arith.maximumf %22, %23 : vector<2x32xf32>
      %c0_20 = arith.constant 0 : index
      %c0_21 = arith.constant 0 : index
      %25 = vector.load %arg6[%c0_20, %c0_21] : memref<2x32xf32, #tpu.memory_space<vmem>>, vector<2x32xf32>
      tpu.vector_store %arg6[%c0_20, %c0_21], %24 {strides = array<i32>} : memref<2x32xf32, #tpu.memory_space<vmem>>, vector<2x32xf32>,
    } else {
    }
    return
  }
  func.func @transform_0(%arg0: i32) -> (i32, i32) {
    %c0_i32 = arith.constant 0 : i32
    %c0_i32_0 = arith.constant 0 : i32
    return %c0_i32, %arg0 : i32, i32
  }
  func.func @transform_1(%arg0: i32) -> (i32, i32) {
    %c0_i32 = arith.constant 0 : i32
    %c0_i32_0 = arith.constant 0 : i32
    return %arg0, %c0_i32 : i32, i32
  }
  func.func @transform_2(%arg0: i32) -> (i32, i32) {
    %c0_i32 = arith.constant 0 : i32
    %c0_i32_0 = arith.constant 0 : i32
    %c0_i32_1 = arith.constant 0 : i32
    return %c0_i32, %c0_i32_0 : i32, i32
  }
  func.func @transform_3(%arg0: i32) -> (i32, i32) {
    %c0_i32 = arith.constant 0 : i32
    %c0_i32_0 = arith.constant 0 : i32
    %c0_i32_1 = arith.constant 0 : i32
    return %c0_i32, %c0_i32_0 : i32, i32
  }
  func.func @transform_4(%arg0: i32) -> (i32, i32) {
    %c0_i32 = arith.constant 0 : i32
    %c0_i32_0 = arith.constant 0 : i32
    %c0_i32_1 = arith.constant 0 : i32
    return %c0_i32, %c0_i32_0 : i32, i32
  }
  func.func @transform_5(%arg0: i32) -> (i32, i32) {
    %c0_i32 = arith.constant 0 : i32
    %c0_i32_0 = arith.constant 0 : i32
    %c0_i32_1 = arith.constant 0 : i32
    return %c0_i32, %c0_i32_0 : i32, i32
  }
}

module attributes {stable_mosaic.version = 11 : i64} {
  func.func @conv_stack_kernel(%arg0: i32, %arg1: memref<1x8x128xf32, #tpu.memory_space<vmem>>, %arg2: memref<16x24xf32, #tpu.memory_space<vmem>>, %arg3: memref<16x1xf32, #tpu.memory_space<vmem>>, %arg4: memref<64x48xf32, #tpu.memory_space<vmem>>, %arg5: memref<64x1xf32, #tpu.memory_space<vmem>>, %arg6: memref<128x192xf32, #tpu.memory_space<vmem>>, %arg7: memref<128x1xf32, #tpu.memory_space<vmem>>, %arg8: memref<128x384xf32, #tpu.memory_space<vmem>>, %arg9: memref<128x1xf32, #tpu.memory_space<vmem>>, %arg10: memref<128x384xf32, #tpu.memory_space<vmem>>, %arg11: memref<128x1xf32, #tpu.memory_space<vmem>>, %arg12: memref<128x384xf32, #tpu.memory_space<vmem>>, %arg13: memref<128x1xf32, #tpu.memory_space<vmem>>, %arg14: memref<128x384xf32, #tpu.memory_space<vmem>>, %arg15: memref<128x1xf32, #tpu.memory_space<vmem>>, %arg16: memref<128x384xf32, #tpu.memory_space<vmem>>, %arg17: memref<128x1xf32, #tpu.memory_space<vmem>>, %arg18: memref<128x384xf32, #tpu.memory_space<vmem>>, %arg19: memref<128x1xf32, #tpu.memory_space<vmem>>, %arg20: memref<32x384xf32, #tpu.memory_space<vmem>>, %arg21: memref<32x1xf32, #tpu.memory_space<vmem>>, %arg22: memref<1x32x128xf32, #tpu.memory_space<vmem>>) attributes {dimension_semantics = [#tpu.dimension_semantics<parallel>], iteration_bounds = array<i64: 2>, scalar_prefetch = 0 : i64, scratch_operands = 0 : i64, tpu.core_type = #tpu.core_type<tc>, window_params = [{transform_indices = @transform_0, window_bounds = array<i64: 1, 8, 128>}, {pipeline_mode = #tpu.pipeline_mode<synchronous>, transform_indices = @transform_1, window_bounds = array<i64: 16, 24>}, {pipeline_mode = #tpu.pipeline_mode<synchronous>, transform_indices = @transform_2, window_bounds = array<i64: 16, 1>}, {pipeline_mode = #tpu.pipeline_mode<synchronous>, transform_indices = @transform_3, window_bounds = array<i64: 64, 48>}, {pipeline_mode = #tpu.pipeline_mode<synchronous>, transform_indices = @transform_4, window_bounds = array<i64: 64, 1>}, {pipeline_mode = #tpu.pipeline_mode<synchronous>, transform_indices = @transform_5, window_bounds = array<i64: 128, 192>}, {pipeline_mode = #tpu.pipeline_mode<synchronous>, transform_indices = @transform_6, window_bounds = array<i64: 128, 1>}, {pipeline_mode = #tpu.pipeline_mode<synchronous>, transform_indices = @transform_7, window_bounds = array<i64: 128, 384>}, {pipeline_mode = #tpu.pipeline_mode<synchronous>, transform_indices = @transform_8, window_bounds = array<i64: 128, 1>}, {pipeline_mode = #tpu.pipeline_mode<synchronous>, transform_indices = @transform_9, window_bounds = array<i64: 128, 384>}, {pipeline_mode = #tpu.pipeline_mode<synchronous>, transform_indices = @transform_10, window_bounds = array<i64: 128, 1>}, {pipeline_mode = #tpu.pipeline_mode<synchronous>, transform_indices = @transform_11, window_bounds = array<i64: 128, 384>}, {pipeline_mode = #tpu.pipeline_mode<synchronous>, transform_indices = @transform_12, window_bounds = array<i64: 128, 1>}, {pipeline_mode = #tpu.pipeline_mode<synchronous>, transform_indices = @transform_13, window_bounds = array<i64: 128, 384>}, {pipeline_mode = #tpu.pipeline_mode<synchronous>, transform_indices = @transform_14, window_bounds = array<i64: 128, 1>}, {pipeline_mode = #tpu.pipeline_mode<synchronous>, transform_indices = @transform_15, window_bounds = array<i64: 128, 384>}, {pipeline_mode = #tpu.pipeline_mode<synchronous>, transform_indices = @transform_16, window_bounds = array<i64: 128, 1>}, {pipeline_mode = #tpu.pipeline_mode<synchronous>, transform_indices = @transform_17, window_bounds = array<i64: 128, 384>}, {pipeline_mode = #tpu.pipeline_mode<synchronous>, transform_indices = @transform_18, window_bounds = array<i64: 128, 1>}, {pipeline_mode = #tpu.pipeline_mode<synchronous>, transform_indices = @transform_19, window_bounds = array<i64: 32, 384>}, {pipeline_mode = #tpu.pipeline_mode<synchronous>, transform_indices = @transform_20, window_bounds = array<i64: 32, 1>}, {transform_indices = @transform_21, window_bounds = array<i64: 1, 32, 128>}]} {
    %c0 = arith.constant 0 : index
    %c0_0 = arith.constant 0 : index
    %c0_1 = arith.constant 0 : index
    %0 = vector.load %arg1[%c0, %c0_0, %c0_1] : memref<1x8x128xf32, #tpu.memory_space<vmem>>, vector<1x8x128xf32>
    %1 = vector.shape_cast %0 : vector<1x8x128xf32> to vector<8x128xf32>
    %cst = arith.constant 0.000000e+00 : f32
    %2 = vector.broadcast %cst : f32 to vector<8x1xf32>
    %3 = vector.extract_strided_slice %1 {offsets = [0, 0], sizes = [8, 127], strides = [1, 1]} : vector<8x128xf32> to vector<8x127xf32>
    %4 = tpu.concatenate %2, %3 in 1 : vector<8x1xf32>, vector<8x127xf32> -> vector<8x128xf32>
    %5 = vector.extract_strided_slice %1 {offsets = [0, 1], sizes = [8, 127], strides = [1, 1]} : vector<8x128xf32> to vector<8x127xf32>
    %6 = tpu.concatenate %5, %2 in 1 : vector<8x127xf32>, vector<8x1xf32> -> vector<8x128xf32>
    %7 = tpu.concatenate %4, %1, %6 in 0 : vector<8x128xf32>, vector<8x128xf32>, vector<8x128xf32> -> vector<24x128xf32>
    %c0_2 = arith.constant 0 : index
    %c0_3 = arith.constant 0 : index
    %8 = vector.load %arg2[%c0_2, %c0_3] : memref<16x24xf32, #tpu.memory_space<vmem>>, vector<16x24xf32>
    %cst_4 = arith.constant dense<0.000000e+00> : vector<16x128xf32>
    %9 = tpu.matmul %8, %7, %cst_4 {dimension_numbers = #tpu.dot_dimension_numbers<[1], [0], [0], [1], [0, 0, 1, 1], [], []>} : vector<16x24xf32>, vector<24x128xf32>, vector<16x128xf32> -> vector<16x128xf32>
    %c0_5 = arith.constant 0 : index
    %c0_6 = arith.constant 0 : index
    %10 = vector.load %arg3[%c0_5, %c0_6] : memref<16x1xf32, #tpu.memory_space<vmem>>, vector<16x1xf32>
    %11 = vector.broadcast %10 : vector<16x1xf32> to vector<16x128xf32>
    %12 = arith.addf %9, %11 : vector<16x128xf32>
    %cst_7 = arith.constant 0.000000e+00 : f32
    %13 = vector.broadcast %cst_7 : f32 to vector<16x128xf32>
    %14 = arith.maximumf %12, %13 : vector<16x128xf32>
    %cst_8 = arith.constant 0.000000e+00 : f32
    %15 = vector.broadcast %cst_8 : f32 to vector<16x1xf32>
    %16 = vector.extract_strided_slice %14 {offsets = [0, 0], sizes = [16, 127], strides = [1, 1]} : vector<16x128xf32> to vector<16x127xf32>
    %17 = tpu.concatenate %15, %16 in 1 : vector<16x1xf32>, vector<16x127xf32> -> vector<16x128xf32>
    %18 = vector.extract_strided_slice %14 {offsets = [0, 1], sizes = [16, 127], strides = [1, 1]} : vector<16x128xf32> to vector<16x127xf32>
    %19 = tpu.concatenate %18, %15 in 1 : vector<16x127xf32>, vector<16x1xf32> -> vector<16x128xf32>
    %20 = tpu.concatenate %17, %14, %19 in 0 : vector<16x128xf32>, vector<16x128xf32>, vector<16x128xf32> -> vector<48x128xf32>
    %c0_9 = arith.constant 0 : index
    %c0_10 = arith.constant 0 : index
    %21 = vector.load %arg4[%c0_9, %c0_10] : memref<64x48xf32, #tpu.memory_space<vmem>>, vector<64x48xf32>
    %cst_11 = arith.constant dense<0.000000e+00> : vector<64x128xf32>
    %22 = tpu.matmul %21, %20, %cst_11 {dimension_numbers = #tpu.dot_dimension_numbers<[1], [0], [0], [1], [0, 0, 1, 1], [], []>} : vector<64x48xf32>, vector<48x128xf32>, vector<64x128xf32> -> vector<64x128xf32>
    %c0_12 = arith.constant 0 : index
    %c0_13 = arith.constant 0 : index
    %23 = vector.load %arg5[%c0_12, %c0_13] : memref<64x1xf32, #tpu.memory_space<vmem>>, vector<64x1xf32>
    %24 = vector.broadcast %23 : vector<64x1xf32> to vector<64x128xf32>
    %25 = arith.addf %22, %24 : vector<64x128xf32>
    %cst_14 = arith.constant 0.000000e+00 : f32
    %26 = vector.broadcast %cst_14 : f32 to vector<64x128xf32>
    %27 = arith.maximumf %25, %26 : vector<64x128xf32>
    %cst_15 = arith.constant 0.000000e+00 : f32
    %28 = vector.broadcast %cst_15 : f32 to vector<64x1xf32>
    %29 = vector.extract_strided_slice %27 {offsets = [0, 0], sizes = [64, 127], strides = [1, 1]} : vector<64x128xf32> to vector<64x127xf32>
    %30 = tpu.concatenate %28, %29 in 1 : vector<64x1xf32>, vector<64x127xf32> -> vector<64x128xf32>
    %31 = vector.extract_strided_slice %27 {offsets = [0, 1], sizes = [64, 127], strides = [1, 1]} : vector<64x128xf32> to vector<64x127xf32>
    %32 = tpu.concatenate %31, %28 in 1 : vector<64x127xf32>, vector<64x1xf32> -> vector<64x128xf32>
    %33 = tpu.concatenate %30, %27, %32 in 0 : vector<64x128xf32>, vector<64x128xf32>, vector<64x128xf32> -> vector<192x128xf32>
    %c0_16 = arith.constant 0 : index
    %c0_17 = arith.constant 0 : index
    %34 = vector.load %arg6[%c0_16, %c0_17] : memref<128x192xf32, #tpu.memory_space<vmem>>, vector<128x192xf32>
    %cst_18 = arith.constant dense<0.000000e+00> : vector<128x128xf32>
    %35 = tpu.matmul %34, %33, %cst_18 {dimension_numbers = #tpu.dot_dimension_numbers<[1], [0], [0], [1], [0, 0, 1, 1], [], []>} : vector<128x192xf32>, vector<192x128xf32>, vector<128x128xf32> -> vector<128x128xf32>
    %c0_19 = arith.constant 0 : index
    %c0_20 = arith.constant 0 : index
    %36 = vector.load %arg7[%c0_19, %c0_20] : memref<128x1xf32, #tpu.memory_space<vmem>>, vector<128x1xf32>
    %37 = vector.broadcast %36 : vector<128x1xf32> to vector<128x128xf32>
    %38 = arith.addf %35, %37 : vector<128x128xf32>
    %cst_21 = arith.constant 0.000000e+00 : f32
    %39 = vector.broadcast %cst_21 : f32 to vector<128x128xf32>
    %40 = arith.maximumf %38, %39 : vector<128x128xf32>
    %cst_22 = arith.constant 0.000000e+00 : f32
    %41 = vector.broadcast %cst_22 : f32 to vector<128x1xf32>
    %42 = vector.extract_strided_slice %40 {offsets = [0, 0], sizes = [128, 127], strides = [1, 1]} : vector<128x128xf32> to vector<128x127xf32>
    %43 = tpu.concatenate %41, %42 in 1 : vector<128x1xf32>, vector<128x127xf32> -> vector<128x128xf32>
    %44 = vector.extract_strided_slice %40 {offsets = [0, 1], sizes = [128, 127], strides = [1, 1]} : vector<128x128xf32> to vector<128x127xf32>
    %45 = tpu.concatenate %44, %41 in 1 : vector<128x127xf32>, vector<128x1xf32> -> vector<128x128xf32>
    %46 = tpu.concatenate %43, %40, %45 in 0 : vector<128x128xf32>, vector<128x128xf32>, vector<128x128xf32> -> vector<384x128xf32>
    %c0_23 = arith.constant 0 : index
    %c0_24 = arith.constant 0 : index
    %47 = vector.load %arg8[%c0_23, %c0_24] : memref<128x384xf32, #tpu.memory_space<vmem>>, vector<128x384xf32>
    %cst_25 = arith.constant dense<0.000000e+00> : vector<128x128xf32>
    %48 = tpu.matmul %47, %46, %cst_25 {dimension_numbers = #tpu.dot_dimension_numbers<[1], [0], [0], [1], [0, 0, 1, 1], [], []>} : vector<128x384xf32>, vector<384x128xf32>, vector<128x128xf32> -> vector<128x128xf32>
    %c0_26 = arith.constant 0 : index
    %c0_27 = arith.constant 0 : index
    %49 = vector.load %arg9[%c0_26, %c0_27] : memref<128x1xf32, #tpu.memory_space<vmem>>, vector<128x1xf32>
    %50 = vector.broadcast %49 : vector<128x1xf32> to vector<128x128xf32>
    %51 = arith.addf %48, %50 : vector<128x128xf32>
    %cst_28 = arith.constant 0.000000e+00 : f32
    %52 = vector.broadcast %cst_28 : f32 to vector<128x128xf32>
    %53 = arith.maximumf %51, %52 : vector<128x128xf32>
    %cst_29 = arith.constant 0.000000e+00 : f32
    %54 = vector.broadcast %cst_29 : f32 to vector<128x1xf32>
    %55 = vector.extract_strided_slice %53 {offsets = [0, 0], sizes = [128, 127], strides = [1, 1]} : vector<128x128xf32> to vector<128x127xf32>
    %56 = tpu.concatenate %54, %55 in 1 : vector<128x1xf32>, vector<128x127xf32> -> vector<128x128xf32>
    %57 = vector.extract_strided_slice %53 {offsets = [0, 1], sizes = [128, 127], strides = [1, 1]} : vector<128x128xf32> to vector<128x127xf32>
    %58 = tpu.concatenate %57, %54 in 1 : vector<128x127xf32>, vector<128x1xf32> -> vector<128x128xf32>
    %59 = tpu.concatenate %56, %53, %58 in 0 : vector<128x128xf32>, vector<128x128xf32>, vector<128x128xf32> -> vector<384x128xf32>
    %c0_30 = arith.constant 0 : index
    %c0_31 = arith.constant 0 : index
    %60 = vector.load %arg10[%c0_30, %c0_31] : memref<128x384xf32, #tpu.memory_space<vmem>>, vector<128x384xf32>
    %cst_32 = arith.constant dense<0.000000e+00> : vector<128x128xf32>
    %61 = tpu.matmul %60, %59, %cst_32 {dimension_numbers = #tpu.dot_dimension_numbers<[1], [0], [0], [1], [0, 0, 1, 1], [], []>} : vector<128x384xf32>, vector<384x128xf32>, vector<128x128xf32> -> vector<128x128xf32>
    %c0_33 = arith.constant 0 : index
    %c0_34 = arith.constant 0 : index
    %62 = vector.load %arg11[%c0_33, %c0_34] : memref<128x1xf32, #tpu.memory_space<vmem>>, vector<128x1xf32>
    %63 = vector.broadcast %62 : vector<128x1xf32> to vector<128x128xf32>
    %64 = arith.addf %61, %63 : vector<128x128xf32>
    %cst_35 = arith.constant 0.000000e+00 : f32
    %65 = vector.broadcast %cst_35 : f32 to vector<128x128xf32>
    %66 = arith.maximumf %64, %65 : vector<128x128xf32>
    %67 = arith.addf %66, %40 : vector<128x128xf32>
    %cst_36 = arith.constant 0.000000e+00 : f32
    %68 = vector.broadcast %cst_36 : f32 to vector<128x1xf32>
    %69 = vector.extract_strided_slice %67 {offsets = [0, 0], sizes = [128, 127], strides = [1, 1]} : vector<128x128xf32> to vector<128x127xf32>
    %70 = tpu.concatenate %68, %69 in 1 : vector<128x1xf32>, vector<128x127xf32> -> vector<128x128xf32>
    %71 = vector.extract_strided_slice %67 {offsets = [0, 1], sizes = [128, 127], strides = [1, 1]} : vector<128x128xf32> to vector<128x127xf32>
    %72 = tpu.concatenate %71, %68 in 1 : vector<128x127xf32>, vector<128x1xf32> -> vector<128x128xf32>
    %73 = tpu.concatenate %70, %67, %72 in 0 : vector<128x128xf32>, vector<128x128xf32>, vector<128x128xf32> -> vector<384x128xf32>
    %c0_37 = arith.constant 0 : index
    %c0_38 = arith.constant 0 : index
    %74 = vector.load %arg12[%c0_37, %c0_38] : memref<128x384xf32, #tpu.memory_space<vmem>>, vector<128x384xf32>
    %cst_39 = arith.constant dense<0.000000e+00> : vector<128x128xf32>
    %75 = tpu.matmul %74, %73, %cst_39 {dimension_numbers = #tpu.dot_dimension_numbers<[1], [0], [0], [1], [0, 0, 1, 1], [], []>} : vector<128x384xf32>, vector<384x128xf32>, vector<128x128xf32> -> vector<128x128xf32>
    %c0_40 = arith.constant 0 : index
    %c0_41 = arith.constant 0 : index
    %76 = vector.load %arg13[%c0_40, %c0_41] : memref<128x1xf32, #tpu.memory_space<vmem>>, vector<128x1xf32>
    %77 = vector.broadcast %76 : vector<128x1xf32> to vector<128x128xf32>
    %78 = arith.addf %75, %77 : vector<128x128xf32>
    %cst_42 = arith.constant 0.000000e+00 : f32
    %79 = vector.broadcast %cst_42 : f32 to vector<128x128xf32>
    %80 = arith.maximumf %78, %79 : vector<128x128xf32>
    %cst_43 = arith.constant 0.000000e+00 : f32
    %81 = vector.broadcast %cst_43 : f32 to vector<128x1xf32>
    %82 = vector.extract_strided_slice %80 {offsets = [0, 0], sizes = [128, 127], strides = [1, 1]} : vector<128x128xf32> to vector<128x127xf32>
    %83 = tpu.concatenate %81, %82 in 1 : vector<128x1xf32>, vector<128x127xf32> -> vector<128x128xf32>
    %84 = vector.extract_strided_slice %80 {offsets = [0, 1], sizes = [128, 127], strides = [1, 1]} : vector<128x128xf32> to vector<128x127xf32>
    %85 = tpu.concatenate %84, %81 in 1 : vector<128x127xf32>, vector<128x1xf32> -> vector<128x128xf32>
    %86 = tpu.concatenate %83, %80, %85 in 0 : vector<128x128xf32>, vector<128x128xf32>, vector<128x128xf32> -> vector<384x128xf32>
    %c0_44 = arith.constant 0 : index
    %c0_45 = arith.constant 0 : index
    %87 = vector.load %arg14[%c0_44, %c0_45] : memref<128x384xf32, #tpu.memory_space<vmem>>, vector<128x384xf32>
    %cst_46 = arith.constant dense<0.000000e+00> : vector<128x128xf32>
    %88 = tpu.matmul %87, %86, %cst_46 {dimension_numbers = #tpu.dot_dimension_numbers<[1], [0], [0], [1], [0, 0, 1, 1], [], []>} : vector<128x384xf32>, vector<384x128xf32>, vector<128x128xf32> -> vector<128x128xf32>
    %c0_47 = arith.constant 0 : index
    %c0_48 = arith.constant 0 : index
    %89 = vector.load %arg15[%c0_47, %c0_48] : memref<128x1xf32, #tpu.memory_space<vmem>>, vector<128x1xf32>
    %90 = vector.broadcast %89 : vector<128x1xf32> to vector<128x128xf32>
    %91 = arith.addf %88, %90 : vector<128x128xf32>
    %cst_49 = arith.constant 0.000000e+00 : f32
    %92 = vector.broadcast %cst_49 : f32 to vector<128x128xf32>
    %93 = arith.maximumf %91, %92 : vector<128x128xf32>
    %94 = arith.addf %93, %66 : vector<128x128xf32>
    %cst_50 = arith.constant 0.000000e+00 : f32
    %95 = vector.broadcast %cst_50 : f32 to vector<128x1xf32>
    %96 = vector.extract_strided_slice %94 {offsets = [0, 0], sizes = [128, 127], strides = [1, 1]} : vector<128x128xf32> to vector<128x127xf32>
    %97 = tpu.concatenate %95, %96 in 1 : vector<128x1xf32>, vector<128x127xf32> -> vector<128x128xf32>
    %98 = vector.extract_strided_slice %94 {offsets = [0, 1], sizes = [128, 127], strides = [1, 1]} : vector<128x128xf32> to vector<128x127xf32>
    %99 = tpu.concatenate %98, %95 in 1 : vector<128x127xf32>, vector<128x1xf32> -> vector<128x128xf32>
    %100 = tpu.concatenate %97, %94, %99 in 0 : vector<128x128xf32>, vector<128x128xf32>, vector<128x128xf32> -> vector<384x128xf32>
    %c0_51 = arith.constant 0 : index
    %c0_52 = arith.constant 0 : index
    %101 = vector.load %arg16[%c0_51, %c0_52] : memref<128x384xf32, #tpu.memory_space<vmem>>, vector<128x384xf32>
    %cst_53 = arith.constant dense<0.000000e+00> : vector<128x128xf32>
    %102 = tpu.matmul %101, %100, %cst_53 {dimension_numbers = #tpu.dot_dimension_numbers<[1], [0], [0], [1], [0, 0, 1, 1], [], []>} : vector<128x384xf32>, vector<384x128xf32>, vector<128x128xf32> -> vector<128x128xf32>
    %c0_54 = arith.constant 0 : index
    %c0_55 = arith.constant 0 : index
    %103 = vector.load %arg17[%c0_54, %c0_55] : memref<128x1xf32, #tpu.memory_space<vmem>>, vector<128x1xf32>
    %104 = vector.broadcast %103 : vector<128x1xf32> to vector<128x128xf32>
    %105 = arith.addf %102, %104 : vector<128x128xf32>
    %cst_56 = arith.constant 0.000000e+00 : f32
    %106 = vector.broadcast %cst_56 : f32 to vector<128x128xf32>
    %107 = arith.maximumf %105, %106 : vector<128x128xf32>
    %cst_57 = arith.constant 0.000000e+00 : f32
    %108 = vector.broadcast %cst_57 : f32 to vector<128x1xf32>
    %109 = vector.extract_strided_slice %107 {offsets = [0, 0], sizes = [128, 127], strides = [1, 1]} : vector<128x128xf32> to vector<128x127xf32>
    %110 = tpu.concatenate %108, %109 in 1 : vector<128x1xf32>, vector<128x127xf32> -> vector<128x128xf32>
    %111 = vector.extract_strided_slice %107 {offsets = [0, 1], sizes = [128, 127], strides = [1, 1]} : vector<128x128xf32> to vector<128x127xf32>
    %112 = tpu.concatenate %111, %108 in 1 : vector<128x127xf32>, vector<128x1xf32> -> vector<128x128xf32>
    %113 = tpu.concatenate %110, %107, %112 in 0 : vector<128x128xf32>, vector<128x128xf32>, vector<128x128xf32> -> vector<384x128xf32>
    %c0_58 = arith.constant 0 : index
    %c0_59 = arith.constant 0 : index
    %114 = vector.load %arg18[%c0_58, %c0_59] : memref<128x384xf32, #tpu.memory_space<vmem>>, vector<128x384xf32>
    %cst_60 = arith.constant dense<0.000000e+00> : vector<128x128xf32>
    %115 = tpu.matmul %114, %113, %cst_60 {dimension_numbers = #tpu.dot_dimension_numbers<[1], [0], [0], [1], [0, 0, 1, 1], [], []>} : vector<128x384xf32>, vector<384x128xf32>, vector<128x128xf32> -> vector<128x128xf32>
    %c0_61 = arith.constant 0 : index
    %c0_62 = arith.constant 0 : index
    %116 = vector.load %arg19[%c0_61, %c0_62] : memref<128x1xf32, #tpu.memory_space<vmem>>, vector<128x1xf32>
    %117 = vector.broadcast %116 : vector<128x1xf32> to vector<128x128xf32>
    %118 = arith.addf %115, %117 : vector<128x128xf32>
    %cst_63 = arith.constant 0.000000e+00 : f32
    %119 = vector.broadcast %cst_63 : f32 to vector<128x128xf32>
    %120 = arith.maximumf %118, %119 : vector<128x128xf32>
    %121 = arith.addf %120, %93 : vector<128x128xf32>
    %cst_64 = arith.constant 0.000000e+00 : f32
    %122 = vector.broadcast %cst_64 : f32 to vector<128x1xf32>
    %123 = vector.extract_strided_slice %121 {offsets = [0, 0], sizes = [128, 127], strides = [1, 1]} : vector<128x128xf32> to vector<128x127xf32>
    %124 = tpu.concatenate %122, %123 in 1 : vector<128x1xf32>, vector<128x127xf32> -> vector<128x128xf32>
    %125 = vector.extract_strided_slice %121 {offsets = [0, 1], sizes = [128, 127], strides = [1, 1]} : vector<128x128xf32> to vector<128x127xf32>
    %126 = tpu.concatenate %125, %122 in 1 : vector<128x127xf32>, vector<128x1xf32> -> vector<128x128xf32>
    %127 = tpu.concatenate %124, %121, %126 in 0 : vector<128x128xf32>, vector<128x128xf32>, vector<128x128xf32> -> vector<384x128xf32>
    %c0_65 = arith.constant 0 : index
    %c0_66 = arith.constant 0 : index
    %128 = vector.load %arg20[%c0_65, %c0_66] : memref<32x384xf32, #tpu.memory_space<vmem>>, vector<32x384xf32>
    %cst_67 = arith.constant dense<0.000000e+00> : vector<32x128xf32>
    %129 = tpu.matmul %128, %127, %cst_67 {dimension_numbers = #tpu.dot_dimension_numbers<[1], [0], [0], [1], [0, 0, 1, 1], [], []>} : vector<32x384xf32>, vector<384x128xf32>, vector<32x128xf32> -> vector<32x128xf32>
    %c0_68 = arith.constant 0 : index
    %c0_69 = arith.constant 0 : index
    %130 = vector.load %arg21[%c0_68, %c0_69] : memref<32x1xf32, #tpu.memory_space<vmem>>, vector<32x1xf32>
    %131 = vector.broadcast %130 : vector<32x1xf32> to vector<32x128xf32>
    %132 = arith.addf %129, %131 : vector<32x128xf32>
    %cst_70 = arith.constant 0.000000e+00 : f32
    %133 = vector.broadcast %cst_70 : f32 to vector<32x128xf32>
    %134 = arith.maximumf %132, %133 : vector<32x128xf32>
    %c0_71 = arith.constant 0 : index
    %c0_72 = arith.constant 0 : index
    %c0_73 = arith.constant 0 : index
    %135 = vector.load %arg22[%c0_71, %c0_72, %c0_73] : memref<1x32x128xf32, #tpu.memory_space<vmem>>, vector<1x32x128xf32>
    %136 = vector.shape_cast %135 : vector<1x32x128xf32> to vector<32x128xf32>
    %137 = vector.shape_cast %134 : vector<32x128xf32> to vector<1x32x128xf32>
    tpu.vector_store %arg22[%c0_71, %c0_72, %c0_73], %137 {strides = array<i32>} : memref<1x32x128xf32, #tpu.memory_space<vmem>>, vector<1x32x128xf32>,
    return
  }
  func.func @transform_0(%arg0: i32) -> (i32, i32, i32) {
    %c0_i32 = arith.constant 0 : i32
    %c0_i32_0 = arith.constant 0 : i32
    %c0_i32_1 = arith.constant 0 : i32
    return %arg0, %c0_i32, %c0_i32_0 : i32, i32, i32
  }
  func.func @transform_1(%arg0: i32) -> (i32, i32) {
    %c0_i32 = arith.constant 0 : i32
    %c0_i32_0 = arith.constant 0 : i32
    %c0_i32_1 = arith.constant 0 : i32
    return %c0_i32, %c0_i32_0 : i32, i32
  }
  func.func @transform_2(%arg0: i32) -> (i32, i32) {
    %c0_i32 = arith.constant 0 : i32
    %c0_i32_0 = arith.constant 0 : i32
    %c0_i32_1 = arith.constant 0 : i32
    return %c0_i32, %c0_i32_0 : i32, i32
  }
  func.func @transform_3(%arg0: i32) -> (i32, i32) {
    %c0_i32 = arith.constant 0 : i32
    %c0_i32_0 = arith.constant 0 : i32
    %c0_i32_1 = arith.constant 0 : i32
    return %c0_i32, %c0_i32_0 : i32, i32
  }
  func.func @transform_4(%arg0: i32) -> (i32, i32) {
    %c0_i32 = arith.constant 0 : i32
    %c0_i32_0 = arith.constant 0 : i32
    %c0_i32_1 = arith.constant 0 : i32
    return %c0_i32, %c0_i32_0 : i32, i32
  }
  func.func @transform_5(%arg0: i32) -> (i32, i32) {
    %c0_i32 = arith.constant 0 : i32
    %c0_i32_0 = arith.constant 0 : i32
    %c0_i32_1 = arith.constant 0 : i32
    return %c0_i32, %c0_i32_0 : i32, i32
  }
  func.func @transform_6(%arg0: i32) -> (i32, i32) {
    %c0_i32 = arith.constant 0 : i32
    %c0_i32_0 = arith.constant 0 : i32
    %c0_i32_1 = arith.constant 0 : i32
    return %c0_i32, %c0_i32_0 : i32, i32
  }
  func.func @transform_7(%arg0: i32) -> (i32, i32) {
    %c0_i32 = arith.constant 0 : i32
    %c0_i32_0 = arith.constant 0 : i32
    %c0_i32_1 = arith.constant 0 : i32
    return %c0_i32, %c0_i32_0 : i32, i32
  }
  func.func @transform_8(%arg0: i32) -> (i32, i32) {
    %c0_i32 = arith.constant 0 : i32
    %c0_i32_0 = arith.constant 0 : i32
    %c0_i32_1 = arith.constant 0 : i32
    return %c0_i32, %c0_i32_0 : i32, i32
  }
  func.func @transform_9(%arg0: i32) -> (i32, i32) {
    %c0_i32 = arith.constant 0 : i32
    %c0_i32_0 = arith.constant 0 : i32
    %c0_i32_1 = arith.constant 0 : i32
    return %c0_i32, %c0_i32_0 : i32, i32
  }
  func.func @transform_10(%arg0: i32) -> (i32, i32) {
    %c0_i32 = arith.constant 0 : i32
    %c0_i32_0 = arith.constant 0 : i32
    %c0_i32_1 = arith.constant 0 : i32
    return %c0_i32, %c0_i32_0 : i32, i32
  }
  func.func @transform_11(%arg0: i32) -> (i32, i32) {
    %c0_i32 = arith.constant 0 : i32
    %c0_i32_0 = arith.constant 0 : i32
    %c0_i32_1 = arith.constant 0 : i32
    return %c0_i32, %c0_i32_0 : i32, i32
  }
  func.func @transform_12(%arg0: i32) -> (i32, i32) {
    %c0_i32 = arith.constant 0 : i32
    %c0_i32_0 = arith.constant 0 : i32
    %c0_i32_1 = arith.constant 0 : i32
    return %c0_i32, %c0_i32_0 : i32, i32
  }
  func.func @transform_13(%arg0: i32) -> (i32, i32) {
    %c0_i32 = arith.constant 0 : i32
    %c0_i32_0 = arith.constant 0 : i32
    %c0_i32_1 = arith.constant 0 : i32
    return %c0_i32, %c0_i32_0 : i32, i32
  }
  func.func @transform_14(%arg0: i32) -> (i32, i32) {
    %c0_i32 = arith.constant 0 : i32
    %c0_i32_0 = arith.constant 0 : i32
    %c0_i32_1 = arith.constant 0 : i32
    return %c0_i32, %c0_i32_0 : i32, i32
  }
  func.func @transform_15(%arg0: i32) -> (i32, i32) {
    %c0_i32 = arith.constant 0 : i32
    %c0_i32_0 = arith.constant 0 : i32
    %c0_i32_1 = arith.constant 0 : i32
    return %c0_i32, %c0_i32_0 : i32, i32
  }
  func.func @transform_16(%arg0: i32) -> (i32, i32) {
    %c0_i32 = arith.constant 0 : i32
    %c0_i32_0 = arith.constant 0 : i32
    %c0_i32_1 = arith.constant 0 : i32
    return %c0_i32, %c0_i32_0 : i32, i32
  }
  func.func @transform_17(%arg0: i32) -> (i32, i32) {
    %c0_i32 = arith.constant 0 : i32
    %c0_i32_0 = arith.constant 0 : i32
    %c0_i32_1 = arith.constant 0 : i32
    return %c0_i32, %c0_i32_0 : i32, i32
  }
  func.func @transform_18(%arg0: i32) -> (i32, i32) {
    %c0_i32 = arith.constant 0 : i32
    %c0_i32_0 = arith.constant 0 : i32
    %c0_i32_1 = arith.constant 0 : i32
    return %c0_i32, %c0_i32_0 : i32, i32
  }
  func.func @transform_19(%arg0: i32) -> (i32, i32) {
    %c0_i32 = arith.constant 0 : i32
    %c0_i32_0 = arith.constant 0 : i32
    %c0_i32_1 = arith.constant 0 : i32
    return %c0_i32, %c0_i32_0 : i32, i32
  }
  func.func @transform_20(%arg0: i32) -> (i32, i32) {
    %c0_i32 = arith.constant 0 : i32
    %c0_i32_0 = arith.constant 0 : i32
    %c0_i32_1 = arith.constant 0 : i32
    return %c0_i32, %c0_i32_0 : i32, i32
  }
  func.func @transform_21(%arg0: i32) -> (i32, i32, i32) {
    %c0_i32 = arith.constant 0 : i32
    %c0_i32_0 = arith.constant 0 : i32
    %c0_i32_1 = arith.constant 0 : i32
    return %arg0, %c0_i32, %c0_i32_0 : i32, i32, i32
  }
}

</mosaic_0001>

<llo_original>
// kernel: convnet10_forward.2
$region0: #{convnet10_forward.2}
  #allocation0 [shape = 'u32[]', space=smem, size = 0x4, offset = 0x4, fixed_abs, tag = 'smem constant byte address 0x4 - core index']
  #allocation1 [shape = 'u32[144,128]{1,0:T(1,128)}', space=vmem, size = 0x12000, scoped, tag = 'internal scratch']
  %s0 = inlined_call_operand.vmem [shape: f32[2,8,128], index: 0, kind: input, shape index: {}]
  %s1 = inlined_call_operand.hbm [shape: f32[16,24], index: 1, kind: input, shape index: {}]
  %s2 = inlined_call_operand.vmem [shape: f32[16,1], index: 2, kind: input, shape index: {}]
  %s3 = inlined_call_operand.vmem [shape: f32[64,48], index: 3, kind: input, shape index: {}]
  %s4 = inlined_call_operand.vmem [shape: f32[64,1], index: 4, kind: input, shape index: {}]
  %s5 = inlined_call_operand.vmem [shape: f32[128,192], index: 5, kind: input, shape index: {}]
  %s6 = inlined_call_operand.vmem [shape: f32[128,1], index: 6, kind: input, shape index: {}]
  %s7 = inlined_call_operand.hbm [shape: f32[128,384], index: 7, kind: input, shape index: {}]
  %s8 = inlined_call_operand.vmem [shape: f32[128,1], index: 8, kind: input, shape index: {}]
  %s9 = inlined_call_operand.hbm [shape: f32[128,384], index: 9, kind: input, shape index: {}]
  %s10 = inlined_call_operand.vmem [shape: f32[128,1], index: 10, kind: input, shape index: {}]
  %s11 = inlined_call_operand.hbm [shape: f32[128,384], index: 11, kind: input, shape index: {}]
  %s12 = inlined_call_operand.vmem [shape: f32[128,1], index: 12, kind: input, shape index: {}]
  %s13 = inlined_call_operand.hbm [shape: f32[128,384], index: 13, kind: input, shape index: {}]
  %s14 = inlined_call_operand.vmem [shape: f32[128,1], index: 14, kind: input, shape index: {}]
  %s15 = inlined_call_operand.hbm [shape: f32[128,384], index: 15, kind: input, shape index: {}]
  %s16 = inlined_call_operand.vmem [shape: f32[128,1], index: 16, kind: input, shape index: {}]
  %s17 = inlined_call_operand.hbm [shape: f32[128,384], index: 17, kind: input, shape index: {}]
  %s18 = inlined_call_operand.vmem [shape: f32[128,1], index: 18, kind: input, shape index: {}]
  %s19 = inlined_call_operand.hbm [shape: f32[32,384], index: 19, kind: input, shape index: {}]
  %s20 = inlined_call_operand.vmem [shape: f32[32,1], index: 20, kind: input, shape index: {}]
  %s21 = inlined_call_operand.vmem [shape: f32[2,32,128], index: 21, kind: output, shape index: {}]
  %s22 = sld [smem:[#allocation0]]
  $region149: #{convnet10_forward.2} parent=0
    _
  %s24 = ssub.s32 1, %s22
  %s25 = scalar_select 0, %s24, %s22
  $region1: #{convnet10_forward.2} parent=0
    #allocation2 [shape = 'u8[8192]{0}', space=vmem, size = 0x2000, scoped, tag = 'input window, operand 1, single buffered']
    #allocation3 [shape = 's32[2]{0}', space=sflag, size = 0x8, scoped, tag = 'scoped memory for convnet10_forward.2']
    #allocation4 [shape = 'u8[196608]{0}', space=vmem, size = 0x30000, scoped, tag = 'input window, operand 7, single buffered']
    #allocation5 [shape = 's32[1]{0}', space=sflag, size = 0x4, scoped, tag = 'scoped memory for convnet10_forward.2']
    #allocation6 [shape = 'u8[196608]{0}', space=vmem, size = 0x30000, scoped, tag = 'input window, operand 9, single buffered']
    #allocation7 [shape = 'u8[196608]{0}', space=vmem, size = 0x30000, scoped, tag = 'input window, operand 11, single buffered']
    #allocation8 [shape = 's32[1]{0}', space=sflag, size = 0x4, scoped, tag = 'scoped memory for convnet10_forward.2']
    #allocation9 [shape = 'u8[196608]{0}', space=vmem, size = 0x30000, scoped, tag = 'input window, operand 13, single buffered']
    #allocation10 [shape = 'u8[196608]{0}', space=vmem, size = 0x30000, scoped, tag = 'input window, operand 15, single buffered']
    #allocation11 [shape = 's32[1]{0}', space=sflag, size = 0x4, scoped, tag = 'scoped memory for convnet10_forward.2']
    #allocation12 [shape = 'u8[196608]{0}', space=vmem, size = 0x30000, scoped, tag = 'input window, operand 17, single buffered']
    #allocation13 [shape = 'u8[49152]{0}', space=vmem, size = 0xc000, scoped, tag = 'input window, operand 19, single buffered']
    #allocation14 [shape = 's32[1]{0}', space=sflag, size = 0x4, scoped, tag = 'scoped memory for convnet10_forward.2']
    %26 = vsyncpa [#allocation3], 0
    %27 = vsyncpa [#allocation5], 0
    %28 = vsyncpa [#allocation8], 0
    %29 = vsyncpa [#allocation11], 0
    %30 = vsyncpa [#allocation14], 0
    loop: start=0, step=1, limit=4
    $region2: #{convnet10_forward.2} parent=1 // loop_pre_header
      _
    $region3: #{convnet10_forward.2} parent=1 // loop_header
      %s32 = sphi 0, %s36
      %p33 = scmp.ge.s32.totalorder %s32, 4
      %s42 = sphi 0, %s44
      %s45 = sphi 0, %s42
      %s46 = sphi 0, %s45
      %s62 = sphi 0, %s46
      %s66 = sphi 0, %s66
      %s68 = sphi 0, %s66
      %s69 = sphi 0, %s68
      %s83 = sphi 0, %s69
      %s87 = sphi 0, %s87
      %s89 = sphi 0, %s87
      %s90 = sphi 0, %s89
      %s104 = sphi 0, %s90
      %s108 = sphi 0, %s108
      %s110 = sphi 0, %s108
      %s111 = sphi 0, %s110
      %s125 = sphi 0, %s111
      %s129 = sphi 0, %s129
      %s131 = sphi 0, %s129
      %s132 = sphi 0, %s131
      %s146 = sphi 0, %s132
      %s150 = sphi 0, %s150
      %s152 = sphi 0, %s150
      %s153 = sphi 0, %s152
      %s167 = sphi 0, %s153
      %s171 = sphi 0, %s171
      %s173 = sphi 0, %s171
      %s174 = sphi 0, %s173
      %s188 = sphi 0, %s174
      %s192 = sphi 0, %s192
      %s194 = sphi 0, %s192
      %s195 = sphi 0, %s194
      %s209 = sphi 0, %s195
      %s213 = sphi 0, %s213
      %s215 = sphi 0, %s213
      %s216 = sphi 0, %s215
      %s230 = sphi 0, %s216
      %s234 = sphi 0, %s234
      %s236 = sphi 0, %s234
      %s237 = sphi 0, %s236
      %s251 = sphi 0, %s237
      %s255 = sphi 0, %s255
      %s257 = sphi 0, %s255
      %s258 = sphi 0, %s257
      %s272 = sphi 0, %s258
      %s276 = sphi 0, %s276
      %s278 = sphi 0, %s276
      %s279 = sphi 0, %s278
      %s293 = sphi 0, %s279
      %s297 = sphi 0, %s297
      %s299 = sphi 0, %s297
      %s300 = sphi 0, %s299
      %s314 = sphi 0, %s300
      %s318 = sphi 0, %s318
      %s320 = sphi 0, %s318
      %s321 = sphi 0, %s320
      %s335 = sphi 0, %s321
      %s339 = sphi 0, %s339
      %s341 = sphi 0, %s339
      %s342 = sphi 0, %s341
      %s356 = sphi 0, %s342
      %s360 = sphi 0, %s360
      %s362 = sphi 0, %s360
      %s363 = sphi 0, %s362
      %s377 = sphi 0, %s363
      %s381 = sphi 0, %s381
      %s383 = sphi 0, %s381
      %s384 = sphi 0, %s383
      %s398 = sphi 0, %s384
      %s402 = sphi 0, %s402
      %s404 = sphi 0, %s402
      %s405 = sphi 0, %s404
      %s419 = sphi 0, %s405
      %s423 = sphi 0, %s423
      %s425 = sphi 0, %s423
      %s426 = sphi 0, %s425
      %s440 = sphi 0, %s426
      %s444 = sphi 0, %s444
      %s446 = sphi 0, %s444
      %s447 = sphi 0, %s446
      %s461 = sphi 0, %s447
      %s465 = sphi 0, %s465
      %s467 = sphi 0, %s465
      %s468 = sphi 0, %s467
      %s482 = sphi 0, %s468
      %s488 = sphi 0, %s490
      %s491 = sphi 0, %s488
      %s492 = sphi 0, %s491
      %s508 = sphi 0, %s492
    $region4: #{convnet10_forward.2} parent=1 // loop_header_branch
      %35 = sbr.rel (%p33) target = $region8
    $region5: #{convnet10_forward.2} parent=1 // loop_body
      %s37 = ssub.s32 %s32, 1
      %s38 = ssub.s32 %s32, 2
      %s39 = sadd.s32 %s32, 1
      %s40 = ssub.s32 %s32, %s39
      %p41 = scmp.eq.s32.totalorder %s40, 0
      %s43 = sadd.s32 %s42, 1
      %s44 = scalar_select %p41, %s42, %s43
      %p47 = pneg %p41
      %p48 = scmp.eq.s32.totalorder %s32, 1
      %p49 = por %p47, %p48
      %p50 = scmp.ne.s32.totalorder %s42, %s45
      %p51 = scmp.eq.s32.totalorder %s32, 0
      %p52 = por %p50, %p51
      %p53 = scmp.ne.s32.totalorder %s42, %s45
      %p54 = scmp.eq.s32.totalorder %s37, 1
      %p55 = por %p53, %p54
      %p56 = scmp.ne.s32.totalorder %s45, %s46
      %p57 = scmp.eq.s32.totalorder %s37, 0
      %p58 = por %p56, %p57
      %p59 = scmp.ne.s32.totalorder %s45, %s46
      %p60 = scmp.eq.s32.totalorder %s38, 1
      %p61 = por %p59, %p60
      %p63 = scmp.ne.s32.totalorder %s46, %s62
      %p64 = scmp.eq.s32.totalorder %s38, 0
      %p65 = por %p63, %p64
      %s67 = sadd.s32 %s66, 1
      %p70 = scmp.eq.s32.totalorder %s32, 1
      %p71 = scmp.ne.s32.totalorder %s66, %s68
      %p72 = scmp.eq.s32.totalorder %s32, 0
      %p73 = por %p71, %p72
      %p74 = scmp.ne.s32.totalorder %s66, %s68
      %p75 = scmp.eq.s32.totalorder %s37, 1
      %p76 = por %p74, %p75
      %p77 = scmp.ne.s32.totalorder %s68, %s69
      %p78 = scmp.eq.s32.totalorder %s37, 0
      %p79 = por %p77, %p78
      %p80 = scmp.ne.s32.totalorder %s68, %s69
      %p81 = scmp.eq.s32.totalorder %s38, 1
      %p82 = por %p80, %p81
      %p84 = scmp.ne.s32.totalorder %s69, %s83
      %p85 = scmp.eq.s32.totalorder %s38, 0
      %p86 = por %p84, %p85
      %s88 = sadd.s32 %s87, 1
      %p91 = scmp.eq.s32.totalorder %s32, 1
      %p92 = scmp.ne.s32.totalorder %s87, %s89
      %p93 = scmp.eq.s32.totalorder %s32, 0
      %p94 = por %p92, %p93
      %p95 = scmp.ne.s32.totalorder %s87, %s89
      %p96 = scmp.eq.s32.totalorder %s37, 1
      %p97 = por %p95, %p96
      %p98 = scmp.ne.s32.totalorder %s89, %s90
      %p99 = scmp.eq.s32.totalorder %s37, 0
      %p100 = por %p98, %p99
      %p101 = scmp.ne.s32.totalorder %s89, %s90
      %p102 = scmp.eq.s32.totalorder %s38, 1
      %p103 = por %p101, %p102
      %p105 = scmp.ne.s32.totalorder %s90, %s104
      %p106 = scmp.eq.s32.totalorder %s38, 0
      %p107 = por %p105, %p106
      %s109 = sadd.s32 %s108, 1
      %p112 = scmp.eq.s32.totalorder %s32, 1
      %p113 = scmp.ne.s32.totalorder %s108, %s110
      %p114 = scmp.eq.s32.totalorder %s32, 0
      %p115 = por %p113, %p114
      %p116 = scmp.ne.s32.totalorder %s108, %s110
      %p117 = scmp.eq.s32.totalorder %s37, 1
      %p118 = por %p116, %p117
      %p119 = scmp.ne.s32.totalorder %s110, %s111
      %p120 = scmp.eq.s32.totalorder %s37, 0
      %p121 = por %p119, %p120
      %p122 = scmp.ne.s32.totalorder %s110, %s111
      %p123 = scmp.eq.s32.totalorder %s38, 1
      %p124 = por %p122, %p123
      %p126 = scmp.ne.s32.totalorder %s111, %s125
      %p127 = scmp.eq.s32.totalorder %s38, 0
      %p128 = por %p126, %p127
      %s130 = sadd.s32 %s129, 1
      %p133 = scmp.eq.s32.totalorder %s32, 1
      %p134 = scmp.ne.s32.totalorder %s129, %s131
      %p135 = scmp.eq.s32.totalorder %s32, 0
      %p136 = por %p134, %p135
      %p137 = scmp.ne.s32.totalorder %s129, %s131
      %p138 = scmp.eq.s32.totalorder %s37, 1
      %p139 = por %p137, %p138
      %p140 = scmp.ne.s32.totalorder %s131, %s132
      %p141 = scmp.eq.s32.totalorder %s37, 0
      %p142 = por %p140, %p141
      %p143 = scmp.ne.s32.totalorder %s131, %s132
      %p144 = scmp.eq.s32.totalorder %s38, 1
      %p145 = por %p143, %p144
      %p147 = scmp.ne.s32.totalorder %s132, %s146
      %p148 = scmp.eq.s32.totalorder %s38, 0
      %p149 = por %p147, %p148
      %s151 = sadd.s32 %s150, 1
      %p154 = scmp.eq.s32.totalorder %s32, 1
      %p155 = scmp.ne.s32.totalorder %s150, %s152
      %p156 = scmp.eq.s32.totalorder %s32, 0
      %p157 = por %p155, %p156
      %p158 = scmp.ne.s32.totalorder %s150, %s152
      %p159 = scmp.eq.s32.totalorder %s37, 1
      %p160 = por %p158, %p159
      %p161 = scmp.ne.s32.totalorder %s152, %s153
      %p162 = scmp.eq.s32.totalorder %s37, 0
      %p163 = por %p161, %p162
      %p164 = scmp.ne.s32.totalorder %s152, %s153
      %p165 = scmp.eq.s32.totalorder %s38, 1
      %p166 = por %p164, %p165
      %p168 = scmp.ne.s32.totalorder %s153, %s167
      %p169 = scmp.eq.s32.totalorder %s38, 0
      %p170 = por %p168, %p169
      %s172 = sadd.s32 %s171, 1
      %p175 = scmp.eq.s32.totalorder %s32, 1
      %p176 = scmp.ne.s32.totalorder %s171, %s173
      %p177 = scmp.eq.s32.totalorder %s32, 0
      %p178 = por %p176, %p177
      %p179 = scmp.ne.s32.totalorder %s171, %s173
      %p180 = scmp.eq.s32.totalorder %s37, 1
      %p181 = por %p179, %p180
      %p182 = scmp.ne.s32.totalorder %s173, %s174
      %p183 = scmp.eq.s32.totalorder %s37, 0
      %p184 = por %p182, %p183
      %p185 = scmp.ne.s32.totalorder %s173, %s174
      %p186 = scmp.eq.s32.totalorder %s38, 1
      %p187 = por %p185, %p186
      %p189 = scmp.ne.s32.totalorder %s174, %s188
      %p190 = scmp.eq.s32.totalorder %s38, 0
      %p191 = por %p189, %p190
      %s193 = sadd.s32 %s192, 1
      %p196 = scmp.eq.s32.totalorder %s32, 1
      %p197 = scmp.ne.s32.totalorder %s192, %s194
      %p198 = scmp.eq.s32.totalorder %s32, 0
      %p199 = por %p197, %p198
      %p200 = scmp.ne.s32.totalorder %s192, %s194
      %p201 = scmp.eq.s32.totalorder %s37, 1
      %p202 = por %p200, %p201
      %p203 = scmp.ne.s32.totalorder %s194, %s195
      %p204 = scmp.eq.s32.totalorder %s37, 0
      %p205 = por %p203, %p204
      %p206 = scmp.ne.s32.totalorder %s194, %s195
      %p207 = scmp.eq.s32.totalorder %s38, 1
      %p208 = por %p206, %p207
      %p210 = scmp.ne.s32.totalorder %s195, %s209
      %p211 = scmp.eq.s32.totalorder %s38, 0
      %p212 = por %p210, %p211
      %s214 = sadd.s32 %s213, 1
      %p217 = scmp.eq.s32.totalorder %s32, 1
      %p218 = scmp.ne.s32.totalorder %s213, %s215
      %p219 = scmp.eq.s32.totalorder %s32, 0
      %p220 = por %p218, %p219
      %p221 = scmp.ne.s32.totalorder %s213, %s215
      %p222 = scmp.eq.s32.totalorder %s37, 1
      %p223 = por %p221, %p222
      %p224 = scmp.ne.s32.totalorder %s215, %s216
      %p225 = scmp.eq.s32.totalorder %s37, 0
      %p226 = por %p224, %p225
      %p227 = scmp.ne.s32.totalorder %s215, %s216
      %p228 = scmp.eq.s32.totalorder %s38, 1
      %p229 = por %p227, %p228
      %p231 = scmp.ne.s32.totalorder %s216, %s230
      %p232 = scmp.eq.s32.totalorder %s38, 0
      %p233 = por %p231, %p232
      %s235 = sadd.s32 %s234, 1
      %p238 = scmp.eq.s32.totalorder %s32, 1
      %p239 = scmp.ne.s32.totalorder %s234, %s236
      %p240 = scmp.eq.s32.totalorder %s32, 0
      %p241 = por %p239, %p240
      %p242 = scmp.ne.s32.totalorder %s234, %s236
      %p243 = scmp.eq.s32.totalorder %s37, 1
      %p244 = por %p242, %p243
      %p245 = scmp.ne.s32.totalorder %s236, %s237
      %p246 = scmp.eq.s32.totalorder %s37, 0
      %p247 = por %p245, %p246
      %p248 = scmp.ne.s32.totalorder %s236, %s237
      %p249 = scmp.eq.s32.totalorder %s38, 1
      %p250 = por %p248, %p249
      %p252 = scmp.ne.s32.totalorder %s237, %s251
      %p253 = scmp.eq.s32.totalorder %s38, 0
      %p254 = por %p252, %p253
      %s256 = sadd.s32 %s255, 1
      %p259 = scmp.eq.s32.totalorder %s32, 1
      %p260 = scmp.ne.s32.totalorder %s255, %s257
      %p261 = scmp.eq.s32.totalorder %s32, 0
      %p262 = por %p260, %p261
      %p263 = scmp.ne.s32.totalorder %s255, %s257
      %p264 = scmp.eq.s32.totalorder %s37, 1
      %p265 = por %p263, %p264
      %p266 = scmp.ne.s32.totalorder %s257, %s258
      %p267 = scmp.eq.s32.totalorder %s37, 0
      %p268 = por %p266, %p267
      %p269 = scmp.ne.s32.totalorder %s257, %s258
      %p270 = scmp.eq.s32.totalorder %s38, 1
      %p271 = por %p269, %p270
      %p273 = scmp.ne.s32.totalorder %s258, %s272
      %p274 = scmp.eq.s32.totalorder %s38, 0
      %p275 = por %p273, %p274
      %s277 = sadd.s32 %s276, 1
      %p280 = scmp.eq.s32.totalorder %s32, 1
      %p281 = scmp.ne.s32.totalorder %s276, %s278
      %p282 = scmp.eq.s32.totalorder %s32, 0
      %p283 = por %p281, %p282
      %p284 = scmp.ne.s32.totalorder %s276, %s278
      %p285 = scmp.eq.s32.totalorder %s37, 1
      %p286 = por %p284, %p285
      %p287 = scmp.ne.s32.totalorder %s278, %s279
      %p288 = scmp.eq.s32.totalorder %s37, 0
      %p289 = por %p287, %p288
      %p290 = scmp.ne.s32.totalorder %s278, %s279
      %p291 = scmp.eq.s32.totalorder %s38, 1
      %p292 = por %p290, %p291
      %p294 = scmp.ne.s32.totalorder %s279, %s293
      %p295 = scmp.eq.s32.totalorder %s38, 0
      %p296 = por %p294, %p295
      %s298 = sadd.s32 %s297, 1
      %p301 = scmp.eq.s32.totalorder %s32, 1
      %p302 = scmp.ne.s32.totalorder %s297, %s299
      %p303 = scmp.eq.s32.totalorder %s32, 0
      %p304 = por %p302, %p303
      %p305 = scmp.ne.s32.totalorder %s297, %s299
      %p306 = scmp.eq.s32.totalorder %s37, 1
      %p307 = por %p305, %p306
      %p308 = scmp.ne.s32.totalorder %s299, %s300
      %p309 = scmp.eq.s32.totalorder %s37, 0
      %p310 = por %p308, %p309
      %p311 = scmp.ne.s32.totalorder %s299, %s300
      %p312 = scmp.eq.s32.totalorder %s38, 1
      %p313 = por %p311, %p312
      %p315 = scmp.ne.s32.totalorder %s300, %s314
      %p316 = scmp.eq.s32.totalorder %s38, 0
      %p317 = por %p315, %p316
      %s319 = sadd.s32 %s318, 1
      %p322 = scmp.eq.s32.totalorder %s32, 1
      %p323 = scmp.ne.s32.totalorder %s318, %s320
      %p324 = scmp.eq.s32.totalorder %s32, 0
      %p325 = por %p323, %p324
      %p326 = scmp.ne.s32.totalorder %s318, %s320
      %p327 = scmp.eq.s32.totalorder %s37, 1
      %p328 = por %p326, %p327
      %p329 = scmp.ne.s32.totalorder %s320, %s321
      %p330 = scmp.eq.s32.totalorder %s37, 0
      %p331 = por %p329, %p330
      %p332 = scmp.ne.s32.totalorder %s320, %s321
      %p333 = scmp.eq.s32.totalorder %s38, 1
      %p334 = por %p332, %p333
      %p336 = scmp.ne.s32.totalorder %s321, %s335
      %p337 = scmp.eq.s32.totalorder %s38, 0
      %p338 = por %p336, %p337
      %s340 = sadd.s32 %s339, 1
      %p343 = scmp.eq.s32.totalorder %s32, 1
      %p344 = scmp.ne.s32.totalorder %s339, %s341
      %p345 = scmp.eq.s32.totalorder %s32, 0
      %p346 = por %p344, %p345
      %p347 = scmp.ne.s32.totalorder %s339, %s341
      %p348 = scmp.eq.s32.totalorder %s37, 1
      %p349 = por %p347, %p348
      %p350 = scmp.ne.s32.totalorder %s341, %s342
      %p351 = scmp.eq.s32.totalorder %s37, 0
      %p352 = por %p350, %p351
      %p353 = scmp.ne.s32.totalorder %s341, %s342
      %p354 = scmp.eq.s32.totalorder %s38, 1
      %p355 = por %p353, %p354
      %p357 = scmp.ne.s32.totalorder %s342, %s356
      %p358 = scmp.eq.s32.totalorder %s38, 0
      %p359 = por %p357, %p358
      %s361 = sadd.s32 %s360, 1
      %p364 = scmp.eq.s32.totalorder %s32, 1
      %p365 = scmp.ne.s32.totalorder %s360, %s362
      %p366 = scmp.eq.s32.totalorder %s32, 0
      %p367 = por %p365, %p366
      %p368 = scmp.ne.s32.totalorder %s360, %s362
      %p369 = scmp.eq.s32.totalorder %s37, 1
      %p370 = por %p368, %p369
      %p371 = scmp.ne.s32.totalorder %s362, %s363
      %p372 = scmp.eq.s32.totalorder %s37, 0
      %p373 = por %p371, %p372
      %p374 = scmp.ne.s32.totalorder %s362, %s363
      %p375 = scmp.eq.s32.totalorder %s38, 1
      %p376 = por %p374, %p375
      %p378 = scmp.ne.s32.totalorder %s363, %s377
      %p379 = scmp.eq.s32.totalorder %s38, 0
      %p380 = por %p378, %p379
      %s382 = sadd.s32 %s381, 1
      %p385 = scmp.eq.s32.totalorder %s32, 1
      %p386 = scmp.ne.s32.totalorder %s381, %s383
      %p387 = scmp.eq.s32.totalorder %s32, 0
      %p388 = por %p386, %p387
      %p389 = scmp.ne.s32.totalorder %s381, %s383
      %p390 = scmp.eq.s32.totalorder %s37, 1
      %p391 = por %p389, %p390
      %p392 = scmp.ne.s32.totalorder %s383, %s384
      %p393 = scmp.eq.s32.totalorder %s37, 0
      %p394 = por %p392, %p393
      %p395 = scmp.ne.s32.totalorder %s383, %s384
      %p396 = scmp.eq.s32.totalorder %s38, 1
      %p397 = por %p395, %p396
      %p399 = scmp.ne.s32.totalorder %s384, %s398
      %p400 = scmp.eq.s32.totalorder %s38, 0
      %p401 = por %p399, %p400
      %s403 = sadd.s32 %s402, 1
      %p406 = scmp.eq.s32.totalorder %s32, 1
      %p407 = scmp.ne.s32.totalorder %s402, %s404
      %p408 = scmp.eq.s32.totalorder %s32, 0
      %p409 = por %p407, %p408
      %p410 = scmp.ne.s32.totalorder %s402, %s404
      %p411 = scmp.eq.s32.totalorder %s37, 1
      %p412 = por %p410, %p411
      %p413 = scmp.ne.s32.totalorder %s404, %s405
      %p414 = scmp.eq.s32.totalorder %s37, 0
      %p415 = por %p413, %p414
      %p416 = scmp.ne.s32.totalorder %s404, %s405
      %p417 = scmp.eq.s32.totalorder %s38, 1
      %p418 = por %p416, %p417
      %p420 = scmp.ne.s32.totalorder %s405, %s419
      %p421 = scmp.eq.s32.totalorder %s38, 0
      %p422 = por %p420, %p421
      %s424 = sadd.s32 %s423, 1
      %p427 = scmp.eq.s32.totalorder %s32, 1
      %p428 = scmp.ne.s32.totalorder %s423, %s425
      %p429 = scmp.eq.s32.totalorder %s32, 0
      %p430 = por %p428, %p429
      %p431 = scmp.ne.s32.totalorder %s423, %s425
      %p432 = scmp.eq.s32.totalorder %s37, 1
      %p433 = por %p431, %p432
      %p434 = scmp.ne.s32.totalorder %s425, %s426
      %p435 = scmp.eq.s32.totalorder %s37, 0
      %p436 = por %p434, %p435
      %p437 = scmp.ne.s32.totalorder %s425, %s426
      %p438 = scmp.eq.s32.totalorder %s38, 1
      %p439 = por %p437, %p438
      %p441 = scmp.ne.s32.totalorder %s426, %s440
      %p442 = scmp.eq.s32.totalorder %s38, 0
      %p443 = por %p441, %p442
      %s445 = sadd.s32 %s444, 1
      %p448 = scmp.eq.s32.totalorder %s32, 1
      %p449 = scmp.ne.s32.totalorder %s444, %s446
      %p450 = scmp.eq.s32.totalorder %s32, 0
      %p451 = por %p449, %p450
      %p452 = scmp.ne.s32.totalorder %s444, %s446
      %p453 = scmp.eq.s32.totalorder %s37, 1
      %p454 = por %p452, %p453
      %p455 = scmp.ne.s32.totalorder %s446, %s447
      %p456 = scmp.eq.s32.totalorder %s37, 0
      %p457 = por %p455, %p456
      %p458 = scmp.ne.s32.totalorder %s446, %s447
      %p459 = scmp.eq.s32.totalorder %s38, 1
      %p460 = por %p458, %p459
      %p462 = scmp.ne.s32.totalorder %s447, %s461
      %p463 = scmp.eq.s32.totalorder %s38, 0
      %p464 = por %p462, %p463
      %s466 = sadd.s32 %s465, 1
      %p469 = scmp.eq.s32.totalorder %s32, 1
      %p470 = scmp.ne.s32.totalorder %s465, %s467
      %p471 = scmp.eq.s32.totalorder %s32, 0
      %p472 = por %p470, %p471
      %p473 = scmp.ne.s32.totalorder %s465, %s467
      %p474 = scmp.eq.s32.totalorder %s37, 1
      %p475 = por %p473, %p474
      %p476 = scmp.ne.s32.totalorder %s467, %s468
      %p477 = scmp.eq.s32.totalorder %s37, 0
      %p478 = por %p476, %p477
      %p479 = scmp.ne.s32.totalorder %s467, %s468
      %p480 = scmp.eq.s32.totalorder %s38, 1
      %p481 = por %p479, %p480
      %p483 = scmp.ne.s32.totalorder %s468, %s482
      %p484 = scmp.eq.s32.totalorder %s38, 0
      %p485 = por %p483, %p484
      %s486 = ssub.s32 %s32, %s39
      %p487 = scmp.eq.s32.totalorder %s486, 0
      %s489 = sadd.s32 %s488, 1
      %s490 = scalar_select %p487, %s488, %s489
      %p493 = pneg %p487
      %p494 = scmp.eq.s32.totalorder %s32, 1
      %p495 = por %p493, %p494
      %p496 = scmp.ne.s32.totalorder %s488, %s491
      %p497 = scmp.eq.s32.totalorder %s32, 0
      %p498 = por %p496, %p497
      %p499 = scmp.ne.s32.totalorder %s488, %s491
      %p500 = scmp.eq.s32.totalorder %s37, 1
      %p501 = por %p499, %p500
      %p502 = scmp.ne.s32.totalorder %s491, %s492
      %p503 = scmp.eq.s32.totalorder %s37, 0
      %p504 = por %p502, %p503
      %p505 = scmp.ne.s32.totalorder %s491, %s492
      %p506 = scmp.eq.s32.totalorder %s38, 1
      %p507 = por %p505, %p506
      %p509 = scmp.ne.s32.totalorder %s492, %s508
      %p510 = scmp.eq.s32.totalorder %s38, 0
      %p511 = por %p509, %p510
      %p512 = scmp.le.s32.totalorder 1, %s32
      %p513 = scmp.lt.s32.totalorder %s32, 3
      %p514 = pnand %p512, %p513
      %p515 = pneg %p514
      // Predicated region
      $region9: #{convnet10_forward.2} parent=5 // pred_check
        _
      $region10: #{convnet10_forward.2} parent=5 // pred_check_branch
        %517 = sbr.rel (%p514) target = $region12
      $region11: #{convnet10_forward.2} parent=5 // pred_region
        %s518 = ssub.s32 %s32, 1
        // Predicated region
        $region13: #{convnet10_forward.2} parent=11 // pred_check
          %p519 = pneg %p79
        $region14: #{convnet10_forward.2} parent=11 // pred_check_branch
          %521 = sbr.rel (%p519) target = $region16
        $region15: #{convnet10_forward.2} parent=11 // pred_region
          %s523 = ssub.s32 256, 256
          %524 = vsyncadd [#allocation3], %s523
          %s525 = sshll.u32 [#allocation2], 4
          %s526 = int_to_ptr.vmem [resolvable:$true] %s525
          %531 = dma.hbm_to_vmem [thread:$0]  %s1, 256, %s526, [#allocation3], 128, 128, 8
        $region16: #{convnet10_forward.2} parent=11 // pred_fallthru
          _
        // Predicated region
        $region17: #{convnet10_forward.2} parent=11 // pred_check
          %p532 = pneg %p100
        $region18: #{convnet10_forward.2} parent=11 // pred_check_branch
          %534 = sbr.rel (%p532) target = $region20
        $region19: #{convnet10_forward.2} parent=11 // pred_region
          _
        $region20: #{convnet10_forward.2} parent=11 // pred_fallthru
          _
        // Predicated region
        $region21: #{convnet10_forward.2} parent=11 // pred_check
          %p535 = pneg %p121
        $region22: #{convnet10_forward.2} parent=11 // pred_check_branch
          %537 = sbr.rel (%p535) target = $region24
        $region23: #{convnet10_forward.2} parent=11 // pred_region
          _
        $region24: #{convnet10_forward.2} parent=11 // pred_fallthru
          _
        // Predicated region
        $region25: #{convnet10_forward.2} parent=11 // pred_check
          %p538 = pneg %p142
        $region26: #{convnet10_forward.2} parent=11 // pred_check_branch
          %540 = sbr.rel (%p538) target = $region28
        $region27: #{convnet10_forward.2} parent=11 // pred_region
          _
        $region28: #{convnet10_forward.2} parent=11 // pred_fallthru
          _
        // Predicated region
        $region29: #{convnet10_forward.2} parent=11 // pred_check
          %p541 = pneg %p163
        $region30: #{convnet10_forward.2} parent=11 // pred_check_branch
          %543 = sbr.rel (%p541) target = $region32
        $region31: #{convnet10_forward.2} parent=11 // pred_region
          _
        $region32: #{convnet10_forward.2} parent=11 // pred_fallthru
          _
        // Predicated region
        $region33: #{convnet10_forward.2} parent=11 // pred_check
          %p544 = pneg %p184
        $region34: #{convnet10_forward.2} parent=11 // pred_check_branch
          %546 = sbr.rel (%p544) target = $region36
        $region35: #{convnet10_forward.2} parent=11 // pred_region
          _
        $region36: #{convnet10_forward.2} parent=11 // pred_fallthru
          _
        // Predicated region
        $region37: #{convnet10_forward.2} parent=11 // pred_check
          %p547 = pneg %p205
        $region38: #{convnet10_forward.2} parent=11 // pred_check_branch
          %549 = sbr.rel (%p547) target = $region40
        $region39: #{convnet10_forward.2} parent=11 // pred_region
          %s551 = ssub.s32 6144, 6144
          %552 = vsyncadd [#allocation5], %s551
          %s553 = sshll.u32 [#allocation4], 4
          %s554 = int_to_ptr.vmem [resolvable:$true] %s553
          %559 = dma.hbm_to_vmem [thread:$0]  %s7, 6144, %s554, [#allocation5], 384, 384, 24
        $region40: #{convnet10_forward.2} parent=11 // pred_fallthru
          _
        // Predicated region
        $region41: #{convnet10_forward.2} parent=11 // pred_check
          %p560 = pneg %p226
        $region42: #{convnet10_forward.2} parent=11 // pred_check_branch
          %562 = sbr.rel (%p560) target = $region44
        $region43: #{convnet10_forward.2} parent=11 // pred_region
          _
        $region44: #{convnet10_forward.2} parent=11 // pred_fallthru
          _
        // Predicated region
        $region45: #{convnet10_forward.2} parent=11 // pred_check
          %p563 = pneg %p247
        $region46: #{convnet10_forward.2} parent=11 // pred_check_branch
          %565 = sbr.rel (%p563) target = $region48
        $region47: #{convnet10_forward.2} parent=11 // pred_region
          %s567 = ssub.s32 6144, 6144
          %568 = vsyncadd [#allocation5], %s567
          %s569 = sshll.u32 [#allocation6], 4
          %s570 = int_to_ptr.vmem [resolvable:$true] %s569
          %575 = dma.hbm_to_vmem [thread:$0]  %s9, 6144, %s570, [#allocation5], 384, 384, 24
        $region48: #{convnet10_forward.2} parent=11 // pred_fallthru
          _
        // Predicated region
        $region49: #{convnet10_forward.2} parent=11 // pred_check
          %p576 = pneg %p268
        $region50: #{convnet10_forward.2} parent=11 // pred_check_branch
          %578 = sbr.rel (%p576) target = $region52
        $region51: #{convnet10_forward.2} parent=11 // pred_region
          _
        $region52: #{convnet10_forward.2} parent=11 // pred_fallthru
          _
        // Predicated region
        $region53: #{convnet10_forward.2} parent=11 // pred_check
          %p579 = pneg %p289
        $region54: #{convnet10_forward.2} parent=11 // pred_check_branch
          %581 = sbr.rel (%p579) target = $region56
        $region55: #{convnet10_forward.2} parent=11 // pred_region
          %s583 = ssub.s32 6144, 6144
          %584 = vsyncadd [#allocation8], %s583
          %s585 = sshll.u32 [#allocation7], 4
          %s586 = int_to_ptr.vmem [resolvable:$true] %s585
          %591 = dma.hbm_to_vmem [thread:$0]  %s11, 6144, %s586, [#allocation8], 384, 384, 24
        $region56: #{convnet10_forward.2} parent=11 // pred_fallthru
          _
        // Predicated region
        $region57: #{convnet10_forward.2} parent=11 // pred_check
          %p592 = pneg %p310
        $region58: #{convnet10_forward.2} parent=11 // pred_check_branch
          %594 = sbr.rel (%p592) target = $region60
        $region59: #{convnet10_forward.2} parent=11 // pred_region
          _
        $region60: #{convnet10_forward.2} parent=11 // pred_fallthru
          _
        // Predicated region
        $region61: #{convnet10_forward.2} parent=11 // pred_check
          %p595 = pneg %p331
        $region62: #{convnet10_forward.2} parent=11 // pred_check_branch
          %597 = sbr.rel (%p595) target = $region64
        $region63: #{convnet10_forward.2} parent=11 // pred_region
          %s599 = ssub.s32 6144, 6144
          %600 = vsyncadd [#allocation8], %s599
          %s601 = sshll.u32 [#allocation9], 4
          %s602 = int_to_ptr.vmem [resolvable:$true] %s601
          %607 = dma.hbm_to_vmem [thread:$0]  %s13, 6144, %s602, [#allocation8], 384, 384, 24
        $region64: #{convnet10_forward.2} parent=11 // pred_fallthru
          _
        // Predicated region
        $region65: #{convnet10_forward.2} parent=11 // pred_check
          %p608 = pneg %p352
        $region66: #{convnet10_forward.2} parent=11 // pred_check_branch
          %610 = sbr.rel (%p608) target = $region68
        $region67: #{convnet10_forward.2} parent=11 // pred_region
          _
        $region68: #{convnet10_forward.2} parent=11 // pred_fallthru
          _
        // Predicated region
        $region69: #{convnet10_forward.2} parent=11 // pred_check
          %p611 = pneg %p373
        $region70: #{convnet10_forward.2} parent=11 // pred_check_branch
          %613 = sbr.rel (%p611) target = $region72
        $region71: #{convnet10_forward.2} parent=11 // pred_region
          %s615 = ssub.s32 6144, 6144
          %616 = vsyncadd [#allocation11], %s615
          %s617 = sshll.u32 [#allocation10], 4
          %s618 = int_to_ptr.vmem [resolvable:$true] %s617
          %623 = dma.hbm_to_vmem [thread:$0]  %s15, 6144, %s618, [#allocation11], 384, 384, 24
        $region72: #{convnet10_forward.2} parent=11 // pred_fallthru
          _
        // Predicated region
        $region73: #{convnet10_forward.2} parent=11 // pred_check
          %p624 = pneg %p394
        $region74: #{convnet10_forward.2} parent=11 // pred_check_branch
          %626 = sbr.rel (%p624) target = $region76
        $region75: #{convnet10_forward.2} parent=11 // pred_region
          _
        $region76: #{convnet10_forward.2} parent=11 // pred_fallthru
          _
        // Predicated region
        $region77: #{convnet10_forward.2} parent=11 // pred_check
          %p627 = pneg %p415
        $region78: #{convnet10_forward.2} parent=11 // pred_check_branch
          %629 = sbr.rel (%p627) target = $region80
        $region79: #{convnet10_forward.2} parent=11 // pred_region
          %s631 = ssub.s32 6144, 6144
          %632 = vsyncadd [#allocation11], %s631
          %s633 = sshll.u32 [#allocation12], 4
          %s634 = int_to_ptr.vmem [resolvable:$true] %s633
          %639 = dma.hbm_to_vmem [thread:$0]  %s17, 6144, %s634, [#allocation11], 384, 384, 24
        $region80: #{convnet10_forward.2} parent=11 // pred_fallthru
          _
        // Predicated region
        $region81: #{convnet10_forward.2} parent=11 // pred_check
          %p640 = pneg %p436
        $region82: #{convnet10_forward.2} parent=11 // pred_check_branch
          %642 = sbr.rel (%p640) target = $region84
        $region83: #{convnet10_forward.2} parent=11 // pred_region
          _
        $region84: #{convnet10_forward.2} parent=11 // pred_fallthru
          _
        // Predicated region
        $region85: #{convnet10_forward.2} parent=11 // pred_check
          %p643 = pneg %p457
        $region86: #{convnet10_forward.2} parent=11 // pred_check_branch
          %645 = sbr.rel (%p643) target = $region88
        $region87: #{convnet10_forward.2} parent=11 // pred_region
          %s647 = ssub.s32 1536, 1536
          %648 = vsyncadd [#allocation14], %s647
          %s649 = sshll.u32 [#allocation13], 4
          %s650 = int_to_ptr.vmem [resolvable:$true] %s649
          %655 = dma.hbm_to_vmem [thread:$0]  %s19, 1536, %s650, [#allocation14], 384, 384, 24
        $region88: #{convnet10_forward.2} parent=11 // pred_fallthru
          _
        // Predicated region
        $region89: #{convnet10_forward.2} parent=11 // pred_check
          %p656 = pneg %p478
        $region90: #{convnet10_forward.2} parent=11 // pred_check_branch
          %658 = sbr.rel (%p656) target = $region92
        $region91: #{convnet10_forward.2} parent=11 // pred_region
          _
        $region92: #{convnet10_forward.2} parent=11 // pred_fallthru
          _
      $region12: #{convnet10_forward.2} parent=5 // pred_fallthru
        _
      %p659 = scmp.lt.s32.totalorder %s32, 2
      // Predicated region
      $region93: #{convnet10_forward.2} parent=5 // pred_check
        %p660 = pneg %p659
      $region94: #{convnet10_forward.2} parent=5 // pred_check_branch
        %662 = sbr.rel (%p660) target = $region96
      $region95: #{convnet10_forward.2} parent=5 // pred_region
        // Predicated region
        $region97: #{convnet10_forward.2} parent=95 // pred_check
          %p663 = pneg %p52
        $region98: #{convnet10_forward.2} parent=95 // pred_check_branch
          %665 = sbr.rel (%p663) target = $region100
        $region99: #{convnet10_forward.2} parent=95 // pred_region
          %p666 = scmp.lt.s32.totalorder %s32, 1
          %s667 = scalar_select %p666, %s32, 1
          %s668 = smul.addr %s667, 8
          %s669 = scalar_lea.vmem %s0, %s668
        $region100: #{convnet10_forward.2} parent=95 // pred_fallthru
          _
      $region96: #{convnet10_forward.2} parent=5 // pred_fallthru
        _
      %p670 = scmp.le.s32.totalorder 1, %s32
      %p671 = scmp.lt.s32.totalorder %s32, 3
      %p672 = pnand %p670, %p671
      %p673 = pneg %p672
      // Predicated region
      $region101: #{convnet10_forward.2} parent=5 // pred_check
        _
      $region102: #{convnet10_forward.2} parent=5 // pred_check_branch
        %675 = sbr.rel (%p672) target = $region104
      $region103: #{convnet10_forward.2} parent=5 // pred_region
        %s676 = ssub.s32 %s32, 1
        // Predicated region
        $region105: #{convnet10_forward.2} parent=103 // pred_check
          %p677 = pneg %p79
        $region106: #{convnet10_forward.2} parent=103 // pred_check_branch
          %679 = sbr.rel (%p677) target = $region108
        $region107: #{convnet10_forward.2} parent=103 // pred_region
          %680 = dma.done [#allocation3], 256
        $region108: #{convnet10_forward.2} parent=103 // pred_fallthru
          _
        // Predicated region
        $region109: #{convnet10_forward.2} parent=103 // pred_check
          %p681 = pneg %p205
        $region110: #{convnet10_forward.2} parent=103 // pred_check_branch
          %683 = sbr.rel (%p681) target = $region112
        $region111: #{convnet10_forward.2} parent=103 // pred_region
          %684 = dma.done [#allocation5], 6144
        $region112: #{convnet10_forward.2} parent=103 // pred_fallthru
          _
        // Predicated region
        $region113: #{convnet10_forward.2} parent=103 // pred_check
          %p685 = pneg %p247
        $region114: #{convnet10_forward.2} parent=103 // pred_check_branch
          %687 = sbr.rel (%p685) target = $region116
        $region115: #{convnet10_forward.2} parent=103 // pred_region
          %688 = dma.done [#allocation5], 6144
        $region116: #{convnet10_forward.2} parent=103 // pred_fallthru
          _
        // Predicated region
        $region117: #{convnet10_forward.2} parent=103 // pred_check
          %p689 = pneg %p289
        $region118: #{convnet10_forward.2} parent=103 // pred_check_branch
          %691 = sbr.rel (%p689) target = $region120
        $region119: #{convnet10_forward.2} parent=103 // pred_region
          %692 = dma.done [#allocation8], 6144
        $region120: #{convnet10_forward.2} parent=103 // pred_fallthru
          _
        // Predicated region
        $region121: #{convnet10_forward.2} parent=103 // pred_check
          %p693 = pneg %p331
        $region122: #{convnet10_forward.2} parent=103 // pred_check_branch
          %695 = sbr.rel (%p693) target = $region124
        $region123: #{convnet10_forward.2} parent=103 // pred_region
          %696 = dma.done [#allocation8], 6144
        $region124: #{convnet10_forward.2} parent=103 // pred_fallthru
          _
        // Predicated region
        $region125: #{convnet10_forward.2} parent=103 // pred_check
          %p697 = pneg %p373
        $region126: #{convnet10_forward.2} parent=103 // pred_check_branch
          %699 = sbr.rel (%p697) target = $region128
        $region127: #{convnet10_forward.2} parent=103 // pred_region
          %700 = dma.done [#allocation11], 6144
        $region128: #{convnet10_forward.2} parent=103 // pred_fallthru
          _
        // Predicated region
        $region129: #{convnet10_forward.2} parent=103 // pred_check
          %p701 = pneg %p415
        $region130: #{convnet10_forward.2} parent=103 // pred_check_branch
          %703 = sbr.rel (%p701) target = $region132
        $region131: #{convnet10_forward.2} parent=103 // pred_region
          %704 = dma.done [#allocation11], 6144
        $region132: #{convnet10_forward.2} parent=103 // pred_fallthru
          _
        // Predicated region
        $region133: #{convnet10_forward.2} parent=103 // pred_check
          %p705 = pneg %p457
        $region134: #{convnet10_forward.2} parent=103 // pred_check_branch
          %707 = sbr.rel (%p705) target = $region136
        $region135: #{convnet10_forward.2} parent=103 // pred_region
          %708 = dma.done [#allocation14], 1536
        $region136: #{convnet10_forward.2} parent=103 // pred_fallthru
          _
        %p709 = scmp.lt.s32.totalorder %s37, 1
        %s710 = scalar_select %p709, %s37, 1
        %s711 = smul.addr %s710, 8
        %s712 = scalar_lea.vmem %s0, %s711
        %p713 = pneg %p58
        %p714 = pneg %p55
        %p715 = pneg %p79
        %p716 = pneg %p76
        %p717 = pneg %p100
        %p718 = pneg %p97
        %p719 = pneg %p121
        %p720 = pneg %p118
        %p721 = pneg %p142
        %p722 = pneg %p139
        %p723 = pneg %p163
        %p724 = pneg %p160
        %p725 = pneg %p184
        %p726 = pneg %p181
        %p727 = pneg %p205
        %p728 = pneg %p202
        %p729 = pneg %p226
        %p730 = pneg %p223
        %p731 = pneg %p247
        %p732 = pneg %p244
        %p733 = pneg %p268
        %p734 = pneg %p265
        %p735 = pneg %p289
        %p736 = pneg %p286
        %p737 = pneg %p310
        %p738 = pneg %p307
        %p739 = pneg %p331
        %p740 = pneg %p328
        %p741 = pneg %p352
        %p742 = pneg %p349
        %p743 = pneg %p373
        %p744 = pneg %p370
        %p745 = pneg %p394
        %p746 = pneg %p391
        %p747 = pneg %p415
        %p748 = pneg %p412
        %p749 = pneg %p436
        %p750 = pneg %p433
        %p751 = pneg %p457
        %p752 = pneg %p454
        %p753 = pneg %p478
        %p754 = pneg %p475
        %p755 = pneg %p504
        %p756 = pneg %p501
        %p757 = scmp.lt.s32.totalorder %s37, 1
        %s758 = scalar_select %p757, %s37, 1
        %s759 = smul.addr %s758, 4
        %s760 = smul.addr %s759, 8
        %s761 = scalar_lea.vmem %s21, %s760
        %p762 = scmp.lt.s32.totalorder %s37, 1
        %s763 = scalar_select %p762, %s37, 1
        %s764 = smul.addr %s763, 8
        %s765 = scalar_lea.vmem %s0, %s764
        %p766 = scmp.lt.s32.totalorder %s37, 1
        %s767 = scalar_select %p766, %s37, 1
        %s768 = smul.addr %s767, 4
        %s769 = smul.addr %s768, 8
        %s770 = scalar_lea.vmem %s21, %s769
        %v771 = vld [vmem:[%s765] sm:$0xff]
        %773 = vrot.lane.b32.xlu0 %v771, 1
        %v774 = vpop.permute.xlu0 %773
        %vm776 = vcmask 7168
        %v777 = vsel %vm776, 0.0, %v774
        %778 = vrot.lane.b32.xlu0 %v771, 127
        %v779 = vpop.permute.xlu0 %778
        %vm781 = vcmask 1039360
        %v782 = vsel %vm781, %v779, 0.0
        %v783 = vld [vmem:[#allocation2] sm:$0xff]
        %v784 = vld [vmem:[#allocation2 + $0x8] sm:$0xff]
        %v785 = vld [vmem:[%s2] sm:$0xff]
        %v786 = vld [vmem:[%s2 + $0x8] sm:$0xff]
        %788 = vset.pattern.permute.xlu0 0
        %789 = vperm.xlu0 %788, %v785
        %v790 = vpop.permute.xlu0 %789
        %793 = vset.pattern.permute.xlu0 0
        %794 = vperm.xlu0 %793, %v786
        %v795 = vpop.permute.xlu0 %794
        %vm797 = vcmask 195584
        %v799 = vsel %vm797, %v783, 0
        %v802 = vsel %vm797, %v784, 0
        %804 = vmatprep.subr.mxu0 0.0
        %805 = vmatpush1.msra.mxu0 0.0
        %806 = vmatprep.subr.mxu0 0.0
        %807 = vmatpush1.msra.mxu0 0.0
        %808 = vmatprep.subr.mxu0 0.0
        %809 = vmatpush1.msra.mxu0 0.0
        %810 = vmatprep.subr.mxu0 0.0
        %811 = vmatpush1.msra.mxu0 0.0
        %812 = vmatprep.subr.mxu0 0.0
        %813 = vmatpush1.msra.mxu0 0.0
        %814 = vmatprep.subr.mxu0 0.0
        %815 = vmatpush1.msra.mxu0 0.0
        %816 = vmatprep.subr.mxu0 0.0
        %817 = vmatpush1.msra.mxu0 0.0
        %818 = vmatprep.subr.mxu0 0.0
        %819 = vmatpush1.msra.mxu0 0.0
        %820 = vmatprep.subr.mxu0 0.0
        %821 = vmatpush1.msra.mxu0 0.0
        %822 = vmatprep.subr.mxu0 0.0
        %823 = vmatpush1.msra.mxu0 0.0
        %824 = vmatprep.subr.mxu0 0.0
        %825 = vmatpush1.msra.mxu0 0.0
        %826 = vmatprep.subr.mxu0 0.0
        %827 = vmatpush1.msra.mxu0 0.0
        %828 = vmatprep.subr.mxu0 0.0
        %829 = vmatpush1.msra.mxu0 0.0
        %830 = vmatprep.subr.mxu0 0.0
        %831 = vmatpush1.msra.mxu0 %v782
        %832 = vmatprep.subr.mxu0 0.0
        %833 = vmatpush1.msra.mxu0 %v771
        %834 = vmatprep.subr.mxu0 0.0
        %835 = vmatpush1.msra.mxu0 %v777
        %836 = vmatprep.subr.mxu0 0.0
        %837 = vmatpush2.msra.mxu0 0.0
        %838 = vmatprep.subr.mxu0 0.0
        %839 = vmatpush2.msra.mxu0 0.0
        %840 = vmatprep.subr.mxu0 0.0
        %841 = vmatpush2.msra.mxu0 0.0
        %842 = vmatprep.subr.mxu0 0.0
        %843 = vmatpush2.msra.mxu0 0.0
        %844 = vmatprep.subr.mxu0 0.0
        %845 = vmatpush2.msra.mxu0 0.0
        %846 = vmatprep.subr.mxu0 0.0
        %847 = vmatpush2.msra.mxu0 0.0
        %848 = vmatprep.subr.mxu0 0.0
        %849 = vmatpush2.msra.mxu0 0.0
        %850 = vmatprep.subr.mxu0 0.0
        %851 = vmatpush2.msra.mxu0 0.0
        %852 = vmatprep.subr.mxu0 0.0
        %853 = vmatpush2.msra.mxu0 0.0
        %854 = vmatprep.subr.mxu0 0.0
        %855 = vmatpush2.msra.mxu0 0.0
        %856 = vmatprep.subr.mxu0 0.0
        %857 = vmatpush2.msra.mxu0 0.0
        %858 = vmatprep.subr.mxu0 0.0
        %859 = vmatpush2.msra.mxu0 0.0
        %860 = vmatprep.subr.mxu0 0.0
        %861 = vmatpush2.msra.mxu0 0.0
        %862 = vmatprep.subr.mxu0 0.0
        %863 = vmatpush2.msra.mxu0 0.0
        %864 = vmatprep.subr.mxu0 0.0
        %865 = vmatpush2.msra.mxu0 0.0
        %866 = vmatprep.subr.mxu0 0.0
        %867 = vmatpush2.msra.mxu0 0.0
        %868 = vmatprep.mubr.f32.mxu0 0.0
        %869 = vmatmul.mubr.f32.gmra.mxu0 %v799
        %v870 = vpop.f32.mrf.mxu0
        %v871 = vadd.f32 %v790, %v870
        %v872 = vpop.f32.mrf.mxu0
        %873 = vmatprep.mubr.f32.mxu0 0.0
        %874 = vmatmul.mubr.f32.gmra.mxu0 %v802
        %v875 = vpop.f32.mrf.mxu0
        %v876 = vadd.f32 %v795, %v875
        %v877 = vpop.f32.mrf.mxu0
        %878 = vdwg.mxu0
        %v879 = vmax.f32 %v871, 0.0
        %v880 = vmax.f32 %v876, 0.0
        %883 = vrot.lane.b32.xlu0 %v879, 1
        %v884 = vpop.permute.xlu0 %883
        %885 = vrot.lane.b32.xlu0 %v880, 1
        %v886 = vpop.permute.xlu0 %885
        %v889 = vsel %vm776, 0.0, %v884
        %v890 = vsel %vm776, 0.0, %v886
        %891 = vrot.lane.b32.xlu0 %v879, 127
        %v892 = vpop.permute.xlu0 %891
        %893 = vrot.lane.b32.xlu0 %v880, 127
        %v894 = vpop.permute.xlu0 %893
        %v897 = vsel %vm781, %v892, 0.0
        %v898 = vsel %vm781, %v894, 0.0
        %v899 = vld [vmem:[%s3] sm:$0xff]
        %v900 = vld [vmem:[%s3 + $0x8] sm:$0xff]
        %v901 = vld [vmem:[%s3 + $0x10] sm:$0xff]
        %v902 = vld [vmem:[%s3 + $0x18] sm:$0xff]
        %v903 = vld [vmem:[%s3 + $0x20] sm:$0xff]
        %v904 = vld [vmem:[%s3 + $0x28] sm:$0xff]
        %v905 = vld [vmem:[%s3 + $0x30] sm:$0xff]
        %v906 = vld [vmem:[%s3 + $0x38] sm:$0xff]
        %v907 = vld [vmem:[%s4] sm:$0xff]
        %v908 = vld [vmem:[%s4 + $0x8] sm:$0xff]
        %v909 = vld [vmem:[%s4 + $0x10] sm:$0xff]
        %v910 = vld [vmem:[%s4 + $0x18] sm:$0xff]
        %v911 = vld [vmem:[%s4 + $0x20] sm:$0xff]
        %v912 = vld [vmem:[%s4 + $0x28] sm:$0xff]
        %v913 = vld [vmem:[%s4 + $0x30] sm:$0xff]
        %v914 = vld [vmem:[%s4 + $0x38] sm:$0xff]
        %916 = vset.pattern.permute.xlu0 0
        %917 = vperm.xlu0 %916, %v907
        %v918 = vpop.permute.xlu0 %917
        %921 = vset.pattern.permute.xlu0 0
        %922 = vperm.xlu0 %921, %v908
        %v923 = vpop.permute.xlu0 %922
        %926 = vset.pattern.permute.xlu0 0
        %927 = vperm.xlu0 %926, %v909
        %v928 = vpop.permute.xlu0 %927
        %931 = vset.pattern.permute.xlu0 0
        %932 = vperm.xlu0 %931, %v910
        %v933 = vpop.permute.xlu0 %932
        %936 = vset.pattern.permute.xlu0 0
        %937 = vperm.xlu0 %936, %v911
        %v938 = vpop.permute.xlu0 %937
        %941 = vset.pattern.permute.xlu0 0
        %942 = vperm.xlu0 %941, %v912
        %v943 = vpop.permute.xlu0 %942
        %946 = vset.pattern.permute.xlu0 0
        %947 = vperm.xlu0 %946, %v913
        %v948 = vpop.permute.xlu0 %947
        %951 = vset.pattern.permute.xlu0 0
        %952 = vperm.xlu0 %951, %v914
        %v953 = vpop.permute.xlu0 %952
        %vm955 = vcmask 392192
        %v957 = vsel %vm955, %v899, 0
        %v960 = vsel %vm955, %v900, 0
        %v963 = vsel %vm955, %v901, 0
        %v966 = vsel %vm955, %v902, 0
        %v969 = vsel %vm955, %v903, 0
        %v972 = vsel %vm955, %v904, 0
        %v975 = vsel %vm955, %v905, 0
        %v978 = vsel %vm955, %v906, 0
        %980 = vmatprep.subr.mxu0 0.0
        %981 = vmatpush1.msra.mxu0 0.0
        %982 = vmatprep.subr.mxu0 0.0
        %983 = vmatpush1.msra.mxu0 0.0
        %984 = vmatprep.subr.mxu0 0.0
        %985 = vmatpush1.msra.mxu0 0.0
        %986 = vmatprep.subr.mxu0 0.0
        %987 = vmatpush1.msra.mxu0 0.0
        %988 = vmatprep.subr.mxu0 0.0
        %989 = vmatpush1.msra.mxu0 0.0
        %990 = vmatprep.subr.mxu0 0.0
        %991 = vmatpush1.msra.mxu0 0.0
        %992 = vmatprep.subr.mxu0 0.0
        %993 = vmatpush1.msra.mxu0 0.0
        %994 = vmatprep.subr.mxu0 0.0
        %995 = vmatpush1.msra.mxu0 0.0
        %996 = vmatprep.subr.mxu0 0.0
        %997 = vmatpush1.msra.mxu0 0.0
        %998 = vmatprep.subr.mxu0 0.0
        %999 = vmatpush1.msra.mxu0 0.0
        %1000 = vmatprep.subr.mxu0 0.0
        %1001 = vmatpush1.msra.mxu0 %v898
        %1002 = vmatprep.subr.mxu0 0.0
        %1003 = vmatpush1.msra.mxu0 %v897
        %1004 = vmatprep.subr.mxu0 0.0
        %1005 = vmatpush1.msra.mxu0 %v880
        %1006 = vmatprep.subr.mxu0 0.0
        %1007 = vmatpush1.msra.mxu0 %v879
        %1008 = vmatprep.subr.mxu0 0.0
        %1009 = vmatpush1.msra.mxu0 %v890
        %1010 = vmatprep.subr.mxu0 0.0
        %1011 = vmatpush1.msra.mxu0 %v889
        %1012 = vmatprep.subr.mxu0 0.0
        %1013 = vmatpush2.msra.mxu0 0.0
        %1014 = vmatprep.subr.mxu0 0.0
        %1015 = vmatpush2.msra.mxu0 0.0
        %1016 = vmatprep.subr.mxu0 0.0
        %1017 = vmatpush2.msra.mxu0 0.0
        %1018 = vmatprep.subr.mxu0 0.0
        %1019 = vmatpush2.msra.mxu0 0.0
        %1020 = vmatprep.subr.mxu0 0.0
        %1021 = vmatpush2.msra.mxu0 0.0
        %1022 = vmatprep.subr.mxu0 0.0
        %1023 = vmatpush2.msra.mxu0 0.0
        %1024 = vmatprep.subr.mxu0 0.0
        %1025 = vmatpush2.msra.mxu0 0.0
        %1026 = vmatprep.subr.mxu0 0.0
        %1027 = vmatpush2.msra.mxu0 0.0
        %1028 = vmatprep.subr.mxu0 0.0
        %1029 = vmatpush2.msra.mxu0 0.0
        %1030 = vmatprep.subr.mxu0 0.0
        %1031 = vmatpush2.msra.mxu0 0.0
        %1032 = vmatprep.subr.mxu0 0.0
        %1033 = vmatpush2.msra.mxu0 0.0
        %1034 = vmatprep.subr.mxu0 0.0
        %1035 = vmatpush2.msra.mxu0 0.0
        %1036 = vmatprep.subr.mxu0 0.0
        %1037 = vmatpush2.msra.mxu0 0.0
        %1038 = vmatprep.subr.mxu0 0.0
        %1039 = vmatpush2.msra.mxu0 0.0
        %1040 = vmatprep.subr.mxu0 0.0
        %1041 = vmatpush2.msra.mxu0 0.0
        %1042 = vmatprep.subr.mxu0 0.0
        %1043 = vmatpush2.msra.mxu0 0.0
        %1044 = vmatprep.mubr.f32.mxu0 0.0
        %1045 = vmatmul.mubr.f32.gmra.mxu0 %v957
        %v1046 = vpop.f32.mrf.mxu0
        %v1047 = vadd.f32 %v918, %v1046
        %v1048 = vpop.f32.mrf.mxu0
        %1049 = vmatprep.mubr.f32.mxu0 0.0
        %1050 = vmatmul.mubr.f32.gmra.mxu0 %v960
        %v1051 = vpop.f32.mrf.mxu0
        %v1052 = vadd.f32 %v923, %v1051
        %v1053 = vpop.f32.mrf.mxu0
        %1054 = vmatprep.mubr.f32.mxu0 0.0
        %1055 = vmatmul.mubr.f32.gmra.mxu0 %v963
        %v1056 = vpop.f32.mrf.mxu0
        %v1057 = vadd.f32 %v928, %v1056
        %v1058 = vpop.f32.mrf.mxu0
        %1059 = vmatprep.mubr.f32.mxu0 0.0
        %1060 = vmatmul.mubr.f32.gmra.mxu0 %v966
        %v1061 = vpop.f32.mrf.mxu0
        %v1062 = vadd.f32 %v933, %v1061
        %v1063 = vpop.f32.mrf.mxu0
        %1064 = vmatprep.mubr.f32.mxu0 0.0
        %1065 = vmatmul.mubr.f32.gmra.mxu0 %v969
        %v1066 = vpop.f32.mrf.mxu0
        %v1067 = vadd.f32 %v938, %v1066
        %v1068 = vpop.f32.mrf.mxu0
        %1069 = vmatprep.mubr.f32.mxu0 0.0
        %1070 = vmatmul.mubr.f32.gmra.mxu0 %v972
        %v1071 = vpop.f32.mrf.mxu0
        %v1072 = vadd.f32 %v943, %v1071
        %v1073 = vpop.f32.mrf.mxu0
        %1074 = vmatprep.mubr.f32.mxu0 0.0
        %1075 = vmatmul.mubr.f32.gmra.mxu0 %v975
        %v1076 = vpop.f32.mrf.mxu0
        %v1077 = vadd.f32 %v948, %v1076
        %v1078 = vpop.f32.mrf.mxu0
        %1079 = vmatprep.mubr.f32.mxu0 0.0
        %1080 = vmatmul.mubr.f32.gmra.mxu0 %v978
        %v1081 = vpop.f32.mrf.mxu0
        %v1082 = vadd.f32 %v953, %v1081
        %v1083 = vpop.f32.mrf.mxu0
        %1084 = vdwg.mxu0
        %v1085 = vmax.f32 %v1047, 0.0
        %v1086 = vmax.f32 %v1052, 0.0
        %v1087 = vmax.f32 %v1057, 0.0
        %v1088 = vmax.f32 %v1062, 0.0
        %v1089 = vmax.f32 %v1067, 0.0
        %v1090 = vmax.f32 %v1072, 0.0
        %v1091 = vmax.f32 %v1077, 0.0
        %v1092 = vmax.f32 %v1082, 0.0
        %1101 = vrot.lane.b32.xlu0 %v1085, 1
        %v1102 = vpop.permute.xlu0 %1101
        %1103 = vrot.lane.b32.xlu0 %v1086, 1
        %v1104 = vpop.permute.xlu0 %1103
        %1105 = vrot.lane.b32.xlu0 %v1087, 1
        %v1106 = vpop.permute.xlu0 %1105
        %1107 = vrot.lane.b32.xlu0 %v1088, 1
        %v1108 = vpop.permute.xlu0 %1107
        %1109 = vrot.lane.b32.xlu0 %v1089, 1
        %v1110 = vpop.permute.xlu0 %1109
        %1111 = vrot.lane.b32.xlu0 %v1090, 1
        %v1112 = vpop.permute.xlu0 %1111
        %1113 = vrot.lane.b32.xlu0 %v1091, 1
        %v1114 = vpop.permute.xlu0 %1113
        %1115 = vrot.lane.b32.xlu0 %v1092, 1
        %v1116 = vpop.permute.xlu0 %1115
        %v1125 = vsel %vm776, 0.0, %v1102
        %v1126 = vsel %vm776, 0.0, %v1104
        %v1127 = vsel %vm776, 0.0, %v1106
        %v1128 = vsel %vm776, 0.0, %v1108
        %v1129 = vsel %vm776, 0.0, %v1110
        %v1130 = vsel %vm776, 0.0, %v1112
        %v1131 = vsel %vm776, 0.0, %v1114
        %v1132 = vsel %vm776, 0.0, %v1116
        %1133 = vrot.lane.b32.xlu0 %v1085, 127
        %v1134 = vpop.permute.xlu0 %1133
        %1135 = vrot.lane.b32.xlu0 %v1086, 127
        %v1136 = vpop.permute.xlu0 %1135
        %1137 = vrot.lane.b32.xlu0 %v1087, 127
        %v1138 = vpop.permute.xlu0 %1137
        %1139 = vrot.lane.b32.xlu0 %v1088, 127
        %v1140 = vpop.permute.xlu0 %1139
        %1141 = vrot.lane.b32.xlu0 %v1089, 127
        %v1142 = vpop.permute.xlu0 %1141
        %1143 = vrot.lane.b32.xlu0 %v1090, 127
        %v1144 = vpop.permute.xlu0 %1143
        %1145 = vrot.lane.b32.xlu0 %v1091, 127
        %v1146 = vpop.permute.xlu0 %1145
        %1147 = vrot.lane.b32.xlu0 %v1092, 127
        %v1148 = vpop.permute.xlu0 %1147
        %v1157 = vsel %vm781, %v1134, 0.0
        %v1158 = vsel %vm781, %v1136, 0.0
        %v1159 = vsel %vm781, %v1138, 0.0
        %v1160 = vsel %vm781, %v1140, 0.0
        %v1161 = vsel %vm781, %v1142, 0.0
        %v1162 = vsel %vm781, %v1144, 0.0
        %v1163 = vsel %vm781, %v1146, 0.0
        %v1164 = vsel %vm781, %v1148, 0.0
        %v1165 = vld [vmem:[%s5] sm:$0xff]
        %v1166 = vld [vmem:[%s5 + $0x8] sm:$0xff]
        %v1167 = vld [vmem:[%s5 + $0x10] sm:$0xff]
        %v1168 = vld [vmem:[%s5 + $0x18] sm:$0xff]
        %v1169 = vld [vmem:[%s5 + $0x20] sm:$0xff]
        %v1170 = vld [vmem:[%s5 + $0x28] sm:$0xff]
        %v1171 = vld [vmem:[%s5 + $0x30] sm:$0xff]
        %v1172 = vld [vmem:[%s5 + $0x38] sm:$0xff]
        %v1173 = vld [vmem:[%s5 + $0x40] sm:$0xff]
        %v1174 = vld [vmem:[%s5 + $0x48] sm:$0xff]
        %v1175 = vld [vmem:[%s5 + $0x50] sm:$0xff]
        %v1176 = vld [vmem:[%s5 + $0x58] sm:$0xff]
        %v1177 = vld [vmem:[%s5 + $0x60] sm:$0xff]
        %v1178 = vld [vmem:[%s5 + $0x68] sm:$0xff]
        %v1179 = vld [vmem:[%s5 + $0x70] sm:$0xff]
        %v1180 = vld [vmem:[%s5 + $0x78] sm:$0xff]
        %v1181 = vld [vmem:[%s5 + $0x80] sm:$0xff]
        %v1182 = vld [vmem:[%s5 + $0x88] sm:$0xff]
        %v1183 = vld [vmem:[%s5 + $0x90] sm:$0xff]
        %v1184 = vld [vmem:[%s5 + $0x98] sm:$0xff]
        %v1185 = vld [vmem:[%s5 + $0xa0] sm:$0xff]
        %v1186 = vld [vmem:[%s5 + $0xa8] sm:$0xff]
        %v1187 = vld [vmem:[%s5 + $0xb0] sm:$0xff]
        %v1188 = vld [vmem:[%s5 + $0xb8] sm:$0xff]
        %v1189 = vld [vmem:[%s5 + $0xc0] sm:$0xff]
        %v1190 = vld [vmem:[%s5 + $0xc8] sm:$0xff]
        %v1191 = vld [vmem:[%s5 + $0xd0] sm:$0xff]
        %v1192 = vld [vmem:[%s5 + $0xd8] sm:$0xff]
        %v1193 = vld [vmem:[%s5 + $0xe0] sm:$0xff]
        %v1194 = vld [vmem:[%s5 + $0xe8] sm:$0xff]
        %v1195 = vld [vmem:[%s5 + $0xf0] sm:$0xff]
        %v1196 = vld [vmem:[%s5 + $0xf8] sm:$0xff]
        %v1197 = vld [vmem:[%s6] sm:$0xff]
        %v1198 = vld [vmem:[%s6 + $0x8] sm:$0xff]
        %v1199 = vld [vmem:[%s6 + $0x10] sm:$0xff]
        %v1200 = vld [vmem:[%s6 + $0x18] sm:$0xff]
        %v1201 = vld [vmem:[%s6 + $0x20] sm:$0xff]
        %v1202 = vld [vmem:[%s6 + $0x28] sm:$0xff]
        %v1203 = vld [vmem:[%s6 + $0x30] sm:$0xff]
        %v1204 = vld [vmem:[%s6 + $0x38] sm:$0xff]
        %v1205 = vld [vmem:[%s6 + $0x40] sm:$0xff]
        %v1206 = vld [vmem:[%s6 + $0x48] sm:$0xff]
        %v1207 = vld [vmem:[%s6 + $0x50] sm:$0xff]
        %v1208 = vld [vmem:[%s6 + $0x58] sm:$0xff]
        %v1209 = vld [vmem:[%s6 + $0x60] sm:$0xff]
        %v1210 = vld [vmem:[%s6 + $0x68] sm:$0xff]
        %v1211 = vld [vmem:[%s6 + $0x70] sm:$0xff]
        %v1212 = vld [vmem:[%s6 + $0x78] sm:$0xff]
        %1214 = vset.pattern.permute.xlu0 0
        %1215 = vperm.xlu0 %1214, %v1197
        %v1216 = vpop.permute.xlu0 %1215
        %1219 = vset.pattern.permute.xlu0 0
        %1220 = vperm.xlu0 %1219, %v1198
        %v1221 = vpop.permute.xlu0 %1220
        %1224 = vset.pattern.permute.xlu0 0
        %1225 = vperm.xlu0 %1224, %v1199
        %v1226 = vpop.permute.xlu0 %1225
        %1229 = vset.pattern.permute.xlu0 0
        %1230 = vperm.xlu0 %1229, %v1200
        %v1231 = vpop.permute.xlu0 %1230
        %1234 = vset.pattern.permute.xlu0 0
        %1235 = vperm.xlu0 %1234, %v1201
        %v1236 = vpop.permute.xlu0 %1235
        %1239 = vset.pattern.permute.xlu0 0
        %1240 = vperm.xlu0 %1239, %v1202
        %v1241 = vpop.permute.xlu0 %1240
        %1244 = vset.pattern.permute.xlu0 0
        %1245 = vperm.xlu0 %1244, %v1203
        %v1246 = vpop.permute.xlu0 %1245
        %1249 = vset.pattern.permute.xlu0 0
        %1250 = vperm.xlu0 %1249, %v1204
        %v1251 = vpop.permute.xlu0 %1250
        %1254 = vset.pattern.permute.xlu0 0
        %1255 = vperm.xlu0 %1254, %v1205
        %v1256 = vpop.permute.xlu0 %1255
        %1259 = vset.pattern.permute.xlu0 0
        %1260 = vperm.xlu0 %1259, %v1206
        %v1261 = vpop.permute.xlu0 %1260
        %1264 = vset.pattern.permute.xlu0 0
        %1265 = vperm.xlu0 %1264, %v1207
        %v1266 = vpop.permute.xlu0 %1265
        %1269 = vset.pattern.permute.xlu0 0
        %1270 = vperm.xlu0 %1269, %v1208
        %v1271 = vpop.permute.xlu0 %1270
        %1274 = vset.pattern.permute.xlu0 0
        %1275 = vperm.xlu0 %1274, %v1209
        %v1276 = vpop.permute.xlu0 %1275
        %1279 = vset.pattern.permute.xlu0 0
        %1280 = vperm.xlu0 %1279, %v1210
        %v1281 = vpop.permute.xlu0 %1280
        %1284 = vset.pattern.permute.xlu0 0
        %1285 = vperm.xlu0 %1284, %v1211
        %v1286 = vpop.permute.xlu0 %1285
        %1289 = vset.pattern.permute.xlu0 0
        %1290 = vperm.xlu0 %1289, %v1212
        %v1291 = vpop.permute.xlu0 %1290
        %vm1293 = vcmask 523264
        %v1295 = vsel %vm1293, %v1166, 0
        %v1298 = vsel %vm1293, %v1168, 0
        %v1301 = vsel %vm1293, %v1170, 0
        %v1304 = vsel %vm1293, %v1172, 0
        %v1307 = vsel %vm1293, %v1174, 0
        %v1310 = vsel %vm1293, %v1176, 0
        %v1313 = vsel %vm1293, %v1178, 0
        %v1316 = vsel %vm1293, %v1180, 0
        %v1319 = vsel %vm1293, %v1182, 0
        %v1322 = vsel %vm1293, %v1184, 0
        %v1325 = vsel %vm1293, %v1186, 0
        %v1328 = vsel %vm1293, %v1188, 0
        %v1331 = vsel %vm1293, %v1190, 0
        %v1334 = vsel %vm1293, %v1192, 0
        %v1337 = vsel %vm1293, %v1194, 0
        %v1340 = vsel %vm1293, %v1196, 0
        %1342 = vmatprep.subr.mxu0 0.0
        %1343 = vmatpush1.msra.mxu0 %v1092
        %1344 = vmatprep.subr.mxu0 0.0
        %1345 = vmatpush1.msra.mxu0 %v1091
        %1346 = vmatprep.subr.mxu0 0.0
        %1347 = vmatpush1.msra.mxu0 %v1090
        %1348 = vmatprep.subr.mxu0 0.0
        %1349 = vmatpush1.msra.mxu0 %v1089
        %1350 = vmatprep.subr.mxu0 0.0
        %1351 = vmatpush1.msra.mxu0 %v1088
        %1352 = vmatprep.subr.mxu0 0.0
        %1353 = vmatpush1.msra.mxu0 %v1087
        %1354 = vmatprep.subr.mxu0 0.0
        %1355 = vmatpush1.msra.mxu0 %v1086
        %1356 = vmatprep.subr.mxu0 0.0
        %1357 = vmatpush1.msra.mxu0 %v1085
        %1358 = vmatprep.subr.mxu0 0.0
        %1359 = vmatpush1.msra.mxu0 %v1132
        %1360 = vmatprep.subr.mxu0 0.0
        %1361 = vmatpush1.msra.mxu0 %v1131
        %1362 = vmatprep.subr.mxu0 0.0
        %1363 = vmatpush1.msra.mxu0 %v1130
        %1364 = vmatprep.subr.mxu0 0.0
        %1365 = vmatpush1.msra.mxu0 %v1129
        %1366 = vmatprep.subr.mxu0 0.0
        %1367 = vmatpush1.msra.mxu0 %v1128
        %1368 = vmatprep.subr.mxu0 0.0
        %1369 = vmatpush1.msra.mxu0 %v1127
        %1370 = vmatprep.subr.mxu0 0.0
        %1371 = vmatpush1.msra.mxu0 %v1126
        %1372 = vmatprep.subr.mxu0 0.0
        %1373 = vmatpush1.msra.mxu0 %v1125
        %1374 = vmatprep.subr.mxu0 0.0
        %1375 = vmatpush2.msra.mxu0 0.0
        %1376 = vmatprep.subr.mxu0 0.0
        %1377 = vmatpush2.msra.mxu0 0.0
        %1378 = vmatprep.subr.mxu0 0.0
        %1379 = vmatpush2.msra.mxu0 0.0
        %1380 = vmatprep.subr.mxu0 0.0
        %1381 = vmatpush2.msra.mxu0 0.0
        %1382 = vmatprep.subr.mxu0 0.0
        %1383 = vmatpush2.msra.mxu0 0.0
        %1384 = vmatprep.subr.mxu0 0.0
        %1385 = vmatpush2.msra.mxu0 0.0
        %1386 = vmatprep.subr.mxu0 0.0
        %1387 = vmatpush2.msra.mxu0 0.0
        %1388 = vmatprep.subr.mxu0 0.0
        %1389 = vmatpush2.msra.mxu0 0.0
        %1390 = vmatprep.subr.mxu0 0.0
        %1391 = vmatpush2.msra.mxu0 %v1164
        %1392 = vmatprep.subr.mxu0 0.0
        %1393 = vmatpush2.msra.mxu0 %v1163
        %1394 = vmatprep.subr.mxu0 0.0
        %1395 = vmatpush2.msra.mxu0 %v1162
        %1396 = vmatprep.subr.mxu0 0.0
        %1397 = vmatpush2.msra.mxu0 %v1161
        %1398 = vmatprep.subr.mxu0 0.0
        %1399 = vmatpush2.msra.mxu0 %v1160
        %1400 = vmatprep.subr.mxu0 0.0
        %1401 = vmatpush2.msra.mxu0 %v1159
        %1402 = vmatprep.subr.mxu0 0.0
        %1403 = vmatpush2.msra.mxu0 %v1158
        %1404 = vmatprep.subr.mxu0 0.0
        %1405 = vmatpush2.msra.mxu0 %v1157
        %1406 = vmatprep.mubr.f32.mxu0 %v1295
        %1407 = vmatmul.mubr.f32.gmra.mxu0 %v1165
        %v1408 = vpop.f32.mrf.mxu0
        %v1409 = vadd.f32 %v1216, %v1408
        %v1410 = vpop.f32.mrf.mxu0
        %1411 = vmatprep.mubr.f32.mxu0 %v1298
        %1412 = vmatmul.mubr.f32.gmra.mxu0 %v1167
        %v1413 = vpop.f32.mrf.mxu0
        %v1414 = vadd.f32 %v1221, %v1413
        %v1415 = vpop.f32.mrf.mxu0
        %1416 = vmatprep.mubr.f32.mxu0 %v1301
        %1417 = vmatmul.mubr.f32.gmra.mxu0 %v1169
        %v1418 = vpop.f32.mrf.mxu0
        %v1419 = vadd.f32 %v1226, %v1418
        %v1420 = vpop.f32.mrf.mxu0
        %1421 = vmatprep.mubr.f32.mxu0 %v1304
        %1422 = vmatmul.mubr.f32.gmra.mxu0 %v1171
        %v1423 = vpop.f32.mrf.mxu0
        %v1424 = vadd.f32 %v1231, %v1423
        %v1425 = vpop.f32.mrf.mxu0
        %1426 = vmatprep.mubr.f32.mxu0 %v1307
        %1427 = vmatmul.mubr.f32.gmra.mxu0 %v1173
        %v1428 = vpop.f32.mrf.mxu0
        %v1429 = vadd.f32 %v1236, %v1428
        %v1430 = vpop.f32.mrf.mxu0
        %1431 = vmatprep.mubr.f32.mxu0 %v1310
        %1432 = vmatmul.mubr.f32.gmra.mxu0 %v1175
        %v1433 = vpop.f32.mrf.mxu0
        %v1434 = vadd.f32 %v1241, %v1433
        %v1435 = vpop.f32.mrf.mxu0
        %1436 = vmatprep.mubr.f32.mxu0 %v1313
        %1437 = vmatmul.mubr.f32.gmra.mxu0 %v1177
        %v1438 = vpop.f32.mrf.mxu0
        %v1439 = vadd.f32 %v1246, %v1438
        %v1440 = vpop.f32.mrf.mxu0
        %1441 = vmatprep.mubr.f32.mxu0 %v1316
        %1442 = vmatmul.mubr.f32.gmra.mxu0 %v1179
        %v1443 = vpop.f32.mrf.mxu0
        %v1444 = vadd.f32 %v1251, %v1443
        %v1445 = vpop.f32.mrf.mxu0
        %1446 = vmatprep.mubr.f32.mxu0 %v1319
        %1447 = vmatmul.mubr.f32.gmra.mxu0 %v1181
        %v1448 = vpop.f32.mrf.mxu0
        %v1449 = vadd.f32 %v1256, %v1448
        %v1450 = vpop.f32.mrf.mxu0
        %1451 = vmatprep.mubr.f32.mxu0 %v1322
        %1452 = vmatmul.mubr.f32.gmra.mxu0 %v1183
        %v1453 = vpop.f32.mrf.mxu0
        %v1454 = vadd.f32 %v1261, %v1453
        %v1455 = vpop.f32.mrf.mxu0
        %1456 = vmatprep.mubr.f32.mxu0 %v1325
        %1457 = vmatmul.mubr.f32.gmra.mxu0 %v1185
        %v1458 = vpop.f32.mrf.mxu0
        %v1459 = vadd.f32 %v1266, %v1458
        %v1460 = vpop.f32.mrf.mxu0
        %1461 = vmatprep.mubr.f32.mxu0 %v1328
        %1462 = vmatmul.mubr.f32.gmra.mxu0 %v1187
        %v1463 = vpop.f32.mrf.mxu0
        %v1464 = vadd.f32 %v1271, %v1463
        %v1465 = vpop.f32.mrf.mxu0
        %1466 = vmatprep.mubr.f32.mxu0 %v1331
        %1467 = vmatmul.mubr.f32.gmra.mxu0 %v1189
        %v1468 = vpop.f32.mrf.mxu0
        %v1469 = vadd.f32 %v1276, %v1468
        %v1470 = vpop.f32.mrf.mxu0
        %1471 = vmatprep.mubr.f32.mxu0 %v1334
        %1472 = vmatmul.mubr.f32.gmra.mxu0 %v1191
        %v1473 = vpop.f32.mrf.mxu0
        %v1474 = vadd.f32 %v1281, %v1473
        %v1475 = vpop.f32.mrf.mxu0
        %1476 = vmatprep.mubr.f32.mxu0 %v1337
        %1477 = vmatmul.mubr.f32.gmra.mxu0 %v1193
        %v1478 = vpop.f32.mrf.mxu0
        %v1479 = vadd.f32 %v1286, %v1478
        %v1480 = vpop.f32.mrf.mxu0
        %1481 = vmatprep.mubr.f32.mxu0 %v1340
        %1482 = vmatmul.mubr.f32.gmra.mxu0 %v1195
        %v1483 = vpop.f32.mrf.mxu0
        %v1484 = vadd.f32 %v1291, %v1483
        %v1485 = vpop.f32.mrf.mxu0
        %1486 = vdwg.mxu0
        %v1487 = vmax.f32 %v1409, 0.0
        %v1488 = vmax.f32 %v1414, 0.0
        %v1489 = vmax.f32 %v1419, 0.0
        %v1490 = vmax.f32 %v1424, 0.0
        %v1491 = vmax.f32 %v1429, 0.0
        %v1492 = vmax.f32 %v1434, 0.0
        %v1493 = vmax.f32 %v1439, 0.0
        %v1494 = vmax.f32 %v1444, 0.0
        %v1495 = vmax.f32 %v1449, 0.0
        %v1496 = vmax.f32 %v1454, 0.0
        %v1497 = vmax.f32 %v1459, 0.0
        %v1498 = vmax.f32 %v1464, 0.0
        %v1499 = vmax.f32 %v1469, 0.0
        %v1500 = vmax.f32 %v1474, 0.0
        %v1501 = vmax.f32 %v1479, 0.0
        %v1502 = vmax.f32 %v1484, 0.0
        %1519 = vrot.lane.b32.xlu0 %v1487, 1
        %v1520 = vpop.permute.xlu0 %1519
        %1521 = vrot.lane.b32.xlu0 %v1488, 1
        %v1522 = vpop.permute.xlu0 %1521
        %1523 = vrot.lane.b32.xlu0 %v1489, 1
        %v1524 = vpop.permute.xlu0 %1523
        %1525 = vrot.lane.b32.xlu0 %v1490, 1
        %v1526 = vpop.permute.xlu0 %1525
        %1527 = vrot.lane.b32.xlu0 %v1491, 1
        %v1528 = vpop.permute.xlu0 %1527
        %1529 = vrot.lane.b32.xlu0 %v1492, 1
        %v1530 = vpop.permute.xlu0 %1529
        %1531 = vrot.lane.b32.xlu0 %v1493, 1
        %v1532 = vpop.permute.xlu0 %1531
        %1533 = vrot.lane.b32.xlu0 %v1494, 1
        %v1534 = vpop.permute.xlu0 %1533
        %1535 = vrot.lane.b32.xlu0 %v1495, 1
        %v1536 = vpop.permute.xlu0 %1535
        %1537 = vrot.lane.b32.xlu0 %v1496, 1
        %v1538 = vpop.permute.xlu0 %1537
        %1539 = vrot.lane.b32.xlu0 %v1497, 1
        %v1540 = vpop.permute.xlu0 %1539
        %1541 = vrot.lane.b32.xlu0 %v1498, 1
        %v1542 = vpop.permute.xlu0 %1541
        %1543 = vrot.lane.b32.xlu0 %v1499, 1
        %v1544 = vpop.permute.xlu0 %1543
        %1545 = vrot.lane.b32.xlu0 %v1500, 1
        %v1546 = vpop.permute.xlu0 %1545
        %1547 = vrot.lane.b32.xlu0 %v1501, 1
        %v1548 = vpop.permute.xlu0 %1547
        %1549 = vrot.lane.b32.xlu0 %v1502, 1
        %v1550 = vpop.permute.xlu0 %1549
        %v1567 = vsel %vm776, 0.0, %v1520
        %v1568 = vsel %vm776, 0.0, %v1522
        %v1569 = vsel %vm776, 0.0, %v1524
        %v1570 = vsel %vm776, 0.0, %v1526
        %v1571 = vsel %vm776, 0.0, %v1528
        %v1572 = vsel %vm776, 0.0, %v1530
        %v1573 = vsel %vm776, 0.0, %v1532
        %v1574 = vsel %vm776, 0.0, %v1534
        %v1575 = vsel %vm776, 0.0, %v1536
        %v1576 = vsel %vm776, 0.0, %v1538
        %v1577 = vsel %vm776, 0.0, %v1540
        %v1578 = vsel %vm776, 0.0, %v1542
        %v1579 = vsel %vm776, 0.0, %v1544
        %v1580 = vsel %vm776, 0.0, %v1546
        %v1581 = vsel %vm776, 0.0, %v1548
        %v1582 = vsel %vm776, 0.0, %v1550
        %1583 = vrot.lane.b32.xlu0 %v1487, 127
        %v1584 = vpop.permute.xlu0 %1583
        %1585 = vrot.lane.b32.xlu0 %v1488, 127
        %v1586 = vpop.permute.xlu0 %1585
        %1587 = vrot.lane.b32.xlu0 %v1489, 127
        %v1588 = vpop.permute.xlu0 %1587
        %1589 = vrot.lane.b32.xlu0 %v1490, 127
        %v1590 = vpop.permute.xlu0 %1589
        %1591 = vrot.lane.b32.xlu0 %v1491, 127
        %v1592 = vpop.permute.xlu0 %1591
        %1593 = vrot.lane.b32.xlu0 %v1492, 127
        %v1594 = vpop.permute.xlu0 %1593
        %1595 = vrot.lane.b32.xlu0 %v1493, 127
        %v1596 = vpop.permute.xlu0 %1595
        %1597 = vrot.lane.b32.xlu0 %v1494, 127
        %v1598 = vpop.permute.xlu0 %1597
        %1599 = vrot.lane.b32.xlu0 %v1495, 127
        %v1600 = vpop.permute.xlu0 %1599
        %1601 = vrot.lane.b32.xlu0 %v1496, 127
        %v1602 = vpop.permute.xlu0 %1601
        %1603 = vrot.lane.b32.xlu0 %v1497, 127
        %v1604 = vpop.permute.xlu0 %1603
        %1605 = vrot.lane.b32.xlu0 %v1498, 127
        %v1606 = vpop.permute.xlu0 %1605
        %1607 = vrot.lane.b32.xlu0 %v1499, 127
        %v1608 = vpop.permute.xlu0 %1607
        %1609 = vrot.lane.b32.xlu0 %v1500, 127
        %v1610 = vpop.permute.xlu0 %1609
        %1611 = vrot.lane.b32.xlu0 %v1501, 127
        %v1612 = vpop.permute.xlu0 %1611
        %1613 = vrot.lane.b32.xlu0 %v1502, 127
        %v1614 = vpop.permute.xlu0 %1613
        %v1631 = vsel %vm781, %v1584, 0.0
        %v1632 = vsel %vm781, %v1586, 0.0
        %v1633 = vsel %vm781, %v1588, 0.0
        %v1634 = vsel %vm781, %v1590, 0.0
        %v1635 = vsel %vm781, %v1592, 0.0
        %v1636 = vsel %vm781, %v1594, 0.0
        %v1637 = vsel %vm781, %v1596, 0.0
        %v1638 = vsel %vm781, %v1598, 0.0
        %v1639 = vsel %vm781, %v1600, 0.0
        %v1640 = vsel %vm781, %v1602, 0.0
        %v1641 = vsel %vm781, %v1604, 0.0
        %v1642 = vsel %vm781, %v1606, 0.0
        %v1643 = vsel %vm781, %v1608, 0.0
        %v1644 = vsel %vm781, %v1610, 0.0
        %v1645 = vsel %vm781, %v1612, 0.0
        %v1646 = vsel %vm781, %v1614, 0.0
        %v1647 = vld [vmem:[#allocation4] sm:$0xff]
        %v1648 = vld [vmem:[#allocation4 + $0x8] sm:$0xff]
        %v1649 = vld [vmem:[#allocation4 + $0x10] sm:$0xff]
        %v1650 = vld [vmem:[#allocation4 + $0x18] sm:$0xff]
        %v1651 = vld [vmem:[#allocation4 + $0x20] sm:$0xff]
        %v1652 = vld [vmem:[#allocation4 + $0x28] sm:$0xff]
        %v1653 = vld [vmem:[#allocation4 + $0x30] sm:$0xff]
        %v1654 = vld [vmem:[#allocation4 + $0x38] sm:$0xff]
        %v1655 = vld [vmem:[#allocation4 + $0x40] sm:$0xff]
        %v1656 = vld [vmem:[#allocation4 + $0x48] sm:$0xff]
        %v1657 = vld [vmem:[#allocation4 + $0x50] sm:$0xff]
        %v1658 = vld [vmem:[#allocation4 + $0x58] sm:$0xff]
        %v1659 = vld [vmem:[#allocation4 + $0x60] sm:$0xff]
        %v1660 = vld [vmem:[#allocation4 + $0x68] sm:$0xff]
        %v1661 = vld [vmem:[#allocation4 + $0x70] sm:$0xff]
        %v1662 = vld [vmem:[#allocation4 + $0x78] sm:$0xff]
        %v1663 = vld [vmem:[#allocation4 + $0x80] sm:$0xff]
        %v1664 = vld [vmem:[#allocation4 + $0x88] sm:$0xff]
        %v1665 = vld [vmem:[#allocation4 + $0x90] sm:$0xff]
        %v1666 = vld [vmem:[#allocation4 + $0x98] sm:$0xff]
        %v1667 = vld [vmem:[#allocation4 + $0xa0] sm:$0xff]
        %v1668 = vld [vmem:[#allocation4 + $0xa8] sm:$0xff]
        %v1669 = vld [vmem:[#allocation4 + $0xb0] sm:$0xff]
        %v1670 = vld [vmem:[#allocation4 + $0xb8] sm:$0xff]
        %v1671 = vld [vmem:[#allocation4 + $0xc0] sm:$0xff]
        %v1672 = vld [vmem:[#allocation4 + $0xc8] sm:$0xff]
        %v1673 = vld [vmem:[#allocation4 + $0xd0] sm:$0xff]
        %v1674 = vld [vmem:[#allocation4 + $0xd8] sm:$0xff]
        %v1675 = vld [vmem:[#allocation4 + $0xe0] sm:$0xff]
        %v1676 = vld [vmem:[#allocation4 + $0xe8] sm:$0xff]
        %v1677 = vld [vmem:[#allocation4 + $0xf0] sm:$0xff]
        %v1678 = vld [vmem:[#allocation4 + $0xf8] sm:$0xff]
        %v1679 = vld [vmem:[#allocation4 + $0x100] sm:$0xff]
        %v1680 = vld [vmem:[#allocation4 + $0x108] sm:$0xff]
        %v1681 = vld [vmem:[#allocation4 + $0x110] sm:$0xff]
        %v1682 = vld [vmem:[#allocation4 + $0x118] sm:$0xff]
        %v1683 = vld [vmem:[#allocation4 + $0x120] sm:$0xff]
        %v1684 = vld [vmem:[#allocation4 + $0x128] sm:$0xff]
        %v1685 = vld [vmem:[#allocation4 + $0x130] sm:$0xff]
        %v1686 = vld [vmem:[#allocation4 + $0x138] sm:$0xff]
        %v1687 = vld [vmem:[#allocation4 + $0x140] sm:$0xff]
        %v1688 = vld [vmem:[#allocation4 + $0x148] sm:$0xff]
        %v1689 = vld [vmem:[#allocation4 + $0x150] sm:$0xff]
        %v1690 = vld [vmem:[#allocation4 + $0x158] sm:$0xff]
        %v1691 = vld [vmem:[#allocation4 + $0x160] sm:$0xff]
        %v1692 = vld [vmem:[#allocation4 + $0x168] sm:$0xff]
        %v1693 = vld [vmem:[#allocation4 + $0x170] sm:$0xff]
        %v1694 = vld [vmem:[#allocation4 + $0x178] sm:$0xff]
        %v1695 = vld [vmem:[%s8] sm:$0xff]
        %v1696 = vld [vmem:[%s8 + $0x8] sm:$0xff]
        %v1697 = vld [vmem:[%s8 + $0x10] sm:$0xff]
        %v1698 = vld [vmem:[%s8 + $0x18] sm:$0xff]
        %v1699 = vld [vmem:[%s8 + $0x20] sm:$0xff]
        %v1700 = vld [vmem:[%s8 + $0x28] sm:$0xff]
        %v1701 = vld [vmem:[%s8 + $0x30] sm:$0xff]
        %v1702 = vld [vmem:[%s8 + $0x38] sm:$0xff]
        %v1703 = vld [vmem:[%s8 + $0x40] sm:$0xff]
        %v1704 = vld [vmem:[%s8 + $0x48] sm:$0xff]
        %v1705 = vld [vmem:[%s8 + $0x50] sm:$0xff]
        %v1706 = vld [vmem:[%s8 + $0x58] sm:$0xff]
        %v1707 = vld [vmem:[%s8 + $0x60] sm:$0xff]
        %v1708 = vld [vmem:[%s8 + $0x68] sm:$0xff]
        %v1709 = vld [vmem:[%s8 + $0x70] sm:$0xff]
        %v1710 = vld [vmem:[%s8 + $0x78] sm:$0xff]
        %1712 = vset.pattern.permute.xlu0 0
        %1713 = vperm.xlu0 %1712, %v1695
        %v1714 = vpop.permute.xlu0 %1713
        %1717 = vset.pattern.permute.xlu0 0
        %1718 = vperm.xlu0 %1717, %v1696
        %v1719 = vpop.permute.xlu0 %1718
        %1722 = vset.pattern.permute.xlu0 0
        %1723 = vperm.xlu0 %1722, %v1697
        %v1724 = vpop.permute.xlu0 %1723
        %1727 = vset.pattern.permute.xlu0 0
        %1728 = vperm.xlu0 %1727, %v1698
        %v1729 = vpop.permute.xlu0 %1728
        %1732 = vset.pattern.permute.xlu0 0
        %1733 = vperm.xlu0 %1732, %v1699
        %v1734 = vpop.permute.xlu0 %1733
        %1737 = vset.pattern.permute.xlu0 0
        %1738 = vperm.xlu0 %1737, %v1700
        %v1739 = vpop.permute.xlu0 %1738
        %1742 = vset.pattern.permute.xlu0 0
        %1743 = vperm.xlu0 %1742, %v1701
        %v1744 = vpop.permute.xlu0 %1743
        %1747 = vset.pattern.permute.xlu0 0
        %1748 = vperm.xlu0 %1747, %v1702
        %v1749 = vpop.permute.xlu0 %1748
        %1752 = vset.pattern.permute.xlu0 0
        %1753 = vperm.xlu0 %1752, %v1703
        %v1754 = vpop.permute.xlu0 %1753
        %1757 = vset.pattern.permute.xlu0 0
        %1758 = vperm.xlu0 %1757, %v1704
        %v1759 = vpop.permute.xlu0 %1758
        %1762 = vset.pattern.permute.xlu0 0
        %1763 = vperm.xlu0 %1762, %v1705
        %v1764 = vpop.permute.xlu0 %1763
        %1767 = vset.pattern.permute.xlu0 0
        %1768 = vperm.xlu0 %1767, %v1706
        %v1769 = vpop.permute.xlu0 %1768
        %1772 = vset.pattern.permute.xlu0 0
        %1773 = vperm.xlu0 %1772, %v1707
        %v1774 = vpop.permute.xlu0 %1773
        %1777 = vset.pattern.permute.xlu0 0
        %1778 = vperm.xlu0 %1777, %v1708
        %v1779 = vpop.permute.xlu0 %1778
        %1782 = vset.pattern.permute.xlu0 0
        %1783 = vperm.xlu0 %1782, %v1709
        %v1784 = vpop.permute.xlu0 %1783
        %1787 = vset.pattern.permute.xlu0 0
        %1788 = vperm.xlu0 %1787, %v1710
        %v1789 = vpop.permute.xlu0 %1788
        %1791 = vmatprep.subr.mxu0 0.0
        %1792 = vmatpush1.msra.mxu0 %v1582
        %1793 = vmatprep.subr.mxu0 0.0
        %1794 = vmatpush1.msra.mxu0 %v1581
        %1795 = vmatprep.subr.mxu0 0.0
        %1796 = vmatpush1.msra.mxu0 %v1580
        %1797 = vmatprep.subr.mxu0 0.0
        %1798 = vmatpush1.msra.mxu0 %v1579
        %1799 = vmatprep.subr.mxu0 0.0
        %1800 = vmatpush1.msra.mxu0 %v1578
        %1801 = vmatprep.subr.mxu0 0.0
        %1802 = vmatpush1.msra.mxu0 %v1577
        %1803 = vmatprep.subr.mxu0 0.0
        %1804 = vmatpush1.msra.mxu0 %v1576
        %1805 = vmatprep.subr.mxu0 0.0
        %1806 = vmatpush1.msra.mxu0 %v1575
        %1807 = vmatprep.subr.mxu0 0.0
        %1808 = vmatpush1.msra.mxu0 %v1574
        %1809 = vmatprep.subr.mxu0 0.0
        %1810 = vmatpush1.msra.mxu0 %v1573
        %1811 = vmatprep.subr.mxu0 0.0
        %1812 = vmatpush1.msra.mxu0 %v1572
        %1813 = vmatprep.subr.mxu0 0.0
        %1814 = vmatpush1.msra.mxu0 %v1571
        %1815 = vmatprep.subr.mxu0 0.0
        %1816 = vmatpush1.msra.mxu0 %v1570
        %1817 = vmatprep.subr.mxu0 0.0
        %1818 = vmatpush1.msra.mxu0 %v1569
        %1819 = vmatprep.subr.mxu0 0.0
        %1820 = vmatpush1.msra.mxu0 %v1568
        %1821 = vmatprep.subr.mxu0 0.0
        %1822 = vmatpush1.msra.mxu0 %v1567
        %1823 = vmatprep.subr.mxu0 0.0
        %1824 = vmatpush2.msra.mxu0 %v1502
        %1825 = vmatprep.subr.mxu0 0.0
        %1826 = vmatpush2.msra.mxu0 %v1501
        %1827 = vmatprep.subr.mxu0 0.0
        %1828 = vmatpush2.msra.mxu0 %v1500
        %1829 = vmatprep.subr.mxu0 0.0
        %1830 = vmatpush2.msra.mxu0 %v1499
        %1831 = vmatprep.subr.mxu0 0.0
        %1832 = vmatpush2.msra.mxu0 %v1498
        %1833 = vmatprep.subr.mxu0 0.0
        %1834 = vmatpush2.msra.mxu0 %v1497
        %1835 = vmatprep.subr.mxu0 0.0
        %1836 = vmatpush2.msra.mxu0 %v1496
        %1837 = vmatprep.subr.mxu0 0.0
        %1838 = vmatpush2.msra.mxu0 %v1495
        %1839 = vmatprep.subr.mxu0 0.0
        %1840 = vmatpush2.msra.mxu0 %v1494
        %1841 = vmatprep.subr.mxu0 0.0
        %1842 = vmatpush2.msra.mxu0 %v1493
        %1843 = vmatprep.subr.mxu0 0.0
        %1844 = vmatpush2.msra.mxu0 %v1492
        %1845 = vmatprep.subr.mxu0 0.0
        %1846 = vmatpush2.msra.mxu0 %v1491
        %1847 = vmatprep.subr.mxu0 0.0
        %1848 = vmatpush2.msra.mxu0 %v1490
        %1849 = vmatprep.subr.mxu0 0.0
        %1850 = vmatpush2.msra.mxu0 %v1489
        %1851 = vmatprep.subr.mxu0 0.0
        %1852 = vmatpush2.msra.mxu0 %v1488
        %1853 = vmatprep.subr.mxu0 0.0
        %1854 = vmatpush2.msra.mxu0 %v1487
        %1855 = vmatprep.mubr.f32.mxu0 %v1648
        %1856 = vmatmul.mubr.f32.gmra.mxu0 %v1647
        %v1857 = vpop.f32.mrf.mxu0
        %v1858 = vadd.f32 %v1714, %v1857
        %v1859 = vpop.f32.mrf.mxu0
        %1860 = vmatprep.mubr.f32.mxu0 %v1651
        %1861 = vmatmul.mubr.f32.gmra.mxu0 %v1650
        %v1862 = vpop.f32.mrf.mxu0
        %v1863 = vadd.f32 %v1719, %v1862
        %v1864 = vpop.f32.mrf.mxu0
        %1865 = vmatprep.mubr.f32.mxu0 %v1654
        %1866 = vmatmul.mubr.f32.gmra.mxu0 %v1653
        %v1867 = vpop.f32.mrf.mxu0
        %v1868 = vadd.f32 %v1724, %v1867
        %v1869 = vpop.f32.mrf.mxu0
        %1870 = vmatprep.mubr.f32.mxu0 %v1657
        %1871 = vmatmul.mubr.f32.gmra.mxu0 %v1656
        %v1872 = vpop.f32.mrf.mxu0
        %v1873 = vadd.f32 %v1729, %v1872
        %v1874 = vpop.f32.mrf.mxu0
        %1875 = vmatprep.mubr.f32.mxu0 %v1660
        %1876 = vmatmul.mubr.f32.gmra.mxu0 %v1659
        %v1877 = vpop.f32.mrf.mxu0
        %v1878 = vadd.f32 %v1734, %v1877
        %v1879 = vpop.f32.mrf.mxu0
        %1880 = vmatprep.mubr.f32.mxu0 %v1663
        %1881 = vmatmul.mubr.f32.gmra.mxu0 %v1662
        %v1882 = vpop.f32.mrf.mxu0
        %v1883 = vadd.f32 %v1739, %v1882
        %v1884 = vpop.f32.mrf.mxu0
        %1885 = vmatprep.mubr.f32.mxu0 %v1666
        %1886 = vmatmul.mubr.f32.gmra.mxu0 %v1665
        %v1887 = vpop.f32.mrf.mxu0
        %v1888 = vadd.f32 %v1744, %v1887
        %v1889 = vpop.f32.mrf.mxu0
        %1890 = vmatprep.mubr.f32.mxu0 %v1669
        %1891 = vmatmul.mubr.f32.gmra.mxu0 %v1668
        %v1892 = vpop.f32.mrf.mxu0
        %v1893 = vadd.f32 %v1749, %v1892
        %v1894 = vpop.f32.mrf.mxu0
        %1895 = vmatprep.mubr.f32.mxu0 %v1672
        %1896 = vmatmul.mubr.f32.gmra.mxu0 %v1671
        %v1897 = vpop.f32.mrf.mxu0
        %v1898 = vadd.f32 %v1754, %v1897
        %v1899 = vpop.f32.mrf.mxu0
        %1900 = vmatprep.mubr.f32.mxu0 %v1675
        %1901 = vmatmul.mubr.f32.gmra.mxu0 %v1674
        %v1902 = vpop.f32.mrf.mxu0
        %v1903 = vadd.f32 %v1759, %v1902
        %v1904 = vpop.f32.mrf.mxu0
        %1905 = vmatprep.mubr.f32.mxu0 %v1678
        %1906 = vmatmul.mubr.f32.gmra.mxu0 %v1677
        %v1907 = vpop.f32.mrf.mxu0
        %v1908 = vadd.f32 %v1764, %v1907
        %v1909 = vpop.f32.mrf.mxu0
        %1910 = vmatprep.mubr.f32.mxu0 %v1681
        %1911 = vmatmul.mubr.f32.gmra.mxu0 %v1680
        %v1912 = vpop.f32.mrf.mxu0
        %v1913 = vadd.f32 %v1769, %v1912
        %v1914 = vpop.f32.mrf.mxu0
        %1915 = vmatprep.mubr.f32.mxu0 %v1684
        %1916 = vmatmul.mubr.f32.gmra.mxu0 %v1683
        %v1917 = vpop.f32.mrf.mxu0
        %v1918 = vadd.f32 %v1774, %v1917
        %v1919 = vpop.f32.mrf.mxu0
        %1920 = vmatprep.mubr.f32.mxu0 %v1687
        %1921 = vmatmul.mubr.f32.gmra.mxu0 %v1686
        %v1922 = vpop.f32.mrf.mxu0
        %v1923 = vadd.f32 %v1779, %v1922
        %v1924 = vpop.f32.mrf.mxu0
        %1925 = vmatprep.mubr.f32.mxu0 %v1690
        %1926 = vmatmul.mubr.f32.gmra.mxu0 %v1689
        %v1927 = vpop.f32.mrf.mxu0
        %v1928 = vadd.f32 %v1784, %v1927
        %v1929 = vpop.f32.mrf.mxu0
        %1930 = vmatprep.mubr.f32.mxu0 %v1693
        %1931 = vmatmul.mubr.f32.gmra.mxu0 %v1692
        %v1932 = vpop.f32.mrf.mxu0
        %v1933 = vadd.f32 %v1789, %v1932
        %v1934 = vpop.f32.mrf.mxu0
        %1935 = vdwg.mxu0
        %1936 = vmatprep.subr.mxu0 0.0
        %1937 = vmatpush1.msra.mxu0 %v1646
        %1938 = vmatprep.subr.mxu0 0.0
        %1939 = vmatpush1.msra.mxu0 %v1645
        %1940 = vmatprep.subr.mxu0 0.0
        %1941 = vmatpush1.msra.mxu0 %v1644
        %1942 = vmatprep.subr.mxu0 0.0
        %1943 = vmatpush1.msra.mxu0 %v1643
        %1944 = vmatprep.subr.mxu0 0.0
        %1945 = vmatpush1.msra.mxu0 %v1642
        %1946 = vmatprep.subr.mxu0 0.0
        %1947 = vmatpush1.msra.mxu0 %v1641
        %1948 = vmatprep.subr.mxu0 0.0
        %1949 = vmatpush1.msra.mxu0 %v1640
        %1950 = vmatprep.subr.mxu0 0.0
        %1951 = vmatpush1.msra.mxu0 %v1639
        %1952 = vmatprep.subr.mxu0 0.0
        %1953 = vmatpush1.msra.mxu0 %v1638
        %1954 = vmatprep.subr.mxu0 0.0
        %1955 = vmatpush1.msra.mxu0 %v1637
        %1956 = vmatprep.subr.mxu0 0.0
        %1957 = vmatpush1.msra.mxu0 %v1636
        %1958 = vmatprep.subr.mxu0 0.0
        %1959 = vmatpush1.msra.mxu0 %v1635
        %1960 = vmatprep.subr.mxu0 0.0
        %1961 = vmatpush1.msra.mxu0 %v1634
        %1962 = vmatprep.subr.mxu0 0.0
        %1963 = vmatpush1.msra.mxu0 %v1633
        %1964 = vmatprep.subr.mxu0 0.0
        %1965 = vmatpush1.msra.mxu0 %v1632
        %1966 = vmatprep.subr.mxu0 0.0
        %1967 = vmatpush1.msra.mxu0 %v1631
        %1968 = vmatprep.subr.mxu0 0.0
        %1969 = vmatpush2.msra.mxu0 0.0
        %1970 = vmatprep.subr.mxu0 0.0
        %1971 = vmatpush2.msra.mxu0 0.0
        %1972 = vmatprep.subr.mxu0 0.0
        %1973 = vmatpush2.msra.mxu0 0.0
        %1974 = vmatprep.subr.mxu0 0.0
        %1975 = vmatpush2.msra.mxu0 0.0
        %1976 = vmatprep.subr.mxu0 0.0
        %1977 = vmatpush2.msra.mxu0 0.0
        %1978 = vmatprep.subr.mxu0 0.0
        %1979 = vmatpush2.msra.mxu0 0.0
        %1980 = vmatprep.subr.mxu0 0.0
        %1981 = vmatpush2.msra.mxu0 0.0
        %1982 = vmatprep.subr.mxu0 0.0
        %1983 = vmatpush2.msra.mxu0 0.0
        %1984 = vmatprep.subr.mxu0 0.0
        %1985 = vmatpush2.msra.mxu0 0.0
        %1986 = vmatprep.subr.mxu0 0.0
        %1987 = vmatpush2.msra.mxu0 0.0
        %1988 = vmatprep.subr.mxu0 0.0
        %1989 = vmatpush2.msra.mxu0 0.0
        %1990 = vmatprep.subr.mxu0 0.0
        %1991 = vmatpush2.msra.mxu0 0.0
        %1992 = vmatprep.subr.mxu0 0.0
        %1993 = vmatpush2.msra.mxu0 0.0
        %1994 = vmatprep.subr.mxu0 0.0
        %1995 = vmatpush2.msra.mxu0 0.0
        %1996 = vmatprep.subr.mxu0 0.0
        %1997 = vmatpush2.msra.mxu0 0.0
        %1998 = vmatprep.subr.mxu0 0.0
        %1999 = vmatpush2.msra.mxu0 0.0
        %2000 = vmatprep.mubr.f32.mxu0 0.0
        %2001 = vmatmul.mubr.f32.gmra.mxu0 %v1649
        %v2002 = vpop.f32.mrf.mxu0
        %v2003 = vadd.f32 %v1858, %v2002
        %v2004 = vpop.f32.mrf.mxu0
        %2005 = vmatprep.mubr.f32.mxu0 0.0
        %2006 = vmatmul.mubr.f32.gmra.mxu0 %v1652
        %v2007 = vpop.f32.mrf.mxu0
        %v2008 = vadd.f32 %v1863, %v2007
        %v2009 = vpop.f32.mrf.mxu0
        %2010 = vmatprep.mubr.f32.mxu0 0.0
        %2011 = vmatmul.mubr.f32.gmra.mxu0 %v1655
        %v2012 = vpop.f32.mrf.mxu0
        %v2013 = vadd.f32 %v1868, %v2012
        %v2014 = vpop.f32.mrf.mxu0
        %2015 = vmatprep.mubr.f32.mxu0 0.0
        %2016 = vmatmul.mubr.f32.gmra.mxu0 %v1658
        %v2017 = vpop.f32.mrf.mxu0
        %v2018 = vadd.f32 %v1873, %v2017
        %v2019 = vpop.f32.mrf.mxu0
        %2020 = vmatprep.mubr.f32.mxu0 0.0
        %2021 = vmatmul.mubr.f32.gmra.mxu0 %v1661
        %v2022 = vpop.f32.mrf.mxu0
        %v2023 = vadd.f32 %v1878, %v2022
        %v2024 = vpop.f32.mrf.mxu0
        %2025 = vmatprep.mubr.f32.mxu0 0.0
        %2026 = vmatmul.mubr.f32.gmra.mxu0 %v1664
        %v2027 = vpop.f32.mrf.mxu0
        %v2028 = vadd.f32 %v1883, %v2027
        %v2029 = vpop.f32.mrf.mxu0
        %2030 = vmatprep.mubr.f32.mxu0 0.0
        %2031 = vmatmul.mubr.f32.gmra.mxu0 %v1667
        %v2032 = vpop.f32.mrf.mxu0
        %v2033 = vadd.f32 %v1888, %v2032
        %v2034 = vpop.f32.mrf.mxu0
        %2035 = vmatprep.mubr.f32.mxu0 0.0
        %2036 = vmatmul.mubr.f32.gmra.mxu0 %v1670
        %v2037 = vpop.f32.mrf.mxu0
        %v2038 = vadd.f32 %v1893, %v2037
        %v2039 = vpop.f32.mrf.mxu0
        %2040 = vmatprep.mubr.f32.mxu0 0.0
        %2041 = vmatmul.mubr.f32.gmra.mxu0 %v1673
        %v2042 = vpop.f32.mrf.mxu0
        %v2043 = vadd.f32 %v1898, %v2042
        %v2044 = vpop.f32.mrf.mxu0
        %2045 = vmatprep.mubr.f32.mxu0 0.0
        %2046 = vmatmul.mubr.f32.gmra.mxu0 %v1676
        %v2047 = vpop.f32.mrf.mxu0
        %v2048 = vadd.f32 %v1903, %v2047
        %v2049 = vpop.f32.mrf.mxu0
        %2050 = vmatprep.mubr.f32.mxu0 0.0
        %2051 = vmatmul.mubr.f32.gmra.mxu0 %v1679
        %v2052 = vpop.f32.mrf.mxu0
        %v2053 = vadd.f32 %v1908, %v2052
        %v2054 = vpop.f32.mrf.mxu0
        %2055 = vmatprep.mubr.f32.mxu0 0.0
        %2056 = vmatmul.mubr.f32.gmra.mxu0 %v1682
        %v2057 = vpop.f32.mrf.mxu0
        %v2058 = vadd.f32 %v1913, %v2057
        %v2059 = vpop.f32.mrf.mxu0
        %2060 = vmatprep.mubr.f32.mxu0 0.0
        %2061 = vmatmul.mubr.f32.gmra.mxu0 %v1685
        %v2062 = vpop.f32.mrf.mxu0
        %v2063 = vadd.f32 %v1918, %v2062
        %v2064 = vpop.f32.mrf.mxu0
        %2065 = vmatprep.mubr.f32.mxu0 0.0
        %2066 = vmatmul.mubr.f32.gmra.mxu0 %v1688
        %v2067 = vpop.f32.mrf.mxu0
        %v2068 = vadd.f32 %v1923, %v2067
        %v2069 = vpop.f32.mrf.mxu0
        %2070 = vmatprep.mubr.f32.mxu0 0.0
        %2071 = vmatmul.mubr.f32.gmra.mxu0 %v1691
        %v2072 = vpop.f32.mrf.mxu0
        %v2073 = vadd.f32 %v1928, %v2072
        %v2074 = vpop.f32.mrf.mxu0
        %2075 = vmatprep.mubr.f32.mxu0 0.0
        %2076 = vmatmul.mubr.f32.gmra.mxu0 %v1694
        %v2077 = vpop.f32.mrf.mxu0
        %v2078 = vadd.f32 %v1933, %v2077
        %v2079 = vpop.f32.mrf.mxu0
        %2080 = vdwg.mxu0
        %v2081 = vmax.f32 %v2003, 0.0
        %v2082 = vmax.f32 %v2008, 0.0
        %v2083 = vmax.f32 %v2013, 0.0
        %v2084 = vmax.f32 %v2018, 0.0
        %v2085 = vmax.f32 %v2023, 0.0
        %v2086 = vmax.f32 %v2028, 0.0
        %v2087 = vmax.f32 %v2033, 0.0
        %v2088 = vmax.f32 %v2038, 0.0
        %v2089 = vmax.f32 %v2043, 0.0
        %v2090 = vmax.f32 %v2048, 0.0
        %v2091 = vmax.f32 %v2053, 0.0
        %v2092 = vmax.f32 %v2058, 0.0
        %v2093 = vmax.f32 %v2063, 0.0
        %v2094 = vmax.f32 %v2068, 0.0
        %v2095 = vmax.f32 %v2073, 0.0
        %v2096 = vmax.f32 %v2078, 0.0
        %2113 = vrot.lane.b32.xlu0 %v2081, 1
        %v2114 = vpop.permute.xlu0 %2113
        %2115 = vrot.lane.b32.xlu0 %v2082, 1
        %v2116 = vpop.permute.xlu0 %2115
        %2117 = vrot.lane.b32.xlu0 %v2083, 1
        %v2118 = vpop.permute.xlu0 %2117
        %2119 = vrot.lane.b32.xlu0 %v2084, 1
        %v2120 = vpop.permute.xlu0 %2119
        %2121 = vrot.lane.b32.xlu0 %v2085, 1
        %v2122 = vpop.permute.xlu0 %2121
        %2123 = vrot.lane.b32.xlu0 %v2086, 1
        %v2124 = vpop.permute.xlu0 %2123
        %2125 = vrot.lane.b32.xlu0 %v2087, 1
        %v2126 = vpop.permute.xlu0 %2125
        %2127 = vrot.lane.b32.xlu0 %v2088, 1
        %v2128 = vpop.permute.xlu0 %2127
        %2129 = vrot.lane.b32.xlu0 %v2089, 1
        %v2130 = vpop.permute.xlu0 %2129
        %2131 = vrot.lane.b32.xlu0 %v2090, 1
        %v2132 = vpop.permute.xlu0 %2131
        %2133 = vrot.lane.b32.xlu0 %v2091, 1
        %v2134 = vpop.permute.xlu0 %2133
        %2135 = vrot.lane.b32.xlu0 %v2092, 1
        %v2136 = vpop.permute.xlu0 %2135
        %2137 = vrot.lane.b32.xlu0 %v2093, 1
        %v2138 = vpop.permute.xlu0 %2137
        %2139 = vrot.lane.b32.xlu0 %v2094, 1
        %v2140 = vpop.permute.xlu0 %2139
        %2141 = vrot.lane.b32.xlu0 %v2095, 1
        %v2142 = vpop.permute.xlu0 %2141
        %2143 = vrot.lane.b32.xlu0 %v2096, 1
        %v2144 = vpop.permute.xlu0 %2143
        %v2161 = vsel %vm776, 0.0, %v2114
        %v2162 = vsel %vm776, 0.0, %v2116
        %v2163 = vsel %vm776, 0.0, %v2118
        %v2164 = vsel %vm776, 0.0, %v2120
        %v2165 = vsel %vm776, 0.0, %v2122
        %v2166 = vsel %vm776, 0.0, %v2124
        %v2167 = vsel %vm776, 0.0, %v2126
        %v2168 = vsel %vm776, 0.0, %v2128
        %v2169 = vsel %vm776, 0.0, %v2130
        %v2170 = vsel %vm776, 0.0, %v2132
        %v2171 = vsel %vm776, 0.0, %v2134
        %v2172 = vsel %vm776, 0.0, %v2136
        %v2173 = vsel %vm776, 0.0, %v2138
        %v2174 = vsel %vm776, 0.0, %v2140
        %v2175 = vsel %vm776, 0.0, %v2142
        %v2176 = vsel %vm776, 0.0, %v2144
        %2177 = vrot.lane.b32.xlu0 %v2081, 127
        %v2178 = vpop.permute.xlu0 %2177
        %2179 = vrot.lane.b32.xlu0 %v2082, 127
        %v2180 = vpop.permute.xlu0 %2179
        %2181 = vrot.lane.b32.xlu0 %v2083, 127
        %v2182 = vpop.permute.xlu0 %2181
        %2183 = vrot.lane.b32.xlu0 %v2084, 127
        %v2184 = vpop.permute.xlu0 %2183
        %2185 = vrot.lane.b32.xlu0 %v2085, 127
        %v2186 = vpop.permute.xlu0 %2185
        %2187 = vrot.lane.b32.xlu0 %v2086, 127
        %v2188 = vpop.permute.xlu0 %2187
        %2189 = vrot.lane.b32.xlu0 %v2087, 127
        %v2190 = vpop.permute.xlu0 %2189
        %2191 = vrot.lane.b32.xlu0 %v2088, 127
        %v2192 = vpop.permute.xlu0 %2191
        %2193 = vrot.lane.b32.xlu0 %v2089, 127
        %v2194 = vpop.permute.xlu0 %2193
        %2195 = vrot.lane.b32.xlu0 %v2090, 127
        %v2196 = vpop.permute.xlu0 %2195
        %2197 = vrot.lane.b32.xlu0 %v2091, 127
        %v2198 = vpop.permute.xlu0 %2197
        %2199 = vrot.lane.b32.xlu0 %v2092, 127
        %v2200 = vpop.permute.xlu0 %2199
        %2201 = vrot.lane.b32.xlu0 %v2093, 127
        %v2202 = vpop.permute.xlu0 %2201
        %2203 = vrot.lane.b32.xlu0 %v2094, 127
        %v2204 = vpop.permute.xlu0 %2203
        %2205 = vrot.lane.b32.xlu0 %v2095, 127
        %v2206 = vpop.permute.xlu0 %2205
        %2207 = vrot.lane.b32.xlu0 %v2096, 127
        %v2208 = vpop.permute.xlu0 %2207
        %v2225 = vsel %vm781, %v2178, 0.0
        %v2226 = vsel %vm781, %v2180, 0.0
        %v2227 = vsel %vm781, %v2182, 0.0
        %v2228 = vsel %vm781, %v2184, 0.0
        %v2229 = vsel %vm781, %v2186, 0.0
        %v2230 = vsel %vm781, %v2188, 0.0
        %v2231 = vsel %vm781, %v2190, 0.0
        %v2232 = vsel %vm781, %v2192, 0.0
        %v2233 = vsel %vm781, %v2194, 0.0
        %v2234 = vsel %vm781, %v2196, 0.0
        %v2235 = vsel %vm781, %v2198, 0.0
        %v2236 = vsel %vm781, %v2200, 0.0
        %v2237 = vsel %vm781, %v2202, 0.0
        %v2238 = vsel %vm781, %v2204, 0.0
        %v2239 = vsel %vm781, %v2206, 0.0
        %v2240 = vsel %vm781, %v2208, 0.0
        %v2241 = vld [vmem:[#allocation6] sm:$0xff]
        %v2242 = vld [vmem:[#allocation6 + $0x8] sm:$0xff]
        %v2243 = vld [vmem:[#allocation6 + $0x10] sm:$0xff]
        %v2244 = vld [vmem:[#allocation6 + $0x18] sm:$0xff]
        %v2245 = vld [vmem:[#allocation6 + $0x20] sm:$0xff]
        %v2246 = vld [vmem:[#allocation6 + $0x28] sm:$0xff]
        %v2247 = vld [vmem:[#allocation6 + $0x30] sm:$0xff]
        %v2248 = vld [vmem:[#allocation6 + $0x38] sm:$0xff]
        %v2249 = vld [vmem:[#allocation6 + $0x40] sm:$0xff]
        %v2250 = vld [vmem:[#allocation6 + $0x48] sm:$0xff]
        %v2251 = vld [vmem:[#allocation6 + $0x50] sm:$0xff]
        %v2252 = vld [vmem:[#allocation6 + $0x58] sm:$0xff]
        %v2253 = vld [vmem:[#allocation6 + $0x60] sm:$0xff]
        %v2254 = vld [vmem:[#allocation6 + $0x68] sm:$0xff]
        %v2255 = vld [vmem:[#allocation6 + $0x70] sm:$0xff]
        %v2256 = vld [vmem:[#allocation6 + $0x78] sm:$0xff]
        %v2257 = vld [vmem:[#allocation6 + $0x80] sm:$0xff]
        %v2258 = vld [vmem:[#allocation6 + $0x88] sm:$0xff]
        %v2259 = vld [vmem:[#allocation6 + $0x90] sm:$0xff]
        %v2260 = vld [vmem:[#allocation6 + $0x98] sm:$0xff]
        %v2261 = vld [vmem:[#allocation6 + $0xa0] sm:$0xff]
        %v2262 = vld [vmem:[#allocation6 + $0xa8] sm:$0xff]
        %v2263 = vld [vmem:[#allocation6 + $0xb0] sm:$0xff]
        %v2264 = vld [vmem:[#allocation6 + $0xb8] sm:$0xff]
        %v2265 = vld [vmem:[#allocation6 + $0xc0] sm:$0xff]
        %v2266 = vld [vmem:[#allocation6 + $0xc8] sm:$0xff]
        %v2267 = vld [vmem:[#allocation6 + $0xd0] sm:$0xff]
        %v2268 = vld [vmem:[#allocation6 + $0xd8] sm:$0xff]
        %v2269 = vld [vmem:[#allocation6 + $0xe0] sm:$0xff]
        %v2270 = vld [vmem:[#allocation6 + $0xe8] sm:$0xff]
        %v2271 = vld [vmem:[#allocation6 + $0xf0] sm:$0xff]
        %v2272 = vld [vmem:[#allocation6 + $0xf8] sm:$0xff]
        %v2273 = vld [vmem:[#allocation6 + $0x100] sm:$0xff]
        %v2274 = vld [vmem:[#allocation6 + $0x108] sm:$0xff]
        %v2275 = vld [vmem:[#allocation6 + $0x110] sm:$0xff]
        %v2276 = vld [vmem:[#allocation6 + $0x118] sm:$0xff]
        %v2277 = vld [vmem:[#allocation6 + $0x120] sm:$0xff]
        %v2278 = vld [vmem:[#allocation6 + $0x128] sm:$0xff]
        %v2279 = vld [vmem:[#allocation6 + $0x130] sm:$0xff]
        %v2280 = vld [vmem:[#allocation6 + $0x138] sm:$0xff]
        %v2281 = vld [vmem:[#allocation6 + $0x140] sm:$0xff]
        %v2282 = vld [vmem:[#allocation6 + $0x148] sm:$0xff]
        %v2283 = vld [vmem:[#allocation6 + $0x150] sm:$0xff]
        %v2284 = vld [vmem:[#allocation6 + $0x158] sm:$0xff]
        %v2285 = vld [vmem:[#allocation6 + $0x160] sm:$0xff]
        %v2286 = vld [vmem:[#allocation6 + $0x168] sm:$0xff]
        %v2287 = vld [vmem:[#allocation6 + $0x170] sm:$0xff]
        %v2288 = vld [vmem:[#allocation6 + $0x178] sm:$0xff]
        %v2289 = vld [vmem:[%s10] sm:$0xff]
        %v2290 = vld [vmem:[%s10 + $0x8] sm:$0xff]
        %v2291 = vld [vmem:[%s10 + $0x10] sm:$0xff]
        %v2292 = vld [vmem:[%s10 + $0x18] sm:$0xff]
        %v2293 = vld [vmem:[%s10 + $0x20] sm:$0xff]
        %v2294 = vld [vmem:[%s10 + $0x28] sm:$0xff]
        %v2295 = vld [vmem:[%s10 + $0x30] sm:$0xff]
        %v2296 = vld [vmem:[%s10 + $0x38] sm:$0xff]
        %v2297 = vld [vmem:[%s10 + $0x40] sm:$0xff]
        %v2298 = vld [vmem:[%s10 + $0x48] sm:$0xff]
        %v2299 = vld [vmem:[%s10 + $0x50] sm:$0xff]
        %v2300 = vld [vmem:[%s10 + $0x58] sm:$0xff]
        %v2301 = vld [vmem:[%s10 + $0x60] sm:$0xff]
        %v2302 = vld [vmem:[%s10 + $0x68] sm:$0xff]
        %v2303 = vld [vmem:[%s10 + $0x70] sm:$0xff]
        %v2304 = vld [vmem:[%s10 + $0x78] sm:$0xff]
        %2306 = vset.pattern.permute.xlu0 0
        %2307 = vperm.xlu0 %2306, %v2289
        %v2308 = vpop.permute.xlu0 %2307
        %2311 = vset.pattern.permute.xlu0 0
        %2312 = vperm.xlu0 %2311, %v2290
        %v2313 = vpop.permute.xlu0 %2312
        %2316 = vset.pattern.permute.xlu0 0
        %2317 = vperm.xlu0 %2316, %v2291
        %v2318 = vpop.permute.xlu0 %2317
        %2321 = vset.pattern.permute.xlu0 0
        %2322 = vperm.xlu0 %2321, %v2292
        %v2323 = vpop.permute.xlu0 %2322
        %2326 = vset.pattern.permute.xlu0 0
        %2327 = vperm.xlu0 %2326, %v2293
        %v2328 = vpop.permute.xlu0 %2327
        %2331 = vset.pattern.permute.xlu0 0
        %2332 = vperm.xlu0 %2331, %v2294
        %v2333 = vpop.permute.xlu0 %2332
        %2336 = vset.pattern.permute.xlu0 0
        %2337 = vperm.xlu0 %2336, %v2295
        %v2338 = vpop.permute.xlu0 %2337
        %2341 = vset.pattern.permute.xlu0 0
        %2342 = vperm.xlu0 %2341, %v2296
        %v2343 = vpop.permute.xlu0 %2342
        %2346 = vset.pattern.permute.xlu0 0
        %2347 = vperm.xlu0 %2346, %v2297
        %v2348 = vpop.permute.xlu0 %2347
        %2351 = vset.pattern.permute.xlu0 0
        %2352 = vperm.xlu0 %2351, %v2298
        %v2353 = vpop.permute.xlu0 %2352
        %2356 = vset.pattern.permute.xlu0 0
        %2357 = vperm.xlu0 %2356, %v2299
        %v2358 = vpop.permute.xlu0 %2357
        %2361 = vset.pattern.permute.xlu0 0
        %2362 = vperm.xlu0 %2361, %v2300
        %v2363 = vpop.permute.xlu0 %2362
        %2366 = vset.pattern.permute.xlu0 0
        %2367 = vperm.xlu0 %2366, %v2301
        %v2368 = vpop.permute.xlu0 %2367
        %2371 = vset.pattern.permute.xlu0 0
        %2372 = vperm.xlu0 %2371, %v2302
        %v2373 = vpop.permute.xlu0 %2372
        %2376 = vset.pattern.permute.xlu0 0
        %2377 = vperm.xlu0 %2376, %v2303
        %v2378 = vpop.permute.xlu0 %2377
        %2381 = vset.pattern.permute.xlu0 0
        %2382 = vperm.xlu0 %2381, %v2304
        %v2383 = vpop.permute.xlu0 %2382
        %2385 = vmatprep.subr.mxu0 0.0
        %2386 = vmatpush1.msra.mxu0 %v2176
        %2387 = vmatprep.subr.mxu0 0.0
        %2388 = vmatpush1.msra.mxu0 %v2175
        %2389 = vmatprep.subr.mxu0 0.0
        %2390 = vmatpush1.msra.mxu0 %v2174
        %2391 = vmatprep.subr.mxu0 0.0
        %2392 = vmatpush1.msra.mxu0 %v2173
        %2393 = vmatprep.subr.mxu0 0.0
        %2394 = vmatpush1.msra.mxu0 %v2172
        %2395 = vmatprep.subr.mxu0 0.0
        %2396 = vmatpush1.msra.mxu0 %v2171
        %2397 = vmatprep.subr.mxu0 0.0
        %2398 = vmatpush1.msra.mxu0 %v2170
        %2399 = vmatprep.subr.mxu0 0.0
        %2400 = vmatpush1.msra.mxu0 %v2169
        %2401 = vmatprep.subr.mxu0 0.0
        %2402 = vmatpush1.msra.mxu0 %v2168
        %2403 = vmatprep.subr.mxu0 0.0
        %2404 = vmatpush1.msra.mxu0 %v2167
        %2405 = vmatprep.subr.mxu0 0.0
        %2406 = vmatpush1.msra.mxu0 %v2166
        %2407 = vmatprep.subr.mxu0 0.0
        %2408 = vmatpush1.msra.mxu0 %v2165
        %2409 = vmatprep.subr.mxu0 0.0
        %2410 = vmatpush1.msra.mxu0 %v2164
        %2411 = vmatprep.subr.mxu0 0.0
        %2412 = vmatpush1.msra.mxu0 %v2163
        %2413 = vmatprep.subr.mxu0 0.0
        %2414 = vmatpush1.msra.mxu0 %v2162
        %2415 = vmatprep.subr.mxu0 0.0
        %2416 = vmatpush1.msra.mxu0 %v2161
        %2417 = vmatprep.subr.mxu0 0.0
        %2418 = vmatpush2.msra.mxu0 %v2096
        %2419 = vmatprep.subr.mxu0 0.0
        %2420 = vmatpush2.msra.mxu0 %v2095
        %2421 = vmatprep.subr.mxu0 0.0
        %2422 = vmatpush2.msra.mxu0 %v2094
        %2423 = vmatprep.subr.mxu0 0.0
        %2424 = vmatpush2.msra.mxu0 %v2093
        %2425 = vmatprep.subr.mxu0 0.0
        %2426 = vmatpush2.msra.mxu0 %v2092
        %2427 = vmatprep.subr.mxu0 0.0
        %2428 = vmatpush2.msra.mxu0 %v2091
        %2429 = vmatprep.subr.mxu0 0.0
        %2430 = vmatpush2.msra.mxu0 %v2090
        %2431 = vmatprep.subr.mxu0 0.0
        %2432 = vmatpush2.msra.mxu0 %v2089
        %2433 = vmatprep.subr.mxu0 0.0
        %2434 = vmatpush2.msra.mxu0 %v2088
        %2435 = vmatprep.subr.mxu0 0.0
        %2436 = vmatpush2.msra.mxu0 %v2087
        %2437 = vmatprep.subr.mxu0 0.0
        %2438 = vmatpush2.msra.mxu0 %v2086
        %2439 = vmatprep.subr.mxu0 0.0
        %2440 = vmatpush2.msra.mxu0 %v2085
        %2441 = vmatprep.subr.mxu0 0.0
        %2442 = vmatpush2.msra.mxu0 %v2084
        %2443 = vmatprep.subr.mxu0 0.0
        %2444 = vmatpush2.msra.mxu0 %v2083
        %2445 = vmatprep.subr.mxu0 0.0
        %2446 = vmatpush2.msra.mxu0 %v2082
        %2447 = vmatprep.subr.mxu0 0.0
        %2448 = vmatpush2.msra.mxu0 %v2081
        %2449 = vmatprep.mubr.f32.mxu0 %v2242
        %2450 = vmatmul.mubr.f32.gmra.mxu0 %v2241
        %v2451 = vpop.f32.mrf.mxu0
        %v2452 = vadd.f32 %v2308, %v2451
        %v2453 = vpop.f32.mrf.mxu0
        %2454 = vmatprep.mubr.f32.mxu0 %v2245
        %2455 = vmatmul.mubr.f32.gmra.mxu0 %v2244
        %v2456 = vpop.f32.mrf.mxu0
        %v2457 = vadd.f32 %v2313, %v2456
        %v2458 = vpop.f32.mrf.mxu0
        %2459 = vmatprep.mubr.f32.mxu0 %v2248
        %2460 = vmatmul.mubr.f32.gmra.mxu0 %v2247
        %v2461 = vpop.f32.mrf.mxu0
        %v2462 = vadd.f32 %v2318, %v2461
        %v2463 = vpop.f32.mrf.mxu0
        %2464 = vmatprep.mubr.f32.mxu0 %v2251
        %2465 = vmatmul.mubr.f32.gmra.mxu0 %v2250
        %v2466 = vpop.f32.mrf.mxu0
        %v2467 = vadd.f32 %v2323, %v2466
        %v2468 = vpop.f32.mrf.mxu0
        %2469 = vmatprep.mubr.f32.mxu0 %v2254
        %2470 = vmatmul.mubr.f32.gmra.mxu0 %v2253
        %v2471 = vpop.f32.mrf.mxu0
        %v2472 = vadd.f32 %v2328, %v2471
        %v2473 = vpop.f32.mrf.mxu0
        %2474 = vmatprep.mubr.f32.mxu0 %v2257
        %2475 = vmatmul.mubr.f32.gmra.mxu0 %v2256
        %v2476 = vpop.f32.mrf.mxu0
        %v2477 = vadd.f32 %v2333, %v2476
        %v2478 = vpop.f32.mrf.mxu0
        %2479 = vmatprep.mubr.f32.mxu0 %v2260
        %2480 = vmatmul.mubr.f32.gmra.mxu0 %v2259
        %v2481 = vpop.f32.mrf.mxu0
        %v2482 = vadd.f32 %v2338, %v2481
        %v2483 = vpop.f32.mrf.mxu0
        %2484 = vmatprep.mubr.f32.mxu0 %v2263
        %2485 = vmatmul.mubr.f32.gmra.mxu0 %v2262
        %v2486 = vpop.f32.mrf.mxu0
        %v2487 = vadd.f32 %v2343, %v2486
        %v2488 = vpop.f32.mrf.mxu0
        %2489 = vmatprep.mubr.f32.mxu0 %v2266
        %2490 = vmatmul.mubr.f32.gmra.mxu0 %v2265
        %v2491 = vpop.f32.mrf.mxu0
        %v2492 = vadd.f32 %v2348, %v2491
        %v2493 = vpop.f32.mrf.mxu0
        %2494 = vmatprep.mubr.f32.mxu0 %v2269
        %2495 = vmatmul.mubr.f32.gmra.mxu0 %v2268
        %v2496 = vpop.f32.mrf.mxu0
        %v2497 = vadd.f32 %v2353, %v2496
        %v2498 = vpop.f32.mrf.mxu0
        %2499 = vmatprep.mubr.f32.mxu0 %v2272
        %2500 = vmatmul.mubr.f32.gmra.mxu0 %v2271
        %v2501 = vpop.f32.mrf.mxu0
        %v2502 = vadd.f32 %v2358, %v2501
        %v2503 = vpop.f32.mrf.mxu0
        %2504 = vmatprep.mubr.f32.mxu0 %v2275
        %2505 = vmatmul.mubr.f32.gmra.mxu0 %v2274
        %v2506 = vpop.f32.mrf.mxu0
        %v2507 = vadd.f32 %v2363, %v2506
        %v2508 = vpop.f32.mrf.mxu0
        %2509 = vmatprep.mubr.f32.mxu0 %v2278
        %2510 = vmatmul.mubr.f32.gmra.mxu0 %v2277
        %v2511 = vpop.f32.mrf.mxu0
        %v2512 = vadd.f32 %v2368, %v2511
        %v2513 = vpop.f32.mrf.mxu0
        %2514 = vmatprep.mubr.f32.mxu0 %v2281
        %2515 = vmatmul.mubr.f32.gmra.mxu0 %v2280
        %v2516 = vpop.f32.mrf.mxu0
        %v2517 = vadd.f32 %v2373, %v2516
        %v2518 = vpop.f32.mrf.mxu0
        %2519 = vmatprep.mubr.f32.mxu0 %v2284
        %2520 = vmatmul.mubr.f32.gmra.mxu0 %v2283
        %v2521 = vpop.f32.mrf.mxu0
        %v2522 = vadd.f32 %v2378, %v2521
        %v2523 = vpop.f32.mrf.mxu0
        %2524 = vmatprep.mubr.f32.mxu0 %v2287
        %2525 = vmatmul.mubr.f32.gmra.mxu0 %v2286
        %v2526 = vpop.f32.mrf.mxu0
        %v2527 = vadd.f32 %v2383, %v2526
        %v2528 = vpop.f32.mrf.mxu0
        %2529 = vdwg.mxu0
        %2530 = vmatprep.subr.mxu0 0.0
        %2531 = vmatpush1.msra.mxu0 %v2240
        %2532 = vmatprep.subr.mxu0 0.0
        %2533 = vmatpush1.msra.mxu0 %v2239
        %2534 = vmatprep.subr.mxu0 0.0
        %2535 = vmatpush1.msra.mxu0 %v2238
        %2536 = vmatprep.subr.mxu0 0.0
        %2537 = vmatpush1.msra.mxu0 %v2237
        %2538 = vmatprep.subr.mxu0 0.0
        %2539 = vmatpush1.msra.mxu0 %v2236
        %2540 = vmatprep.subr.mxu0 0.0
        %2541 = vmatpush1.msra.mxu0 %v2235
        %2542 = vmatprep.subr.mxu0 0.0
        %2543 = vmatpush1.msra.mxu0 %v2234
        %2544 = vmatprep.subr.mxu0 0.0
        %2545 = vmatpush1.msra.mxu0 %v2233
        %2546 = vmatprep.subr.mxu0 0.0
        %2547 = vmatpush1.msra.mxu0 %v2232
        %2548 = vmatprep.subr.mxu0 0.0
        %2549 = vmatpush1.msra.mxu0 %v2231
        %2550 = vmatprep.subr.mxu0 0.0
        %2551 = vmatpush1.msra.mxu0 %v2230
        %2552 = vmatprep.subr.mxu0 0.0
        %2553 = vmatpush1.msra.mxu0 %v2229
        %2554 = vmatprep.subr.mxu0 0.0
        %2555 = vmatpush1.msra.mxu0 %v2228
        %2556 = vmatprep.subr.mxu0 0.0
        %2557 = vmatpush1.msra.mxu0 %v2227
        %2558 = vmatprep.subr.mxu0 0.0
        %2559 = vmatpush1.msra.mxu0 %v2226
        %2560 = vmatprep.subr.mxu0 0.0
        %2561 = vmatpush1.msra.mxu0 %v2225
        %2562 = vmatprep.subr.mxu0 0.0
        %2563 = vmatpush2.msra.mxu0 0.0
        %2564 = vmatprep.subr.mxu0 0.0
        %2565 = vmatpush2.msra.mxu0 0.0
        %2566 = vmatprep.subr.mxu0 0.0
        %2567 = vmatpush2.msra.mxu0 0.0
        %2568 = vmatprep.subr.mxu0 0.0
        %2569 = vmatpush2.msra.mxu0 0.0
        %2570 = vmatprep.subr.mxu0 0.0
        %2571 = vmatpush2.msra.mxu0 0.0
        %2572 = vmatprep.subr.mxu0 0.0
        %2573 = vmatpush2.msra.mxu0 0.0
        %2574 = vmatprep.subr.mxu0 0.0
        %2575 = vmatpush2.msra.mxu0 0.0
        %2576 = vmatprep.subr.mxu0 0.0
        %2577 = vmatpush2.msra.mxu0 0.0
        %2578 = vmatprep.subr.mxu0 0.0
        %2579 = vmatpush2.msra.mxu0 0.0
        %2580 = vmatprep.subr.mxu0 0.0
        %2581 = vmatpush2.msra.mxu0 0.0
        %2582 = vmatprep.subr.mxu0 0.0
        %2583 = vmatpush2.msra.mxu0 0.0
        %2584 = vmatprep.subr.mxu0 0.0
        %2585 = vmatpush2.msra.mxu0 0.0
        %2586 = vmatprep.subr.mxu0 0.0
        %2587 = vmatpush2.msra.mxu0 0.0
        %2588 = vmatprep.subr.mxu0 0.0
        %2589 = vmatpush2.msra.mxu0 0.0
        %2590 = vmatprep.subr.mxu0 0.0
        %2591 = vmatpush2.msra.mxu0 0.0
        %2592 = vmatprep.subr.mxu0 0.0
        %2593 = vmatpush2.msra.mxu0 0.0
        %2594 = vmatprep.mubr.f32.mxu0 0.0
        %2595 = vmatmul.mubr.f32.gmra.mxu0 %v2243
        %v2596 = vpop.f32.mrf.mxu0
        %v2597 = vadd.f32 %v2452, %v2596
        %v2598 = vpop.f32.mrf.mxu0
        %2599 = vmatprep.mubr.f32.mxu0 0.0
        %2600 = vmatmul.mubr.f32.gmra.mxu0 %v2246
        %v2601 = vpop.f32.mrf.mxu0
        %v2602 = vadd.f32 %v2457, %v2601
        %v2603 = vpop.f32.mrf.mxu0
        %2604 = vmatprep.mubr.f32.mxu0 0.0
        %2605 = vmatmul.mubr.f32.gmra.mxu0 %v2249
        %v2606 = vpop.f32.mrf.mxu0
        %v2607 = vadd.f32 %v2462, %v2606
        %v2608 = vpop.f32.mrf.mxu0
        %2609 = vmatprep.mubr.f32.mxu0 0.0
        %2610 = vmatmul.mubr.f32.gmra.mxu0 %v2252
        %v2611 = vpop.f32.mrf.mxu0
        %v2612 = vadd.f32 %v2467, %v2611
        %v2613 = vpop.f32.mrf.mxu0
        %2614 = vmatprep.mubr.f32.mxu0 0.0
        %2615 = vmatmul.mubr.f32.gmra.mxu0 %v2255
        %v2616 = vpop.f32.mrf.mxu0
        %v2617 = vadd.f32 %v2472, %v2616
        %v2618 = vpop.f32.mrf.mxu0
        %2619 = vmatprep.mubr.f32.mxu0 0.0
        %2620 = vmatmul.mubr.f32.gmra.mxu0 %v2258
        %v2621 = vpop.f32.mrf.mxu0
        %v2622 = vadd.f32 %v2477, %v2621
        %v2623 = vpop.f32.mrf.mxu0
        %2624 = vmatprep.mubr.f32.mxu0 0.0
        %2625 = vmatmul.mubr.f32.gmra.mxu0 %v2261
        %v2626 = vpop.f32.mrf.mxu0
        %v2627 = vadd.f32 %v2482, %v2626
        %v2628 = vpop.f32.mrf.mxu0
        %2629 = vmatprep.mubr.f32.mxu0 0.0
        %2630 = vmatmul.mubr.f32.gmra.mxu0 %v2264
        %v2631 = vpop.f32.mrf.mxu0
        %v2632 = vadd.f32 %v2487, %v2631
        %v2633 = vpop.f32.mrf.mxu0
        %2634 = vmatprep.mubr.f32.mxu0 0.0
        %2635 = vmatmul.mubr.f32.gmra.mxu0 %v2267
        %v2636 = vpop.f32.mrf.mxu0
        %v2637 = vadd.f32 %v2492, %v2636
        %v2638 = vpop.f32.mrf.mxu0
        %2639 = vmatprep.mubr.f32.mxu0 0.0
        %2640 = vmatmul.mubr.f32.gmra.mxu0 %v2270
        %v2641 = vpop.f32.mrf.mxu0
        %v2642 = vadd.f32 %v2497, %v2641
        %v2643 = vpop.f32.mrf.mxu0
        %2644 = vmatprep.mubr.f32.mxu0 0.0
        %2645 = vmatmul.mubr.f32.gmra.mxu0 %v2273
        %v2646 = vpop.f32.mrf.mxu0
        %v2647 = vadd.f32 %v2502, %v2646
        %v2648 = vpop.f32.mrf.mxu0
        %2649 = vmatprep.mubr.f32.mxu0 0.0
        %2650 = vmatmul.mubr.f32.gmra.mxu0 %v2276
        %v2651 = vpop.f32.mrf.mxu0
        %v2652 = vadd.f32 %v2507, %v2651
        %v2653 = vpop.f32.mrf.mxu0
        %2654 = vmatprep.mubr.f32.mxu0 0.0
        %2655 = vmatmul.mubr.f32.gmra.mxu0 %v2279
        %v2656 = vpop.f32.mrf.mxu0
        %v2657 = vadd.f32 %v2512, %v2656
        %v2658 = vpop.f32.mrf.mxu0
        %2659 = vmatprep.mubr.f32.mxu0 0.0
        %2660 = vmatmul.mubr.f32.gmra.mxu0 %v2282
        %v2661 = vpop.f32.mrf.mxu0
        %v2662 = vadd.f32 %v2517, %v2661
        %v2663 = vpop.f32.mrf.mxu0
        %2664 = vmatprep.mubr.f32.mxu0 0.0
        %2665 = vmatmul.mubr.f32.gmra.mxu0 %v2285
        %v2666 = vpop.f32.mrf.mxu0
        %v2667 = vadd.f32 %v2522, %v2666
        %v2668 = vpop.f32.mrf.mxu0
        %2669 = vmatprep.mubr.f32.mxu0 0.0
        %2670 = vmatmul.mubr.f32.gmra.mxu0 %v2288
        %v2671 = vpop.f32.mrf.mxu0
        %v2672 = vadd.f32 %v2527, %v2671
        %v2673 = vpop.f32.mrf.mxu0
        %2674 = vdwg.mxu0
        %v2675 = vmax.f32 %v2597, 0.0
        %v2676 = vmax.f32 %v2602, 0.0
        %v2677 = vmax.f32 %v2607, 0.0
        %v2678 = vmax.f32 %v2612, 0.0
        %v2679 = vmax.f32 %v2617, 0.0
        %v2680 = vmax.f32 %v2622, 0.0
        %v2681 = vmax.f32 %v2627, 0.0
        %v2682 = vmax.f32 %v2632, 0.0
        %v2683 = vmax.f32 %v2637, 0.0
        %v2684 = vmax.f32 %v2642, 0.0
        %v2685 = vmax.f32 %v2647, 0.0
        %v2686 = vmax.f32 %v2652, 0.0
        %v2687 = vmax.f32 %v2657, 0.0
        %v2688 = vmax.f32 %v2662, 0.0
        %v2689 = vmax.f32 %v2667, 0.0
        %v2690 = vmax.f32 %v2672, 0.0
        %v2691 = vadd.f32 %v2675, %v1487
        %v2692 = vadd.f32 %v2676, %v1488
        %v2693 = vadd.f32 %v2677, %v1489
        %v2694 = vadd.f32 %v2678, %v1490
        %v2695 = vadd.f32 %v2679, %v1491
        %v2696 = vadd.f32 %v2680, %v1492
        %v2697 = vadd.f32 %v2681, %v1493
        %v2698 = vadd.f32 %v2682, %v1494
        %v2699 = vadd.f32 %v2683, %v1495
        %v2700 = vadd.f32 %v2684, %v1496
        %v2701 = vadd.f32 %v2685, %v1497
        %v2702 = vadd.f32 %v2686, %v1498
        %v2703 = vadd.f32 %v2687, %v1499
        %v2704 = vadd.f32 %v2688, %v1500
        %v2705 = vadd.f32 %v2689, %v1501
        %v2706 = vadd.f32 %v2690, %v1502
        %2723 = vrot.lane.b32.xlu0 %v2691, 1
        %v2724 = vpop.permute.xlu0 %2723
        %2725 = vrot.lane.b32.xlu0 %v2692, 1
        %v2726 = vpop.permute.xlu0 %2725
        %2727 = vrot.lane.b32.xlu0 %v2693, 1
        %v2728 = vpop.permute.xlu0 %2727
        %2729 = vrot.lane.b32.xlu0 %v2694, 1
        %v2730 = vpop.permute.xlu0 %2729
        %2731 = vrot.lane.b32.xlu0 %v2695, 1
        %v2732 = vpop.permute.xlu0 %2731
        %2733 = vrot.lane.b32.xlu0 %v2696, 1
        %v2734 = vpop.permute.xlu0 %2733
        %2735 = vrot.lane.b32.xlu0 %v2697, 1
        %v2736 = vpop.permute.xlu0 %2735
        %2737 = vrot.lane.b32.xlu0 %v2698, 1
        %v2738 = vpop.permute.xlu0 %2737
        %2739 = vrot.lane.b32.xlu0 %v2699, 1
        %v2740 = vpop.permute.xlu0 %2739
        %2741 = vrot.lane.b32.xlu0 %v2700, 1
        %v2742 = vpop.permute.xlu0 %2741
        %2743 = vrot.lane.b32.xlu0 %v2701, 1
        %v2744 = vpop.permute.xlu0 %2743
        %2745 = vrot.lane.b32.xlu0 %v2702, 1
        %v2746 = vpop.permute.xlu0 %2745
        %2747 = vrot.lane.b32.xlu0 %v2703, 1
        %v2748 = vpop.permute.xlu0 %2747
        %2749 = vrot.lane.b32.xlu0 %v2704, 1
        %v2750 = vpop.permute.xlu0 %2749
        %2751 = vrot.lane.b32.xlu0 %v2705, 1
        %v2752 = vpop.permute.xlu0 %2751
        %2753 = vrot.lane.b32.xlu0 %v2706, 1
        %v2754 = vpop.permute.xlu0 %2753
        %v2771 = vsel %vm776, 0.0, %v2724
        %v2772 = vsel %vm776, 0.0, %v2726
        %v2773 = vsel %vm776, 0.0, %v2728
        %v2774 = vsel %vm776, 0.0, %v2730
        %v2775 = vsel %vm776, 0.0, %v2732
        %v2776 = vsel %vm776, 0.0, %v2734
        %v2777 = vsel %vm776, 0.0, %v2736
        %v2778 = vsel %vm776, 0.0, %v2738
        %v2779 = vsel %vm776, 0.0, %v2740
        %v2780 = vsel %vm776, 0.0, %v2742
        %v2781 = vsel %vm776, 0.0, %v2744
        %v2782 = vsel %vm776, 0.0, %v2746
        %v2783 = vsel %vm776, 0.0, %v2748
        %v2784 = vsel %vm776, 0.0, %v2750
        %v2785 = vsel %vm776, 0.0, %v2752
        %v2786 = vsel %vm776, 0.0, %v2754
        %2787 = vrot.lane.b32.xlu0 %v2691, 127
        %v2788 = vpop.permute.xlu0 %2787
        %2789 = vrot.lane.b32.xlu0 %v2692, 127
        %v2790 = vpop.permute.xlu0 %2789
        %2791 = vrot.lane.b32.xlu0 %v2693, 127
        %v2792 = vpop.permute.xlu0 %2791
        %2793 = vrot.lane.b32.xlu0 %v2694, 127
        %v2794 = vpop.permute.xlu0 %2793
        %2795 = vrot.lane.b32.xlu0 %v2695, 127
        %v2796 = vpop.permute.xlu0 %2795
        %2797 = vrot.lane.b32.xlu0 %v2696, 127
        %v2798 = vpop.permute.xlu0 %2797
        %2799 = vrot.lane.b32.xlu0 %v2697, 127
        %v2800 = vpop.permute.xlu0 %2799
        %2801 = vrot.lane.b32.xlu0 %v2698, 127
        %v2802 = vpop.permute.xlu0 %2801
        %2803 = vrot.lane.b32.xlu0 %v2699, 127
        %v2804 = vpop.permute.xlu0 %2803
        %2805 = vrot.lane.b32.xlu0 %v2700, 127
        %v2806 = vpop.permute.xlu0 %2805
        %2807 = vrot.lane.b32.xlu0 %v2701, 127
        %v2808 = vpop.permute.xlu0 %2807
        %2809 = vrot.lane.b32.xlu0 %v2702, 127
        %v2810 = vpop.permute.xlu0 %2809
        %2811 = vrot.lane.b32.xlu0 %v2703, 127
        %v2812 = vpop.permute.xlu0 %2811
        %2813 = vrot.lane.b32.xlu0 %v2704, 127
        %v2814 = vpop.permute.xlu0 %2813
        %2815 = vrot.lane.b32.xlu0 %v2705, 127
        %v2816 = vpop.permute.xlu0 %2815
        %2817 = vrot.lane.b32.xlu0 %v2706, 127
        %v2818 = vpop.permute.xlu0 %2817
        %v2835 = vsel %vm781, %v2788, 0.0
        %v2836 = vsel %vm781, %v2790, 0.0
        %v2837 = vsel %vm781, %v2792, 0.0
        %v2838 = vsel %vm781, %v2794, 0.0
        %v2839 = vsel %vm781, %v2796, 0.0
        %v2840 = vsel %vm781, %v2798, 0.0
        %v2841 = vsel %vm781, %v2800, 0.0
        %v2842 = vsel %vm781, %v2802, 0.0
        %v2843 = vsel %vm781, %v2804, 0.0
        %v2844 = vsel %vm781, %v2806, 0.0
        %v2845 = vsel %vm781, %v2808, 0.0
        %v2846 = vsel %vm781, %v2810, 0.0
        %v2847 = vsel %vm781, %v2812, 0.0
        %v2848 = vsel %vm781, %v2814, 0.0
        %v2849 = vsel %vm781, %v2816, 0.0
        %v2850 = vsel %vm781, %v2818, 0.0
        %v2851 = vld [vmem:[#allocation7] sm:$0xff]
        %v2852 = vld [vmem:[#allocation7 + $0x8] sm:$0xff]
        %v2853 = vld [vmem:[#allocation7 + $0x10] sm:$0xff]
        %v2854 = vld [vmem:[#allocation7 + $0x18] sm:$0xff]
        %v2855 = vld [vmem:[#allocation7 + $0x20] sm:$0xff]
        %v2856 = vld [vmem:[#allocation7 + $0x28] sm:$0xff]
        %v2857 = vld [vmem:[#allocation7 + $0x30] sm:$0xff]
        %v2858 = vld [vmem:[#allocation7 + $0x38] sm:$0xff]
        %v2859 = vld [vmem:[#allocation7 + $0x40] sm:$0xff]
        %v2860 = vld [vmem:[#allocation7 + $0x48] sm:$0xff]
        %v2861 = vld [vmem:[#allocation7 + $0x50] sm:$0xff]
        %v2862 = vld [vmem:[#allocation7 + $0x58] sm:$0xff]
        %v2863 = vld [vmem:[#allocation7 + $0x60] sm:$0xff]
        %v2864 = vld [vmem:[#allocation7 + $0x68] sm:$0xff]
        %v2865 = vld [vmem:[#allocation7 + $0x70] sm:$0xff]
        %v2866 = vld [vmem:[#allocation7 + $0x78] sm:$0xff]
        %v2867 = vld [vmem:[#allocation7 + $0x80] sm:$0xff]
        %v2868 = vld [vmem:[#allocation7 + $0x88] sm:$0xff]
        %v2869 = vld [vmem:[#allocation7 + $0x90] sm:$0xff]
        %v2870 = vld [vmem:[#allocation7 + $0x98] sm:$0xff]
        %v2871 = vld [vmem:[#allocation7 + $0xa0] sm:$0xff]
        %v2872 = vld [vmem:[#allocation7 + $0xa8] sm:$0xff]
        %v2873 = vld [vmem:[#allocation7 + $0xb0] sm:$0xff]
        %v2874 = vld [vmem:[#allocation7 + $0xb8] sm:$0xff]
        %v2875 = vld [vmem:[#allocation7 + $0xc0] sm:$0xff]
        %v2876 = vld [vmem:[#allocation7 + $0xc8] sm:$0xff]
        %v2877 = vld [vmem:[#allocation7 + $0xd0] sm:$0xff]
        %v2878 = vld [vmem:[#allocation7 + $0xd8] sm:$0xff]
        %v2879 = vld [vmem:[#allocation7 + $0xe0] sm:$0xff]
        %v2880 = vld [vmem:[#allocation7 + $0xe8] sm:$0xff]
        %v2881 = vld [vmem:[#allocation7 + $0xf0] sm:$0xff]
        %v2882 = vld [vmem:[#allocation7 + $0xf8] sm:$0xff]
        %v2883 = vld [vmem:[#allocation7 + $0x100] sm:$0xff]
        %v2884 = vld [vmem:[#allocation7 + $0x108] sm:$0xff]
        %v2885 = vld [vmem:[#allocation7 + $0x110] sm:$0xff]
        %v2886 = vld [vmem:[#allocation7 + $0x118] sm:$0xff]
        %v2887 = vld [vmem:[#allocation7 + $0x120] sm:$0xff]
        %v2888 = vld [vmem:[#allocation7 + $0x128] sm:$0xff]
        %v2889 = vld [vmem:[#allocation7 + $0x130] sm:$0xff]
        %v2890 = vld [vmem:[#allocation7 + $0x138] sm:$0xff]
        %v2891 = vld [vmem:[#allocation7 + $0x140] sm:$0xff]
        %v2892 = vld [vmem:[#allocation7 + $0x148] sm:$0xff]
        %v2893 = vld [vmem:[#allocation7 + $0x150] sm:$0xff]
        %v2894 = vld [vmem:[#allocation7 + $0x158] sm:$0xff]
        %v2895 = vld [vmem:[#allocation7 + $0x160] sm:$0xff]
        %v2896 = vld [vmem:[#allocation7 + $0x168] sm:$0xff]
        %v2897 = vld [vmem:[#allocation7 + $0x170] sm:$0xff]
        %v2898 = vld [vmem:[#allocation7 + $0x178] sm:$0xff]
        %v2899 = vld [vmem:[%s12] sm:$0xff]
        %v2900 = vld [vmem:[%s12 + $0x8] sm:$0xff]
        %v2901 = vld [vmem:[%s12 + $0x10] sm:$0xff]
        %v2902 = vld [vmem:[%s12 + $0x18] sm:$0xff]
        %v2903 = vld [vmem:[%s12 + $0x20] sm:$0xff]
        %v2904 = vld [vmem:[%s12 + $0x28] sm:$0xff]
        %v2905 = vld [vmem:[%s12 + $0x30] sm:$0xff]
        %v2906 = vld [vmem:[%s12 + $0x38] sm:$0xff]
        %v2907 = vld [vmem:[%s12 + $0x40] sm:$0xff]
        %v2908 = vld [vmem:[%s12 + $0x48] sm:$0xff]
        %v2909 = vld [vmem:[%s12 + $0x50] sm:$0xff]
        %v2910 = vld [vmem:[%s12 + $0x58] sm:$0xff]
        %v2911 = vld [vmem:[%s12 + $0x60] sm:$0xff]
        %v2912 = vld [vmem:[%s12 + $0x68] sm:$0xff]
        %v2913 = vld [vmem:[%s12 + $0x70] sm:$0xff]
        %v2914 = vld [vmem:[%s12 + $0x78] sm:$0xff]
        %2916 = vset.pattern.permute.xlu0 0
        %2917 = vperm.xlu0 %2916, %v2899
        %v2918 = vpop.permute.xlu0 %2917
        %2921 = vset.pattern.permute.xlu0 0
        %2922 = vperm.xlu0 %2921, %v2900
        %v2923 = vpop.permute.xlu0 %2922
        %2926 = vset.pattern.permute.xlu0 0
        %2927 = vperm.xlu0 %2926, %v2901
        %v2928 = vpop.permute.xlu0 %2927
        %2931 = vset.pattern.permute.xlu0 0
        %2932 = vperm.xlu0 %2931, %v2902
        %v2933 = vpop.permute.xlu0 %2932
        %2936 = vset.pattern.permute.xlu0 0
        %2937 = vperm.xlu0 %2936, %v2903
        %v2938 = vpop.permute.xlu0 %2937
        %2941 = vset.pattern.permute.xlu0 0
        %2942 = vperm.xlu0 %2941, %v2904
        %v2943 = vpop.permute.xlu0 %2942
        %2946 = vset.pattern.permute.xlu0 0
        %2947 = vperm.xlu0 %2946, %v2905
        %v2948 = vpop.permute.xlu0 %2947
        %2951 = vset.pattern.permute.xlu0 0
        %2952 = vperm.xlu0 %2951, %v2906
        %v2953 = vpop.permute.xlu0 %2952
        %2956 = vset.pattern.permute.xlu0 0
        %2957 = vperm.xlu0 %2956, %v2907
        %v2958 = vpop.permute.xlu0 %2957
        %2961 = vset.pattern.permute.xlu0 0
        %2962 = vperm.xlu0 %2961, %v2908
        %v2963 = vpop.permute.xlu0 %2962
        %2966 = vset.pattern.permute.xlu0 0
        %2967 = vperm.xlu0 %2966, %v2909
        %v2968 = vpop.permute.xlu0 %2967
        %2971 = vset.pattern.permute.xlu0 0
        %2972 = vperm.xlu0 %2971, %v2910
        %v2973 = vpop.permute.xlu0 %2972
        %2976 = vset.pattern.permute.xlu0 0
        %2977 = vperm.xlu0 %2976, %v2911
        %v2978 = vpop.permute.xlu0 %2977
        %2981 = vset.pattern.permute.xlu0 0
        %2982 = vperm.xlu0 %2981, %v2912
        %v2983 = vpop.permute.xlu0 %2982
        %2986 = vset.pattern.permute.xlu0 0
        %2987 = vperm.xlu0 %2986, %v2913
        %v2988 = vpop.permute.xlu0 %2987
        %2991 = vset.pattern.permute.xlu0 0
        %2992 = vperm.xlu0 %2991, %v2914
        %v2993 = vpop.permute.xlu0 %2992
        %2995 = vmatprep.subr.mxu0 0.0
        %2996 = vmatpush1.msra.mxu0 %v2786
        %2997 = vmatprep.subr.mxu0 0.0
        %2998 = vmatpush1.msra.mxu0 %v2785
        %2999 = vmatprep.subr.mxu0 0.0
        %3000 = vmatpush1.msra.mxu0 %v2784
        %3001 = vmatprep.subr.mxu0 0.0
        %3002 = vmatpush1.msra.mxu0 %v2783
        %3003 = vmatprep.subr.mxu0 0.0
        %3004 = vmatpush1.msra.mxu0 %v2782
        %3005 = vmatprep.subr.mxu0 0.0
        %3006 = vmatpush1.msra.mxu0 %v2781
        %3007 = vmatprep.subr.mxu0 0.0
        %3008 = vmatpush1.msra.mxu0 %v2780
        %3009 = vmatprep.subr.mxu0 0.0
        %3010 = vmatpush1.msra.mxu0 %v2779
        %3011 = vmatprep.subr.mxu0 0.0
        %3012 = vmatpush1.msra.mxu0 %v2778
        %3013 = vmatprep.subr.mxu0 0.0
        %3014 = vmatpush1.msra.mxu0 %v2777
        %3015 = vmatprep.subr.mxu0 0.0
        %3016 = vmatpush1.msra.mxu0 %v2776
        %3017 = vmatprep.subr.mxu0 0.0
        %3018 = vmatpush1.msra.mxu0 %v2775
        %3019 = vmatprep.subr.mxu0 0.0
        %3020 = vmatpush1.msra.mxu0 %v2774
        %3021 = vmatprep.subr.mxu0 0.0
        %3022 = vmatpush1.msra.mxu0 %v2773
        %3023 = vmatprep.subr.mxu0 0.0
        %3024 = vmatpush1.msra.mxu0 %v2772
        %3025 = vmatprep.subr.mxu0 0.0
        %3026 = vmatpush1.msra.mxu0 %v2771
        %3027 = vmatprep.subr.mxu0 0.0
        %3028 = vmatpush2.msra.mxu0 %v2706
        %3029 = vmatprep.subr.mxu0 0.0
        %3030 = vmatpush2.msra.mxu0 %v2705
        %3031 = vmatprep.subr.mxu0 0.0
        %3032 = vmatpush2.msra.mxu0 %v2704
        %3033 = vmatprep.subr.mxu0 0.0
        %3034 = vmatpush2.msra.mxu0 %v2703
        %3035 = vmatprep.subr.mxu0 0.0
        %3036 = vmatpush2.msra.mxu0 %v2702
        %3037 = vmatprep.subr.mxu0 0.0
        %3038 = vmatpush2.msra.mxu0 %v2701
        %3039 = vmatprep.subr.mxu0 0.0
        %3040 = vmatpush2.msra.mxu0 %v2700
        %3041 = vmatprep.subr.mxu0 0.0
        %3042 = vmatpush2.msra.mxu0 %v2699
        %3043 = vmatprep.subr.mxu0 0.0
        %3044 = vmatpush2.msra.mxu0 %v2698
        %3045 = vmatprep.subr.mxu0 0.0
        %3046 = vmatpush2.msra.mxu0 %v2697
        %3047 = vmatprep.subr.mxu0 0.0
        %3048 = vmatpush2.msra.mxu0 %v2696
        %3049 = vmatprep.subr.mxu0 0.0
        %3050 = vmatpush2.msra.mxu0 %v2695
        %3051 = vmatprep.subr.mxu0 0.0
        %3052 = vmatpush2.msra.mxu0 %v2694
        %3053 = vmatprep.subr.mxu0 0.0
        %3054 = vmatpush2.msra.mxu0 %v2693
        %3055 = vmatprep.subr.mxu0 0.0
        %3056 = vmatpush2.msra.mxu0 %v2692
        %3057 = vmatprep.subr.mxu0 0.0
        %3058 = vmatpush2.msra.mxu0 %v2691
        %3059 = vmatprep.mubr.f32.mxu0 %v2852
        %3060 = vmatmul.mubr.f32.gmra.mxu0 %v2851
        %v3061 = vpop.f32.mrf.mxu0
        %v3062 = vadd.f32 %v2918, %v3061
        %v3063 = vpop.f32.mrf.mxu0
        %3064 = vmatprep.mubr.f32.mxu0 %v2855
        %3065 = vmatmul.mubr.f32.gmra.mxu0 %v2854
        %v3066 = vpop.f32.mrf.mxu0
        %v3067 = vadd.f32 %v2923, %v3066
        %v3068 = vpop.f32.mrf.mxu0
        %3069 = vmatprep.mubr.f32.mxu0 %v2858
        %3070 = vmatmul.mubr.f32.gmra.mxu0 %v2857
        %v3071 = vpop.f32.mrf.mxu0
        %v3072 = vadd.f32 %v2928, %v3071
        %v3073 = vpop.f32.mrf.mxu0
        %3074 = vmatprep.mubr.f32.mxu0 %v2861
        %3075 = vmatmul.mubr.f32.gmra.mxu0 %v2860
        %v3076 = vpop.f32.mrf.mxu0
        %v3077 = vadd.f32 %v2933, %v3076
        %v3078 = vpop.f32.mrf.mxu0
        %3079 = vmatprep.mubr.f32.mxu0 %v2864
        %3080 = vmatmul.mubr.f32.gmra.mxu0 %v2863
        %v3081 = vpop.f32.mrf.mxu0
        %v3082 = vadd.f32 %v2938, %v3081
        %v3083 = vpop.f32.mrf.mxu0
        %3084 = vmatprep.mubr.f32.mxu0 %v2867
        %3085 = vmatmul.mubr.f32.gmra.mxu0 %v2866
        %v3086 = vpop.f32.mrf.mxu0
        %v3087 = vadd.f32 %v2943, %v3086
        %v3088 = vpop.f32.mrf.mxu0
        %3089 = vmatprep.mubr.f32.mxu0 %v2870
        %3090 = vmatmul.mubr.f32.gmra.mxu0 %v2869
        %v3091 = vpop.f32.mrf.mxu0
        %v3092 = vadd.f32 %v2948, %v3091
        %v3093 = vpop.f32.mrf.mxu0
        %3094 = vmatprep.mubr.f32.mxu0 %v2873
        %3095 = vmatmul.mubr.f32.gmra.mxu0 %v2872
        %v3096 = vpop.f32.mrf.mxu0
        %v3097 = vadd.f32 %v2953, %v3096
        %v3098 = vpop.f32.mrf.mxu0
        %3099 = vmatprep.mubr.f32.mxu0 %v2876
        %3100 = vmatmul.mubr.f32.gmra.mxu0 %v2875
        %v3101 = vpop.f32.mrf.mxu0
        %v3102 = vadd.f32 %v2958, %v3101
        %v3103 = vpop.f32.mrf.mxu0
        %3104 = vmatprep.mubr.f32.mxu0 %v2879
        %3105 = vmatmul.mubr.f32.gmra.mxu0 %v2878
        %v3106 = vpop.f32.mrf.mxu0
        %v3107 = vadd.f32 %v2963, %v3106
        %v3108 = vpop.f32.mrf.mxu0
        %3109 = vmatprep.mubr.f32.mxu0 %v2882
        %3110 = vmatmul.mubr.f32.gmra.mxu0 %v2881
        %v3111 = vpop.f32.mrf.mxu0
        %v3112 = vadd.f32 %v2968, %v3111
        %v3113 = vpop.f32.mrf.mxu0
        %3114 = vmatprep.mubr.f32.mxu0 %v2885
        %3115 = vmatmul.mubr.f32.gmra.mxu0 %v2884
        %v3116 = vpop.f32.mrf.mxu0
        %v3117 = vadd.f32 %v2973, %v3116
        %v3118 = vpop.f32.mrf.mxu0
        %3119 = vmatprep.mubr.f32.mxu0 %v2888
        %3120 = vmatmul.mubr.f32.gmra.mxu0 %v2887
        %v3121 = vpop.f32.mrf.mxu0
        %v3122 = vadd.f32 %v2978, %v3121
        %v3123 = vpop.f32.mrf.mxu0
        %3124 = vmatprep.mubr.f32.mxu0 %v2891
        %3125 = vmatmul.mubr.f32.gmra.mxu0 %v2890
        %v3126 = vpop.f32.mrf.mxu0
        %v3127 = vadd.f32 %v2983, %v3126
        %v3128 = vpop.f32.mrf.mxu0
        %3129 = vmatprep.mubr.f32.mxu0 %v2894
        %3130 = vmatmul.mubr.f32.gmra.mxu0 %v2893
        %v3131 = vpop.f32.mrf.mxu0
        %v3132 = vadd.f32 %v2988, %v3131
        %v3133 = vpop.f32.mrf.mxu0
        %3134 = vmatprep.mubr.f32.mxu0 %v2897
        %3135 = vmatmul.mubr.f32.gmra.mxu0 %v2896
        %v3136 = vpop.f32.mrf.mxu0
        %v3137 = vadd.f32 %v2993, %v3136
        %v3138 = vpop.f32.mrf.mxu0
        %3139 = vdwg.mxu0
        %3140 = vmatprep.subr.mxu0 0.0
        %3141 = vmatpush1.msra.mxu0 %v2850
        %3142 = vmatprep.subr.mxu0 0.0
        %3143 = vmatpush1.msra.mxu0 %v2849
        %3144 = vmatprep.subr.mxu0 0.0
        %3145 = vmatpush1.msra.mxu0 %v2848
        %3146 = vmatprep.subr.mxu0 0.0
        %3147 = vmatpush1.msra.mxu0 %v2847
        %3148 = vmatprep.subr.mxu0 0.0
        %3149 = vmatpush1.msra.mxu0 %v2846
        %3150 = vmatprep.subr.mxu0 0.0
        %3151 = vmatpush1.msra.mxu0 %v2845
        %3152 = vmatprep.subr.mxu0 0.0
        %3153 = vmatpush1.msra.mxu0 %v2844
        %3154 = vmatprep.subr.mxu0 0.0
        %3155 = vmatpush1.msra.mxu0 %v2843
        %3156 = vmatprep.subr.mxu0 0.0
        %3157 = vmatpush1.msra.mxu0 %v2842
        %3158 = vmatprep.subr.mxu0 0.0
        %3159 = vmatpush1.msra.mxu0 %v2841
        %3160 = vmatprep.subr.mxu0 0.0
        %3161 = vmatpush1.msra.mxu0 %v2840
        %3162 = vmatprep.subr.mxu0 0.0
        %3163 = vmatpush1.msra.mxu0 %v2839
        %3164 = vmatprep.subr.mxu0 0.0
        %3165 = vmatpush1.msra.mxu0 %v2838
        %3166 = vmatprep.subr.mxu0 0.0
        %3167 = vmatpush1.msra.mxu0 %v2837
        %3168 = vmatprep.subr.mxu0 0.0
        %3169 = vmatpush1.msra.mxu0 %v2836
        %3170 = vmatprep.subr.mxu0 0.0
        %3171 = vmatpush1.msra.mxu0 %v2835
        %3172 = vmatprep.subr.mxu0 0.0
        %3173 = vmatpush2.msra.mxu0 0.0
        %3174 = vmatprep.subr.mxu0 0.0
        %3175 = vmatpush2.msra.mxu0 0.0
        %3176 = vmatprep.subr.mxu0 0.0
        %3177 = vmatpush2.msra.mxu0 0.0
        %3178 = vmatprep.subr.mxu0 0.0
        %3179 = vmatpush2.msra.mxu0 0.0
        %3180 = vmatprep.subr.mxu0 0.0
        %3181 = vmatpush2.msra.mxu0 0.0
        %3182 = vmatprep.subr.mxu0 0.0
        %3183 = vmatpush2.msra.mxu0 0.0
        %3184 = vmatprep.subr.mxu0 0.0
        %3185 = vmatpush2.msra.mxu0 0.0
        %3186 = vmatprep.subr.mxu0 0.0
        %3187 = vmatpush2.msra.mxu0 0.0
        %3188 = vmatprep.subr.mxu0 0.0
        %3189 = vmatpush2.msra.mxu0 0.0
        %3190 = vmatprep.subr.mxu0 0.0
        %3191 = vmatpush2.msra.mxu0 0.0
        %3192 = vmatprep.subr.mxu0 0.0
        %3193 = vmatpush2.msra.mxu0 0.0
        %3194 = vmatprep.subr.mxu0 0.0
        %3195 = vmatpush2.msra.mxu0 0.0
        %3196 = vmatprep.subr.mxu0 0.0
        %3197 = vmatpush2.msra.mxu0 0.0
        %3198 = vmatprep.subr.mxu0 0.0
        %3199 = vmatpush2.msra.mxu0 0.0
        %3200 = vmatprep.subr.mxu0 0.0
        %3201 = vmatpush2.msra.mxu0 0.0
        %3202 = vmatprep.subr.mxu0 0.0
        %3203 = vmatpush2.msra.mxu0 0.0
        %3204 = vmatprep.mubr.f32.mxu0 0.0
        %3205 = vmatmul.mubr.f32.gmra.mxu0 %v2853
        %v3206 = vpop.f32.mrf.mxu0
        %v3207 = vadd.f32 %v3062, %v3206
        %v3208 = vpop.f32.mrf.mxu0
        %3209 = vmatprep.mubr.f32.mxu0 0.0
        %3210 = vmatmul.mubr.f32.gmra.mxu0 %v2856
        %v3211 = vpop.f32.mrf.mxu0
        %v3212 = vadd.f32 %v3067, %v3211
        %v3213 = vpop.f32.mrf.mxu0
        %3214 = vmatprep.mubr.f32.mxu0 0.0
        %3215 = vmatmul.mubr.f32.gmra.mxu0 %v2859
        %v3216 = vpop.f32.mrf.mxu0
        %v3217 = vadd.f32 %v3072, %v3216
        %v3218 = vpop.f32.mrf.mxu0
        %3219 = vmatprep.mubr.f32.mxu0 0.0
        %3220 = vmatmul.mubr.f32.gmra.mxu0 %v2862
        %v3221 = vpop.f32.mrf.mxu0
        %v3222 = vadd.f32 %v3077, %v3221
        %v3223 = vpop.f32.mrf.mxu0
        %3224 = vmatprep.mubr.f32.mxu0 0.0
        %3225 = vmatmul.mubr.f32.gmra.mxu0 %v2865
        %v3226 = vpop.f32.mrf.mxu0
        %v3227 = vadd.f32 %v3082, %v3226
        %v3228 = vpop.f32.mrf.mxu0
        %3229 = vmatprep.mubr.f32.mxu0 0.0
        %3230 = vmatmul.mubr.f32.gmra.mxu0 %v2868
        %v3231 = vpop.f32.mrf.mxu0
        %v3232 = vadd.f32 %v3087, %v3231
        %v3233 = vpop.f32.mrf.mxu0
        %3234 = vmatprep.mubr.f32.mxu0 0.0
        %3235 = vmatmul.mubr.f32.gmra.mxu0 %v2871
        %v3236 = vpop.f32.mrf.mxu0
        %v3237 = vadd.f32 %v3092, %v3236
        %v3238 = vpop.f32.mrf.mxu0
        %3239 = vmatprep.mubr.f32.mxu0 0.0
        %3240 = vmatmul.mubr.f32.gmra.mxu0 %v2874
        %v3241 = vpop.f32.mrf.mxu0
        %v3242 = vadd.f32 %v3097, %v3241
        %v3243 = vpop.f32.mrf.mxu0
        %3244 = vmatprep.mubr.f32.mxu0 0.0
        %3245 = vmatmul.mubr.f32.gmra.mxu0 %v2877
        %v3246 = vpop.f32.mrf.mxu0
        %v3247 = vadd.f32 %v3102, %v3246
        %v3248 = vpop.f32.mrf.mxu0
        %3249 = vmatprep.mubr.f32.mxu0 0.0
        %3250 = vmatmul.mubr.f32.gmra.mxu0 %v2880
        %v3251 = vpop.f32.mrf.mxu0
        %v3252 = vadd.f32 %v3107, %v3251
        %v3253 = vpop.f32.mrf.mxu0
        %3254 = vmatprep.mubr.f32.mxu0 0.0
        %3255 = vmatmul.mubr.f32.gmra.mxu0 %v2883
        %v3256 = vpop.f32.mrf.mxu0
        %v3257 = vadd.f32 %v3112, %v3256
        %v3258 = vpop.f32.mrf.mxu0
        %3259 = vmatprep.mubr.f32.mxu0 0.0
        %3260 = vmatmul.mubr.f32.gmra.mxu0 %v2886
        %v3261 = vpop.f32.mrf.mxu0
        %v3262 = vadd.f32 %v3117, %v3261
        %v3263 = vpop.f32.mrf.mxu0
        %3264 = vmatprep.mubr.f32.mxu0 0.0
        %3265 = vmatmul.mubr.f32.gmra.mxu0 %v2889
        %v3266 = vpop.f32.mrf.mxu0
        %v3267 = vadd.f32 %v3122, %v3266
        %v3268 = vpop.f32.mrf.mxu0
        %3269 = vmatprep.mubr.f32.mxu0 0.0
        %3270 = vmatmul.mubr.f32.gmra.mxu0 %v2892
        %v3271 = vpop.f32.mrf.mxu0
        %v3272 = vadd.f32 %v3127, %v3271
        %v3273 = vpop.f32.mrf.mxu0
        %3274 = vmatprep.mubr.f32.mxu0 0.0
        %3275 = vmatmul.mubr.f32.gmra.mxu0 %v2895
        %v3276 = vpop.f32.mrf.mxu0
        %v3277 = vadd.f32 %v3132, %v3276
        %v3278 = vpop.f32.mrf.mxu0
        %3279 = vmatprep.mubr.f32.mxu0 0.0
        %3280 = vmatmul.mubr.f32.gmra.mxu0 %v2898
        %v3281 = vpop.f32.mrf.mxu0
        %v3282 = vadd.f32 %v3137, %v3281
        %v3283 = vpop.f32.mrf.mxu0
        %3284 = vdwg.mxu0
        %v3285 = vmax.f32 %v3207, 0.0
        %v3286 = vmax.f32 %v3212, 0.0
        %v3287 = vmax.f32 %v3217, 0.0
        %v3288 = vmax.f32 %v3222, 0.0
        %v3289 = vmax.f32 %v3227, 0.0
        %v3290 = vmax.f32 %v3232, 0.0
        %v3291 = vmax.f32 %v3237, 0.0
        %v3292 = vmax.f32 %v3242, 0.0
        %v3293 = vmax.f32 %v3247, 0.0
        %v3294 = vmax.f32 %v3252, 0.0
        %v3295 = vmax.f32 %v3257, 0.0
        %v3296 = vmax.f32 %v3262, 0.0
        %v3297 = vmax.f32 %v3267, 0.0
        %v3298 = vmax.f32 %v3272, 0.0
        %v3299 = vmax.f32 %v3277, 0.0
        %v3300 = vmax.f32 %v3282, 0.0
        %3317 = vrot.lane.b32.xlu0 %v3285, 1
        %v3318 = vpop.permute.xlu0 %3317
        %3319 = vrot.lane.b32.xlu0 %v3286, 1
        %v3320 = vpop.permute.xlu0 %3319
        %3321 = vrot.lane.b32.xlu0 %v3287, 1
        %v3322 = vpop.permute.xlu0 %3321
        %3323 = vrot.lane.b32.xlu0 %v3288, 1
        %v3324 = vpop.permute.xlu0 %3323
        %3325 = vrot.lane.b32.xlu0 %v3289, 1
        %v3326 = vpop.permute.xlu0 %3325
        %3327 = vrot.lane.b32.xlu0 %v3290, 1
        %v3328 = vpop.permute.xlu0 %3327
        %3329 = vrot.lane.b32.xlu0 %v3291, 1
        %v3330 = vpop.permute.xlu0 %3329
        %3331 = vrot.lane.b32.xlu0 %v3292, 1
        %v3332 = vpop.permute.xlu0 %3331
        %3333 = vrot.lane.b32.xlu0 %v3293, 1
        %v3334 = vpop.permute.xlu0 %3333
        %3335 = vrot.lane.b32.xlu0 %v3294, 1
        %v3336 = vpop.permute.xlu0 %3335
        %3337 = vrot.lane.b32.xlu0 %v3295, 1
        %v3338 = vpop.permute.xlu0 %3337
        %3339 = vrot.lane.b32.xlu0 %v3296, 1
        %v3340 = vpop.permute.xlu0 %3339
        %3341 = vrot.lane.b32.xlu0 %v3297, 1
        %v3342 = vpop.permute.xlu0 %3341
        %3343 = vrot.lane.b32.xlu0 %v3298, 1
        %v3344 = vpop.permute.xlu0 %3343
        %3345 = vrot.lane.b32.xlu0 %v3299, 1
        %v3346 = vpop.permute.xlu0 %3345
        %3347 = vrot.lane.b32.xlu0 %v3300, 1
        %v3348 = vpop.permute.xlu0 %3347
        %v3365 = vsel %vm776, 0.0, %v3318
        %v3366 = vsel %vm776, 0.0, %v3320
        %v3367 = vsel %vm776, 0.0, %v3322
        %v3368 = vsel %vm776, 0.0, %v3324
        %v3369 = vsel %vm776, 0.0, %v3326
        %v3370 = vsel %vm776, 0.0, %v3328
        %v3371 = vsel %vm776, 0.0, %v3330
        %v3372 = vsel %vm776, 0.0, %v3332
        %v3373 = vsel %vm776, 0.0, %v3334
        %v3374 = vsel %vm776, 0.0, %v3336
        %v3375 = vsel %vm776, 0.0, %v3338
        %v3376 = vsel %vm776, 0.0, %v3340
        %v3377 = vsel %vm776, 0.0, %v3342
        %v3378 = vsel %vm776, 0.0, %v3344
        %v3379 = vsel %vm776, 0.0, %v3346
        %v3380 = vsel %vm776, 0.0, %v3348
        %3381 = vrot.lane.b32.xlu0 %v3285, 127
        %v3382 = vpop.permute.xlu0 %3381
        %3383 = vrot.lane.b32.xlu0 %v3286, 127
        %v3384 = vpop.permute.xlu0 %3383
        %3385 = vrot.lane.b32.xlu0 %v3287, 127
        %v3386 = vpop.permute.xlu0 %3385
        %3387 = vrot.lane.b32.xlu0 %v3288, 127
        %v3388 = vpop.permute.xlu0 %3387
        %3389 = vrot.lane.b32.xlu0 %v3289, 127
        %v3390 = vpop.permute.xlu0 %3389
        %3391 = vrot.lane.b32.xlu0 %v3290, 127
        %v3392 = vpop.permute.xlu0 %3391
        %3393 = vrot.lane.b32.xlu0 %v3291, 127
        %v3394 = vpop.permute.xlu0 %3393
        %3395 = vrot.lane.b32.xlu0 %v3292, 127
        %v3396 = vpop.permute.xlu0 %3395
        %3397 = vrot.lane.b32.xlu0 %v3293, 127
        %v3398 = vpop.permute.xlu0 %3397
        %3399 = vrot.lane.b32.xlu0 %v3294, 127
        %v3400 = vpop.permute.xlu0 %3399
        %3401 = vrot.lane.b32.xlu0 %v3295, 127
        %v3402 = vpop.permute.xlu0 %3401
        %3403 = vrot.lane.b32.xlu0 %v3296, 127
        %v3404 = vpop.permute.xlu0 %3403
        %3405 = vrot.lane.b32.xlu0 %v3297, 127
        %v3406 = vpop.permute.xlu0 %3405
        %3407 = vrot.lane.b32.xlu0 %v3298, 127
        %v3408 = vpop.permute.xlu0 %3407
        %3409 = vrot.lane.b32.xlu0 %v3299, 127
        %v3410 = vpop.permute.xlu0 %3409
        %3411 = vrot.lane.b32.xlu0 %v3300, 127
        %v3412 = vpop.permute.xlu0 %3411
        %v3429 = vsel %vm781, %v3382, 0.0
        %v3430 = vsel %vm781, %v3384, 0.0
        %v3431 = vsel %vm781, %v3386, 0.0
        %v3432 = vsel %vm781, %v3388, 0.0
        %v3433 = vsel %vm781, %v3390, 0.0
        %v3434 = vsel %vm781, %v3392, 0.0
        %v3435 = vsel %vm781, %v3394, 0.0
        %v3436 = vsel %vm781, %v3396, 0.0
        %v3437 = vsel %vm781, %v3398, 0.0
        %v3438 = vsel %vm781, %v3400, 0.0
        %v3439 = vsel %vm781, %v3402, 0.0
        %v3440 = vsel %vm781, %v3404, 0.0
        %v3441 = vsel %vm781, %v3406, 0.0
        %v3442 = vsel %vm781, %v3408, 0.0
        %v3443 = vsel %vm781, %v3410, 0.0
        %v3444 = vsel %vm781, %v3412, 0.0
        %v3445 = vld [vmem:[#allocation9] sm:$0xff]
        %v3446 = vld [vmem:[#allocation9 + $0x8] sm:$0xff]
        %v3447 = vld [vmem:[#allocation9 + $0x10] sm:$0xff]
        %v3448 = vld [vmem:[#allocation9 + $0x18] sm:$0xff]
        %v3449 = vld [vmem:[#allocation9 + $0x20] sm:$0xff]
        %v3450 = vld [vmem:[#allocation9 + $0x28] sm:$0xff]
        %v3451 = vld [vmem:[#allocation9 + $0x30] sm:$0xff]
        %v3452 = vld [vmem:[#allocation9 + $0x38] sm:$0xff]
        %v3453 = vld [vmem:[#allocation9 + $0x40] sm:$0xff]
        %v3454 = vld [vmem:[#allocation9 + $0x48] sm:$0xff]
        %v3455 = vld [vmem:[#allocation9 + $0x50] sm:$0xff]
        %v3456 = vld [vmem:[#allocation9 + $0x58] sm:$0xff]
        %v3457 = vld [vmem:[#allocation9 + $0x60] sm:$0xff]
        %v3458 = vld [vmem:[#allocation9 + $0x68] sm:$0xff]
        %v3459 = vld [vmem:[#allocation9 + $0x70] sm:$0xff]
        %v3460 = vld [vmem:[#allocation9 + $0x78] sm:$0xff]
        %v3461 = vld [vmem:[#allocation9 + $0x80] sm:$0xff]
        %v3462 = vld [vmem:[#allocation9 + $0x88] sm:$0xff]
        %v3463 = vld [vmem:[#allocation9 + $0x90] sm:$0xff]
        %v3464 = vld [vmem:[#allocation9 + $0x98] sm:$0xff]
        %v3465 = vld [vmem:[#allocation9 + $0xa0] sm:$0xff]
        %v3466 = vld [vmem:[#allocation9 + $0xa8] sm:$0xff]
        %v3467 = vld [vmem:[#allocation9 + $0xb0] sm:$0xff]
        %v3468 = vld [vmem:[#allocation9 + $0xb8] sm:$0xff]
        %v3469 = vld [vmem:[#allocation9 + $0xc0] sm:$0xff]
        %v3470 = vld [vmem:[#allocation9 + $0xc8] sm:$0xff]
        %v3471 = vld [vmem:[#allocation9 + $0xd0] sm:$0xff]
        %v3472 = vld [vmem:[#allocation9 + $0xd8] sm:$0xff]
        %v3473 = vld [vmem:[#allocation9 + $0xe0] sm:$0xff]
        %v3474 = vld [vmem:[#allocation9 + $0xe8] sm:$0xff]
        %v3475 = vld [vmem:[#allocation9 + $0xf0] sm:$0xff]
        %v3476 = vld [vmem:[#allocation9 + $0xf8] sm:$0xff]
        %v3477 = vld [vmem:[#allocation9 + $0x100] sm:$0xff]
        %v3478 = vld [vmem:[#allocation9 + $0x108] sm:$0xff]
        %v3479 = vld [vmem:[#allocation9 + $0x110] sm:$0xff]
        %v3480 = vld [vmem:[#allocation9 + $0x118] sm:$0xff]
        %v3481 = vld [vmem:[#allocation9 + $0x120] sm:$0xff]
        %v3482 = vld [vmem:[#allocation9 + $0x128] sm:$0xff]
        %v3483 = vld [vmem:[#allocation9 + $0x130] sm:$0xff]
        %v3484 = vld [vmem:[#allocation9 + $0x138] sm:$0xff]
        %v3485 = vld [vmem:[#allocation9 + $0x140] sm:$0xff]
        %v3486 = vld [vmem:[#allocation9 + $0x148] sm:$0xff]
        %v3487 = vld [vmem:[#allocation9 + $0x150] sm:$0xff]
        %v3488 = vld [vmem:[#allocation9 + $0x158] sm:$0xff]
        %v3489 = vld [vmem:[#allocation9 + $0x160] sm:$0xff]
        %v3490 = vld [vmem:[#allocation9 + $0x168] sm:$0xff]
        %v3491 = vld [vmem:[#allocation9 + $0x170] sm:$0xff]
        %v3492 = vld [vmem:[#allocation9 + $0x178] sm:$0xff]
        %v3493 = vld [vmem:[%s14] sm:$0xff]
        %v3494 = vld [vmem:[%s14 + $0x8] sm:$0xff]
        %v3495 = vld [vmem:[%s14 + $0x10] sm:$0xff]
        %v3496 = vld [vmem:[%s14 + $0x18] sm:$0xff]
        %v3497 = vld [vmem:[%s14 + $0x20] sm:$0xff]
        %v3498 = vld [vmem:[%s14 + $0x28] sm:$0xff]
        %v3499 = vld [vmem:[%s14 + $0x30] sm:$0xff]
        %v3500 = vld [vmem:[%s14 + $0x38] sm:$0xff]
        %v3501 = vld [vmem:[%s14 + $0x40] sm:$0xff]
        %v3502 = vld [vmem:[%s14 + $0x48] sm:$0xff]
        %v3503 = vld [vmem:[%s14 + $0x50] sm:$0xff]
        %v3504 = vld [vmem:[%s14 + $0x58] sm:$0xff]
        %v3505 = vld [vmem:[%s14 + $0x60] sm:$0xff]
        %v3506 = vld [vmem:[%s14 + $0x68] sm:$0xff]
        %v3507 = vld [vmem:[%s14 + $0x70] sm:$0xff]
        %v3508 = vld [vmem:[%s14 + $0x78] sm:$0xff]
        %3510 = vset.pattern.permute.xlu0 0
        %3511 = vperm.xlu0 %3510, %v3493
        %v3512 = vpop.permute.xlu0 %3511
        %3515 = vset.pattern.permute.xlu0 0
        %3516 = vperm.xlu0 %3515, %v3494
        %v3517 = vpop.permute.xlu0 %3516
        %3520 = vset.pattern.permute.xlu0 0
        %3521 = vperm.xlu0 %3520, %v3495
        %v3522 = vpop.permute.xlu0 %3521
        %3525 = vset.pattern.permute.xlu0 0
        %3526 = vperm.xlu0 %3525, %v3496
        %v3527 = vpop.permute.xlu0 %3526
        %3530 = vset.pattern.permute.xlu0 0
        %3531 = vperm.xlu0 %3530, %v3497
        %v3532 = vpop.permute.xlu0 %3531
        %3535 = vset.pattern.permute.xlu0 0
        %3536 = vperm.xlu0 %3535, %v3498
        %v3537 = vpop.permute.xlu0 %3536
        %3540 = vset.pattern.permute.xlu0 0
        %3541 = vperm.xlu0 %3540, %v3499
        %v3542 = vpop.permute.xlu0 %3541
        %3545 = vset.pattern.permute.xlu0 0
        %3546 = vperm.xlu0 %3545, %v3500
        %v3547 = vpop.permute.xlu0 %3546
        %3550 = vset.pattern.permute.xlu0 0
        %3551 = vperm.xlu0 %3550, %v3501
        %v3552 = vpop.permute.xlu0 %3551
        %3555 = vset.pattern.permute.xlu0 0
        %3556 = vperm.xlu0 %3555, %v3502
        %v3557 = vpop.permute.xlu0 %3556
        %3560 = vset.pattern.permute.xlu0 0
        %3561 = vperm.xlu0 %3560, %v3503
        %v3562 = vpop.permute.xlu0 %3561
        %3565 = vset.pattern.permute.xlu0 0
        %3566 = vperm.xlu0 %3565, %v3504
        %v3567 = vpop.permute.xlu0 %3566
        %3570 = vset.pattern.permute.xlu0 0
        %3571 = vperm.xlu0 %3570, %v3505
        %v3572 = vpop.permute.xlu0 %3571
        %3575 = vset.pattern.permute.xlu0 0
        %3576 = vperm.xlu0 %3575, %v3506
        %v3577 = vpop.permute.xlu0 %3576
        %3580 = vset.pattern.permute.xlu0 0
        %3581 = vperm.xlu0 %3580, %v3507
        %v3582 = vpop.permute.xlu0 %3581
        %3585 = vset.pattern.permute.xlu0 0
        %3586 = vperm.xlu0 %3585, %v3508
        %v3587 = vpop.permute.xlu0 %3586
        %3589 = vmatprep.subr.mxu0 0.0
        %3590 = vmatpush1.msra.mxu0 %v3380
        %3591 = vmatprep.subr.mxu0 0.0
        %3592 = vmatpush1.msra.mxu0 %v3379
        %3593 = vmatprep.subr.mxu0 0.0
        %3594 = vmatpush1.msra.mxu0 %v3378
        %3595 = vmatprep.subr.mxu0 0.0
        %3596 = vmatpush1.msra.mxu0 %v3377
        %3597 = vmatprep.subr.mxu0 0.0
        %3598 = vmatpush1.msra.mxu0 %v3376
        %3599 = vmatprep.subr.mxu0 0.0
        %3600 = vmatpush1.msra.mxu0 %v3375
        %3601 = vmatprep.subr.mxu0 0.0
        %3602 = vmatpush1.msra.mxu0 %v3374
        %3603 = vmatprep.subr.mxu0 0.0
        %3604 = vmatpush1.msra.mxu0 %v3373
        %3605 = vmatprep.subr.mxu0 0.0
        %3606 = vmatpush1.msra.mxu0 %v3372
        %3607 = vmatprep.subr.mxu0 0.0
        %3608 = vmatpush1.msra.mxu0 %v3371
        %3609 = vmatprep.subr.mxu0 0.0
        %3610 = vmatpush1.msra.mxu0 %v3370
        %3611 = vmatprep.subr.mxu0 0.0
        %3612 = vmatpush1.msra.mxu0 %v3369
        %3613 = vmatprep.subr.mxu0 0.0
        %3614 = vmatpush1.msra.mxu0 %v3368
        %3615 = vmatprep.subr.mxu0 0.0
        %3616 = vmatpush1.msra.mxu0 %v3367
        %3617 = vmatprep.subr.mxu0 0.0
        %3618 = vmatpush1.msra.mxu0 %v3366
        %3619 = vmatprep.subr.mxu0 0.0
        %3620 = vmatpush1.msra.mxu0 %v3365
        %3621 = vmatprep.subr.mxu0 0.0
        %3622 = vmatpush2.msra.mxu0 %v3300
        %3623 = vmatprep.subr.mxu0 0.0
        %3624 = vmatpush2.msra.mxu0 %v3299
        %3625 = vmatprep.subr.mxu0 0.0
        %3626 = vmatpush2.msra.mxu0 %v3298
        %3627 = vmatprep.subr.mxu0 0.0
        %3628 = vmatpush2.msra.mxu0 %v3297
        %3629 = vmatprep.subr.mxu0 0.0
        %3630 = vmatpush2.msra.mxu0 %v3296
        %3631 = vmatprep.subr.mxu0 0.0
        %3632 = vmatpush2.msra.mxu0 %v3295
        %3633 = vmatprep.subr.mxu0 0.0
        %3634 = vmatpush2.msra.mxu0 %v3294
        %3635 = vmatprep.subr.mxu0 0.0
        %3636 = vmatpush2.msra.mxu0 %v3293
        %3637 = vmatprep.subr.mxu0 0.0
        %3638 = vmatpush2.msra.mxu0 %v3292
        %3639 = vmatprep.subr.mxu0 0.0
        %3640 = vmatpush2.msra.mxu0 %v3291
        %3641 = vmatprep.subr.mxu0 0.0
        %3642 = vmatpush2.msra.mxu0 %v3290
        %3643 = vmatprep.subr.mxu0 0.0
        %3644 = vmatpush2.msra.mxu0 %v3289
        %3645 = vmatprep.subr.mxu0 0.0
        %3646 = vmatpush2.msra.mxu0 %v3288
        %3647 = vmatprep.subr.mxu0 0.0
        %3648 = vmatpush2.msra.mxu0 %v3287
        %3649 = vmatprep.subr.mxu0 0.0
        %3650 = vmatpush2.msra.mxu0 %v3286
        %3651 = vmatprep.subr.mxu0 0.0
        %3652 = vmatpush2.msra.mxu0 %v3285
        %3653 = vmatprep.mubr.f32.mxu0 %v3446
        %3654 = vmatmul.mubr.f32.gmra.mxu0 %v3445
        %v3655 = vpop.f32.mrf.mxu0
        %v3656 = vadd.f32 %v3512, %v3655
        %v3657 = vpop.f32.mrf.mxu0
        %3658 = vmatprep.mubr.f32.mxu0 %v3449
        %3659 = vmatmul.mubr.f32.gmra.mxu0 %v3448
        %v3660 = vpop.f32.mrf.mxu0
        %v3661 = vadd.f32 %v3517, %v3660
        %v3662 = vpop.f32.mrf.mxu0
        %3663 = vmatprep.mubr.f32.mxu0 %v3452
        %3664 = vmatmul.mubr.f32.gmra.mxu0 %v3451
        %v3665 = vpop.f32.mrf.mxu0
        %v3666 = vadd.f32 %v3522, %v3665
        %v3667 = vpop.f32.mrf.mxu0
        %3668 = vmatprep.mubr.f32.mxu0 %v3455
        %3669 = vmatmul.mubr.f32.gmra.mxu0 %v3454
        %v3670 = vpop.f32.mrf.mxu0
        %v3671 = vadd.f32 %v3527, %v3670
        %v3672 = vpop.f32.mrf.mxu0
        %3673 = vmatprep.mubr.f32.mxu0 %v3458
        %3674 = vmatmul.mubr.f32.gmra.mxu0 %v3457
        %v3675 = vpop.f32.mrf.mxu0
        %v3676 = vadd.f32 %v3532, %v3675
        %v3677 = vpop.f32.mrf.mxu0
        %3678 = vmatprep.mubr.f32.mxu0 %v3461
        %3679 = vmatmul.mubr.f32.gmra.mxu0 %v3460
        %v3680 = vpop.f32.mrf.mxu0
        %v3681 = vadd.f32 %v3537, %v3680
        %v3682 = vpop.f32.mrf.mxu0
        %3683 = vmatprep.mubr.f32.mxu0 %v3464
        %3684 = vmatmul.mubr.f32.gmra.mxu0 %v3463
        %v3685 = vpop.f32.mrf.mxu0
        %v3686 = vadd.f32 %v3542, %v3685
        %v3687 = vpop.f32.mrf.mxu0
        %3688 = vmatprep.mubr.f32.mxu0 %v3467
        %3689 = vmatmul.mubr.f32.gmra.mxu0 %v3466
        %v3690 = vpop.f32.mrf.mxu0
        %v3691 = vadd.f32 %v3547, %v3690
        %v3692 = vpop.f32.mrf.mxu0
        %3693 = vmatprep.mubr.f32.mxu0 %v3470
        %3694 = vmatmul.mubr.f32.gmra.mxu0 %v3469
        %v3695 = vpop.f32.mrf.mxu0
        %v3696 = vadd.f32 %v3552, %v3695
        %v3697 = vpop.f32.mrf.mxu0
        %3698 = vmatprep.mubr.f32.mxu0 %v3473
        %3699 = vmatmul.mubr.f32.gmra.mxu0 %v3472
        %v3700 = vpop.f32.mrf.mxu0
        %v3701 = vadd.f32 %v3557, %v3700
        %v3702 = vpop.f32.mrf.mxu0
        %3703 = vmatprep.mubr.f32.mxu0 %v3476
        %3704 = vmatmul.mubr.f32.gmra.mxu0 %v3475
        %v3705 = vpop.f32.mrf.mxu0
        %v3706 = vadd.f32 %v3562, %v3705
        %v3707 = vpop.f32.mrf.mxu0
        %3708 = vmatprep.mubr.f32.mxu0 %v3479
        %3709 = vmatmul.mubr.f32.gmra.mxu0 %v3478
        %v3710 = vpop.f32.mrf.mxu0
        %v3711 = vadd.f32 %v3567, %v3710
        %v3712 = vpop.f32.mrf.mxu0
        %3713 = vmatprep.mubr.f32.mxu0 %v3482
        %3714 = vmatmul.mubr.f32.gmra.mxu0 %v3481
        %v3715 = vpop.f32.mrf.mxu0
        %v3716 = vadd.f32 %v3572, %v3715
        %v3717 = vpop.f32.mrf.mxu0
        %3718 = vmatprep.mubr.f32.mxu0 %v3485
        %3719 = vmatmul.mubr.f32.gmra.mxu0 %v3484
        %v3720 = vpop.f32.mrf.mxu0
        %v3721 = vadd.f32 %v3577, %v3720
        %v3722 = vpop.f32.mrf.mxu0
        %3723 = vmatprep.mubr.f32.mxu0 %v3488
        %3724 = vmatmul.mubr.f32.gmra.mxu0 %v3487
        %v3725 = vpop.f32.mrf.mxu0
        %v3726 = vadd.f32 %v3582, %v3725
        %v3727 = vpop.f32.mrf.mxu0
        %3728 = vmatprep.mubr.f32.mxu0 %v3491
        %3729 = vmatmul.mubr.f32.gmra.mxu0 %v3490
        %v3730 = vpop.f32.mrf.mxu0
        %v3731 = vadd.f32 %v3587, %v3730
        %v3732 = vpop.f32.mrf.mxu0
        %3733 = vdwg.mxu0
        %3734 = vmatprep.subr.mxu0 0.0
        %3735 = vmatpush1.msra.mxu0 %v3444
        %3736 = vmatprep.subr.mxu0 0.0
        %3737 = vmatpush1.msra.mxu0 %v3443
        %3738 = vmatprep.subr.mxu0 0.0
        %3739 = vmatpush1.msra.mxu0 %v3442
        %3740 = vmatprep.subr.mxu0 0.0
        %3741 = vmatpush1.msra.mxu0 %v3441
        %3742 = vmatprep.subr.mxu0 0.0
        %3743 = vmatpush1.msra.mxu0 %v3440
        %3744 = vmatprep.subr.mxu0 0.0
        %3745 = vmatpush1.msra.mxu0 %v3439
        %3746 = vmatprep.subr.mxu0 0.0
        %3747 = vmatpush1.msra.mxu0 %v3438
        %3748 = vmatprep.subr.mxu0 0.0
        %3749 = vmatpush1.msra.mxu0 %v3437
        %3750 = vmatprep.subr.mxu0 0.0
        %3751 = vmatpush1.msra.mxu0 %v3436
        %3752 = vmatprep.subr.mxu0 0.0
        %3753 = vmatpush1.msra.mxu0 %v3435
        %3754 = vmatprep.subr.mxu0 0.0
        %3755 = vmatpush1.msra.mxu0 %v3434
        %3756 = vmatprep.subr.mxu0 0.0
        %3757 = vmatpush1.msra.mxu0 %v3433
        %3758 = vmatprep.subr.mxu0 0.0
        %3759 = vmatpush1.msra.mxu0 %v3432
        %3760 = vmatprep.subr.mxu0 0.0
        %3761 = vmatpush1.msra.mxu0 %v3431
        %3762 = vmatprep.subr.mxu0 0.0
        %3763 = vmatpush1.msra.mxu0 %v3430
        %3764 = vmatprep.subr.mxu0 0.0
        %3765 = vmatpush1.msra.mxu0 %v3429
        %3766 = vmatprep.subr.mxu0 0.0
        %3767 = vmatpush2.msra.mxu0 0.0
        %3768 = vmatprep.subr.mxu0 0.0
        %3769 = vmatpush2.msra.mxu0 0.0
        %3770 = vmatprep.subr.mxu0 0.0
        %3771 = vmatpush2.msra.mxu0 0.0
        %3772 = vmatprep.subr.mxu0 0.0
        %3773 = vmatpush2.msra.mxu0 0.0
        %3774 = vmatprep.subr.mxu0 0.0
        %3775 = vmatpush2.msra.mxu0 0.0
        %3776 = vmatprep.subr.mxu0 0.0
        %3777 = vmatpush2.msra.mxu0 0.0
        %3778 = vmatprep.subr.mxu0 0.0
        %3779 = vmatpush2.msra.mxu0 0.0
        %3780 = vmatprep.subr.mxu0 0.0
        %3781 = vmatpush2.msra.mxu0 0.0
        %3782 = vmatprep.subr.mxu0 0.0
        %3783 = vmatpush2.msra.mxu0 0.0
        %3784 = vmatprep.subr.mxu0 0.0
        %3785 = vmatpush2.msra.mxu0 0.0
        %3786 = vmatprep.subr.mxu0 0.0
        %3787 = vmatpush2.msra.mxu0 0.0
        %3788 = vmatprep.subr.mxu0 0.0
        %3789 = vmatpush2.msra.mxu0 0.0
        %3790 = vmatprep.subr.mxu0 0.0
        %3791 = vmatpush2.msra.mxu0 0.0
        %3792 = vmatprep.subr.mxu0 0.0
        %3793 = vmatpush2.msra.mxu0 0.0
        %3794 = vmatprep.subr.mxu0 0.0
        %3795 = vmatpush2.msra.mxu0 0.0
        %3796 = vmatprep.subr.mxu0 0.0
        %3797 = vmatpush2.msra.mxu0 0.0
        %3798 = vmatprep.mubr.f32.mxu0 0.0
        %3799 = vmatmul.mubr.f32.gmra.mxu0 %v3447
        %v3800 = vpop.f32.mrf.mxu0
        %v3801 = vadd.f32 %v3656, %v3800
        %v3802 = vpop.f32.mrf.mxu0
        %3803 = vmatprep.mubr.f32.mxu0 0.0
        %3804 = vmatmul.mubr.f32.gmra.mxu0 %v3450
        %v3805 = vpop.f32.mrf.mxu0
        %v3806 = vadd.f32 %v3661, %v3805
        %v3807 = vpop.f32.mrf.mxu0
        %3808 = vmatprep.mubr.f32.mxu0 0.0
        %3809 = vmatmul.mubr.f32.gmra.mxu0 %v3453
        %v3810 = vpop.f32.mrf.mxu0
        %v3811 = vadd.f32 %v3666, %v3810
        %v3812 = vpop.f32.mrf.mxu0
        %3813 = vmatprep.mubr.f32.mxu0 0.0
        %3814 = vmatmul.mubr.f32.gmra.mxu0 %v3456
        %v3815 = vpop.f32.mrf.mxu0
        %v3816 = vadd.f32 %v3671, %v3815
        %v3817 = vpop.f32.mrf.mxu0
        %3818 = vmatprep.mubr.f32.mxu0 0.0
        %3819 = vmatmul.mubr.f32.gmra.mxu0 %v3459
        %v3820 = vpop.f32.mrf.mxu0
        %v3821 = vadd.f32 %v3676, %v3820
        %v3822 = vpop.f32.mrf.mxu0
        %3823 = vmatprep.mubr.f32.mxu0 0.0
        %3824 = vmatmul.mubr.f32.gmra.mxu0 %v3462
        %v3825 = vpop.f32.mrf.mxu0
        %v3826 = vadd.f32 %v3681, %v3825
        %v3827 = vpop.f32.mrf.mxu0
        %3828 = vmatprep.mubr.f32.mxu0 0.0
        %3829 = vmatmul.mubr.f32.gmra.mxu0 %v3465
        %v3830 = vpop.f32.mrf.mxu0
        %v3831 = vadd.f32 %v3686, %v3830
        %v3832 = vpop.f32.mrf.mxu0
        %3833 = vmatprep.mubr.f32.mxu0 0.0
        %3834 = vmatmul.mubr.f32.gmra.mxu0 %v3468
        %v3835 = vpop.f32.mrf.mxu0
        %v3836 = vadd.f32 %v3691, %v3835
        %v3837 = vpop.f32.mrf.mxu0
        %3838 = vmatprep.mubr.f32.mxu0 0.0
        %3839 = vmatmul.mubr.f32.gmra.mxu0 %v3471
        %v3840 = vpop.f32.mrf.mxu0
        %v3841 = vadd.f32 %v3696, %v3840
        %v3842 = vpop.f32.mrf.mxu0
        %3843 = vmatprep.mubr.f32.mxu0 0.0
        %3844 = vmatmul.mubr.f32.gmra.mxu0 %v3474
        %v3845 = vpop.f32.mrf.mxu0
        %v3846 = vadd.f32 %v3701, %v3845
        %v3847 = vpop.f32.mrf.mxu0
        %3848 = vmatprep.mubr.f32.mxu0 0.0
        %3849 = vmatmul.mubr.f32.gmra.mxu0 %v3477
        %v3850 = vpop.f32.mrf.mxu0
        %v3851 = vadd.f32 %v3706, %v3850
        %v3852 = vpop.f32.mrf.mxu0
        %3853 = vmatprep.mubr.f32.mxu0 0.0
        %3854 = vmatmul.mubr.f32.gmra.mxu0 %v3480
        %v3855 = vpop.f32.mrf.mxu0
        %v3856 = vadd.f32 %v3711, %v3855
        %v3857 = vpop.f32.mrf.mxu0
        %3858 = vmatprep.mubr.f32.mxu0 0.0
        %3859 = vmatmul.mubr.f32.gmra.mxu0 %v3483
        %v3860 = vpop.f32.mrf.mxu0
        %v3861 = vadd.f32 %v3716, %v3860
        %v3862 = vpop.f32.mrf.mxu0
        %3863 = vmatprep.mubr.f32.mxu0 0.0
        %3864 = vmatmul.mubr.f32.gmra.mxu0 %v3486
        %v3865 = vpop.f32.mrf.mxu0
        %v3866 = vadd.f32 %v3721, %v3865
        %v3867 = vpop.f32.mrf.mxu0
        %3868 = vmatprep.mubr.f32.mxu0 0.0
        %3869 = vmatmul.mubr.f32.gmra.mxu0 %v3489
        %v3870 = vpop.f32.mrf.mxu0
        %v3871 = vadd.f32 %v3726, %v3870
        %v3872 = vpop.f32.mrf.mxu0
        %3873 = vmatprep.mubr.f32.mxu0 0.0
        %3874 = vmatmul.mubr.f32.gmra.mxu0 %v3492
        %v3875 = vpop.f32.mrf.mxu0
        %v3876 = vadd.f32 %v3731, %v3875
        %v3877 = vpop.f32.mrf.mxu0
        %3878 = vdwg.mxu0
        %v3879 = vmax.f32 %v3801, 0.0
        %v3880 = vmax.f32 %v3806, 0.0
        %v3881 = vmax.f32 %v3811, 0.0
        %v3882 = vmax.f32 %v3816, 0.0
        %v3883 = vmax.f32 %v3821, 0.0
        %v3884 = vmax.f32 %v3826, 0.0
        %v3885 = vmax.f32 %v3831, 0.0
        %v3886 = vmax.f32 %v3836, 0.0
        %v3887 = vmax.f32 %v3841, 0.0
        %v3888 = vmax.f32 %v3846, 0.0
        %v3889 = vmax.f32 %v3851, 0.0
        %v3890 = vmax.f32 %v3856, 0.0
        %v3891 = vmax.f32 %v3861, 0.0
        %v3892 = vmax.f32 %v3866, 0.0
        %v3893 = vmax.f32 %v3871, 0.0
        %v3894 = vmax.f32 %v3876, 0.0
        %v3895 = vadd.f32 %v3879, %v2675
        %v3896 = vadd.f32 %v3880, %v2676
        %v3897 = vadd.f32 %v3881, %v2677
        %v3898 = vadd.f32 %v3882, %v2678
        %v3899 = vadd.f32 %v3883, %v2679
        %v3900 = vadd.f32 %v3884, %v2680
        %v3901 = vadd.f32 %v3885, %v2681
        %v3902 = vadd.f32 %v3886, %v2682
        %v3903 = vadd.f32 %v3887, %v2683
        %v3904 = vadd.f32 %v3888, %v2684
        %v3905 = vadd.f32 %v3889, %v2685
        %v3906 = vadd.f32 %v3890, %v2686
        %v3907 = vadd.f32 %v3891, %v2687
        %v3908 = vadd.f32 %v3892, %v2688
        %v3909 = vadd.f32 %v3893, %v2689
        %v3910 = vadd.f32 %v3894, %v2690
        %3927 = vrot.lane.b32.xlu0 %v3895, 1
        %v3928 = vpop.permute.xlu0 %3927
        %3929 = vrot.lane.b32.xlu0 %v3896, 1
        %v3930 = vpop.permute.xlu0 %3929
        %3931 = vrot.lane.b32.xlu0 %v3897, 1
        %v3932 = vpop.permute.xlu0 %3931
        %3933 = vrot.lane.b32.xlu0 %v3898, 1
        %v3934 = vpop.permute.xlu0 %3933
        %3935 = vrot.lane.b32.xlu0 %v3899, 1
        %v3936 = vpop.permute.xlu0 %3935
        %3937 = vrot.lane.b32.xlu0 %v3900, 1
        %v3938 = vpop.permute.xlu0 %3937
        %3939 = vrot.lane.b32.xlu0 %v3901, 1
        %v3940 = vpop.permute.xlu0 %3939
        %3941 = vrot.lane.b32.xlu0 %v3902, 1
        %v3942 = vpop.permute.xlu0 %3941
        %3943 = vrot.lane.b32.xlu0 %v3903, 1
        %v3944 = vpop.permute.xlu0 %3943
        %3945 = vrot.lane.b32.xlu0 %v3904, 1
        %v3946 = vpop.permute.xlu0 %3945
        %3947 = vrot.lane.b32.xlu0 %v3905, 1
        %v3948 = vpop.permute.xlu0 %3947
        %3949 = vrot.lane.b32.xlu0 %v3906, 1
        %v3950 = vpop.permute.xlu0 %3949
        %3951 = vrot.lane.b32.xlu0 %v3907, 1
        %v3952 = vpop.permute.xlu0 %3951
        %3953 = vrot.lane.b32.xlu0 %v3908, 1
        %v3954 = vpop.permute.xlu0 %3953
        %3955 = vrot.lane.b32.xlu0 %v3909, 1
        %v3956 = vpop.permute.xlu0 %3955
        %3957 = vrot.lane.b32.xlu0 %v3910, 1
        %v3958 = vpop.permute.xlu0 %3957
        %v3975 = vsel %vm776, 0.0, %v3928
        %v3976 = vsel %vm776, 0.0, %v3930
        %v3977 = vsel %vm776, 0.0, %v3932
        %v3978 = vsel %vm776, 0.0, %v3934
        %v3979 = vsel %vm776, 0.0, %v3936
        %v3980 = vsel %vm776, 0.0, %v3938
        %v3981 = vsel %vm776, 0.0, %v3940
        %v3982 = vsel %vm776, 0.0, %v3942
        %v3983 = vsel %vm776, 0.0, %v3944
        %v3984 = vsel %vm776, 0.0, %v3946
        %v3985 = vsel %vm776, 0.0, %v3948
        %v3986 = vsel %vm776, 0.0, %v3950
        %v3987 = vsel %vm776, 0.0, %v3952
        %v3988 = vsel %vm776, 0.0, %v3954
        %v3989 = vsel %vm776, 0.0, %v3956
        %v3990 = vsel %vm776, 0.0, %v3958
        %3991 = vrot.lane.b32.xlu0 %v3895, 127
        %v3992 = vpop.permute.xlu0 %3991
        %3993 = vrot.lane.b32.xlu0 %v3896, 127
        %v3994 = vpop.permute.xlu0 %3993
        %3995 = vrot.lane.b32.xlu0 %v3897, 127
        %v3996 = vpop.permute.xlu0 %3995
        %3997 = vrot.lane.b32.xlu0 %v3898, 127
        %v3998 = vpop.permute.xlu0 %3997
        %3999 = vrot.lane.b32.xlu0 %v3899, 127
        %v4000 = vpop.permute.xlu0 %3999
        %4001 = vrot.lane.b32.xlu0 %v3900, 127
        %v4002 = vpop.permute.xlu0 %4001
        %4003 = vrot.lane.b32.xlu0 %v3901, 127
        %v4004 = vpop.permute.xlu0 %4003
        %4005 = vrot.lane.b32.xlu0 %v3902, 127
        %v4006 = vpop.permute.xlu0 %4005
        %4007 = vrot.lane.b32.xlu0 %v3903, 127
        %v4008 = vpop.permute.xlu0 %4007
        %4009 = vrot.lane.b32.xlu0 %v3904, 127
        %v4010 = vpop.permute.xlu0 %4009
        %4011 = vrot.lane.b32.xlu0 %v3905, 127
        %v4012 = vpop.permute.xlu0 %4011
        %4013 = vrot.lane.b32.xlu0 %v3906, 127
        %v4014 = vpop.permute.xlu0 %4013
        %4015 = vrot.lane.b32.xlu0 %v3907, 127
        %v4016 = vpop.permute.xlu0 %4015
        %4017 = vrot.lane.b32.xlu0 %v3908, 127
        %v4018 = vpop.permute.xlu0 %4017
        %4019 = vrot.lane.b32.xlu0 %v3909, 127
        %v4020 = vpop.permute.xlu0 %4019
        %4021 = vrot.lane.b32.xlu0 %v3910, 127
        %v4022 = vpop.permute.xlu0 %4021
        %v4039 = vsel %vm781, %v3992, 0.0
        %v4040 = vsel %vm781, %v3994, 0.0
        %v4041 = vsel %vm781, %v3996, 0.0
        %v4042 = vsel %vm781, %v3998, 0.0
        %v4043 = vsel %vm781, %v4000, 0.0
        %v4044 = vsel %vm781, %v4002, 0.0
        %v4045 = vsel %vm781, %v4004, 0.0
        %v4046 = vsel %vm781, %v4006, 0.0
        %v4047 = vsel %vm781, %v4008, 0.0
        %v4048 = vsel %vm781, %v4010, 0.0
        %v4049 = vsel %vm781, %v4012, 0.0
        %v4050 = vsel %vm781, %v4014, 0.0
        %v4051 = vsel %vm781, %v4016, 0.0
        %v4052 = vsel %vm781, %v4018, 0.0
        %v4053 = vsel %vm781, %v4020, 0.0
        %v4054 = vsel %vm781, %v4022, 0.0
        %v4055 = vld [vmem:[#allocation10] sm:$0xff]
        %v4056 = vld [vmem:[#allocation10 + $0x8] sm:$0xff]
        %v4057 = vld [vmem:[#allocation10 + $0x10] sm:$0xff]
        %v4058 = vld [vmem:[#allocation10 + $0x18] sm:$0xff]
        %v4059 = vld [vmem:[#allocation10 + $0x20] sm:$0xff]
        %v4060 = vld [vmem:[#allocation10 + $0x28] sm:$0xff]
        %v4061 = vld [vmem:[#allocation10 + $0x30] sm:$0xff]
        %v4062 = vld [vmem:[#allocation10 + $0x38] sm:$0xff]
        %v4063 = vld [vmem:[#allocation10 + $0x40] sm:$0xff]
        %v4064 = vld [vmem:[#allocation10 + $0x48] sm:$0xff]
        %v4065 = vld [vmem:[#allocation10 + $0x50] sm:$0xff]
        %v4066 = vld [vmem:[#allocation10 + $0x58] sm:$0xff]
        %v4067 = vld [vmem:[#allocation10 + $0x60] sm:$0xff]
        %v4068 = vld [vmem:[#allocation10 + $0x68] sm:$0xff]
        %v4069 = vld [vmem:[#allocation10 + $0x70] sm:$0xff]
        %v4070 = vld [vmem:[#allocation10 + $0x78] sm:$0xff]
        %v4071 = vld [vmem:[#allocation10 + $0x80] sm:$0xff]
        %v4072 = vld [vmem:[#allocation10 + $0x88] sm:$0xff]
        %v4073 = vld [vmem:[#allocation10 + $0x90] sm:$0xff]
        %v4074 = vld [vmem:[#allocation10 + $0x98] sm:$0xff]
        %v4075 = vld [vmem:[#allocation10 + $0xa0] sm:$0xff]
        %v4076 = vld [vmem:[#allocation10 + $0xa8] sm:$0xff]
        %v4077 = vld [vmem:[#allocation10 + $0xb0] sm:$0xff]
        %v4078 = vld [vmem:[#allocation10 + $0xb8] sm:$0xff]
        %v4079 = vld [vmem:[#allocation10 + $0xc0] sm:$0xff]
        %v4080 = vld [vmem:[#allocation10 + $0xc8] sm:$0xff]
        %v4081 = vld [vmem:[#allocation10 + $0xd0] sm:$0xff]
        %v4082 = vld [vmem:[#allocation10 + $0xd8] sm:$0xff]
        %v4083 = vld [vmem:[#allocation10 + $0xe0] sm:$0xff]
        %v4084 = vld [vmem:[#allocation10 + $0xe8] sm:$0xff]
        %v4085 = vld [vmem:[#allocation10 + $0xf0] sm:$0xff]
        %v4086 = vld [vmem:[#allocation10 + $0xf8] sm:$0xff]
        %v4087 = vld [vmem:[#allocation10 + $0x100] sm:$0xff]
        %v4088 = vld [vmem:[#allocation10 + $0x108] sm:$0xff]
        %v4089 = vld [vmem:[#allocation10 + $0x110] sm:$0xff]
        %v4090 = vld [vmem:[#allocation10 + $0x118] sm:$0xff]
        %v4091 = vld [vmem:[#allocation10 + $0x120] sm:$0xff]
        %v4092 = vld [vmem:[#allocation10 + $0x128] sm:$0xff]
        %v4093 = vld [vmem:[#allocation10 + $0x130] sm:$0xff]
        %v4094 = vld [vmem:[#allocation10 + $0x138] sm:$0xff]
        %v4095 = vld [vmem:[#allocation10 + $0x140] sm:$0xff]
        %v4096 = vld [vmem:[#allocation10 + $0x148] sm:$0xff]
        %v4097 = vld [vmem:[#allocation10 + $0x150] sm:$0xff]
        %v4098 = vld [vmem:[#allocation10 + $0x158] sm:$0xff]
        %v4099 = vld [vmem:[#allocation10 + $0x160] sm:$0xff]
        %v4100 = vld [vmem:[#allocation10 + $0x168] sm:$0xff]
        %v4101 = vld [vmem:[#allocation10 + $0x170] sm:$0xff]
        %v4102 = vld [vmem:[#allocation10 + $0x178] sm:$0xff]
        %v4103 = vld [vmem:[%s16] sm:$0xff]
        %v4104 = vld [vmem:[%s16 + $0x8] sm:$0xff]
        %v4105 = vld [vmem:[%s16 + $0x10] sm:$0xff]
        %v4106 = vld [vmem:[%s16 + $0x18] sm:$0xff]
        %v4107 = vld [vmem:[%s16 + $0x20] sm:$0xff]
        %v4108 = vld [vmem:[%s16 + $0x28] sm:$0xff]
        %v4109 = vld [vmem:[%s16 + $0x30] sm:$0xff]
        %v4110 = vld [vmem:[%s16 + $0x38] sm:$0xff]
        %v4111 = vld [vmem:[%s16 + $0x40] sm:$0xff]
        %v4112 = vld [vmem:[%s16 + $0x48] sm:$0xff]
        %v4113 = vld [vmem:[%s16 + $0x50] sm:$0xff]
        %v4114 = vld [vmem:[%s16 + $0x58] sm:$0xff]
        %v4115 = vld [vmem:[%s16 + $0x60] sm:$0xff]
        %v4116 = vld [vmem:[%s16 + $0x68] sm:$0xff]
        %v4117 = vld [vmem:[%s16 + $0x70] sm:$0xff]
        %v4118 = vld [vmem:[%s16 + $0x78] sm:$0xff]
        %4120 = vset.pattern.permute.xlu0 0
        %4121 = vperm.xlu0 %4120, %v4103
        %v4122 = vpop.permute.xlu0 %4121
        %4125 = vset.pattern.permute.xlu0 0
        %4126 = vperm.xlu0 %4125, %v4104
        %v4127 = vpop.permute.xlu0 %4126
        %4130 = vset.pattern.permute.xlu0 0
        %4131 = vperm.xlu0 %4130, %v4105
        %v4132 = vpop.permute.xlu0 %4131
        %4135 = vset.pattern.permute.xlu0 0
        %4136 = vperm.xlu0 %4135, %v4106
        %v4137 = vpop.permute.xlu0 %4136
        %4140 = vset.pattern.permute.xlu0 0
        %4141 = vperm.xlu0 %4140, %v4107
        %v4142 = vpop.permute.xlu0 %4141
        %4145 = vset.pattern.permute.xlu0 0
        %4146 = vperm.xlu0 %4145, %v4108
        %v4147 = vpop.permute.xlu0 %4146
        %4150 = vset.pattern.permute.xlu0 0
        %4151 = vperm.xlu0 %4150, %v4109
        %v4152 = vpop.permute.xlu0 %4151
        %4155 = vset.pattern.permute.xlu0 0
        %4156 = vperm.xlu0 %4155, %v4110
        %v4157 = vpop.permute.xlu0 %4156
        %4160 = vset.pattern.permute.xlu0 0
        %4161 = vperm.xlu0 %4160, %v4111
        %v4162 = vpop.permute.xlu0 %4161
        %4165 = vset.pattern.permute.xlu0 0
        %4166 = vperm.xlu0 %4165, %v4112
        %v4167 = vpop.permute.xlu0 %4166
        %4170 = vset.pattern.permute.xlu0 0
        %4171 = vperm.xlu0 %4170, %v4113
        %v4172 = vpop.permute.xlu0 %4171
        %4175 = vset.pattern.permute.xlu0 0
        %4176 = vperm.xlu0 %4175, %v4114
        %v4177 = vpop.permute.xlu0 %4176
        %4180 = vset.pattern.permute.xlu0 0
        %4181 = vperm.xlu0 %4180, %v4115
        %v4182 = vpop.permute.xlu0 %4181
        %4185 = vset.pattern.permute.xlu0 0
        %4186 = vperm.xlu0 %4185, %v4116
        %v4187 = vpop.permute.xlu0 %4186
        %4190 = vset.pattern.permute.xlu0 0
        %4191 = vperm.xlu0 %4190, %v4117
        %v4192 = vpop.permute.xlu0 %4191
        %4195 = vset.pattern.permute.xlu0 0
        %4196 = vperm.xlu0 %4195, %v4118
        %v4197 = vpop.permute.xlu0 %4196
        %4199 = vmatprep.subr.mxu0 0.0
        %4200 = vmatpush1.msra.mxu0 %v3990
        %4201 = vmatprep.subr.mxu0 0.0
        %4202 = vmatpush1.msra.mxu0 %v3989
        %4203 = vmatprep.subr.mxu0 0.0
        %4204 = vmatpush1.msra.mxu0 %v3988
        %4205 = vmatprep.subr.mxu0 0.0
        %4206 = vmatpush1.msra.mxu0 %v3987
        %4207 = vmatprep.subr.mxu0 0.0
        %4208 = vmatpush1.msra.mxu0 %v3986
        %4209 = vmatprep.subr.mxu0 0.0
        %4210 = vmatpush1.msra.mxu0 %v3985
        %4211 = vmatprep.subr.mxu0 0.0
        %4212 = vmatpush1.msra.mxu0 %v3984
        %4213 = vmatprep.subr.mxu0 0.0
        %4214 = vmatpush1.msra.mxu0 %v3983
        %4215 = vmatprep.subr.mxu0 0.0
        %4216 = vmatpush1.msra.mxu0 %v3982
        %4217 = vmatprep.subr.mxu0 0.0
        %4218 = vmatpush1.msra.mxu0 %v3981
        %4219 = vmatprep.subr.mxu0 0.0
        %4220 = vmatpush1.msra.mxu0 %v3980
        %4221 = vmatprep.subr.mxu0 0.0
        %4222 = vmatpush1.msra.mxu0 %v3979
        %4223 = vmatprep.subr.mxu0 0.0
        %4224 = vmatpush1.msra.mxu0 %v3978
        %4225 = vmatprep.subr.mxu0 0.0
        %4226 = vmatpush1.msra.mxu0 %v3977
        %4227 = vmatprep.subr.mxu0 0.0
        %4228 = vmatpush1.msra.mxu0 %v3976
        %4229 = vmatprep.subr.mxu0 0.0
        %4230 = vmatpush1.msra.mxu0 %v3975
        %4231 = vmatprep.subr.mxu0 0.0
        %4232 = vmatpush2.msra.mxu0 %v3910
        %4233 = vmatprep.subr.mxu0 0.0
        %4234 = vmatpush2.msra.mxu0 %v3909
        %4235 = vmatprep.subr.mxu0 0.0
        %4236 = vmatpush2.msra.mxu0 %v3908
        %4237 = vmatprep.subr.mxu0 0.0
        %4238 = vmatpush2.msra.mxu0 %v3907
        %4239 = vmatprep.subr.mxu0 0.0
        %4240 = vmatpush2.msra.mxu0 %v3906
        %4241 = vmatprep.subr.mxu0 0.0
        %4242 = vmatpush2.msra.mxu0 %v3905
        %4243 = vmatprep.subr.mxu0 0.0
        %4244 = vmatpush2.msra.mxu0 %v3904
        %4245 = vmatprep.subr.mxu0 0.0
        %4246 = vmatpush2.msra.mxu0 %v3903
        %4247 = vmatprep.subr.mxu0 0.0
        %4248 = vmatpush2.msra.mxu0 %v3902
        %4249 = vmatprep.subr.mxu0 0.0
        %4250 = vmatpush2.msra.mxu0 %v3901
        %4251 = vmatprep.subr.mxu0 0.0
        %4252 = vmatpush2.msra.mxu0 %v3900
        %4253 = vmatprep.subr.mxu0 0.0
        %4254 = vmatpush2.msra.mxu0 %v3899
        %4255 = vmatprep.subr.mxu0 0.0
        %4256 = vmatpush2.msra.mxu0 %v3898
        %4257 = vmatprep.subr.mxu0 0.0
        %4258 = vmatpush2.msra.mxu0 %v3897
        %4259 = vmatprep.subr.mxu0 0.0
        %4260 = vmatpush2.msra.mxu0 %v3896
        %4261 = vmatprep.subr.mxu0 0.0
        %4262 = vmatpush2.msra.mxu0 %v3895
        %4263 = vmatprep.mubr.f32.mxu0 %v4056
        %4264 = vmatmul.mubr.f32.gmra.mxu0 %v4055
        %v4265 = vpop.f32.mrf.mxu0
        %v4266 = vadd.f32 %v4122, %v4265
        %v4267 = vpop.f32.mrf.mxu0
        %4268 = vmatprep.mubr.f32.mxu0 %v4059
        %4269 = vmatmul.mubr.f32.gmra.mxu0 %v4058
        %v4270 = vpop.f32.mrf.mxu0
        %v4271 = vadd.f32 %v4127, %v4270
        %v4272 = vpop.f32.mrf.mxu0
        %4273 = vmatprep.mubr.f32.mxu0 %v4062
        %4274 = vmatmul.mubr.f32.gmra.mxu0 %v4061
        %v4275 = vpop.f32.mrf.mxu0
        %v4276 = vadd.f32 %v4132, %v4275
        %v4277 = vpop.f32.mrf.mxu0
        %4278 = vmatprep.mubr.f32.mxu0 %v4065
        %4279 = vmatmul.mubr.f32.gmra.mxu0 %v4064
        %v4280 = vpop.f32.mrf.mxu0
        %v4281 = vadd.f32 %v4137, %v4280
        %v4282 = vpop.f32.mrf.mxu0
        %4283 = vmatprep.mubr.f32.mxu0 %v4068
        %4284 = vmatmul.mubr.f32.gmra.mxu0 %v4067
        %v4285 = vpop.f32.mrf.mxu0
        %v4286 = vadd.f32 %v4142, %v4285
        %v4287 = vpop.f32.mrf.mxu0
        %4288 = vmatprep.mubr.f32.mxu0 %v4071
        %4289 = vmatmul.mubr.f32.gmra.mxu0 %v4070
        %v4290 = vpop.f32.mrf.mxu0
        %v4291 = vadd.f32 %v4147, %v4290
        %v4292 = vpop.f32.mrf.mxu0
        %4293 = vmatprep.mubr.f32.mxu0 %v4074
        %4294 = vmatmul.mubr.f32.gmra.mxu0 %v4073
        %v4295 = vpop.f32.mrf.mxu0
        %v4296 = vadd.f32 %v4152, %v4295
        %v4297 = vpop.f32.mrf.mxu0
        %4298 = vmatprep.mubr.f32.mxu0 %v4077
        %4299 = vmatmul.mubr.f32.gmra.mxu0 %v4076
        %v4300 = vpop.f32.mrf.mxu0
        %v4301 = vadd.f32 %v4157, %v4300
        %v4302 = vpop.f32.mrf.mxu0
        %4303 = vmatprep.mubr.f32.mxu0 %v4080
        %4304 = vmatmul.mubr.f32.gmra.mxu0 %v4079
        %v4305 = vpop.f32.mrf.mxu0
        %v4306 = vadd.f32 %v4162, %v4305
        %v4307 = vpop.f32.mrf.mxu0
        %4308 = vmatprep.mubr.f32.mxu0 %v4083
        %4309 = vmatmul.mubr.f32.gmra.mxu0 %v4082
        %v4310 = vpop.f32.mrf.mxu0
        %v4311 = vadd.f32 %v4167, %v4310
        %v4312 = vpop.f32.mrf.mxu0
        %4313 = vmatprep.mubr.f32.mxu0 %v4086
        %4314 = vmatmul.mubr.f32.gmra.mxu0 %v4085
        %v4315 = vpop.f32.mrf.mxu0
        %v4316 = vadd.f32 %v4172, %v4315
        %v4317 = vpop.f32.mrf.mxu0
        %4318 = vmatprep.mubr.f32.mxu0 %v4089
        %4319 = vmatmul.mubr.f32.gmra.mxu0 %v4088
        %v4320 = vpop.f32.mrf.mxu0
        %v4321 = vadd.f32 %v4177, %v4320
        %v4322 = vpop.f32.mrf.mxu0
        %4323 = vmatprep.mubr.f32.mxu0 %v4092
        %4324 = vmatmul.mubr.f32.gmra.mxu0 %v4091
        %v4325 = vpop.f32.mrf.mxu0
        %v4326 = vadd.f32 %v4182, %v4325
        %v4327 = vpop.f32.mrf.mxu0
        %4328 = vmatprep.mubr.f32.mxu0 %v4095
        %4329 = vmatmul.mubr.f32.gmra.mxu0 %v4094
        %v4330 = vpop.f32.mrf.mxu0
        %v4331 = vadd.f32 %v4187, %v4330
        %v4332 = vpop.f32.mrf.mxu0
        %4333 = vmatprep.mubr.f32.mxu0 %v4098
        %4334 = vmatmul.mubr.f32.gmra.mxu0 %v4097
        %v4335 = vpop.f32.mrf.mxu0
        %v4336 = vadd.f32 %v4192, %v4335
        %v4337 = vpop.f32.mrf.mxu0
        %4338 = vmatprep.mubr.f32.mxu0 %v4101
        %4339 = vmatmul.mubr.f32.gmra.mxu0 %v4100
        %v4340 = vpop.f32.mrf.mxu0
        %v4341 = vadd.f32 %v4197, %v4340
        %v4342 = vpop.f32.mrf.mxu0
        %4343 = vdwg.mxu0
        %4344 = vmatprep.subr.mxu0 0.0
        %4345 = vmatpush1.msra.mxu0 %v4054
        %4346 = vmatprep.subr.mxu0 0.0
        %4347 = vmatpush1.msra.mxu0 %v4053
        %4348 = vmatprep.subr.mxu0 0.0
        %4349 = vmatpush1.msra.mxu0 %v4052
        %4350 = vmatprep.subr.mxu0 0.0
        %4351 = vmatpush1.msra.mxu0 %v4051
        %4352 = vmatprep.subr.mxu0 0.0
        %4353 = vmatpush1.msra.mxu0 %v4050
        %4354 = vmatprep.subr.mxu0 0.0
        %4355 = vmatpush1.msra.mxu0 %v4049
        %4356 = vmatprep.subr.mxu0 0.0
        %4357 = vmatpush1.msra.mxu0 %v4048
        %4358 = vmatprep.subr.mxu0 0.0
        %4359 = vmatpush1.msra.mxu0 %v4047
        %4360 = vmatprep.subr.mxu0 0.0
        %4361 = vmatpush1.msra.mxu0 %v4046
        %4362 = vmatprep.subr.mxu0 0.0
        %4363 = vmatpush1.msra.mxu0 %v4045
        %4364 = vmatprep.subr.mxu0 0.0
        %4365 = vmatpush1.msra.mxu0 %v4044
        %4366 = vmatprep.subr.mxu0 0.0
        %4367 = vmatpush1.msra.mxu0 %v4043
        %4368 = vmatprep.subr.mxu0 0.0
        %4369 = vmatpush1.msra.mxu0 %v4042
        %4370 = vmatprep.subr.mxu0 0.0
        %4371 = vmatpush1.msra.mxu0 %v4041
        %4372 = vmatprep.subr.mxu0 0.0
        %4373 = vmatpush1.msra.mxu0 %v4040
        %4374 = vmatprep.subr.mxu0 0.0
        %4375 = vmatpush1.msra.mxu0 %v4039
        %4376 = vmatprep.subr.mxu0 0.0
        %4377 = vmatpush2.msra.mxu0 0.0
        %4378 = vmatprep.subr.mxu0 0.0
        %4379 = vmatpush2.msra.mxu0 0.0
        %4380 = vmatprep.subr.mxu0 0.0
        %4381 = vmatpush2.msra.mxu0 0.0
        %4382 = vmatprep.subr.mxu0 0.0
        %4383 = vmatpush2.msra.mxu0 0.0
        %4384 = vmatprep.subr.mxu0 0.0
        %4385 = vmatpush2.msra.mxu0 0.0
        %4386 = vmatprep.subr.mxu0 0.0
        %4387 = vmatpush2.msra.mxu0 0.0
        %4388 = vmatprep.subr.mxu0 0.0
        %4389 = vmatpush2.msra.mxu0 0.0
        %4390 = vmatprep.subr.mxu0 0.0
        %4391 = vmatpush2.msra.mxu0 0.0
        %4392 = vmatprep.subr.mxu0 0.0
        %4393 = vmatpush2.msra.mxu0 0.0
        %4394 = vmatprep.subr.mxu0 0.0
        %4395 = vmatpush2.msra.mxu0 0.0
        %4396 = vmatprep.subr.mxu0 0.0
        %4397 = vmatpush2.msra.mxu0 0.0
        %4398 = vmatprep.subr.mxu0 0.0
        %4399 = vmatpush2.msra.mxu0 0.0
        %4400 = vmatprep.subr.mxu0 0.0
        %4401 = vmatpush2.msra.mxu0 0.0
        %4402 = vmatprep.subr.mxu0 0.0
        %4403 = vmatpush2.msra.mxu0 0.0
        %4404 = vmatprep.subr.mxu0 0.0
        %4405 = vmatpush2.msra.mxu0 0.0
        %4406 = vmatprep.subr.mxu0 0.0
        %4407 = vmatpush2.msra.mxu0 0.0
        %4408 = vmatprep.mubr.f32.mxu0 0.0
        %4409 = vmatmul.mubr.f32.gmra.mxu0 %v4057
        %v4410 = vpop.f32.mrf.mxu0
        %v4411 = vadd.f32 %v4266, %v4410
        %v4412 = vpop.f32.mrf.mxu0
        %4413 = vmatprep.mubr.f32.mxu0 0.0
        %4414 = vmatmul.mubr.f32.gmra.mxu0 %v4060
        %v4415 = vpop.f32.mrf.mxu0
        %v4416 = vadd.f32 %v4271, %v4415
        %v4417 = vpop.f32.mrf.mxu0
        %4418 = vmatprep.mubr.f32.mxu0 0.0
        %4419 = vmatmul.mubr.f32.gmra.mxu0 %v4063
        %v4420 = vpop.f32.mrf.mxu0
        %v4421 = vadd.f32 %v4276, %v4420
        %v4422 = vpop.f32.mrf.mxu0
        %4423 = vmatprep.mubr.f32.mxu0 0.0
        %4424 = vmatmul.mubr.f32.gmra.mxu0 %v4066
        %v4425 = vpop.f32.mrf.mxu0
        %v4426 = vadd.f32 %v4281, %v4425
        %v4427 = vpop.f32.mrf.mxu0
        %4428 = vmatprep.mubr.f32.mxu0 0.0
        %4429 = vmatmul.mubr.f32.gmra.mxu0 %v4069
        %v4430 = vpop.f32.mrf.mxu0
        %v4431 = vadd.f32 %v4286, %v4430
        %v4432 = vpop.f32.mrf.mxu0
        %4433 = vmatprep.mubr.f32.mxu0 0.0
        %4434 = vmatmul.mubr.f32.gmra.mxu0 %v4072
        %v4435 = vpop.f32.mrf.mxu0
        %v4436 = vadd.f32 %v4291, %v4435
        %v4437 = vpop.f32.mrf.mxu0
        %4438 = vmatprep.mubr.f32.mxu0 0.0
        %4439 = vmatmul.mubr.f32.gmra.mxu0 %v4075
        %v4440 = vpop.f32.mrf.mxu0
        %v4441 = vadd.f32 %v4296, %v4440
        %v4442 = vpop.f32.mrf.mxu0
        %4443 = vmatprep.mubr.f32.mxu0 0.0
        %4444 = vmatmul.mubr.f32.gmra.mxu0 %v4078
        %v4445 = vpop.f32.mrf.mxu0
        %v4446 = vadd.f32 %v4301, %v4445
        %v4447 = vpop.f32.mrf.mxu0
        %4448 = vmatprep.mubr.f32.mxu0 0.0
        %4449 = vmatmul.mubr.f32.gmra.mxu0 %v4081
        %v4450 = vpop.f32.mrf.mxu0
        %v4451 = vadd.f32 %v4306, %v4450
        %v4452 = vpop.f32.mrf.mxu0
        %4453 = vmatprep.mubr.f32.mxu0 0.0
        %4454 = vmatmul.mubr.f32.gmra.mxu0 %v4084
        %v4455 = vpop.f32.mrf.mxu0
        %v4456 = vadd.f32 %v4311, %v4455
        %v4457 = vpop.f32.mrf.mxu0
        %4458 = vmatprep.mubr.f32.mxu0 0.0
        %4459 = vmatmul.mubr.f32.gmra.mxu0 %v4087
        %v4460 = vpop.f32.mrf.mxu0
        %v4461 = vadd.f32 %v4316, %v4460
        %v4462 = vpop.f32.mrf.mxu0
        %4463 = vmatprep.mubr.f32.mxu0 0.0
        %4464 = vmatmul.mubr.f32.gmra.mxu0 %v4090
        %v4465 = vpop.f32.mrf.mxu0
        %v4466 = vadd.f32 %v4321, %v4465
        %v4467 = vpop.f32.mrf.mxu0
        %4468 = vmatprep.mubr.f32.mxu0 0.0
        %4469 = vmatmul.mubr.f32.gmra.mxu0 %v4093
        %v4470 = vpop.f32.mrf.mxu0
        %v4471 = vadd.f32 %v4326, %v4470
        %v4472 = vpop.f32.mrf.mxu0
        %4473 = vmatprep.mubr.f32.mxu0 0.0
        %4474 = vmatmul.mubr.f32.gmra.mxu0 %v4096
        %v4475 = vpop.f32.mrf.mxu0
        %v4476 = vadd.f32 %v4331, %v4475
        %v4477 = vpop.f32.mrf.mxu0
        %4478 = vmatprep.mubr.f32.mxu0 0.0
        %4479 = vmatmul.mubr.f32.gmra.mxu0 %v4099
        %v4480 = vpop.f32.mrf.mxu0
        %v4481 = vadd.f32 %v4336, %v4480
        %v4482 = vpop.f32.mrf.mxu0
        %4483 = vmatprep.mubr.f32.mxu0 0.0
        %4484 = vmatmul.mubr.f32.gmra.mxu0 %v4102
        %v4485 = vpop.f32.mrf.mxu0
        %v4486 = vadd.f32 %v4341, %v4485
        %v4487 = vpop.f32.mrf.mxu0
        %4488 = vdwg.mxu0
        %v4489 = vmax.f32 %v4411, 0.0
        %v4490 = vmax.f32 %v4416, 0.0
        %v4491 = vmax.f32 %v4421, 0.0
        %v4492 = vmax.f32 %v4426, 0.0
        %v4493 = vmax.f32 %v4431, 0.0
        %v4494 = vmax.f32 %v4436, 0.0
        %v4495 = vmax.f32 %v4441, 0.0
        %v4496 = vmax.f32 %v4446, 0.0
        %v4497 = vmax.f32 %v4451, 0.0
        %v4498 = vmax.f32 %v4456, 0.0
        %v4499 = vmax.f32 %v4461, 0.0
        %v4500 = vmax.f32 %v4466, 0.0
        %v4501 = vmax.f32 %v4471, 0.0
        %v4502 = vmax.f32 %v4476, 0.0
        %v4503 = vmax.f32 %v4481, 0.0
        %v4504 = vmax.f32 %v4486, 0.0
        %4521 = vrot.lane.b32.xlu0 %v4489, 1
        %v4522 = vpop.permute.xlu0 %4521
        %4523 = vrot.lane.b32.xlu0 %v4490, 1
        %v4524 = vpop.permute.xlu0 %4523
        %4525 = vrot.lane.b32.xlu0 %v4491, 1
        %v4526 = vpop.permute.xlu0 %4525
        %4527 = vrot.lane.b32.xlu0 %v4492, 1
        %v4528 = vpop.permute.xlu0 %4527
        %4529 = vrot.lane.b32.xlu0 %v4493, 1
        %v4530 = vpop.permute.xlu0 %4529
        %4531 = vrot.lane.b32.xlu0 %v4494, 1
        %v4532 = vpop.permute.xlu0 %4531
        %4533 = vrot.lane.b32.xlu0 %v4495, 1
        %v4534 = vpop.permute.xlu0 %4533
        %4535 = vrot.lane.b32.xlu0 %v4496, 1
        %v4536 = vpop.permute.xlu0 %4535
        %4537 = vrot.lane.b32.xlu0 %v4497, 1
        %v4538 = vpop.permute.xlu0 %4537
        %4539 = vrot.lane.b32.xlu0 %v4498, 1
        %v4540 = vpop.permute.xlu0 %4539
        %4541 = vrot.lane.b32.xlu0 %v4499, 1
        %v4542 = vpop.permute.xlu0 %4541
        %4543 = vrot.lane.b32.xlu0 %v4500, 1
        %v4544 = vpop.permute.xlu0 %4543
        %4545 = vrot.lane.b32.xlu0 %v4501, 1
        %v4546 = vpop.permute.xlu0 %4545
        %4547 = vrot.lane.b32.xlu0 %v4502, 1
        %v4548 = vpop.permute.xlu0 %4547
        %4549 = vrot.lane.b32.xlu0 %v4503, 1
        %v4550 = vpop.permute.xlu0 %4549
        %4551 = vrot.lane.b32.xlu0 %v4504, 1
        %v4552 = vpop.permute.xlu0 %4551
        %v4569 = vsel %vm776, 0.0, %v4522
        %v4570 = vsel %vm776, 0.0, %v4524
        %v4571 = vsel %vm776, 0.0, %v4526
        %v4572 = vsel %vm776, 0.0, %v4528
        %v4573 = vsel %vm776, 0.0, %v4530
        %v4574 = vsel %vm776, 0.0, %v4532
        %v4575 = vsel %vm776, 0.0, %v4534
        %v4576 = vsel %vm776, 0.0, %v4536
        %v4577 = vsel %vm776, 0.0, %v4538
        %v4578 = vsel %vm776, 0.0, %v4540
        %v4579 = vsel %vm776, 0.0, %v4542
        %v4580 = vsel %vm776, 0.0, %v4544
        %v4581 = vsel %vm776, 0.0, %v4546
        %v4582 = vsel %vm776, 0.0, %v4548
        %v4583 = vsel %vm776, 0.0, %v4550
        %v4584 = vsel %vm776, 0.0, %v4552
        %4585 = vrot.lane.b32.xlu0 %v4489, 127
        %v4586 = vpop.permute.xlu0 %4585
        %4587 = vrot.lane.b32.xlu0 %v4490, 127
        %v4588 = vpop.permute.xlu0 %4587
        %4589 = vrot.lane.b32.xlu0 %v4491, 127
        %v4590 = vpop.permute.xlu0 %4589
        %4591 = vrot.lane.b32.xlu0 %v4492, 127
        %v4592 = vpop.permute.xlu0 %4591
        %4593 = vrot.lane.b32.xlu0 %v4493, 127
        %v4594 = vpop.permute.xlu0 %4593
        %4595 = vrot.lane.b32.xlu0 %v4494, 127
        %v4596 = vpop.permute.xlu0 %4595
        %4597 = vrot.lane.b32.xlu0 %v4495, 127
        %v4598 = vpop.permute.xlu0 %4597
        %4599 = vrot.lane.b32.xlu0 %v4496, 127
        %v4600 = vpop.permute.xlu0 %4599
        %4601 = vrot.lane.b32.xlu0 %v4497, 127
        %v4602 = vpop.permute.xlu0 %4601
        %4603 = vrot.lane.b32.xlu0 %v4498, 127
        %v4604 = vpop.permute.xlu0 %4603
        %4605 = vrot.lane.b32.xlu0 %v4499, 127
        %v4606 = vpop.permute.xlu0 %4605
        %4607 = vrot.lane.b32.xlu0 %v4500, 127
        %v4608 = vpop.permute.xlu0 %4607
        %4609 = vrot.lane.b32.xlu0 %v4501, 127
        %v4610 = vpop.permute.xlu0 %4609
        %4611 = vrot.lane.b32.xlu0 %v4502, 127
        %v4612 = vpop.permute.xlu0 %4611
        %4613 = vrot.lane.b32.xlu0 %v4503, 127
        %v4614 = vpop.permute.xlu0 %4613
        %4615 = vrot.lane.b32.xlu0 %v4504, 127
        %v4616 = vpop.permute.xlu0 %4615
        %v4633 = vsel %vm781, %v4586, 0.0
        %v4634 = vsel %vm781, %v4588, 0.0
        %v4635 = vsel %vm781, %v4590, 0.0
        %v4636 = vsel %vm781, %v4592, 0.0
        %v4637 = vsel %vm781, %v4594, 0.0
        %v4638 = vsel %vm781, %v4596, 0.0
        %v4639 = vsel %vm781, %v4598, 0.0
        %v4640 = vsel %vm781, %v4600, 0.0
        %v4641 = vsel %vm781, %v4602, 0.0
        %v4642 = vsel %vm781, %v4604, 0.0
        %v4643 = vsel %vm781, %v4606, 0.0
        %v4644 = vsel %vm781, %v4608, 0.0
        %v4645 = vsel %vm781, %v4610, 0.0
        %v4646 = vsel %vm781, %v4612, 0.0
        %v4647 = vsel %vm781, %v4614, 0.0
        %v4648 = vsel %vm781, %v4616, 0.0
        %v4649 = vld [vmem:[#allocation12] sm:$0xff]
        %v4650 = vld [vmem:[#allocation12 + $0x8] sm:$0xff]
        %v4651 = vld [vmem:[#allocation12 + $0x10] sm:$0xff]
        %v4652 = vld [vmem:[#allocation12 + $0x18] sm:$0xff]
        %v4653 = vld [vmem:[#allocation12 + $0x20] sm:$0xff]
        %v4654 = vld [vmem:[#allocation12 + $0x28] sm:$0xff]
        %v4655 = vld [vmem:[#allocation12 + $0x30] sm:$0xff]
        %v4656 = vld [vmem:[#allocation12 + $0x38] sm:$0xff]
        %v4657 = vld [vmem:[#allocation12 + $0x40] sm:$0xff]
        %v4658 = vld [vmem:[#allocation12 + $0x48] sm:$0xff]
        %v4659 = vld [vmem:[#allocation12 + $0x50] sm:$0xff]
        %v4660 = vld [vmem:[#allocation12 + $0x58] sm:$0xff]
        %v4661 = vld [vmem:[#allocation12 + $0x60] sm:$0xff]
        %v4662 = vld [vmem:[#allocation12 + $0x68] sm:$0xff]
        %v4663 = vld [vmem:[#allocation12 + $0x70] sm:$0xff]
        %v4664 = vld [vmem:[#allocation12 + $0x78] sm:$0xff]
        %v4665 = vld [vmem:[#allocation12 + $0x80] sm:$0xff]
        %v4666 = vld [vmem:[#allocation12 + $0x88] sm:$0xff]
        %v4667 = vld [vmem:[#allocation12 + $0x90] sm:$0xff]
        %v4668 = vld [vmem:[#allocation12 + $0x98] sm:$0xff]
        %v4669 = vld [vmem:[#allocation12 + $0xa0] sm:$0xff]
        %v4670 = vld [vmem:[#allocation12 + $0xa8] sm:$0xff]
        %v4671 = vld [vmem:[#allocation12 + $0xb0] sm:$0xff]
        %v4672 = vld [vmem:[#allocation12 + $0xb8] sm:$0xff]
        %v4673 = vld [vmem:[#allocation12 + $0xc0] sm:$0xff]
        %v4674 = vld [vmem:[#allocation12 + $0xc8] sm:$0xff]
        %v4675 = vld [vmem:[#allocation12 + $0xd0] sm:$0xff]
        %v4676 = vld [vmem:[#allocation12 + $0xd8] sm:$0xff]
        %v4677 = vld [vmem:[#allocation12 + $0xe0] sm:$0xff]
        %v4678 = vld [vmem:[#allocation12 + $0xe8] sm:$0xff]
        %v4679 = vld [vmem:[#allocation12 + $0xf0] sm:$0xff]
        %v4680 = vld [vmem:[#allocation12 + $0xf8] sm:$0xff]
        %v4681 = vld [vmem:[#allocation12 + $0x100] sm:$0xff]
        %v4682 = vld [vmem:[#allocation12 + $0x108] sm:$0xff]
        %v4683 = vld [vmem:[#allocation12 + $0x110] sm:$0xff]
        %v4684 = vld [vmem:[#allocation12 + $0x118] sm:$0xff]
        %v4685 = vld [vmem:[#allocation12 + $0x120] sm:$0xff]
        %v4686 = vld [vmem:[#allocation12 + $0x128] sm:$0xff]
        %v4687 = vld [vmem:[#allocation12 + $0x130] sm:$0xff]
        %v4688 = vld [vmem:[#allocation12 + $0x138] sm:$0xff]
        %v4689 = vld [vmem:[#allocation12 + $0x140] sm:$0xff]
        %v4690 = vld [vmem:[#allocation12 + $0x148] sm:$0xff]
        %v4691 = vld [vmem:[#allocation12 + $0x150] sm:$0xff]
        %v4692 = vld [vmem:[#allocation12 + $0x158] sm:$0xff]
        %v4693 = vld [vmem:[#allocation12 + $0x160] sm:$0xff]
        %v4694 = vld [vmem:[#allocation12 + $0x168] sm:$0xff]
        %v4695 = vld [vmem:[#allocation12 + $0x170] sm:$0xff]
        %v4696 = vld [vmem:[#allocation12 + $0x178] sm:$0xff]
        %v4697 = vld [vmem:[%s18] sm:$0xff]
        %v4698 = vld [vmem:[%s18 + $0x8] sm:$0xff]
        %v4699 = vld [vmem:[%s18 + $0x10] sm:$0xff]
        %v4700 = vld [vmem:[%s18 + $0x18] sm:$0xff]
        %v4701 = vld [vmem:[%s18 + $0x20] sm:$0xff]
        %v4702 = vld [vmem:[%s18 + $0x28] sm:$0xff]
        %v4703 = vld [vmem:[%s18 + $0x30] sm:$0xff]
        %v4704 = vld [vmem:[%s18 + $0x38] sm:$0xff]
        %v4705 = vld [vmem:[%s18 + $0x40] sm:$0xff]
        %v4706 = vld [vmem:[%s18 + $0x48] sm:$0xff]
        %v4707 = vld [vmem:[%s18 + $0x50] sm:$0xff]
        %v4708 = vld [vmem:[%s18 + $0x58] sm:$0xff]
        %v4709 = vld [vmem:[%s18 + $0x60] sm:$0xff]
        %v4710 = vld [vmem:[%s18 + $0x68] sm:$0xff]
        %v4711 = vld [vmem:[%s18 + $0x70] sm:$0xff]
        %v4712 = vld [vmem:[%s18 + $0x78] sm:$0xff]
        %4714 = vset.pattern.permute.xlu0 0
        %4715 = vperm.xlu0 %4714, %v4697
        %v4716 = vpop.permute.xlu0 %4715
        %4719 = vset.pattern.permute.xlu0 0
        %4720 = vperm.xlu0 %4719, %v4698
        %v4721 = vpop.permute.xlu0 %4720
        %4724 = vset.pattern.permute.xlu0 0
        %4725 = vperm.xlu0 %4724, %v4699
        %v4726 = vpop.permute.xlu0 %4725
        %4729 = vset.pattern.permute.xlu0 0
        %4730 = vperm.xlu0 %4729, %v4700
        %v4731 = vpop.permute.xlu0 %4730
        %4734 = vset.pattern.permute.xlu0 0
        %4735 = vperm.xlu0 %4734, %v4701
        %v4736 = vpop.permute.xlu0 %4735
        %4739 = vset.pattern.permute.xlu0 0
        %4740 = vperm.xlu0 %4739, %v4702
        %v4741 = vpop.permute.xlu0 %4740
        %4744 = vset.pattern.permute.xlu0 0
        %4745 = vperm.xlu0 %4744, %v4703
        %v4746 = vpop.permute.xlu0 %4745
        %4749 = vset.pattern.permute.xlu0 0
        %4750 = vperm.xlu0 %4749, %v4704
        %v4751 = vpop.permute.xlu0 %4750
        %4754 = vset.pattern.permute.xlu0 0
        %4755 = vperm.xlu0 %4754, %v4705
        %v4756 = vpop.permute.xlu0 %4755
        %4759 = vset.pattern.permute.xlu0 0
        %4760 = vperm.xlu0 %4759, %v4706
        %v4761 = vpop.permute.xlu0 %4760
        %4764 = vset.pattern.permute.xlu0 0
        %4765 = vperm.xlu0 %4764, %v4707
        %v4766 = vpop.permute.xlu0 %4765
        %4769 = vset.pattern.permute.xlu0 0
        %4770 = vperm.xlu0 %4769, %v4708
        %v4771 = vpop.permute.xlu0 %4770
        %4774 = vset.pattern.permute.xlu0 0
        %4775 = vperm.xlu0 %4774, %v4709
        %v4776 = vpop.permute.xlu0 %4775
        %4779 = vset.pattern.permute.xlu0 0
        %4780 = vperm.xlu0 %4779, %v4710
        %v4781 = vpop.permute.xlu0 %4780
        %4784 = vset.pattern.permute.xlu0 0
        %4785 = vperm.xlu0 %4784, %v4711
        %v4786 = vpop.permute.xlu0 %4785
        %4789 = vset.pattern.permute.xlu0 0
        %4790 = vperm.xlu0 %4789, %v4712
        %v4791 = vpop.permute.xlu0 %4790
        %4793 = vmatprep.subr.mxu0 0.0
        %4794 = vmatpush1.msra.mxu0 %v4584
        %4795 = vmatprep.subr.mxu0 0.0
        %4796 = vmatpush1.msra.mxu0 %v4583
        %4797 = vmatprep.subr.mxu0 0.0
        %4798 = vmatpush1.msra.mxu0 %v4582
        %4799 = vmatprep.subr.mxu0 0.0
        %4800 = vmatpush1.msra.mxu0 %v4581
        %4801 = vmatprep.subr.mxu0 0.0
        %4802 = vmatpush1.msra.mxu0 %v4580
        %4803 = vmatprep.subr.mxu0 0.0
        %4804 = vmatpush1.msra.mxu0 %v4579
        %4805 = vmatprep.subr.mxu0 0.0
        %4806 = vmatpush1.msra.mxu0 %v4578
        %4807 = vmatprep.subr.mxu0 0.0
        %4808 = vmatpush1.msra.mxu0 %v4577
        %4809 = vmatprep.subr.mxu0 0.0
        %4810 = vmatpush1.msra.mxu0 %v4576
        %4811 = vmatprep.subr.mxu0 0.0
        %4812 = vmatpush1.msra.mxu0 %v4575
        %4813 = vmatprep.subr.mxu0 0.0
        %4814 = vmatpush1.msra.mxu0 %v4574
        %4815 = vmatprep.subr.mxu0 0.0
        %4816 = vmatpush1.msra.mxu0 %v4573
        %4817 = vmatprep.subr.mxu0 0.0
        %4818 = vmatpush1.msra.mxu0 %v4572
        %4819 = vmatprep.subr.mxu0 0.0
        %4820 = vmatpush1.msra.mxu0 %v4571
        %4821 = vmatprep.subr.mxu0 0.0
        %4822 = vmatpush1.msra.mxu0 %v4570
        %4823 = vmatprep.subr.mxu0 0.0
        %4824 = vmatpush1.msra.mxu0 %v4569
        %4825 = vmatprep.subr.mxu0 0.0
        %4826 = vmatpush2.msra.mxu0 %v4504
        %4827 = vmatprep.subr.mxu0 0.0
        %4828 = vmatpush2.msra.mxu0 %v4503
        %4829 = vmatprep.subr.mxu0 0.0
        %4830 = vmatpush2.msra.mxu0 %v4502
        %4831 = vmatprep.subr.mxu0 0.0
        %4832 = vmatpush2.msra.mxu0 %v4501
        %4833 = vmatprep.subr.mxu0 0.0
        %4834 = vmatpush2.msra.mxu0 %v4500
        %4835 = vmatprep.subr.mxu0 0.0
        %4836 = vmatpush2.msra.mxu0 %v4499
        %4837 = vmatprep.subr.mxu0 0.0
        %4838 = vmatpush2.msra.mxu0 %v4498
        %4839 = vmatprep.subr.mxu0 0.0
        %4840 = vmatpush2.msra.mxu0 %v4497
        %4841 = vmatprep.subr.mxu0 0.0
        %4842 = vmatpush2.msra.mxu0 %v4496
        %4843 = vmatprep.subr.mxu0 0.0
        %4844 = vmatpush2.msra.mxu0 %v4495
        %4845 = vmatprep.subr.mxu0 0.0
        %4846 = vmatpush2.msra.mxu0 %v4494
        %4847 = vmatprep.subr.mxu0 0.0
        %4848 = vmatpush2.msra.mxu0 %v4493
        %4849 = vmatprep.subr.mxu0 0.0
        %4850 = vmatpush2.msra.mxu0 %v4492
        %4851 = vmatprep.subr.mxu0 0.0
        %4852 = vmatpush2.msra.mxu0 %v4491
        %4853 = vmatprep.subr.mxu0 0.0
        %4854 = vmatpush2.msra.mxu0 %v4490
        %4855 = vmatprep.subr.mxu0 0.0
        %4856 = vmatpush2.msra.mxu0 %v4489
        %4857 = vmatprep.mubr.f32.mxu0 %v4650
        %4858 = vmatmul.mubr.f32.gmra.mxu0 %v4649
        %v4859 = vpop.f32.mrf.mxu0
        %v4860 = vadd.f32 %v4716, %v4859
        %v4861 = vpop.f32.mrf.mxu0
        %4862 = vmatprep.mubr.f32.mxu0 %v4653
        %4863 = vmatmul.mubr.f32.gmra.mxu0 %v4652
        %v4864 = vpop.f32.mrf.mxu0
        %v4865 = vadd.f32 %v4721, %v4864
        %v4866 = vpop.f32.mrf.mxu0
        %4867 = vmatprep.mubr.f32.mxu0 %v4656
        %4868 = vmatmul.mubr.f32.gmra.mxu0 %v4655
        %v4869 = vpop.f32.mrf.mxu0
        %v4870 = vadd.f32 %v4726, %v4869
        %v4871 = vpop.f32.mrf.mxu0
        %4872 = vmatprep.mubr.f32.mxu0 %v4659
        %4873 = vmatmul.mubr.f32.gmra.mxu0 %v4658
        %v4874 = vpop.f32.mrf.mxu0
        %v4875 = vadd.f32 %v4731, %v4874
        %v4876 = vpop.f32.mrf.mxu0
        %4877 = vmatprep.mubr.f32.mxu0 %v4662
        %4878 = vmatmul.mubr.f32.gmra.mxu0 %v4661
        %v4879 = vpop.f32.mrf.mxu0
        %v4880 = vadd.f32 %v4736, %v4879
        %v4881 = vpop.f32.mrf.mxu0
        %4882 = vmatprep.mubr.f32.mxu0 %v4665
        %4883 = vmatmul.mubr.f32.gmra.mxu0 %v4664
        %v4884 = vpop.f32.mrf.mxu0
        %v4885 = vadd.f32 %v4741, %v4884
        %v4886 = vpop.f32.mrf.mxu0
        %4887 = vmatprep.mubr.f32.mxu0 %v4668
        %4888 = vmatmul.mubr.f32.gmra.mxu0 %v4667
        %v4889 = vpop.f32.mrf.mxu0
        %v4890 = vadd.f32 %v4746, %v4889
        %v4891 = vpop.f32.mrf.mxu0
        %4892 = vmatprep.mubr.f32.mxu0 %v4671
        %4893 = vmatmul.mubr.f32.gmra.mxu0 %v4670
        %v4894 = vpop.f32.mrf.mxu0
        %v4895 = vadd.f32 %v4751, %v4894
        %v4896 = vpop.f32.mrf.mxu0
        %4897 = vmatprep.mubr.f32.mxu0 %v4674
        %4898 = vmatmul.mubr.f32.gmra.mxu0 %v4673
        %v4899 = vpop.f32.mrf.mxu0
        %v4900 = vadd.f32 %v4756, %v4899
        %v4901 = vpop.f32.mrf.mxu0
        %4902 = vmatprep.mubr.f32.mxu0 %v4677
        %4903 = vmatmul.mubr.f32.gmra.mxu0 %v4676
        %v4904 = vpop.f32.mrf.mxu0
        %v4905 = vadd.f32 %v4761, %v4904
        %v4906 = vpop.f32.mrf.mxu0
        %4907 = vmatprep.mubr.f32.mxu0 %v4680
        %4908 = vmatmul.mubr.f32.gmra.mxu0 %v4679
        %v4909 = vpop.f32.mrf.mxu0
        %v4910 = vadd.f32 %v4766, %v4909
        %v4911 = vpop.f32.mrf.mxu0
        %4912 = vmatprep.mubr.f32.mxu0 %v4683
        %4913 = vmatmul.mubr.f32.gmra.mxu0 %v4682
        %v4914 = vpop.f32.mrf.mxu0
        %v4915 = vadd.f32 %v4771, %v4914
        %v4916 = vpop.f32.mrf.mxu0
        %4917 = vmatprep.mubr.f32.mxu0 %v4686
        %4918 = vmatmul.mubr.f32.gmra.mxu0 %v4685
        %v4919 = vpop.f32.mrf.mxu0
        %v4920 = vadd.f32 %v4776, %v4919
        %v4921 = vpop.f32.mrf.mxu0
        %4922 = vmatprep.mubr.f32.mxu0 %v4689
        %4923 = vmatmul.mubr.f32.gmra.mxu0 %v4688
        %v4924 = vpop.f32.mrf.mxu0
        %v4925 = vadd.f32 %v4781, %v4924
        %v4926 = vpop.f32.mrf.mxu0
        %4927 = vmatprep.mubr.f32.mxu0 %v4692
        %4928 = vmatmul.mubr.f32.gmra.mxu0 %v4691
        %v4929 = vpop.f32.mrf.mxu0
        %v4930 = vadd.f32 %v4786, %v4929
        %v4931 = vpop.f32.mrf.mxu0
        %4932 = vmatprep.mubr.f32.mxu0 %v4695
        %4933 = vmatmul.mubr.f32.gmra.mxu0 %v4694
        %v4934 = vpop.f32.mrf.mxu0
        %v4935 = vadd.f32 %v4791, %v4934
        %v4936 = vpop.f32.mrf.mxu0
        %4937 = vdwg.mxu0
        %4938 = vmatprep.subr.mxu0 0.0
        %4939 = vmatpush1.msra.mxu0 %v4648
        %4940 = vmatprep.subr.mxu0 0.0
        %4941 = vmatpush1.msra.mxu0 %v4647
        %4942 = vmatprep.subr.mxu0 0.0
        %4943 = vmatpush1.msra.mxu0 %v4646
        %4944 = vmatprep.subr.mxu0 0.0
        %4945 = vmatpush1.msra.mxu0 %v4645
        %4946 = vmatprep.subr.mxu0 0.0
        %4947 = vmatpush1.msra.mxu0 %v4644
        %4948 = vmatprep.subr.mxu0 0.0
        %4949 = vmatpush1.msra.mxu0 %v4643
        %4950 = vmatprep.subr.mxu0 0.0
        %4951 = vmatpush1.msra.mxu0 %v4642
        %4952 = vmatprep.subr.mxu0 0.0
        %4953 = vmatpush1.msra.mxu0 %v4641
        %4954 = vmatprep.subr.mxu0 0.0
        %4955 = vmatpush1.msra.mxu0 %v4640
        %4956 = vmatprep.subr.mxu0 0.0
        %4957 = vmatpush1.msra.mxu0 %v4639
        %4958 = vmatprep.subr.mxu0 0.0
        %4959 = vmatpush1.msra.mxu0 %v4638
        %4960 = vmatprep.subr.mxu0 0.0
        %4961 = vmatpush1.msra.mxu0 %v4637
        %4962 = vmatprep.subr.mxu0 0.0
        %4963 = vmatpush1.msra.mxu0 %v4636
        %4964 = vmatprep.subr.mxu0 0.0
        %4965 = vmatpush1.msra.mxu0 %v4635
        %4966 = vmatprep.subr.mxu0 0.0
        %4967 = vmatpush1.msra.mxu0 %v4634
        %4968 = vmatprep.subr.mxu0 0.0
        %4969 = vmatpush1.msra.mxu0 %v4633
        %4970 = vmatprep.subr.mxu0 0.0
        %4971 = vmatpush2.msra.mxu0 0.0
        %4972 = vmatprep.subr.mxu0 0.0
        %4973 = vmatpush2.msra.mxu0 0.0
        %4974 = vmatprep.subr.mxu0 0.0
        %4975 = vmatpush2.msra.mxu0 0.0
        %4976 = vmatprep.subr.mxu0 0.0
        %4977 = vmatpush2.msra.mxu0 0.0
        %4978 = vmatprep.subr.mxu0 0.0
        %4979 = vmatpush2.msra.mxu0 0.0
        %4980 = vmatprep.subr.mxu0 0.0
        %4981 = vmatpush2.msra.mxu0 0.0
        %4982 = vmatprep.subr.mxu0 0.0
        %4983 = vmatpush2.msra.mxu0 0.0
        %4984 = vmatprep.subr.mxu0 0.0
        %4985 = vmatpush2.msra.mxu0 0.0
        %4986 = vmatprep.subr.mxu0 0.0
        %4987 = vmatpush2.msra.mxu0 0.0
        %4988 = vmatprep.subr.mxu0 0.0
        %4989 = vmatpush2.msra.mxu0 0.0
        %4990 = vmatprep.subr.mxu0 0.0
        %4991 = vmatpush2.msra.mxu0 0.0
        %4992 = vmatprep.subr.mxu0 0.0
        %4993 = vmatpush2.msra.mxu0 0.0
        %4994 = vmatprep.subr.mxu0 0.0
        %4995 = vmatpush2.msra.mxu0 0.0
        %4996 = vmatprep.subr.mxu0 0.0
        %4997 = vmatpush2.msra.mxu0 0.0
        %4998 = vmatprep.subr.mxu0 0.0
        %4999 = vmatpush2.msra.mxu0 0.0
        %5000 = vmatprep.subr.mxu0 0.0
        %5001 = vmatpush2.msra.mxu0 0.0
        %5002 = vmatprep.mubr.f32.mxu0 0.0
        %5003 = vmatmul.mubr.f32.gmra.mxu0 %v4651
        %v5004 = vpop.f32.mrf.mxu0
        %v5005 = vadd.f32 %v4860, %v5004
        %v5006 = vpop.f32.mrf.mxu0
        %5007 = vmatprep.mubr.f32.mxu0 0.0
        %5008 = vmatmul.mubr.f32.gmra.mxu0 %v4654
        %v5009 = vpop.f32.mrf.mxu0
        %v5010 = vadd.f32 %v4865, %v5009
        %v5011 = vpop.f32.mrf.mxu0
        %5012 = vmatprep.mubr.f32.mxu0 0.0
        %5013 = vmatmul.mubr.f32.gmra.mxu0 %v4657
        %v5014 = vpop.f32.mrf.mxu0
        %v5015 = vadd.f32 %v4870, %v5014
        %v5016 = vpop.f32.mrf.mxu0
        %5017 = vmatprep.mubr.f32.mxu0 0.0
        %5018 = vmatmul.mubr.f32.gmra.mxu0 %v4660
        %v5019 = vpop.f32.mrf.mxu0
        %v5020 = vadd.f32 %v4875, %v5019
        %v5021 = vpop.f32.mrf.mxu0
        %5022 = vmatprep.mubr.f32.mxu0 0.0
        %5023 = vmatmul.mubr.f32.gmra.mxu0 %v4663
        %v5024 = vpop.f32.mrf.mxu0
        %v5025 = vadd.f32 %v4880, %v5024
        %v5026 = vpop.f32.mrf.mxu0
        %5027 = vmatprep.mubr.f32.mxu0 0.0
        %5028 = vmatmul.mubr.f32.gmra.mxu0 %v4666
        %v5029 = vpop.f32.mrf.mxu0
        %v5030 = vadd.f32 %v4885, %v5029
        %v5031 = vpop.f32.mrf.mxu0
        %5032 = vmatprep.mubr.f32.mxu0 0.0
        %5033 = vmatmul.mubr.f32.gmra.mxu0 %v4669
        %v5034 = vpop.f32.mrf.mxu0
        %v5035 = vadd.f32 %v4890, %v5034
        %v5036 = vpop.f32.mrf.mxu0
        %5037 = vmatprep.mubr.f32.mxu0 0.0
        %5038 = vmatmul.mubr.f32.gmra.mxu0 %v4672
        %v5039 = vpop.f32.mrf.mxu0
        %v5040 = vadd.f32 %v4895, %v5039
        %v5041 = vpop.f32.mrf.mxu0
        %5042 = vmatprep.mubr.f32.mxu0 0.0
        %5043 = vmatmul.mubr.f32.gmra.mxu0 %v4675
        %v5044 = vpop.f32.mrf.mxu0
        %v5045 = vadd.f32 %v4900, %v5044
        %v5046 = vpop.f32.mrf.mxu0
        %5047 = vmatprep.mubr.f32.mxu0 0.0
        %5048 = vmatmul.mubr.f32.gmra.mxu0 %v4678
        %v5049 = vpop.f32.mrf.mxu0
        %v5050 = vadd.f32 %v4905, %v5049
        %v5051 = vpop.f32.mrf.mxu0
        %5052 = vmatprep.mubr.f32.mxu0 0.0
        %5053 = vmatmul.mubr.f32.gmra.mxu0 %v4681
        %v5054 = vpop.f32.mrf.mxu0
        %v5055 = vadd.f32 %v4910, %v5054
        %v5056 = vpop.f32.mrf.mxu0
        %5057 = vmatprep.mubr.f32.mxu0 0.0
        %5058 = vmatmul.mubr.f32.gmra.mxu0 %v4684
        %v5059 = vpop.f32.mrf.mxu0
        %v5060 = vadd.f32 %v4915, %v5059
        %v5061 = vpop.f32.mrf.mxu0
        %5062 = vmatprep.mubr.f32.mxu0 0.0
        %5063 = vmatmul.mubr.f32.gmra.mxu0 %v4687
        %v5064 = vpop.f32.mrf.mxu0
        %v5065 = vadd.f32 %v4920, %v5064
        %v5066 = vpop.f32.mrf.mxu0
        %5067 = vmatprep.mubr.f32.mxu0 0.0
        %5068 = vmatmul.mubr.f32.gmra.mxu0 %v4690
        %v5069 = vpop.f32.mrf.mxu0
        %v5070 = vadd.f32 %v4925, %v5069
        %v5071 = vpop.f32.mrf.mxu0
        %5072 = vmatprep.mubr.f32.mxu0 0.0
        %5073 = vmatmul.mubr.f32.gmra.mxu0 %v4693
        %v5074 = vpop.f32.mrf.mxu0
        %v5075 = vadd.f32 %v4930, %v5074
        %v5076 = vpop.f32.mrf.mxu0
        %5077 = vmatprep.mubr.f32.mxu0 0.0
        %5078 = vmatmul.mubr.f32.gmra.mxu0 %v4696
        %v5079 = vpop.f32.mrf.mxu0
        %v5080 = vadd.f32 %v4935, %v5079
        %v5081 = vpop.f32.mrf.mxu0
        %5082 = vdwg.mxu0
        %v5083 = vmax.f32 %v5005, 0.0
        %v5084 = vmax.f32 %v5010, 0.0
        %v5085 = vmax.f32 %v5015, 0.0
        %v5086 = vmax.f32 %v5020, 0.0
        %v5087 = vmax.f32 %v5025, 0.0
        %v5088 = vmax.f32 %v5030, 0.0
        %v5089 = vmax.f32 %v5035, 0.0
        %v5090 = vmax.f32 %v5040, 0.0
        %v5091 = vmax.f32 %v5045, 0.0
        %v5092 = vmax.f32 %v5050, 0.0
        %v5093 = vmax.f32 %v5055, 0.0
        %v5094 = vmax.f32 %v5060, 0.0
        %v5095 = vmax.f32 %v5065, 0.0
        %v5096 = vmax.f32 %v5070, 0.0
        %v5097 = vmax.f32 %v5075, 0.0
        %v5098 = vmax.f32 %v5080, 0.0
        %v5099 = vadd.f32 %v5083, %v3879
        %v5100 = vadd.f32 %v5084, %v3880
        %v5101 = vadd.f32 %v5085, %v3881
        %v5102 = vadd.f32 %v5086, %v3882
        %v5103 = vadd.f32 %v5087, %v3883
        %v5104 = vadd.f32 %v5088, %v3884
        %v5105 = vadd.f32 %v5089, %v3885
        %v5106 = vadd.f32 %v5090, %v3886
        %v5107 = vadd.f32 %v5091, %v3887
        %v5108 = vadd.f32 %v5092, %v3888
        %v5109 = vadd.f32 %v5093, %v3889
        %v5110 = vadd.f32 %v5094, %v3890
        %v5111 = vadd.f32 %v5095, %v3891
        %v5112 = vadd.f32 %v5096, %v3892
        %v5113 = vadd.f32 %v5097, %v3893
        %v5114 = vadd.f32 %v5098, %v3894
        %5131 = vrot.lane.b32.xlu0 %v5099, 1
        %v5132 = vpop.permute.xlu0 %5131
        %5133 = vrot.lane.b32.xlu0 %v5100, 1
        %v5134 = vpop.permute.xlu0 %5133
        %5135 = vrot.lane.b32.xlu0 %v5101, 1
        %v5136 = vpop.permute.xlu0 %5135
        %5137 = vrot.lane.b32.xlu0 %v5102, 1
        %v5138 = vpop.permute.xlu0 %5137
        %5139 = vrot.lane.b32.xlu0 %v5103, 1
        %v5140 = vpop.permute.xlu0 %5139
        %5141 = vrot.lane.b32.xlu0 %v5104, 1
        %v5142 = vpop.permute.xlu0 %5141
        %5143 = vrot.lane.b32.xlu0 %v5105, 1
        %v5144 = vpop.permute.xlu0 %5143
        %5145 = vrot.lane.b32.xlu0 %v5106, 1
        %v5146 = vpop.permute.xlu0 %5145
        %5147 = vrot.lane.b32.xlu0 %v5107, 1
        %v5148 = vpop.permute.xlu0 %5147
        %5149 = vrot.lane.b32.xlu0 %v5108, 1
        %v5150 = vpop.permute.xlu0 %5149
        %5151 = vrot.lane.b32.xlu0 %v5109, 1
        %v5152 = vpop.permute.xlu0 %5151
        %5153 = vrot.lane.b32.xlu0 %v5110, 1
        %v5154 = vpop.permute.xlu0 %5153
        %5155 = vrot.lane.b32.xlu0 %v5111, 1
        %v5156 = vpop.permute.xlu0 %5155
        %5157 = vrot.lane.b32.xlu0 %v5112, 1
        %v5158 = vpop.permute.xlu0 %5157
        %5159 = vrot.lane.b32.xlu0 %v5113, 1
        %v5160 = vpop.permute.xlu0 %5159
        %5161 = vrot.lane.b32.xlu0 %v5114, 1
        %v5162 = vpop.permute.xlu0 %5161
        %v5179 = vsel %vm776, 0.0, %v5132
        %v5180 = vsel %vm776, 0.0, %v5134
        %v5181 = vsel %vm776, 0.0, %v5136
        %v5182 = vsel %vm776, 0.0, %v5138
        %v5183 = vsel %vm776, 0.0, %v5140
        %v5184 = vsel %vm776, 0.0, %v5142
        %v5185 = vsel %vm776, 0.0, %v5144
        %v5186 = vsel %vm776, 0.0, %v5146
        %v5187 = vsel %vm776, 0.0, %v5148
        %v5188 = vsel %vm776, 0.0, %v5150
        %v5189 = vsel %vm776, 0.0, %v5152
        %v5190 = vsel %vm776, 0.0, %v5154
        %v5191 = vsel %vm776, 0.0, %v5156
        %v5192 = vsel %vm776, 0.0, %v5158
        %v5193 = vsel %vm776, 0.0, %v5160
        %v5194 = vsel %vm776, 0.0, %v5162
        %5195 = vrot.lane.b32.xlu0 %v5099, 127
        %v5196 = vpop.permute.xlu0 %5195
        %5197 = vrot.lane.b32.xlu0 %v5100, 127
        %v5198 = vpop.permute.xlu0 %5197
        %5199 = vrot.lane.b32.xlu0 %v5101, 127
        %v5200 = vpop.permute.xlu0 %5199
        %5201 = vrot.lane.b32.xlu0 %v5102, 127
        %v5202 = vpop.permute.xlu0 %5201
        %5203 = vrot.lane.b32.xlu0 %v5103, 127
        %v5204 = vpop.permute.xlu0 %5203
        %5205 = vrot.lane.b32.xlu0 %v5104, 127
        %v5206 = vpop.permute.xlu0 %5205
        %5207 = vrot.lane.b32.xlu0 %v5105, 127
        %v5208 = vpop.permute.xlu0 %5207
        %5209 = vrot.lane.b32.xlu0 %v5106, 127
        %v5210 = vpop.permute.xlu0 %5209
        %5211 = vrot.lane.b32.xlu0 %v5107, 127
        %v5212 = vpop.permute.xlu0 %5211
        %5213 = vrot.lane.b32.xlu0 %v5108, 127
        %v5214 = vpop.permute.xlu0 %5213
        %5215 = vrot.lane.b32.xlu0 %v5109, 127
        %v5216 = vpop.permute.xlu0 %5215
        %5217 = vrot.lane.b32.xlu0 %v5110, 127
        %v5218 = vpop.permute.xlu0 %5217
        %5219 = vrot.lane.b32.xlu0 %v5111, 127
        %v5220 = vpop.permute.xlu0 %5219
        %5221 = vrot.lane.b32.xlu0 %v5112, 127
        %v5222 = vpop.permute.xlu0 %5221
        %5223 = vrot.lane.b32.xlu0 %v5113, 127
        %v5224 = vpop.permute.xlu0 %5223
        %5225 = vrot.lane.b32.xlu0 %v5114, 127
        %v5226 = vpop.permute.xlu0 %5225
        %v5243 = vsel %vm781, %v5196, 0.0
        %v5244 = vsel %vm781, %v5198, 0.0
        %v5245 = vsel %vm781, %v5200, 0.0
        %v5246 = vsel %vm781, %v5202, 0.0
        %v5247 = vsel %vm781, %v5204, 0.0
        %v5248 = vsel %vm781, %v5206, 0.0
        %v5249 = vsel %vm781, %v5208, 0.0
        %v5250 = vsel %vm781, %v5210, 0.0
        %v5251 = vsel %vm781, %v5212, 0.0
        %v5252 = vsel %vm781, %v5214, 0.0
        %v5253 = vsel %vm781, %v5216, 0.0
        %v5254 = vsel %vm781, %v5218, 0.0
        %v5255 = vsel %vm781, %v5220, 0.0
        %v5256 = vsel %vm781, %v5222, 0.0
        %v5257 = vsel %vm781, %v5224, 0.0
        %v5258 = vsel %vm781, %v5226, 0.0
        %v5259 = vld [vmem:[#allocation13] sm:$0xff]
        %v5260 = vld [vmem:[#allocation13 + $0x8] sm:$0xff]
        %v5261 = vld [vmem:[#allocation13 + $0x10] sm:$0xff]
        %v5262 = vld [vmem:[#allocation13 + $0x18] sm:$0xff]
        %v5263 = vld [vmem:[#allocation13 + $0x20] sm:$0xff]
        %v5264 = vld [vmem:[#allocation13 + $0x28] sm:$0xff]
        %v5265 = vld [vmem:[#allocation13 + $0x30] sm:$0xff]
        %v5266 = vld [vmem:[#allocation13 + $0x38] sm:$0xff]
        %v5267 = vld [vmem:[#allocation13 + $0x40] sm:$0xff]
        %v5268 = vld [vmem:[#allocation13 + $0x48] sm:$0xff]
        %v5269 = vld [vmem:[#allocation13 + $0x50] sm:$0xff]
        %v5270 = vld [vmem:[#allocation13 + $0x58] sm:$0xff]
        %v5271 = vld [vmem:[%s20] sm:$0xff]
        %v5272 = vld [vmem:[%s20 + $0x8] sm:$0xff]
        %v5273 = vld [vmem:[%s20 + $0x10] sm:$0xff]
        %v5274 = vld [vmem:[%s20 + $0x18] sm:$0xff]
        %5276 = vset.pattern.permute.xlu0 0
        %5277 = vperm.xlu0 %5276, %v5271
        %v5278 = vpop.permute.xlu0 %5277
        %5281 = vset.pattern.permute.xlu0 0
        %5282 = vperm.xlu0 %5281, %v5272
        %v5283 = vpop.permute.xlu0 %5282
        %5286 = vset.pattern.permute.xlu0 0
        %5287 = vperm.xlu0 %5286, %v5273
        %v5288 = vpop.permute.xlu0 %5287
        %5291 = vset.pattern.permute.xlu0 0
        %5292 = vperm.xlu0 %5291, %v5274
        %v5293 = vpop.permute.xlu0 %5292
        %5295 = vmatprep.subr.mxu0 0.0
        %5296 = vmatpush1.msra.mxu0 %v5194
        %5297 = vmatprep.subr.mxu0 0.0
        %5298 = vmatpush1.msra.mxu0 %v5193
        %5299 = vmatprep.subr.mxu0 0.0
        %5300 = vmatpush1.msra.mxu0 %v5192
        %5301 = vmatprep.subr.mxu0 0.0
        %5302 = vmatpush1.msra.mxu0 %v5191
        %5303 = vmatprep.subr.mxu0 0.0
        %5304 = vmatpush1.msra.mxu0 %v5190
        %5305 = vmatprep.subr.mxu0 0.0
        %5306 = vmatpush1.msra.mxu0 %v5189
        %5307 = vmatprep.subr.mxu0 0.0
        %5308 = vmatpush1.msra.mxu0 %v5188
        %5309 = vmatprep.subr.mxu0 0.0
        %5310 = vmatpush1.msra.mxu0 %v5187
        %5311 = vmatprep.subr.mxu0 0.0
        %5312 = vmatpush1.msra.mxu0 %v5186
        %5313 = vmatprep.subr.mxu0 0.0
        %5314 = vmatpush1.msra.mxu0 %v5185
        %5315 = vmatprep.subr.mxu0 0.0
        %5316 = vmatpush1.msra.mxu0 %v5184
        %5317 = vmatprep.subr.mxu0 0.0
        %5318 = vmatpush1.msra.mxu0 %v5183
        %5319 = vmatprep.subr.mxu0 0.0
        %5320 = vmatpush1.msra.mxu0 %v5182
        %5321 = vmatprep.subr.mxu0 0.0
        %5322 = vmatpush1.msra.mxu0 %v5181
        %5323 = vmatprep.subr.mxu0 0.0
        %5324 = vmatpush1.msra.mxu0 %v5180
        %5325 = vmatprep.subr.mxu0 0.0
        %5326 = vmatpush1.msra.mxu0 %v5179
        %5327 = vmatprep.subr.mxu0 0.0
        %5328 = vmatpush2.msra.mxu0 %v5114
        %5329 = vmatprep.subr.mxu0 0.0
        %5330 = vmatpush2.msra.mxu0 %v5113
        %5331 = vmatprep.subr.mxu0 0.0
        %5332 = vmatpush2.msra.mxu0 %v5112
        %5333 = vmatprep.subr.mxu0 0.0
        %5334 = vmatpush2.msra.mxu0 %v5111
        %5335 = vmatprep.subr.mxu0 0.0
        %5336 = vmatpush2.msra.mxu0 %v5110
        %5337 = vmatprep.subr.mxu0 0.0
        %5338 = vmatpush2.msra.mxu0 %v5109
        %5339 = vmatprep.subr.mxu0 0.0
        %5340 = vmatpush2.msra.mxu0 %v5108
        %5341 = vmatprep.subr.mxu0 0.0
        %5342 = vmatpush2.msra.mxu0 %v5107
        %5343 = vmatprep.subr.mxu0 0.0
        %5344 = vmatpush2.msra.mxu0 %v5106
        %5345 = vmatprep.subr.mxu0 0.0
        %5346 = vmatpush2.msra.mxu0 %v5105
        %5347 = vmatprep.subr.mxu0 0.0
        %5348 = vmatpush2.msra.mxu0 %v5104
        %5349 = vmatprep.subr.mxu0 0.0
        %5350 = vmatpush2.msra.mxu0 %v5103
        %5351 = vmatprep.subr.mxu0 0.0
        %5352 = vmatpush2.msra.mxu0 %v5102
        %5353 = vmatprep.subr.mxu0 0.0
        %5354 = vmatpush2.msra.mxu0 %v5101
        %5355 = vmatprep.subr.mxu0 0.0
        %5356 = vmatpush2.msra.mxu0 %v5100
        %5357 = vmatprep.subr.mxu0 0.0
        %5358 = vmatpush2.msra.mxu0 %v5099
        %5359 = vmatprep.mubr.f32.mxu0 %v5260
        %5360 = vmatmul.mubr.f32.gmra.mxu0 %v5259
        %v5361 = vpop.f32.mrf.mxu0
        %v5362 = vadd.f32 %v5278, %v5361
        %v5363 = vpop.f32.mrf.mxu0
        %5364 = vmatprep.mubr.f32.mxu0 %v5263
        %5365 = vmatmul.mubr.f32.gmra.mxu0 %v5262
        %v5366 = vpop.f32.mrf.mxu0
        %v5367 = vadd.f32 %v5283, %v5366
        %v5368 = vpop.f32.mrf.mxu0
        %5369 = vmatprep.mubr.f32.mxu0 %v5266
        %5370 = vmatmul.mubr.f32.gmra.mxu0 %v5265
        %v5371 = vpop.f32.mrf.mxu0
        %v5372 = vadd.f32 %v5288, %v5371
        %v5373 = vpop.f32.mrf.mxu0
        %5374 = vmatprep.mubr.f32.mxu0 %v5269
        %5375 = vmatmul.mubr.f32.gmra.mxu0 %v5268
        %v5376 = vpop.f32.mrf.mxu0
        %v5377 = vadd.f32 %v5293, %v5376
        %v5378 = vpop.f32.mrf.mxu0
        %5379 = vdwg.mxu0
        %5380 = vmatprep.subr.mxu0 0.0
        %5381 = vmatpush1.msra.mxu0 %v5258
        %5382 = vmatprep.subr.mxu0 0.0
        %5383 = vmatpush1.msra.mxu0 %v5257
        %5384 = vmatprep.subr.mxu0 0.0
        %5385 = vmatpush1.msra.mxu0 %v5256
        %5386 = vmatprep.subr.mxu0 0.0
        %5387 = vmatpush1.msra.mxu0 %v5255
        %5388 = vmatprep.subr.mxu0 0.0
        %5389 = vmatpush1.msra.mxu0 %v5254
        %5390 = vmatprep.subr.mxu0 0.0
        %5391 = vmatpush1.msra.mxu0 %v5253
        %5392 = vmatprep.subr.mxu0 0.0
        %5393 = vmatpush1.msra.mxu0 %v5252
        %5394 = vmatprep.subr.mxu0 0.0
        %5395 = vmatpush1.msra.mxu0 %v5251
        %5396 = vmatprep.subr.mxu0 0.0
        %5397 = vmatpush1.msra.mxu0 %v5250
        %5398 = vmatprep.subr.mxu0 0.0
        %5399 = vmatpush1.msra.mxu0 %v5249
        %5400 = vmatprep.subr.mxu0 0.0
        %5401 = vmatpush1.msra.mxu0 %v5248
        %5402 = vmatprep.subr.mxu0 0.0
        %5403 = vmatpush1.msra.mxu0 %v5247
        %5404 = vmatprep.subr.mxu0 0.0
        %5405 = vmatpush1.msra.mxu0 %v5246
        %5406 = vmatprep.subr.mxu0 0.0
        %5407 = vmatpush1.msra.mxu0 %v5245
        %5408 = vmatprep.subr.mxu0 0.0
        %5409 = vmatpush1.msra.mxu0 %v5244
        %5410 = vmatprep.subr.mxu0 0.0
        %5411 = vmatpush1.msra.mxu0 %v5243
        %5412 = vmatprep.subr.mxu0 0.0
        %5413 = vmatpush2.msra.mxu0 0.0
        %5414 = vmatprep.subr.mxu0 0.0
        %5415 = vmatpush2.msra.mxu0 0.0
        %5416 = vmatprep.subr.mxu0 0.0
        %5417 = vmatpush2.msra.mxu0 0.0
        %5418 = vmatprep.subr.mxu0 0.0
        %5419 = vmatpush2.msra.mxu0 0.0
        %5420 = vmatprep.subr.mxu0 0.0
        %5421 = vmatpush2.msra.mxu0 0.0
        %5422 = vmatprep.subr.mxu0 0.0
        %5423 = vmatpush2.msra.mxu0 0.0
        %5424 = vmatprep.subr.mxu0 0.0
        %5425 = vmatpush2.msra.mxu0 0.0
        %5426 = vmatprep.subr.mxu0 0.0
        %5427 = vmatpush2.msra.mxu0 0.0
        %5428 = vmatprep.subr.mxu0 0.0
        %5429 = vmatpush2.msra.mxu0 0.0
        %5430 = vmatprep.subr.mxu0 0.0
        %5431 = vmatpush2.msra.mxu0 0.0
        %5432 = vmatprep.subr.mxu0 0.0
        %5433 = vmatpush2.msra.mxu0 0.0
        %5434 = vmatprep.subr.mxu0 0.0
        %5435 = vmatpush2.msra.mxu0 0.0
        %5436 = vmatprep.subr.mxu0 0.0
        %5437 = vmatpush2.msra.mxu0 0.0
        %5438 = vmatprep.subr.mxu0 0.0
        %5439 = vmatpush2.msra.mxu0 0.0
        %5440 = vmatprep.subr.mxu0 0.0
        %5441 = vmatpush2.msra.mxu0 0.0
        %5442 = vmatprep.subr.mxu0 0.0
        %5443 = vmatpush2.msra.mxu0 0.0
        %5444 = vmatprep.mubr.f32.mxu0 0.0
        %5445 = vmatmul.mubr.f32.gmra.mxu0 %v5261
        %v5446 = vpop.f32.mrf.mxu0
        %v5447 = vadd.f32 %v5362, %v5446
        %v5448 = vpop.f32.mrf.mxu0
        %5449 = vmatprep.mubr.f32.mxu0 0.0
        %5450 = vmatmul.mubr.f32.gmra.mxu0 %v5264
        %v5451 = vpop.f32.mrf.mxu0
        %v5452 = vadd.f32 %v5367, %v5451
        %v5453 = vpop.f32.mrf.mxu0
        %5454 = vmatprep.mubr.f32.mxu0 0.0
        %5455 = vmatmul.mubr.f32.gmra.mxu0 %v5267
        %v5456 = vpop.f32.mrf.mxu0
        %v5457 = vadd.f32 %v5372, %v5456
        %v5458 = vpop.f32.mrf.mxu0
        %5459 = vmatprep.mubr.f32.mxu0 0.0
        %5460 = vmatmul.mubr.f32.gmra.mxu0 %v5270
        %v5461 = vpop.f32.mrf.mxu0
        %v5462 = vadd.f32 %v5377, %v5461
        %v5463 = vpop.f32.mrf.mxu0
        %5464 = vdwg.mxu0
        %v5465 = vmax.f32 %v5447, 0.0
        %v5466 = vmax.f32 %v5452, 0.0
        %v5467 = vmax.f32 %v5457, 0.0
        %v5468 = vmax.f32 %v5462, 0.0
        %5469 = vst [vmem:[%s770] sm:$0xff] %v5465
        %5470 = vst [vmem:[%s770 + $0x8] sm:$0xff] %v5466
        %5471 = vst [vmem:[%s770 + $0x10] sm:$0xff] %v5467
        %5472 = vst [vmem:[%s770 + $0x18] sm:$0xff] %v5468
        %p5473 = scmp.lt.s32.totalorder %s37, 1
        %s5474 = scalar_select %p5473, %s37, 1
        %s5475 = smul.addr %s5474, 4
        %s5476 = smul.addr %s5475, 8
        %s5477 = scalar_lea.vmem %s21, %s5476
        // Predicated region
        $region137: #{convnet10_forward.2} parent=103 // pred_check
          %p5478 = pneg %p501
        $region138: #{convnet10_forward.2} parent=103 // pred_check_branch
          %5480 = sbr.rel (%p5478) target = $region140
        $region139: #{convnet10_forward.2} parent=103 // pred_region
          _
        $region140: #{convnet10_forward.2} parent=103 // pred_fallthru
          _
      $region104: #{convnet10_forward.2} parent=5 // pred_fallthru
        _
      %p5481 = scmp.le.s32.totalorder 2, %s32
      // Predicated region
      $region141: #{convnet10_forward.2} parent=5 // pred_check
        %p5482 = pneg %p5481
      $region142: #{convnet10_forward.2} parent=5 // pred_check_branch
        %5484 = sbr.rel (%p5482) target = $region144
      $region143: #{convnet10_forward.2} parent=5 // pred_region
        %s5485 = ssub.s32 %s32, 2
        // Predicated region
        $region145: #{convnet10_forward.2} parent=143 // pred_check
          %p5486 = pneg %p507
        $region146: #{convnet10_forward.2} parent=143 // pred_check_branch
          %5488 = sbr.rel (%p5486) target = $region148
        $region147: #{convnet10_forward.2} parent=143 // pred_region
          %p5489 = scmp.lt.s32.totalorder %s38, 1
          %s5490 = scalar_select %p5489, %s38, 1
          %s5491 = smul.addr %s5490, 4
          %s5492 = smul.addr %s5491, 8
          %s5493 = scalar_lea.vmem %s21, %s5492
        $region148: #{convnet10_forward.2} parent=143 // pred_fallthru
          _
      $region144: #{convnet10_forward.2} parent=5 // pred_fallthru
        _
    $region6: #{convnet10_forward.2} parent=1 // loop_footer
      %s36 = sadd.s32 1, %s32
    $region7: #{convnet10_forward.2} parent=1 // loop_footer_branch
      %31 = sbr.rel target = $region3
    $region8: #{convnet10_forward.2} parent=1 // loop_exit
      _
    %5494 = vsyncpa [#allocation3], 1
    %s5495 = scalar_lea.sflag [#allocation3], 1
    %5496 = vsyncpa %s5495, 1
    %5497 = vsyncpa [#allocation5], 1
    %5498 = vsyncpa [#allocation8], 1
    %5499 = vsyncpa [#allocation11], 1
    %5500 = vsyncpa [#allocation14], 1

// kernel: convnet10_forward.3
$region0: #{convnet10_forward.3}
  #allocation0 [shape = 'u32[]', space=smem, size = 0x4, offset = 0x4, fixed_abs, tag = 'smem constant byte address 0x4 - core index']
  #allocation1 [shape = 'u32[144,128]{1,0:T(1,128)}', space=vmem, size = 0x12000, scoped, tag = 'internal scratch']
  #allocation2 [shape = 'f32[2,2048]{1,0:T(2,128)}', space=vmem, size = 0x4000, scoped, tag = 'scratch operand']
  %s0 = inlined_call_operand.vmem [shape: f32[2,4096], index: 0, kind: input, shape index: {}]
  %s1 = inlined_call_operand.hbm [shape: f32[4096,2048], index: 1, kind: input, shape index: {}]
  %s2 = inlined_call_operand.hbm [shape: f32[1,2048], index: 2, kind: input, shape index: {}]
  %s3 = inlined_call_operand.vmem [shape: f32[2048,32], index: 3, kind: input, shape index: {}]
  %s4 = inlined_call_operand.hbm [shape: f32[1,32], index: 4, kind: input, shape index: {}]
  %s5 = inlined_call_operand.hbm [shape: f32[2,32], index: 5, kind: output, shape index: {}]
  %s6 = sld [smem:[#allocation0]]
  $region73: #{convnet10_forward.3} parent=0
    _
  %s8 = ssub.s32 1, %s6
  %s9 = scalar_select 0, %s8, %s6
  $region1: #{convnet10_forward.3} parent=0
    #allocation3 [shape = 'u8[8388608]{0}', space=vmem, size = 0x800000, scoped, tag = 'input window, operand 1']
    #allocation4 [shape = 's32[2]{0}', space=sflag, size = 0x8, scoped, tag = 'scoped memory for convnet10_forward.3']
    #allocation5 [shape = 's32[2]{0}', space=sflag, size = 0x8, scoped, tag = 'scoped memory for convnet10_forward.3']
    #allocation6 [shape = 'u8[8192]{0}', space=vmem, size = 0x2000, scoped, tag = 'input window, operand 2, single buffered']
    #allocation7 [shape = 's32[1]{0}', space=sflag, size = 0x4, scoped, tag = 'scoped memory for convnet10_forward.3']
    #allocation8 [shape = 'u8[512]{0}', space=vmem, size = 0x400, scoped, tag = 'input window, operand 4, single buffered']
    #allocation9 [shape = 'u8[1024]{0}', space=vmem, size = 0x400, scoped, tag = 'output window, operand 0, single buffered']
    %10 = vsyncpa [#allocation4], 0
    %s11 = scalar_lea.sflag [#allocation4], 1
    %12 = vsyncpa %s11, 0
    %13 = vsyncpa [#allocation7], 0
    %14 = vsyncpa [#allocation5], 0
    loop: start=0, step=1, limit=10
    $region2: #{convnet10_forward.3} parent=1 // loop_pre_header
      _
    $region3: #{convnet10_forward.3} parent=1 // loop_header
      %s16 = sphi 0, %s20
      %p17 = scmp.ge.s32.totalorder %s16, 10
      %s26 = sphi 0, %s28
      %s29 = sphi 0, %s26
      %s30 = sphi 0, %s29
      %s46 = sphi 0, %s30
      %s52 = sphi 0, %s54
      %s55 = sphi 0, %s52
      %s56 = sphi 0, %s55
      %s72 = sphi 0, %s56
      %s76 = sphi 0, %s76
      %s78 = sphi 0, %s76
      %s79 = sphi 0, %s78
      %s93 = sphi 0, %s79
      %s97 = sphi 0, %s97
      %s99 = sphi 0, %s97
      %s100 = sphi 0, %s99
      %s114 = sphi 0, %s100
      %s118 = sphi 0, %s118
      %s120 = sphi 0, %s118
      %s121 = sphi 0, %s120
      %s135 = sphi 0, %s121
      %s139 = sphi 0, %s139
      %s141 = sphi 0, %s139
      %s142 = sphi 0, %s141
      %s156 = sphi 0, %s142
    $region4: #{convnet10_forward.3} parent=1 // loop_header_branch
      %19 = sbr.rel (%p17) target = $region8
    $region5: #{convnet10_forward.3} parent=1 // loop_body
      %s21 = ssub.s32 %s16, 1
      %s22 = ssub.s32 %s16, 2
      %s23 = sadd.s32 %s16, 1
      %s24 = ssub.s32 %s16, %s23
      %p25 = scmp.eq.s32.totalorder %s24, 0
      %s27 = sadd.s32 %s26, 1
      %s28 = scalar_select %p25, %s26, %s27
      %p31 = pneg %p25
      %p32 = scmp.eq.s32.totalorder %s16, 7
      %p33 = por %p31, %p32
      %p34 = scmp.ne.s32.totalorder %s26, %s29
      %p35 = scmp.eq.s32.totalorder %s16, 0
      %p36 = por %p34, %p35
      %p37 = scmp.ne.s32.totalorder %s26, %s29
      %p38 = scmp.eq.s32.totalorder %s21, 7
      %p39 = por %p37, %p38
      %p40 = scmp.ne.s32.totalorder %s29, %s30
      %p41 = scmp.eq.s32.totalorder %s21, 0
      %p42 = por %p40, %p41
      %p43 = scmp.ne.s32.totalorder %s29, %s30
      %p44 = scmp.eq.s32.totalorder %s22, 7
      %p45 = por %p43, %p44
      %p47 = scmp.ne.s32.totalorder %s30, %s46
      %p48 = scmp.eq.s32.totalorder %s22, 0
      %p49 = por %p47, %p48
      %s50 = ssub.s32 %s16, %s23
      %p51 = scmp.eq.s32.totalorder %s50, 0
      %s53 = sadd.s32 %s52, 1
      %s54 = scalar_select %p51, %s52, %s53
      %p57 = pneg %p51
      %p58 = scmp.eq.s32.totalorder %s16, 7
      %p59 = por %p57, %p58
      %p60 = scmp.ne.s32.totalorder %s52, %s55
      %p61 = scmp.eq.s32.totalorder %s16, 0
      %p62 = por %p60, %p61
      %p63 = scmp.ne.s32.totalorder %s52, %s55
      %p64 = scmp.eq.s32.totalorder %s21, 7
      %p65 = por %p63, %p64
      %p66 = scmp.ne.s32.totalorder %s55, %s56
      %p67 = scmp.eq.s32.totalorder %s21, 0
      %p68 = por %p66, %p67
      %p69 = scmp.ne.s32.totalorder %s55, %s56
      %p70 = scmp.eq.s32.totalorder %s22, 7
      %p71 = por %p69, %p70
      %p73 = scmp.ne.s32.totalorder %s56, %s72
      %p74 = scmp.eq.s32.totalorder %s22, 0
      %p75 = por %p73, %p74
      %s77 = sadd.s32 %s76, 1
      %p80 = scmp.eq.s32.totalorder %s16, 7
      %p81 = scmp.ne.s32.totalorder %s76, %s78
      %p82 = scmp.eq.s32.totalorder %s16, 0
      %p83 = por %p81, %p82
      %p84 = scmp.ne.s32.totalorder %s76, %s78
      %p85 = scmp.eq.s32.totalorder %s21, 7
      %p86 = por %p84, %p85
      %p87 = scmp.ne.s32.totalorder %s78, %s79
      %p88 = scmp.eq.s32.totalorder %s21, 0
      %p89 = por %p87, %p88
      %p90 = scmp.ne.s32.totalorder %s78, %s79
      %p91 = scmp.eq.s32.totalorder %s22, 7
      %p92 = por %p90, %p91
      %p94 = scmp.ne.s32.totalorder %s79, %s93
      %p95 = scmp.eq.s32.totalorder %s22, 0
      %p96 = por %p94, %p95
      %s98 = sadd.s32 %s97, 1
      %p101 = scmp.eq.s32.totalorder %s16, 7
      %p102 = scmp.ne.s32.totalorder %s97, %s99
      %p103 = scmp.eq.s32.totalorder %s16, 0
      %p104 = por %p102, %p103
      %p105 = scmp.ne.s32.totalorder %s97, %s99
      %p106 = scmp.eq.s32.totalorder %s21, 7
      %p107 = por %p105, %p106
      %p108 = scmp.ne.s32.totalorder %s99, %s100
      %p109 = scmp.eq.s32.totalorder %s21, 0
      %p110 = por %p108, %p109
      %p111 = scmp.ne.s32.totalorder %s99, %s100
      %p112 = scmp.eq.s32.totalorder %s22, 7
      %p113 = por %p111, %p112
      %p115 = scmp.ne.s32.totalorder %s100, %s114
      %p116 = scmp.eq.s32.totalorder %s22, 0
      %p117 = por %p115, %p116
      %s119 = sadd.s32 %s118, 1
      %p122 = scmp.eq.s32.totalorder %s16, 7
      %p123 = scmp.ne.s32.totalorder %s118, %s120
      %p124 = scmp.eq.s32.totalorder %s16, 0
      %p125 = por %p123, %p124
      %p126 = scmp.ne.s32.totalorder %s118, %s120
      %p127 = scmp.eq.s32.totalorder %s21, 7
      %p128 = por %p126, %p127
      %p129 = scmp.ne.s32.totalorder %s120, %s121
      %p130 = scmp.eq.s32.totalorder %s21, 0
      %p131 = por %p129, %p130
      %p132 = scmp.ne.s32.totalorder %s120, %s121
      %p133 = scmp.eq.s32.totalorder %s22, 7
      %p134 = por %p132, %p133
      %p136 = scmp.ne.s32.totalorder %s121, %s135
      %p137 = scmp.eq.s32.totalorder %s22, 0
      %p138 = por %p136, %p137
      %s140 = sadd.s32 %s139, 1
      %p143 = scmp.eq.s32.totalorder %s16, 7
      %p144 = scmp.ne.s32.totalorder %s139, %s141
      %p145 = scmp.eq.s32.totalorder %s16, 0
      %p146 = por %p144, %p145
      %p147 = scmp.ne.s32.totalorder %s139, %s141
      %p148 = scmp.eq.s32.totalorder %s21, 7
      %p149 = por %p147, %p148
      %p150 = scmp.ne.s32.totalorder %s141, %s142
      %p151 = scmp.eq.s32.totalorder %s21, 0
      %p152 = por %p150, %p151
      %p153 = scmp.ne.s32.totalorder %s141, %s142
      %p154 = scmp.eq.s32.totalorder %s22, 7
      %p155 = por %p153, %p154
      %p157 = scmp.ne.s32.totalorder %s142, %s156
      %p158 = scmp.eq.s32.totalorder %s22, 0
      %p159 = por %p157, %p158
      %p160 = scmp.le.s32.totalorder 1, %s16
      %p161 = scmp.lt.s32.totalorder %s16, 9
      %p162 = pnand %p160, %p161
      %p163 = pneg %p162
      // Predicated region
      $region9: #{convnet10_forward.3} parent=5 // pred_check
        _
      $region10: #{convnet10_forward.3} parent=5 // pred_check_branch
        %165 = sbr.rel (%p162) target = $region12
      $region11: #{convnet10_forward.3} parent=5 // pred_region
        %s166 = ssub.s32 %s16, 1
        // Predicated region
        $region13: #{convnet10_forward.3} parent=11 // pred_check
          %p167 = pneg %p89
        $region14: #{convnet10_forward.3} parent=11 // pred_check_branch
          %169 = sbr.rel (%p167) target = $region16
        $region15: #{convnet10_forward.3} parent=11 // pred_region
          %s171 = ssub.s32 256, 256
          %172 = vsyncadd [#allocation7], %s171
          %s174 = sshll.u32 [#allocation6], 4
          %s175 = int_to_ptr.vmem [resolvable:$true] %s174
          %177 = dma.hbm_to_vmem [thread:$0]  %s2, 256, %s175, [#allocation7]
        $region16: #{convnet10_forward.3} parent=11 // pred_fallthru
          _
        // Predicated region
        $region17: #{convnet10_forward.3} parent=11 // pred_check
          %p178 = pneg %p110
        $region18: #{convnet10_forward.3} parent=11 // pred_check_branch
          %180 = sbr.rel (%p178) target = $region20
        $region19: #{convnet10_forward.3} parent=11 // pred_region
          _
        $region20: #{convnet10_forward.3} parent=11 // pred_fallthru
          _
        // Predicated region
        $region21: #{convnet10_forward.3} parent=11 // pred_check
          %p181 = pneg %p131
        $region22: #{convnet10_forward.3} parent=11 // pred_check_branch
          %183 = sbr.rel (%p181) target = $region24
        $region23: #{convnet10_forward.3} parent=11 // pred_region
          %s185 = ssub.s32 16, 16
          %186 = vsyncadd [#allocation7], %s185
          %s188 = sshll.u32 [#allocation8], 4
          %s189 = int_to_ptr.vmem [resolvable:$true] %s188
          %191 = dma.hbm_to_vmem [thread:$0]  %s4, 16, %s189, [#allocation7]
        $region24: #{convnet10_forward.3} parent=11 // pred_fallthru
          _
      $region12: #{convnet10_forward.3} parent=5 // pred_fallthru
        _
      %p192 = scmp.lt.s32.totalorder %s16, 8
      // Predicated region
      $region25: #{convnet10_forward.3} parent=5 // pred_check
        %p193 = pneg %p192
      $region26: #{convnet10_forward.3} parent=5 // pred_check_branch
        %195 = sbr.rel (%p193) target = $region28
      $region27: #{convnet10_forward.3} parent=5 // pred_region
        // Predicated region
        $region29: #{convnet10_forward.3} parent=27 // pred_check
          %p196 = pneg %p36
        $region30: #{convnet10_forward.3} parent=27 // pred_check_branch
          %198 = sbr.rel (%p196) target = $region32
        $region31: #{convnet10_forward.3} parent=27 // pred_region
          %s199 = smul.u32 4, %s16
          %p200 = scmp.lt.s32.totalorder %s199, 31
          %s201 = scalar_select %p200, %s199, 31
          %s202 = smul.addr %s201, 2
          %s203 = scalar_lea.vmem %s0, %s202
          %s204 = smul.u32 4, %s16
        $region32: #{convnet10_forward.3} parent=27 // pred_fallthru
          _
        // Predicated region
        $region33: #{convnet10_forward.3} parent=27 // pred_check
          %p205 = pneg %p62
        $region34: #{convnet10_forward.3} parent=27 // pred_check_branch
          %207 = sbr.rel (%p205) target = $region36
        $region35: #{convnet10_forward.3} parent=27 // pred_region
          %s208 = sand.u32 %s52, 1
          %s209 = scalar_lea.sflag [#allocation4], %s208
          %s210 = sand.u32 %s52, 1
          %s211 = smul.addr %s210, 8192
          %s212 = scalar_lea.vmem [#allocation3], %s211
          %s213 = smul.u32 64, %s16
          %s215 = ssub.s32 131072, 131072
          %216 = vsyncadd %s209, %s215
          %s217 = smul.addr %s213, 16
          %s218 = smul.addr %s217, 128
          %s219 = scalar_lea.hbm %s1, %s218
          %s220 = sshll.u32 %s212, 4
          %s221 = int_to_ptr.vmem [resolvable:$true] %s220
          %226 = dma.hbm_to_vmem [thread:$0]  %s219, 131072, %s221, %s209, 2048, 2048, 128
        $region36: #{convnet10_forward.3} parent=27 // pred_fallthru
          _
      $region28: #{convnet10_forward.3} parent=5 // pred_fallthru
        _
      %p227 = scmp.le.s32.totalorder 1, %s16
      %p228 = scmp.lt.s32.totalorder %s16, 9
      %p229 = pnand %p227, %p228
      %p230 = pneg %p229
      // Predicated region
      $region37: #{convnet10_forward.3} parent=5 // pred_check
        _
      $region38: #{convnet10_forward.3} parent=5 // pred_check_branch
        %232 = sbr.rel (%p229) target = $region40
      $region39: #{convnet10_forward.3} parent=5 // pred_region
        %s233 = ssub.s32 %s16, 1
        %s234 = sand.u32 %s55, 1
        %s235 = scalar_lea.sflag [#allocation4], %s234
        %s236 = sand.u32 %s55, 1
        %s237 = smul.addr %s236, 8192
        %s238 = scalar_lea.vmem [#allocation3], %s237
        // Predicated region
        $region41: #{convnet10_forward.3} parent=39 // pred_check
          %p239 = pneg %p68
        $region42: #{convnet10_forward.3} parent=39 // pred_check_branch
          %241 = sbr.rel (%p239) target = $region44
        $region43: #{convnet10_forward.3} parent=39 // pred_region
          %242 = dma.done %s235, 131072
        $region44: #{convnet10_forward.3} parent=39 // pred_fallthru
          _
        // Predicated region
        $region45: #{convnet10_forward.3} parent=39 // pred_check
          %p243 = pneg %p89
        $region46: #{convnet10_forward.3} parent=39 // pred_check_branch
          %245 = sbr.rel (%p243) target = $region48
        $region47: #{convnet10_forward.3} parent=39 // pred_region
          %246 = dma.done [#allocation7], 256
        $region48: #{convnet10_forward.3} parent=39 // pred_fallthru
          _
        // Predicated region
        $region49: #{convnet10_forward.3} parent=39 // pred_check
          %p247 = pneg %p131
        $region50: #{convnet10_forward.3} parent=39 // pred_check_branch
          %249 = sbr.rel (%p247) target = $region52
        $region51: #{convnet10_forward.3} parent=39 // pred_region
          %250 = dma.done [#allocation7], 16
        $region52: #{convnet10_forward.3} parent=39 // pred_fallthru
          _
        %s251 = smul.u32 4, %s21
        %p252 = scmp.lt.s32.totalorder %s251, 31
        %s253 = scalar_select %p252, %s251, 31
        %s254 = smul.addr %s253, 2
        %s255 = scalar_lea.vmem %s0, %s254
        %p256 = pneg %p42
        %p257 = pneg %p39
        %s258 = sand.u32 %s55, 1
        %s259 = scalar_lea.sflag [#allocation4], %s258
        %s260 = sand.u32 %s55, 1
        %s261 = smul.addr %s260, 8192
        %s262 = scalar_lea.vmem [#allocation3], %s261
        %p263 = pneg %p68
        %p264 = pneg %p65
        %p265 = pneg %p89
        %p266 = pneg %p86
        %p267 = pneg %p110
        %p268 = pneg %p107
        %p269 = pneg %p131
        %p270 = pneg %p128
        %p271 = pneg %p152
        %p272 = pneg %p149
        %s273 = smul.u32 4, %s21
        %p274 = scmp.lt.s32.totalorder %s273, 31
        %s275 = scalar_select %p274, %s273, 31
        %s276 = smul.addr %s275, 2
        %s277 = scalar_lea.vmem %s0, %s276
        %s278 = smul.u32 4, %s21
        %s279 = smul.u32 64, %s21
        %p280 = scmp.eq.s32.totalorder %s21, 0
        // Predicated region
        $region53: #{convnet10_forward.3} parent=39 // pred_check
          %p281 = pneg %p280
        $region54: #{convnet10_forward.3} parent=39 // pred_check_branch
          %283 = sbr.rel (%p281) target = $region56
        $region55: #{convnet10_forward.3} parent=39 // pred_region
          %284 = vst [vmem:[#allocation2] sm:$0xff] 0.0
          %285 = vst [vmem:[#allocation2 + $0x8] sm:$0xff] 0.0
          %286 = vst [vmem:[#allocation2 + $0x10] sm:$0xff] 0.0
          %287 = vst [vmem:[#allocation2 + $0x18] sm:$0xff] 0.0
        $region56: #{convnet10_forward.3} parent=39 // pred_fallthru
          _
        %v288 = vld [vmem:[#allocation2] sm:$0xff]
        %v289 = vld [vmem:[#allocation2 + $0x8] sm:$0xff]
        %v290 = vld [vmem:[#allocation2 + $0x10] sm:$0xff]
        %v291 = vld [vmem:[#allocation2 + $0x18] sm:$0xff]
        %v292 = vld [vmem:[%s277] sm:$0xff]
        %v293 = vld [vmem:[%s238] sm:$0xff]
        %v294 = vld [vmem:[%s238 + $0x8] sm:$0xff]
        %v295 = vld [vmem:[%s238 + $0x10] sm:$0xff]
        %v296 = vld [vmem:[%s238 + $0x18] sm:$0xff]
        %v297 = vld [vmem:[%s238 + $0x20] sm:$0xff]
        %v298 = vld [vmem:[%s238 + $0x28] sm:$0xff]
        %v299 = vld [vmem:[%s238 + $0x30] sm:$0xff]
        %v300 = vld [vmem:[%s238 + $0x38] sm:$0xff]
        %v301 = vld [vmem:[%s238 + $0x40] sm:$0xff]
        %v302 = vld [vmem:[%s238 + $0x48] sm:$0xff]
        %v303 = vld [vmem:[%s238 + $0x50] sm:$0xff]
        %v304 = vld [vmem:[%s238 + $0x58] sm:$0xff]
        %v305 = vld [vmem:[%s238 + $0x60] sm:$0xff]
        %v306 = vld [vmem:[%s238 + $0x68] sm:$0xff]
        %v307 = vld [vmem:[%s238 + $0x70] sm:$0xff]
        %v308 = vld [vmem:[%s238 + $0x78] sm:$0xff]
        %v309 = vld [vmem:[%s238 + $0x80] sm:$0xff]
        %v310 = vld [vmem:[%s238 + $0x88] sm:$0xff]
        %v311 = vld [vmem:[%s238 + $0x90] sm:$0xff]
        %v312 = vld [vmem:[%s238 + $0x98] sm:$0xff]
        %v313 = vld [vmem:[%s238 + $0xa0] sm:$0xff]
        %v314 = vld [vmem:[%s238 + $0xa8] sm:$0xff]
        %v315 = vld [vmem:[%s238 + $0xb0] sm:$0xff]
        %v316 = vld [vmem:[%s238 + $0xb8] sm:$0xff]
        %v317 = vld [vmem:[%s238 + $0xc0] sm:$0xff]
        %v318 = vld [vmem:[%s238 + $0xc8] sm:$0xff]
        %v319 = vld [vmem:[%s238 + $0xd0] sm:$0xff]
        %v320 = vld [vmem:[%s238 + $0xd8] sm:$0xff]
        %v321 = vld [vmem:[%s238 + $0xe0] sm:$0xff]
        %v322 = vld [vmem:[%s238 + $0xe8] sm:$0xff]
        %v323 = vld [vmem:[%s238 + $0xf0] sm:$0xff]
        %v324 = vld [vmem:[%s238 + $0xf8] sm:$0xff]
        %v325 = vld [vmem:[%s238 + $0x100] sm:$0xff]
        %v326 = vld [vmem:[%s238 + $0x108] sm:$0xff]
        %v327 = vld [vmem:[%s238 + $0x110] sm:$0xff]
        %v328 = vld [vmem:[%s238 + $0x118] sm:$0xff]
        %v329 = vld [vmem:[%s238 + $0x120] sm:$0xff]
        %v330 = vld [vmem:[%s238 + $0x128] sm:$0xff]
        %v331 = vld [vmem:[%s238 + $0x130] sm:$0xff]
        %v332 = vld [vmem:[%s238 + $0x138] sm:$0xff]
        %v333 = vld [vmem:[%s238 + $0x140] sm:$0xff]
        %v334 = vld [vmem:[%s238 + $0x148] sm:$0xff]
        %v335 = vld [vmem:[%s238 + $0x150] sm:$0xff]
        %v336 = vld [vmem:[%s238 + $0x158] sm:$0xff]
        %v337 = vld [vmem:[%s238 + $0x160] sm:$0xff]
        %v338 = vld [vmem:[%s238 + $0x168] sm:$0xff]
        %v339 = vld [vmem:[%s238 + $0x170] sm:$0xff]
        %v340 = vld [vmem:[%s238 + $0x178] sm:$0xff]
        %v341 = vld [vmem:[%s238 + $0x180] sm:$0xff]
        %v342 = vld [vmem:[%s238 + $0x188] sm:$0xff]
        %v343 = vld [vmem:[%s238 + $0x190] sm:$0xff]
        %v344 = vld [vmem:[%s238 + $0x198] sm:$0xff]
        %v345 = vld [vmem:[%s238 + $0x1a0] sm:$0xff]
        %v346 = vld [vmem:[%s238 + $0x1a8] sm:$0xff]
        %v347 = vld [vmem:[%s238 + $0x1b0] sm:$0xff]
        %v348 = vld [vmem:[%s238 + $0x1b8] sm:$0xff]
        %v349 = vld [vmem:[%s238 + $0x1c0] sm:$0xff]
        %v350 = vld [vmem:[%s238 + $0x1c8] sm:$0xff]
        %v351 = vld [vmem:[%s238 + $0x1d0] sm:$0xff]
        %v352 = vld [vmem:[%s238 + $0x1d8] sm:$0xff]
        %v353 = vld [vmem:[%s238 + $0x1e0] sm:$0xff]
        %v354 = vld [vmem:[%s238 + $0x1e8] sm:$0xff]
        %v355 = vld [vmem:[%s238 + $0x1f0] sm:$0xff]
        %v356 = vld [vmem:[%s238 + $0x1f8] sm:$0xff]
        %v357 = vld [vmem:[%s238 + $0x200] sm:$0xff]
        %v358 = vld [vmem:[%s238 + $0x208] sm:$0xff]
        %v359 = vld [vmem:[%s238 + $0x210] sm:$0xff]
        %v360 = vld [vmem:[%s238 + $0x218] sm:$0xff]
        %v361 = vld [vmem:[%s238 + $0x220] sm:$0xff]
        %v362 = vld [vmem:[%s238 + $0x228] sm:$0xff]
        %v363 = vld [vmem:[%s238 + $0x230] sm:$0xff]
        %v364 = vld [vmem:[%s238 + $0x238] sm:$0xff]
        %v365 = vld [vmem:[%s238 + $0x240] sm:$0xff]
        %v366 = vld [vmem:[%s238 + $0x248] sm:$0xff]
        %v367 = vld [vmem:[%s238 + $0x250] sm:$0xff]
        %v368 = vld [vmem:[%s238 + $0x258] sm:$0xff]
        %v369 = vld [vmem:[%s238 + $0x260] sm:$0xff]
        %v370 = vld [vmem:[%s238 + $0x268] sm:$0xff]
        %v371 = vld [vmem:[%s238 + $0x270] sm:$0xff]
        %v372 = vld [vmem:[%s238 + $0x278] sm:$0xff]
        %v373 = vld [vmem:[%s238 + $0x280] sm:$0xff]
        %v374 = vld [vmem:[%s238 + $0x288] sm:$0xff]
        %v375 = vld [vmem:[%s238 + $0x290] sm:$0xff]
        %v376 = vld [vmem:[%s238 + $0x298] sm:$0xff]
        %v377 = vld [vmem:[%s238 + $0x2a0] sm:$0xff]
        %v378 = vld [vmem:[%s238 + $0x2a8] sm:$0xff]
        %v379 = vld [vmem:[%s238 + $0x2b0] sm:$0xff]
        %v380 = vld [vmem:[%s238 + $0x2b8] sm:$0xff]
        %v381 = vld [vmem:[%s238 + $0x2c0] sm:$0xff]
        %v382 = vld [vmem:[%s238 + $0x2c8] sm:$0xff]
        %v383 = vld [vmem:[%s238 + $0x2d0] sm:$0xff]
        %v384 = vld [vmem:[%s238 + $0x2d8] sm:$0xff]
        %v385 = vld [vmem:[%s238 + $0x2e0] sm:$0xff]
        %v386 = vld [vmem:[%s238 + $0x2e8] sm:$0xff]
        %v387 = vld [vmem:[%s238 + $0x2f0] sm:$0xff]
        %v388 = vld [vmem:[%s238 + $0x2f8] sm:$0xff]
        %v389 = vld [vmem:[%s238 + $0x300] sm:$0xff]
        %v390 = vld [vmem:[%s238 + $0x308] sm:$0xff]
        %v391 = vld [vmem:[%s238 + $0x310] sm:$0xff]
        %v392 = vld [vmem:[%s238 + $0x318] sm:$0xff]
        %v393 = vld [vmem:[%s238 + $0x320] sm:$0xff]
        %v394 = vld [vmem:[%s238 + $0x328] sm:$0xff]
        %v395 = vld [vmem:[%s238 + $0x330] sm:$0xff]
        %v396 = vld [vmem:[%s238 + $0x338] sm:$0xff]
        %v397 = vld [vmem:[%s238 + $0x340] sm:$0xff]
        %v398 = vld [vmem:[%s238 + $0x348] sm:$0xff]
        %v399 = vld [vmem:[%s238 + $0x350] sm:$0xff]
        %v400 = vld [vmem:[%s238 + $0x358] sm:$0xff]
        %v401 = vld [vmem:[%s238 + $0x360] sm:$0xff]
        %v402 = vld [vmem:[%s238 + $0x368] sm:$0xff]
        %v403 = vld [vmem:[%s238 + $0x370] sm:$0xff]
        %v404 = vld [vmem:[%s238 + $0x378] sm:$0xff]
        %v405 = vld [vmem:[%s238 + $0x380] sm:$0xff]
        %v406 = vld [vmem:[%s238 + $0x388] sm:$0xff]
        %v407 = vld [vmem:[%s238 + $0x390] sm:$0xff]
        %v408 = vld [vmem:[%s238 + $0x398] sm:$0xff]
        %v409 = vld [vmem:[%s238 + $0x3a0] sm:$0xff]
        %v410 = vld [vmem:[%s238 + $0x3a8] sm:$0xff]
        %v411 = vld [vmem:[%s238 + $0x3b0] sm:$0xff]
        %v412 = vld [vmem:[%s238 + $0x3b8] sm:$0xff]
        %v413 = vld [vmem:[%s238 + $0x3c0] sm:$0xff]
        %v414 = vld [vmem:[%s238 + $0x3c8] sm:$0xff]
        %v415 = vld [vmem:[%s238 + $0x3d0] sm:$0xff]
        %v416 = vld [vmem:[%s238 + $0x3d8] sm:$0xff]
        %v417 = vld [vmem:[%s238 + $0x3e0] sm:$0xff]
        %v418 = vld [vmem:[%s238 + $0x3e8] sm:$0xff]
        %v419 = vld [vmem:[%s238 + $0x3f0] sm:$0xff]
        %v420 = vld [vmem:[%s238 + $0x3f8] sm:$0xff]
        %v421 = vld [vmem:[%s238 + $0x400] sm:$0xff]
        %v422 = vld [vmem:[%s238 + $0x408] sm:$0xff]
        %v423 = vld [vmem:[%s238 + $0x410] sm:$0xff]
        %v424 = vld [vmem:[%s238 + $0x418] sm:$0xff]
        %v425 = vld [vmem:[%s238 + $0x420] sm:$0xff]
        %v426 = vld [vmem:[%s238 + $0x428] sm:$0xff]
        %v427 = vld [vmem:[%s238 + $0x430] sm:$0xff]
        %v428 = vld [vmem:[%s238 + $0x438] sm:$0xff]
        %v429 = vld [vmem:[%s238 + $0x440] sm:$0xff]
        %v430 = vld [vmem:[%s238 + $0x448] sm:$0xff]
        %v431 = vld [vmem:[%s238 + $0x450] sm:$0xff]
        %v432 = vld [vmem:[%s238 + $0x458] sm:$0xff]
        %v433 = vld [vmem:[%s238 + $0x460] sm:$0xff]
        %v434 = vld [vmem:[%s238 + $0x468] sm:$0xff]
        %v435 = vld [vmem:[%s238 + $0x470] sm:$0xff]
        %v436 = vld [vmem:[%s238 + $0x478] sm:$0xff]
        %v437 = vld [vmem:[%s238 + $0x480] sm:$0xff]
        %v438 = vld [vmem:[%s238 + $0x488] sm:$0xff]
        %v439 = vld [vmem:[%s238 + $0x490] sm:$0xff]
        %v440 = vld [vmem:[%s238 + $0x498] sm:$0xff]
        %v441 = vld [vmem:[%s238 + $0x4a0] sm:$0xff]
        %v442 = vld [vmem:[%s238 + $0x4a8] sm:$0xff]
        %v443 = vld [vmem:[%s238 + $0x4b0] sm:$0xff]
        %v444 = vld [vmem:[%s238 + $0x4b8] sm:$0xff]
        %v445 = vld [vmem:[%s238 + $0x4c0] sm:$0xff]
        %v446 = vld [vmem:[%s238 + $0x4c8] sm:$0xff]
        %v447 = vld [vmem:[%s238 + $0x4d0] sm:$0xff]
        %v448 = vld [vmem:[%s238 + $0x4d8] sm:$0xff]
        %v449 = vld [vmem:[%s238 + $0x4e0] sm:$0xff]
        %v450 = vld [vmem:[%s238 + $0x4e8] sm:$0xff]
        %v451 = vld [vmem:[%s238 + $0x4f0] sm:$0xff]
        %v452 = vld [vmem:[%s238 + $0x4f8] sm:$0xff]
        %v453 = vld [vmem:[%s238 + $0x500] sm:$0xff]
        %v454 = vld [vmem:[%s238 + $0x508] sm:$0xff]
        %v455 = vld [vmem:[%s238 + $0x510] sm:$0xff]
        %v456 = vld [vmem:[%s238 + $0x518] sm:$0xff]
        %v457 = vld [vmem:[%s238 + $0x520] sm:$0xff]
        %v458 = vld [vmem:[%s238 + $0x528] sm:$0xff]
        %v459 = vld [vmem:[%s238 + $0x530] sm:$0xff]
        %v460 = vld [vmem:[%s238 + $0x538] sm:$0xff]
        %v461 = vld [vmem:[%s238 + $0x540] sm:$0xff]
        %v462 = vld [vmem:[%s238 + $0x548] sm:$0xff]
        %v463 = vld [vmem:[%s238 + $0x550] sm:$0xff]
        %v464 = vld [vmem:[%s238 + $0x558] sm:$0xff]
        %v465 = vld [vmem:[%s238 + $0x560] sm:$0xff]
        %v466 = vld [vmem:[%s238 + $0x568] sm:$0xff]
        %v467 = vld [vmem:[%s238 + $0x570] sm:$0xff]
        %v468 = vld [vmem:[%s238 + $0x578] sm:$0xff]
        %v469 = vld [vmem:[%s238 + $0x580] sm:$0xff]
        %v470 = vld [vmem:[%s238 + $0x588] sm:$0xff]
        %v471 = vld [vmem:[%s238 + $0x590] sm:$0xff]
        %v472 = vld [vmem:[%s238 + $0x598] sm:$0xff]
        %v473 = vld [vmem:[%s238 + $0x5a0] sm:$0xff]
        %v474 = vld [vmem:[%s238 + $0x5a8] sm:$0xff]
        %v475 = vld [vmem:[%s238 + $0x5b0] sm:$0xff]
        %v476 = vld [vmem:[%s238 + $0x5b8] sm:$0xff]
        %v477 = vld [vmem:[%s238 + $0x5c0] sm:$0xff]
        %v478 = vld [vmem:[%s238 + $0x5c8] sm:$0xff]
        %v479 = vld [vmem:[%s238 + $0x5d0] sm:$0xff]
        %v480 = vld [vmem:[%s238 + $0x5d8] sm:$0xff]
        %v481 = vld [vmem:[%s238 + $0x5e0] sm:$0xff]
        %v482 = vld [vmem:[%s238 + $0x5e8] sm:$0xff]
        %v483 = vld [vmem:[%s238 + $0x5f0] sm:$0xff]
        %v484 = vld [vmem:[%s238 + $0x5f8] sm:$0xff]
        %v485 = vld [vmem:[%s238 + $0x600] sm:$0xff]
        %v486 = vld [vmem:[%s238 + $0x608] sm:$0xff]
        %v487 = vld [vmem:[%s238 + $0x610] sm:$0xff]
        %v488 = vld [vmem:[%s238 + $0x618] sm:$0xff]
        %v489 = vld [vmem:[%s238 + $0x620] sm:$0xff]
        %v490 = vld [vmem:[%s238 + $0x628] sm:$0xff]
        %v491 = vld [vmem:[%s238 + $0x630] sm:$0xff]
        %v492 = vld [vmem:[%s238 + $0x638] sm:$0xff]
        %v493 = vld [vmem:[%s238 + $0x640] sm:$0xff]
        %v494 = vld [vmem:[%s238 + $0x648] sm:$0xff]
        %v495 = vld [vmem:[%s238 + $0x650] sm:$0xff]
        %v496 = vld [vmem:[%s238 + $0x658] sm:$0xff]
        %v497 = vld [vmem:[%s238 + $0x660] sm:$0xff]
        %v498 = vld [vmem:[%s238 + $0x668] sm:$0xff]
        %v499 = vld [vmem:[%s238 + $0x670] sm:$0xff]
        %v500 = vld [vmem:[%s238 + $0x678] sm:$0xff]
        %v501 = vld [vmem:[%s238 + $0x680] sm:$0xff]
        %v502 = vld [vmem:[%s238 + $0x688] sm:$0xff]
        %v503 = vld [vmem:[%s238 + $0x690] sm:$0xff]
        %v504 = vld [vmem:[%s238 + $0x698] sm:$0xff]
        %v505 = vld [vmem:[%s238 + $0x6a0] sm:$0xff]
        %v506 = vld [vmem:[%s238 + $0x6a8] sm:$0xff]
        %v507 = vld [vmem:[%s238 + $0x6b0] sm:$0xff]
        %v508 = vld [vmem:[%s238 + $0x6b8] sm:$0xff]
        %v509 = vld [vmem:[%s238 + $0x6c0] sm:$0xff]
        %v510 = vld [vmem:[%s238 + $0x6c8] sm:$0xff]
        %v511 = vld [vmem:[%s238 + $0x6d0] sm:$0xff]
        %v512 = vld [vmem:[%s238 + $0x6d8] sm:$0xff]
        %v513 = vld [vmem:[%s238 + $0x6e0] sm:$0xff]
        %v514 = vld [vmem:[%s238 + $0x6e8] sm:$0xff]
        %v515 = vld [vmem:[%s238 + $0x6f0] sm:$0xff]
        %v516 = vld [vmem:[%s238 + $0x6f8] sm:$0xff]
        %v517 = vld [vmem:[%s238 + $0x700] sm:$0xff]
        %v518 = vld [vmem:[%s238 + $0x708] sm:$0xff]
        %v519 = vld [vmem:[%s238 + $0x710] sm:$0xff]
        %v520 = vld [vmem:[%s238 + $0x718] sm:$0xff]
        %v521 = vld [vmem:[%s238 + $0x720] sm:$0xff]
        %v522 = vld [vmem:[%s238 + $0x728] sm:$0xff]
        %v523 = vld [vmem:[%s238 + $0x730] sm:$0xff]
        %v524 = vld [vmem:[%s238 + $0x738] sm:$0xff]
        %v525 = vld [vmem:[%s238 + $0x740] sm:$0xff]
        %v526 = vld [vmem:[%s238 + $0x748] sm:$0xff]
        %v527 = vld [vmem:[%s238 + $0x750] sm:$0xff]
        %v528 = vld [vmem:[%s238 + $0x758] sm:$0xff]
        %v529 = vld [vmem:[%s238 + $0x760] sm:$0xff]
        %v530 = vld [vmem:[%s238 + $0x768] sm:$0xff]
        %v531 = vld [vmem:[%s238 + $0x770] sm:$0xff]
        %v532 = vld [vmem:[%s238 + $0x778] sm:$0xff]
        %v533 = vld [vmem:[%s238 + $0x780] sm:$0xff]
        %v534 = vld [vmem:[%s238 + $0x788] sm:$0xff]
        %v535 = vld [vmem:[%s238 + $0x790] sm:$0xff]
        %v536 = vld [vmem:[%s238 + $0x798] sm:$0xff]
        %v537 = vld [vmem:[%s238 + $0x7a0] sm:$0xff]
        %v538 = vld [vmem:[%s238 + $0x7a8] sm:$0xff]
        %v539 = vld [vmem:[%s238 + $0x7b0] sm:$0xff]
        %v540 = vld [vmem:[%s238 + $0x7b8] sm:$0xff]
        %v541 = vld [vmem:[%s238 + $0x7c0] sm:$0xff]
        %v542 = vld [vmem:[%s238 + $0x7c8] sm:$0xff]
        %v543 = vld [vmem:[%s238 + $0x7d0] sm:$0xff]
        %v544 = vld [vmem:[%s238 + $0x7d8] sm:$0xff]
        %v545 = vld [vmem:[%s238 + $0x7e0] sm:$0xff]
        %v546 = vld [vmem:[%s238 + $0x7e8] sm:$0xff]
        %v547 = vld [vmem:[%s238 + $0x7f0] sm:$0xff]
        %v548 = vld [vmem:[%s238 + $0x7f8] sm:$0xff]
        %v549 = vld [vmem:[%s238 + $0x800] sm:$0xff]
        %v550 = vld [vmem:[%s238 + $0x808] sm:$0xff]
        %v551 = vld [vmem:[%s238 + $0x810] sm:$0xff]
        %v552 = vld [vmem:[%s238 + $0x818] sm:$0xff]
        %v553 = vld [vmem:[%s238 + $0x820] sm:$0xff]
        %v554 = vld [vmem:[%s238 + $0x828] sm:$0xff]
        %v555 = vld [vmem:[%s238 + $0x830] sm:$0xff]
        %v556 = vld [vmem:[%s238 + $0x838] sm:$0xff]
        %v557 = vld [vmem:[%s238 + $0x840] sm:$0xff]
        %v558 = vld [vmem:[%s238 + $0x848] sm:$0xff]
        %v559 = vld [vmem:[%s238 + $0x850] sm:$0xff]
        %v560 = vld [vmem:[%s238 + $0x858] sm:$0xff]
        %v561 = vld [vmem:[%s238 + $0x860] sm:$0xff]
        %v562 = vld [vmem:[%s238 + $0x868] sm:$0xff]
        %v563 = vld [vmem:[%s238 + $0x870] sm:$0xff]
        %v564 = vld [vmem:[%s238 + $0x878] sm:$0xff]
        %v565 = vld [vmem:[%s238 + $0x880] sm:$0xff]
        %v566 = vld [vmem:[%s238 + $0x888] sm:$0xff]
        %v567 = vld [vmem:[%s238 + $0x890] sm:$0xff]
        %v568 = vld [vmem:[%s238 + $0x898] sm:$0xff]
        %v569 = vld [vmem:[%s238 + $0x8a0] sm:$0xff]
        %v570 = vld [vmem:[%s238 + $0x8a8] sm:$0xff]
        %v571 = vld [vmem:[%s238 + $0x8b0] sm:$0xff]
        %v572 = vld [vmem:[%s238 + $0x8b8] sm:$0xff]
        %v573 = vld [vmem:[%s238 + $0x8c0] sm:$0xff]
        %v574 = vld [vmem:[%s238 + $0x8c8] sm:$0xff]
        %v575 = vld [vmem:[%s238 + $0x8d0] sm:$0xff]
        %v576 = vld [vmem:[%s238 + $0x8d8] sm:$0xff]
        %v577 = vld [vmem:[%s238 + $0x8e0] sm:$0xff]
        %v578 = vld [vmem:[%s238 + $0x8e8] sm:$0xff]
        %v579 = vld [vmem:[%s238 + $0x8f0] sm:$0xff]
        %v580 = vld [vmem:[%s238 + $0x8f8] sm:$0xff]
        %v581 = vld [vmem:[%s238 + $0x900] sm:$0xff]
        %v582 = vld [vmem:[%s238 + $0x908] sm:$0xff]
        %v583 = vld [vmem:[%s238 + $0x910] sm:$0xff]
        %v584 = vld [vmem:[%s238 + $0x918] sm:$0xff]
        %v585 = vld [vmem:[%s238 + $0x920] sm:$0xff]
        %v586 = vld [vmem:[%s238 + $0x928] sm:$0xff]
        %v587 = vld [vmem:[%s238 + $0x930] sm:$0xff]
        %v588 = vld [vmem:[%s238 + $0x938] sm:$0xff]
        %v589 = vld [vmem:[%s238 + $0x940] sm:$0xff]
        %v590 = vld [vmem:[%s238 + $0x948] sm:$0xff]
        %v591 = vld [vmem:[%s238 + $0x950] sm:$0xff]
        %v592 = vld [vmem:[%s238 + $0x958] sm:$0xff]
        %v593 = vld [vmem:[%s238 + $0x960] sm:$0xff]
        %v594 = vld [vmem:[%s238 + $0x968] sm:$0xff]
        %v595 = vld [vmem:[%s238 + $0x970] sm:$0xff]
        %v596 = vld [vmem:[%s238 + $0x978] sm:$0xff]
        %v597 = vld [vmem:[%s238 + $0x980] sm:$0xff]
        %v598 = vld [vmem:[%s238 + $0x988] sm:$0xff]
        %v599 = vld [vmem:[%s238 + $0x990] sm:$0xff]
        %v600 = vld [vmem:[%s238 + $0x998] sm:$0xff]
        %v601 = vld [vmem:[%s238 + $0x9a0] sm:$0xff]
        %v602 = vld [vmem:[%s238 + $0x9a8] sm:$0xff]
        %v603 = vld [vmem:[%s238 + $0x9b0] sm:$0xff]
        %v604 = vld [vmem:[%s238 + $0x9b8] sm:$0xff]
        %v605 = vld [vmem:[%s238 + $0x9c0] sm:$0xff]
        %v606 = vld [vmem:[%s238 + $0x9c8] sm:$0xff]
        %v607 = vld [vmem:[%s238 + $0x9d0] sm:$0xff]
        %v608 = vld [vmem:[%s238 + $0x9d8] sm:$0xff]
        %v609 = vld [vmem:[%s238 + $0x9e0] sm:$0xff]
        %v610 = vld [vmem:[%s238 + $0x9e8] sm:$0xff]
        %v611 = vld [vmem:[%s238 + $0x9f0] sm:$0xff]
        %v612 = vld [vmem:[%s238 + $0x9f8] sm:$0xff]
        %v613 = vld [vmem:[%s238 + $0xa00] sm:$0xff]
        %v614 = vld [vmem:[%s238 + $0xa08] sm:$0xff]
        %v615 = vld [vmem:[%s238 + $0xa10] sm:$0xff]
        %v616 = vld [vmem:[%s238 + $0xa18] sm:$0xff]
        %v617 = vld [vmem:[%s238 + $0xa20] sm:$0xff]
        %v618 = vld [vmem:[%s238 + $0xa28] sm:$0xff]
        %v619 = vld [vmem:[%s238 + $0xa30] sm:$0xff]
        %v620 = vld [vmem:[%s238 + $0xa38] sm:$0xff]
        %v621 = vld [vmem:[%s238 + $0xa40] sm:$0xff]
        %v622 = vld [vmem:[%s238 + $0xa48] sm:$0xff]
        %v623 = vld [vmem:[%s238 + $0xa50] sm:$0xff]
        %v624 = vld [vmem:[%s238 + $0xa58] sm:$0xff]
        %v625 = vld [vmem:[%s238 + $0xa60] sm:$0xff]
        %v626 = vld [vmem:[%s238 + $0xa68] sm:$0xff]
        %v627 = vld [vmem:[%s238 + $0xa70] sm:$0xff]
        %v628 = vld [vmem:[%s238 + $0xa78] sm:$0xff]
        %v629 = vld [vmem:[%s238 + $0xa80] sm:$0xff]
        %v630 = vld [vmem:[%s238 + $0xa88] sm:$0xff]
        %v631 = vld [vmem:[%s238 + $0xa90] sm:$0xff]
        %v632 = vld [vmem:[%s238 + $0xa98] sm:$0xff]
        %v633 = vld [vmem:[%s238 + $0xaa0] sm:$0xff]
        %v634 = vld [vmem:[%s238 + $0xaa8] sm:$0xff]
        %v635 = vld [vmem:[%s238 + $0xab0] sm:$0xff]
        %v636 = vld [vmem:[%s238 + $0xab8] sm:$0xff]
        %v637 = vld [vmem:[%s238 + $0xac0] sm:$0xff]
        %v638 = vld [vmem:[%s238 + $0xac8] sm:$0xff]
        %v639 = vld [vmem:[%s238 + $0xad0] sm:$0xff]
        %v640 = vld [vmem:[%s238 + $0xad8] sm:$0xff]
        %v641 = vld [vmem:[%s238 + $0xae0] sm:$0xff]
        %v642 = vld [vmem:[%s238 + $0xae8] sm:$0xff]
        %v643 = vld [vmem:[%s238 + $0xaf0] sm:$0xff]
        %v644 = vld [vmem:[%s238 + $0xaf8] sm:$0xff]
        %v645 = vld [vmem:[%s238 + $0xb00] sm:$0xff]
        %v646 = vld [vmem:[%s238 + $0xb08] sm:$0xff]
        %v647 = vld [vmem:[%s238 + $0xb10] sm:$0xff]
        %v648 = vld [vmem:[%s238 + $0xb18] sm:$0xff]
        %v649 = vld [vmem:[%s238 + $0xb20] sm:$0xff]
        %v650 = vld [vmem:[%s238 + $0xb28] sm:$0xff]
        %v651 = vld [vmem:[%s238 + $0xb30] sm:$0xff]
        %v652 = vld [vmem:[%s238 + $0xb38] sm:$0xff]
        %v653 = vld [vmem:[%s238 + $0xb40] sm:$0xff]
        %v654 = vld [vmem:[%s238 + $0xb48] sm:$0xff]
        %v655 = vld [vmem:[%s238 + $0xb50] sm:$0xff]
        %v656 = vld [vmem:[%s238 + $0xb58] sm:$0xff]
        %v657 = vld [vmem:[%s238 + $0xb60] sm:$0xff]
        %v658 = vld [vmem:[%s238 + $0xb68] sm:$0xff]
        %v659 = vld [vmem:[%s238 + $0xb70] sm:$0xff]
        %v660 = vld [vmem:[%s238 + $0xb78] sm:$0xff]
        %v661 = vld [vmem:[%s238 + $0xb80] sm:$0xff]
        %v662 = vld [vmem:[%s238 + $0xb88] sm:$0xff]
        %v663 = vld [vmem:[%s238 + $0xb90] sm:$0xff]
        %v664 = vld [vmem:[%s238 + $0xb98] sm:$0xff]
        %v665 = vld [vmem:[%s238 + $0xba0] sm:$0xff]
        %v666 = vld [vmem:[%s238 + $0xba8] sm:$0xff]
        %v667 = vld [vmem:[%s238 + $0xbb0] sm:$0xff]
        %v668 = vld [vmem:[%s238 + $0xbb8] sm:$0xff]
        %v669 = vld [vmem:[%s238 + $0xbc0] sm:$0xff]
        %v670 = vld [vmem:[%s238 + $0xbc8] sm:$0xff]
        %v671 = vld [vmem:[%s238 + $0xbd0] sm:$0xff]
        %v672 = vld [vmem:[%s238 + $0xbd8] sm:$0xff]
        %v673 = vld [vmem:[%s238 + $0xbe0] sm:$0xff]
        %v674 = vld [vmem:[%s238 + $0xbe8] sm:$0xff]
        %v675 = vld [vmem:[%s238 + $0xbf0] sm:$0xff]
        %v676 = vld [vmem:[%s238 + $0xbf8] sm:$0xff]
        %v677 = vld [vmem:[%s238 + $0xc00] sm:$0xff]
        %v678 = vld [vmem:[%s238 + $0xc08] sm:$0xff]
        %v679 = vld [vmem:[%s238 + $0xc10] sm:$0xff]
        %v680 = vld [vmem:[%s238 + $0xc18] sm:$0xff]
        %v681 = vld [vmem:[%s238 + $0xc20] sm:$0xff]
        %v682 = vld [vmem:[%s238 + $0xc28] sm:$0xff]
        %v683 = vld [vmem:[%s238 + $0xc30] sm:$0xff]
        %v684 = vld [vmem:[%s238 + $0xc38] sm:$0xff]
        %v685 = vld [vmem:[%s238 + $0xc40] sm:$0xff]
        %v686 = vld [vmem:[%s238 + $0xc48] sm:$0xff]
        %v687 = vld [vmem:[%s238 + $0xc50] sm:$0xff]
        %v688 = vld [vmem:[%s238 + $0xc58] sm:$0xff]
        %v689 = vld [vmem:[%s238 + $0xc60] sm:$0xff]
        %v690 = vld [vmem:[%s238 + $0xc68] sm:$0xff]
        %v691 = vld [vmem:[%s238 + $0xc70] sm:$0xff]
        %v692 = vld [vmem:[%s238 + $0xc78] sm:$0xff]
        %v693 = vld [vmem:[%s238 + $0xc80] sm:$0xff]
        %v694 = vld [vmem:[%s238 + $0xc88] sm:$0xff]
        %v695 = vld [vmem:[%s238 + $0xc90] sm:$0xff]
        %v696 = vld [vmem:[%s238 + $0xc98] sm:$0xff]
        %v697 = vld [vmem:[%s238 + $0xca0] sm:$0xff]
        %v698 = vld [vmem:[%s238 + $0xca8] sm:$0xff]
        %v699 = vld [vmem:[%s238 + $0xcb0] sm:$0xff]
        %v700 = vld [vmem:[%s238 + $0xcb8] sm:$0xff]
        %v701 = vld [vmem:[%s238 + $0xcc0] sm:$0xff]
        %v702 = vld [vmem:[%s238 + $0xcc8] sm:$0xff]
        %v703 = vld [vmem:[%s238 + $0xcd0] sm:$0xff]
        %v704 = vld [vmem:[%s238 + $0xcd8] sm:$0xff]
        %v705 = vld [vmem:[%s238 + $0xce0] sm:$0xff]
        %v706 = vld [vmem:[%s238 + $0xce8] sm:$0xff]
        %v707 = vld [vmem:[%s238 + $0xcf0] sm:$0xff]
        %v708 = vld [vmem:[%s238 + $0xcf8] sm:$0xff]
        %v709 = vld [vmem:[%s238 + $0xd00] sm:$0xff]
        %v710 = vld [vmem:[%s238 + $0xd08] sm:$0xff]
        %v711 = vld [vmem:[%s238 + $0xd10] sm:$0xff]
        %v712 = vld [vmem:[%s238 + $0xd18] sm:$0xff]
        %v713 = vld [vmem:[%s238 + $0xd20] sm:$0xff]
        %v714 = vld [vmem:[%s238 + $0xd28] sm:$0xff]
        %v715 = vld [vmem:[%s238 + $0xd30] sm:$0xff]
        %v716 = vld [vmem:[%s238 + $0xd38] sm:$0xff]
        %v717 = vld [vmem:[%s238 + $0xd40] sm:$0xff]
        %v718 = vld [vmem:[%s238 + $0xd48] sm:$0xff]
        %v719 = vld [vmem:[%s238 + $0xd50] sm:$0xff]
        %v720 = vld [vmem:[%s238 + $0xd58] sm:$0xff]
        %v721 = vld [vmem:[%s238 + $0xd60] sm:$0xff]
        %v722 = vld [vmem:[%s238 + $0xd68] sm:$0xff]
        %v723 = vld [vmem:[%s238 + $0xd70] sm:$0xff]
        %v724 = vld [vmem:[%s238 + $0xd78] sm:$0xff]
        %v725 = vld [vmem:[%s238 + $0xd80] sm:$0xff]
        %v726 = vld [vmem:[%s238 + $0xd88] sm:$0xff]
        %v727 = vld [vmem:[%s238 + $0xd90] sm:$0xff]
        %v728 = vld [vmem:[%s238 + $0xd98] sm:$0xff]
        %v729 = vld [vmem:[%s238 + $0xda0] sm:$0xff]
        %v730 = vld [vmem:[%s238 + $0xda8] sm:$0xff]
        %v731 = vld [vmem:[%s238 + $0xdb0] sm:$0xff]
        %v732 = vld [vmem:[%s238 + $0xdb8] sm:$0xff]
        %v733 = vld [vmem:[%s238 + $0xdc0] sm:$0xff]
        %v734 = vld [vmem:[%s238 + $0xdc8] sm:$0xff]
        %v735 = vld [vmem:[%s238 + $0xdd0] sm:$0xff]
        %v736 = vld [vmem:[%s238 + $0xdd8] sm:$0xff]
        %v737 = vld [vmem:[%s238 + $0xde0] sm:$0xff]
        %v738 = vld [vmem:[%s238 + $0xde8] sm:$0xff]
        %v739 = vld [vmem:[%s238 + $0xdf0] sm:$0xff]
        %v740 = vld [vmem:[%s238 + $0xdf8] sm:$0xff]
        %v741 = vld [vmem:[%s238 + $0xe00] sm:$0xff]
        %v742 = vld [vmem:[%s238 + $0xe08] sm:$0xff]
        %v743 = vld [vmem:[%s238 + $0xe10] sm:$0xff]
        %v744 = vld [vmem:[%s238 + $0xe18] sm:$0xff]
        %v745 = vld [vmem:[%s238 + $0xe20] sm:$0xff]
        %v746 = vld [vmem:[%s238 + $0xe28] sm:$0xff]
        %v747 = vld [vmem:[%s238 + $0xe30] sm:$0xff]
        %v748 = vld [vmem:[%s238 + $0xe38] sm:$0xff]
        %v749 = vld [vmem:[%s238 + $0xe40] sm:$0xff]
        %v750 = vld [vmem:[%s238 + $0xe48] sm:$0xff]
        %v751 = vld [vmem:[%s238 + $0xe50] sm:$0xff]
        %v752 = vld [vmem:[%s238 + $0xe58] sm:$0xff]
        %v753 = vld [vmem:[%s238 + $0xe60] sm:$0xff]
        %v754 = vld [vmem:[%s238 + $0xe68] sm:$0xff]
        %v755 = vld [vmem:[%s238 + $0xe70] sm:$0xff]
        %v756 = vld [vmem:[%s238 + $0xe78] sm:$0xff]
        %v757 = vld [vmem:[%s238 + $0xe80] sm:$0xff]
        %v758 = vld [vmem:[%s238 + $0xe88] sm:$0xff]
        %v759 = vld [vmem:[%s238 + $0xe90] sm:$0xff]
        %v760 = vld [vmem:[%s238 + $0xe98] sm:$0xff]
        %v761 = vld [vmem:[%s238 + $0xea0] sm:$0xff]
        %v762 = vld [vmem:[%s238 + $0xea8] sm:$0xff]
        %v763 = vld [vmem:[%s238 + $0xeb0] sm:$0xff]
        %v764 = vld [vmem:[%s238 + $0xeb8] sm:$0xff]
        %v765 = vld [vmem:[%s238 + $0xec0] sm:$0xff]
        %v766 = vld [vmem:[%s238 + $0xec8] sm:$0xff]
        %v767 = vld [vmem:[%s238 + $0xed0] sm:$0xff]
        %v768 = vld [vmem:[%s238 + $0xed8] sm:$0xff]
        %v769 = vld [vmem:[%s238 + $0xee0] sm:$0xff]
        %v770 = vld [vmem:[%s238 + $0xee8] sm:$0xff]
        %v771 = vld [vmem:[%s238 + $0xef0] sm:$0xff]
        %v772 = vld [vmem:[%s238 + $0xef8] sm:$0xff]
        %v773 = vld [vmem:[%s238 + $0xf00] sm:$0xff]
        %v774 = vld [vmem:[%s238 + $0xf08] sm:$0xff]
        %v775 = vld [vmem:[%s238 + $0xf10] sm:$0xff]
        %v776 = vld [vmem:[%s238 + $0xf18] sm:$0xff]
        %v777 = vld [vmem:[%s238 + $0xf20] sm:$0xff]
        %v778 = vld [vmem:[%s238 + $0xf28] sm:$0xff]
        %v779 = vld [vmem:[%s238 + $0xf30] sm:$0xff]
        %v780 = vld [vmem:[%s238 + $0xf38] sm:$0xff]
        %v781 = vld [vmem:[%s238 + $0xf40] sm:$0xff]
        %v782 = vld [vmem:[%s238 + $0xf48] sm:$0xff]
        %v783 = vld [vmem:[%s238 + $0xf50] sm:$0xff]
        %v784 = vld [vmem:[%s238 + $0xf58] sm:$0xff]
        %v785 = vld [vmem:[%s238 + $0xf60] sm:$0xff]
        %v786 = vld [vmem:[%s238 + $0xf68] sm:$0xff]
        %v787 = vld [vmem:[%s238 + $0xf70] sm:$0xff]
        %v788 = vld [vmem:[%s238 + $0xf78] sm:$0xff]
        %v789 = vld [vmem:[%s238 + $0xf80] sm:$0xff]
        %v790 = vld [vmem:[%s238 + $0xf88] sm:$0xff]
        %v791 = vld [vmem:[%s238 + $0xf90] sm:$0xff]
        %v792 = vld [vmem:[%s238 + $0xf98] sm:$0xff]
        %v793 = vld [vmem:[%s238 + $0xfa0] sm:$0xff]
        %v794 = vld [vmem:[%s238 + $0xfa8] sm:$0xff]
        %v795 = vld [vmem:[%s238 + $0xfb0] sm:$0xff]
        %v796 = vld [vmem:[%s238 + $0xfb8] sm:$0xff]
        %v797 = vld [vmem:[%s238 + $0xfc0] sm:$0xff]
        %v798 = vld [vmem:[%s238 + $0xfc8] sm:$0xff]
        %v799 = vld [vmem:[%s238 + $0xfd0] sm:$0xff]
        %v800 = vld [vmem:[%s238 + $0xfd8] sm:$0xff]
        %v801 = vld [vmem:[%s238 + $0xfe0] sm:$0xff]
        %v802 = vld [vmem:[%s238 + $0xfe8] sm:$0xff]
        %v803 = vld [vmem:[%s238 + $0xff0] sm:$0xff]
        %v804 = vld [vmem:[%s238 + $0xff8] sm:$0xff]
        %v805 = vld [vmem:[%s238 + $0x1000] sm:$0xff]
        %v806 = vld [vmem:[%s238 + $0x1008] sm:$0xff]
        %v807 = vld [vmem:[%s238 + $0x1010] sm:$0xff]
        %v808 = vld [vmem:[%s238 + $0x1018] sm:$0xff]
        %v809 = vld [vmem:[%s238 + $0x1020] sm:$0xff]
        %v810 = vld [vmem:[%s238 + $0x1028] sm:$0xff]
        %v811 = vld [vmem:[%s238 + $0x1030] sm:$0xff]
        %v812 = vld [vmem:[%s238 + $0x1038] sm:$0xff]
        %v813 = vld [vmem:[%s238 + $0x1040] sm:$0xff]
        %v814 = vld [vmem:[%s238 + $0x1048] sm:$0xff]
        %v815 = vld [vmem:[%s238 + $0x1050] sm:$0xff]
        %v816 = vld [vmem:[%s238 + $0x1058] sm:$0xff]
        %v817 = vld [vmem:[%s238 + $0x1060] sm:$0xff]
        %v818 = vld [vmem:[%s238 + $0x1068] sm:$0xff]
        %v819 = vld [vmem:[%s238 + $0x1070] sm:$0xff]
        %v820 = vld [vmem:[%s238 + $0x1078] sm:$0xff]
        %v821 = vld [vmem:[%s238 + $0x1080] sm:$0xff]
        %v822 = vld [vmem:[%s238 + $0x1088] sm:$0xff]
        %v823 = vld [vmem:[%s238 + $0x1090] sm:$0xff]
        %v824 = vld [vmem:[%s238 + $0x1098] sm:$0xff]
        %v825 = vld [vmem:[%s238 + $0x10a0] sm:$0xff]
        %v826 = vld [vmem:[%s238 + $0x10a8] sm:$0xff]
        %v827 = vld [vmem:[%s238 + $0x10b0] sm:$0xff]
        %v828 = vld [vmem:[%s238 + $0x10b8] sm:$0xff]
        %v829 = vld [vmem:[%s238 + $0x10c0] sm:$0xff]
        %v830 = vld [vmem:[%s238 + $0x10c8] sm:$0xff]
        %v831 = vld [vmem:[%s238 + $0x10d0] sm:$0xff]
        %v832 = vld [vmem:[%s238 + $0x10d8] sm:$0xff]
        %v833 = vld [vmem:[%s238 + $0x10e0] sm:$0xff]
        %v834 = vld [vmem:[%s238 + $0x10e8] sm:$0xff]
        %v835 = vld [vmem:[%s238 + $0x10f0] sm:$0xff]
        %v836 = vld [vmem:[%s238 + $0x10f8] sm:$0xff]
        %v837 = vld [vmem:[%s238 + $0x1100] sm:$0xff]
        %v838 = vld [vmem:[%s238 + $0x1108] sm:$0xff]
        %v839 = vld [vmem:[%s238 + $0x1110] sm:$0xff]
        %v840 = vld [vmem:[%s238 + $0x1118] sm:$0xff]
        %v841 = vld [vmem:[%s238 + $0x1120] sm:$0xff]
        %v842 = vld [vmem:[%s238 + $0x1128] sm:$0xff]
        %v843 = vld [vmem:[%s238 + $0x1130] sm:$0xff]
        %v844 = vld [vmem:[%s238 + $0x1138] sm:$0xff]
        %v845 = vld [vmem:[%s238 + $0x1140] sm:$0xff]
        %v846 = vld [vmem:[%s238 + $0x1148] sm:$0xff]
        %v847 = vld [vmem:[%s238 + $0x1150] sm:$0xff]
        %v848 = vld [vmem:[%s238 + $0x1158] sm:$0xff]
        %v849 = vld [vmem:[%s238 + $0x1160] sm:$0xff]
        %v850 = vld [vmem:[%s238 + $0x1168] sm:$0xff]
        %v851 = vld [vmem:[%s238 + $0x1170] sm:$0xff]
        %v852 = vld [vmem:[%s238 + $0x1178] sm:$0xff]
        %v853 = vld [vmem:[%s238 + $0x1180] sm:$0xff]
        %v854 = vld [vmem:[%s238 + $0x1188] sm:$0xff]
        %v855 = vld [vmem:[%s238 + $0x1190] sm:$0xff]
        %v856 = vld [vmem:[%s238 + $0x1198] sm:$0xff]
        %v857 = vld [vmem:[%s238 + $0x11a0] sm:$0xff]
        %v858 = vld [vmem:[%s238 + $0x11a8] sm:$0xff]
        %v859 = vld [vmem:[%s238 + $0x11b0] sm:$0xff]
        %v860 = vld [vmem:[%s238 + $0x11b8] sm:$0xff]
        %v861 = vld [vmem:[%s238 + $0x11c0] sm:$0xff]
        %v862 = vld [vmem:[%s238 + $0x11c8] sm:$0xff]
        %v863 = vld [vmem:[%s238 + $0x11d0] sm:$0xff]
        %v864 = vld [vmem:[%s238 + $0x11d8] sm:$0xff]
        %v865 = vld [vmem:[%s238 + $0x11e0] sm:$0xff]
        %v866 = vld [vmem:[%s238 + $0x11e8] sm:$0xff]
        %v867 = vld [vmem:[%s238 + $0x11f0] sm:$0xff]
        %v868 = vld [vmem:[%s238 + $0x11f8] sm:$0xff]
        %v869 = vld [vmem:[%s238 + $0x1200] sm:$0xff]
        %v870 = vld [vmem:[%s238 + $0x1208] sm:$0xff]
        %v871 = vld [vmem:[%s238 + $0x1210] sm:$0xff]
        %v872 = vld [vmem:[%s238 + $0x1218] sm:$0xff]
        %v873 = vld [vmem:[%s238 + $0x1220] sm:$0xff]
        %v874 = vld [vmem:[%s238 + $0x1228] sm:$0xff]
        %v875 = vld [vmem:[%s238 + $0x1230] sm:$0xff]
        %v876 = vld [vmem:[%s238 + $0x1238] sm:$0xff]
        %v877 = vld [vmem:[%s238 + $0x1240] sm:$0xff]
        %v878 = vld [vmem:[%s238 + $0x1248] sm:$0xff]
        %v879 = vld [vmem:[%s238 + $0x1250] sm:$0xff]
        %v880 = vld [vmem:[%s238 + $0x1258] sm:$0xff]
        %v881 = vld [vmem:[%s238 + $0x1260] sm:$0xff]
        %v882 = vld [vmem:[%s238 + $0x1268] sm:$0xff]
        %v883 = vld [vmem:[%s238 + $0x1270] sm:$0xff]
        %v884 = vld [vmem:[%s238 + $0x1278] sm:$0xff]
        %v885 = vld [vmem:[%s238 + $0x1280] sm:$0xff]
        %v886 = vld [vmem:[%s238 + $0x1288] sm:$0xff]
        %v887 = vld [vmem:[%s238 + $0x1290] sm:$0xff]
        %v888 = vld [vmem:[%s238 + $0x1298] sm:$0xff]
        %v889 = vld [vmem:[%s238 + $0x12a0] sm:$0xff]
        %v890 = vld [vmem:[%s238 + $0x12a8] sm:$0xff]
        %v891 = vld [vmem:[%s238 + $0x12b0] sm:$0xff]
        %v892 = vld [vmem:[%s238 + $0x12b8] sm:$0xff]
        %v893 = vld [vmem:[%s238 + $0x12c0] sm:$0xff]
        %v894 = vld [vmem:[%s238 + $0x12c8] sm:$0xff]
        %v895 = vld [vmem:[%s238 + $0x12d0] sm:$0xff]
        %v896 = vld [vmem:[%s238 + $0x12d8] sm:$0xff]
        %v897 = vld [vmem:[%s238 + $0x12e0] sm:$0xff]
        %v898 = vld [vmem:[%s238 + $0x12e8] sm:$0xff]
        %v899 = vld [vmem:[%s238 + $0x12f0] sm:$0xff]
        %v900 = vld [vmem:[%s238 + $0x12f8] sm:$0xff]
        %v901 = vld [vmem:[%s238 + $0x1300] sm:$0xff]
        %v902 = vld [vmem:[%s238 + $0x1308] sm:$0xff]
        %v903 = vld [vmem:[%s238 + $0x1310] sm:$0xff]
        %v904 = vld [vmem:[%s238 + $0x1318] sm:$0xff]
        %v905 = vld [vmem:[%s238 + $0x1320] sm:$0xff]
        %v906 = vld [vmem:[%s238 + $0x1328] sm:$0xff]
        %v907 = vld [vmem:[%s238 + $0x1330] sm:$0xff]
        %v908 = vld [vmem:[%s238 + $0x1338] sm:$0xff]
        %v909 = vld [vmem:[%s238 + $0x1340] sm:$0xff]
        %v910 = vld [vmem:[%s238 + $0x1348] sm:$0xff]
        %v911 = vld [vmem:[%s238 + $0x1350] sm:$0xff]
        %v912 = vld [vmem:[%s238 + $0x1358] sm:$0xff]
        %v913 = vld [vmem:[%s238 + $0x1360] sm:$0xff]
        %v914 = vld [vmem:[%s238 + $0x1368] sm:$0xff]
        %v915 = vld [vmem:[%s238 + $0x1370] sm:$0xff]
        %v916 = vld [vmem:[%s238 + $0x1378] sm:$0xff]
        %v917 = vld [vmem:[%s238 + $0x1380] sm:$0xff]
        %v918 = vld [vmem:[%s238 + $0x1388] sm:$0xff]
        %v919 = vld [vmem:[%s238 + $0x1390] sm:$0xff]
        %v920 = vld [vmem:[%s238 + $0x1398] sm:$0xff]
        %v921 = vld [vmem:[%s238 + $0x13a0] sm:$0xff]
        %v922 = vld [vmem:[%s238 + $0x13a8] sm:$0xff]
        %v923 = vld [vmem:[%s238 + $0x13b0] sm:$0xff]
        %v924 = vld [vmem:[%s238 + $0x13b8] sm:$0xff]
        %v925 = vld [vmem:[%s238 + $0x13c0] sm:$0xff]
        %v926 = vld [vmem:[%s238 + $0x13c8] sm:$0xff]
        %v927 = vld [vmem:[%s238 + $0x13d0] sm:$0xff]
        %v928 = vld [vmem:[%s238 + $0x13d8] sm:$0xff]
        %v929 = vld [vmem:[%s238 + $0x13e0] sm:$0xff]
        %v930 = vld [vmem:[%s238 + $0x13e8] sm:$0xff]
        %v931 = vld [vmem:[%s238 + $0x13f0] sm:$0xff]
        %v932 = vld [vmem:[%s238 + $0x13f8] sm:$0xff]
        %v933 = vld [vmem:[%s238 + $0x1400] sm:$0xff]
        %v934 = vld [vmem:[%s238 + $0x1408] sm:$0xff]
        %v935 = vld [vmem:[%s238 + $0x1410] sm:$0xff]
        %v936 = vld [vmem:[%s238 + $0x1418] sm:$0xff]
        %v937 = vld [vmem:[%s238 + $0x1420] sm:$0xff]
        %v938 = vld [vmem:[%s238 + $0x1428] sm:$0xff]
        %v939 = vld [vmem:[%s238 + $0x1430] sm:$0xff]
        %v940 = vld [vmem:[%s238 + $0x1438] sm:$0xff]
        %v941 = vld [vmem:[%s238 + $0x1440] sm:$0xff]
        %v942 = vld [vmem:[%s238 + $0x1448] sm:$0xff]
        %v943 = vld [vmem:[%s238 + $0x1450] sm:$0xff]
        %v944 = vld [vmem:[%s238 + $0x1458] sm:$0xff]
        %v945 = vld [vmem:[%s238 + $0x1460] sm:$0xff]
        %v946 = vld [vmem:[%s238 + $0x1468] sm:$0xff]
        %v947 = vld [vmem:[%s238 + $0x1470] sm:$0xff]
        %v948 = vld [vmem:[%s238 + $0x1478] sm:$0xff]
        %v949 = vld [vmem:[%s238 + $0x1480] sm:$0xff]
        %v950 = vld [vmem:[%s238 + $0x1488] sm:$0xff]
        %v951 = vld [vmem:[%s238 + $0x1490] sm:$0xff]
        %v952 = vld [vmem:[%s238 + $0x1498] sm:$0xff]
        %v953 = vld [vmem:[%s238 + $0x14a0] sm:$0xff]
        %v954 = vld [vmem:[%s238 + $0x14a8] sm:$0xff]
        %v955 = vld [vmem:[%s238 + $0x14b0] sm:$0xff]
        %v956 = vld [vmem:[%s238 + $0x14b8] sm:$0xff]
        %v957 = vld [vmem:[%s238 + $0x14c0] sm:$0xff]
        %v958 = vld [vmem:[%s238 + $0x14c8] sm:$0xff]
        %v959 = vld [vmem:[%s238 + $0x14d0] sm:$0xff]
        %v960 = vld [vmem:[%s238 + $0x14d8] sm:$0xff]
        %v961 = vld [vmem:[%s238 + $0x14e0] sm:$0xff]
        %v962 = vld [vmem:[%s238 + $0x14e8] sm:$0xff]
        %v963 = vld [vmem:[%s238 + $0x14f0] sm:$0xff]
        %v964 = vld [vmem:[%s238 + $0x14f8] sm:$0xff]
        %v965 = vld [vmem:[%s238 + $0x1500] sm:$0xff]
        %v966 = vld [vmem:[%s238 + $0x1508] sm:$0xff]
        %v967 = vld [vmem:[%s238 + $0x1510] sm:$0xff]
        %v968 = vld [vmem:[%s238 + $0x1518] sm:$0xff]
        %v969 = vld [vmem:[%s238 + $0x1520] sm:$0xff]
        %v970 = vld [vmem:[%s238 + $0x1528] sm:$0xff]
        %v971 = vld [vmem:[%s238 + $0x1530] sm:$0xff]
        %v972 = vld [vmem:[%s238 + $0x1538] sm:$0xff]
        %v973 = vld [vmem:[%s238 + $0x1540] sm:$0xff]
        %v974 = vld [vmem:[%s238 + $0x1548] sm:$0xff]
        %v975 = vld [vmem:[%s238 + $0x1550] sm:$0xff]
        %v976 = vld [vmem:[%s238 + $0x1558] sm:$0xff]
        %v977 = vld [vmem:[%s238 + $0x1560] sm:$0xff]
        %v978 = vld [vmem:[%s238 + $0x1568] sm:$0xff]
        %v979 = vld [vmem:[%s238 + $0x1570] sm:$0xff]
        %v980 = vld [vmem:[%s238 + $0x1578] sm:$0xff]
        %v981 = vld [vmem:[%s238 + $0x1580] sm:$0xff]
        %v982 = vld [vmem:[%s238 + $0x1588] sm:$0xff]
        %v983 = vld [vmem:[%s238 + $0x1590] sm:$0xff]
        %v984 = vld [vmem:[%s238 + $0x1598] sm:$0xff]
        %v985 = vld [vmem:[%s238 + $0x15a0] sm:$0xff]
        %v986 = vld [vmem:[%s238 + $0x15a8] sm:$0xff]
        %v987 = vld [vmem:[%s238 + $0x15b0] sm:$0xff]
        %v988 = vld [vmem:[%s238 + $0x15b8] sm:$0xff]
        %v989 = vld [vmem:[%s238 + $0x15c0] sm:$0xff]
        %v990 = vld [vmem:[%s238 + $0x15c8] sm:$0xff]
        %v991 = vld [vmem:[%s238 + $0x15d0] sm:$0xff]
        %v992 = vld [vmem:[%s238 + $0x15d8] sm:$0xff]
        %v993 = vld [vmem:[%s238 + $0x15e0] sm:$0xff]
        %v994 = vld [vmem:[%s238 + $0x15e8] sm:$0xff]
        %v995 = vld [vmem:[%s238 + $0x15f0] sm:$0xff]
        %v996 = vld [vmem:[%s238 + $0x15f8] sm:$0xff]
        %v997 = vld [vmem:[%s238 + $0x1600] sm:$0xff]
        %v998 = vld [vmem:[%s238 + $0x1608] sm:$0xff]
        %v999 = vld [vmem:[%s238 + $0x1610] sm:$0xff]
        %v1000 = vld [vmem:[%s238 + $0x1618] sm:$0xff]
        %v1001 = vld [vmem:[%s238 + $0x1620] sm:$0xff]
        %v1002 = vld [vmem:[%s238 + $0x1628] sm:$0xff]
        %v1003 = vld [vmem:[%s238 + $0x1630] sm:$0xff]
        %v1004 = vld [vmem:[%s238 + $0x1638] sm:$0xff]
        %v1005 = vld [vmem:[%s238 + $0x1640] sm:$0xff]
        %v1006 = vld [vmem:[%s238 + $0x1648] sm:$0xff]
        %v1007 = vld [vmem:[%s238 + $0x1650] sm:$0xff]
        %v1008 = vld [vmem:[%s238 + $0x1658] sm:$0xff]
        %v1009 = vld [vmem:[%s238 + $0x1660] sm:$0xff]
        %v1010 = vld [vmem:[%s238 + $0x1668] sm:$0xff]
        %v1011 = vld [vmem:[%s238 + $0x1670] sm:$0xff]
        %v1012 = vld [vmem:[%s238 + $0x1678] sm:$0xff]
        %v1013 = vld [vmem:[%s238 + $0x1680] sm:$0xff]
        %v1014 = vld [vmem:[%s238 + $0x1688] sm:$0xff]
        %v1015 = vld [vmem:[%s238 + $0x1690] sm:$0xff]
        %v1016 = vld [vmem:[%s238 + $0x1698] sm:$0xff]
        %v1017 = vld [vmem:[%s238 + $0x16a0] sm:$0xff]
        %v1018 = vld [vmem:[%s238 + $0x16a8] sm:$0xff]
        %v1019 = vld [vmem:[%s238 + $0x16b0] sm:$0xff]
        %v1020 = vld [vmem:[%s238 + $0x16b8] sm:$0xff]
        %v1021 = vld [vmem:[%s238 + $0x16c0] sm:$0xff]
        %v1022 = vld [vmem:[%s238 + $0x16c8] sm:$0xff]
        %v1023 = vld [vmem:[%s238 + $0x16d0] sm:$0xff]
        %v1024 = vld [vmem:[%s238 + $0x16d8] sm:$0xff]
        %v1025 = vld [vmem:[%s238 + $0x16e0] sm:$0xff]
        %v1026 = vld [vmem:[%s238 + $0x16e8] sm:$0xff]
        %v1027 = vld [vmem:[%s238 + $0x16f0] sm:$0xff]
        %v1028 = vld [vmem:[%s238 + $0x16f8] sm:$0xff]
        %v1029 = vld [vmem:[%s238 + $0x1700] sm:$0xff]
        %v1030 = vld [vmem:[%s238 + $0x1708] sm:$0xff]
        %v1031 = vld [vmem:[%s238 + $0x1710] sm:$0xff]
        %v1032 = vld [vmem:[%s238 + $0x1718] sm:$0xff]
        %v1033 = vld [vmem:[%s238 + $0x1720] sm:$0xff]
        %v1034 = vld [vmem:[%s238 + $0x1728] sm:$0xff]
        %v1035 = vld [vmem:[%s238 + $0x1730] sm:$0xff]
        %v1036 = vld [vmem:[%s238 + $0x1738] sm:$0xff]
        %v1037 = vld [vmem:[%s238 + $0x1740] sm:$0xff]
        %v1038 = vld [vmem:[%s238 + $0x1748] sm:$0xff]
        %v1039 = vld [vmem:[%s238 + $0x1750] sm:$0xff]
        %v1040 = vld [vmem:[%s238 + $0x1758] sm:$0xff]
        %v1041 = vld [vmem:[%s238 + $0x1760] sm:$0xff]
        %v1042 = vld [vmem:[%s238 + $0x1768] sm:$0xff]
        %v1043 = vld [vmem:[%s238 + $0x1770] sm:$0xff]
        %v1044 = vld [vmem:[%s238 + $0x1778] sm:$0xff]
        %v1045 = vld [vmem:[%s238 + $0x1780] sm:$0xff]
        %v1046 = vld [vmem:[%s238 + $0x1788] sm:$0xff]
        %v1047 = vld [vmem:[%s238 + $0x1790] sm:$0xff]
        %v1048 = vld [vmem:[%s238 + $0x1798] sm:$0xff]
        %v1049 = vld [vmem:[%s238 + $0x17a0] sm:$0xff]
        %v1050 = vld [vmem:[%s238 + $0x17a8] sm:$0xff]
        %v1051 = vld [vmem:[%s238 + $0x17b0] sm:$0xff]
        %v1052 = vld [vmem:[%s238 + $0x17b8] sm:$0xff]
        %v1053 = vld [vmem:[%s238 + $0x17c0] sm:$0xff]
        %v1054 = vld [vmem:[%s238 + $0x17c8] sm:$0xff]
        %v1055 = vld [vmem:[%s238 + $0x17d0] sm:$0xff]
        %v1056 = vld [vmem:[%s238 + $0x17d8] sm:$0xff]
        %v1057 = vld [vmem:[%s238 + $0x17e0] sm:$0xff]
        %v1058 = vld [vmem:[%s238 + $0x17e8] sm:$0xff]
        %v1059 = vld [vmem:[%s238 + $0x17f0] sm:$0xff]
        %v1060 = vld [vmem:[%s238 + $0x17f8] sm:$0xff]
        %v1061 = vld [vmem:[%s238 + $0x1800] sm:$0xff]
        %v1062 = vld [vmem:[%s238 + $0x1808] sm:$0xff]
        %v1063 = vld [vmem:[%s238 + $0x1810] sm:$0xff]
        %v1064 = vld [vmem:[%s238 + $0x1818] sm:$0xff]
        %v1065 = vld [vmem:[%s238 + $0x1820] sm:$0xff]
        %v1066 = vld [vmem:[%s238 + $0x1828] sm:$0xff]
        %v1067 = vld [vmem:[%s238 + $0x1830] sm:$0xff]
        %v1068 = vld [vmem:[%s238 + $0x1838] sm:$0xff]
        %v1069 = vld [vmem:[%s238 + $0x1840] sm:$0xff]
        %v1070 = vld [vmem:[%s238 + $0x1848] sm:$0xff]
        %v1071 = vld [vmem:[%s238 + $0x1850] sm:$0xff]
        %v1072 = vld [vmem:[%s238 + $0x1858] sm:$0xff]
        %v1073 = vld [vmem:[%s238 + $0x1860] sm:$0xff]
        %v1074 = vld [vmem:[%s238 + $0x1868] sm:$0xff]
        %v1075 = vld [vmem:[%s238 + $0x1870] sm:$0xff]
        %v1076 = vld [vmem:[%s238 + $0x1878] sm:$0xff]
        %v1077 = vld [vmem:[%s238 + $0x1880] sm:$0xff]
        %v1078 = vld [vmem:[%s238 + $0x1888] sm:$0xff]
        %v1079 = vld [vmem:[%s238 + $0x1890] sm:$0xff]
        %v1080 = vld [vmem:[%s238 + $0x1898] sm:$0xff]
        %v1081 = vld [vmem:[%s238 + $0x18a0] sm:$0xff]
        %v1082 = vld [vmem:[%s238 + $0x18a8] sm:$0xff]
        %v1083 = vld [vmem:[%s238 + $0x18b0] sm:$0xff]
        %v1084 = vld [vmem:[%s238 + $0x18b8] sm:$0xff]
        %v1085 = vld [vmem:[%s238 + $0x18c0] sm:$0xff]
        %v1086 = vld [vmem:[%s238 + $0x18c8] sm:$0xff]
        %v1087 = vld [vmem:[%s238 + $0x18d0] sm:$0xff]
        %v1088 = vld [vmem:[%s238 + $0x18d8] sm:$0xff]
        %v1089 = vld [vmem:[%s238 + $0x18e0] sm:$0xff]
        %v1090 = vld [vmem:[%s238 + $0x18e8] sm:$0xff]
        %v1091 = vld [vmem:[%s238 + $0x18f0] sm:$0xff]
        %v1092 = vld [vmem:[%s238 + $0x18f8] sm:$0xff]
        %v1093 = vld [vmem:[%s238 + $0x1900] sm:$0xff]
        %v1094 = vld [vmem:[%s238 + $0x1908] sm:$0xff]
        %v1095 = vld [vmem:[%s238 + $0x1910] sm:$0xff]
        %v1096 = vld [vmem:[%s238 + $0x1918] sm:$0xff]
        %v1097 = vld [vmem:[%s238 + $0x1920] sm:$0xff]
        %v1098 = vld [vmem:[%s238 + $0x1928] sm:$0xff]
        %v1099 = vld [vmem:[%s238 + $0x1930] sm:$0xff]
        %v1100 = vld [vmem:[%s238 + $0x1938] sm:$0xff]
        %v1101 = vld [vmem:[%s238 + $0x1940] sm:$0xff]
        %v1102 = vld [vmem:[%s238 + $0x1948] sm:$0xff]
        %v1103 = vld [vmem:[%s238 + $0x1950] sm:$0xff]
        %v1104 = vld [vmem:[%s238 + $0x1958] sm:$0xff]
        %v1105 = vld [vmem:[%s238 + $0x1960] sm:$0xff]
        %v1106 = vld [vmem:[%s238 + $0x1968] sm:$0xff]
        %v1107 = vld [vmem:[%s238 + $0x1970] sm:$0xff]
        %v1108 = vld [vmem:[%s238 + $0x1978] sm:$0xff]
        %v1109 = vld [vmem:[%s238 + $0x1980] sm:$0xff]
        %v1110 = vld [vmem:[%s238 + $0x1988] sm:$0xff]
        %v1111 = vld [vmem:[%s238 + $0x1990] sm:$0xff]
        %v1112 = vld [vmem:[%s238 + $0x1998] sm:$0xff]
        %v1113 = vld [vmem:[%s238 + $0x19a0] sm:$0xff]
        %v1114 = vld [vmem:[%s238 + $0x19a8] sm:$0xff]
        %v1115 = vld [vmem:[%s238 + $0x19b0] sm:$0xff]
        %v1116 = vld [vmem:[%s238 + $0x19b8] sm:$0xff]
        %v1117 = vld [vmem:[%s238 + $0x19c0] sm:$0xff]
        %v1118 = vld [vmem:[%s238 + $0x19c8] sm:$0xff]
        %v1119 = vld [vmem:[%s238 + $0x19d0] sm:$0xff]
        %v1120 = vld [vmem:[%s238 + $0x19d8] sm:$0xff]
        %v1121 = vld [vmem:[%s238 + $0x19e0] sm:$0xff]
        %v1122 = vld [vmem:[%s238 + $0x19e8] sm:$0xff]
        %v1123 = vld [vmem:[%s238 + $0x19f0] sm:$0xff]
        %v1124 = vld [vmem:[%s238 + $0x19f8] sm:$0xff]
        %v1125 = vld [vmem:[%s238 + $0x1a00] sm:$0xff]
        %v1126 = vld [vmem:[%s238 + $0x1a08] sm:$0xff]
        %v1127 = vld [vmem:[%s238 + $0x1a10] sm:$0xff]
        %v1128 = vld [vmem:[%s238 + $0x1a18] sm:$0xff]
        %v1129 = vld [vmem:[%s238 + $0x1a20] sm:$0xff]
        %v1130 = vld [vmem:[%s238 + $0x1a28] sm:$0xff]
        %v1131 = vld [vmem:[%s238 + $0x1a30] sm:$0xff]
        %v1132 = vld [vmem:[%s238 + $0x1a38] sm:$0xff]
        %v1133 = vld [vmem:[%s238 + $0x1a40] sm:$0xff]
        %v1134 = vld [vmem:[%s238 + $0x1a48] sm:$0xff]
        %v1135 = vld [vmem:[%s238 + $0x1a50] sm:$0xff]
        %v1136 = vld [vmem:[%s238 + $0x1a58] sm:$0xff]
        %v1137 = vld [vmem:[%s238 + $0x1a60] sm:$0xff]
        %v1138 = vld [vmem:[%s238 + $0x1a68] sm:$0xff]
        %v1139 = vld [vmem:[%s238 + $0x1a70] sm:$0xff]
        %v1140 = vld [vmem:[%s238 + $0x1a78] sm:$0xff]
        %v1141 = vld [vmem:[%s238 + $0x1a80] sm:$0xff]
        %v1142 = vld [vmem:[%s238 + $0x1a88] sm:$0xff]
        %v1143 = vld [vmem:[%s238 + $0x1a90] sm:$0xff]
        %v1144 = vld [vmem:[%s238 + $0x1a98] sm:$0xff]
        %v1145 = vld [vmem:[%s238 + $0x1aa0] sm:$0xff]
        %v1146 = vld [vmem:[%s238 + $0x1aa8] sm:$0xff]
        %v1147 = vld [vmem:[%s238 + $0x1ab0] sm:$0xff]
        %v1148 = vld [vmem:[%s238 + $0x1ab8] sm:$0xff]
        %v1149 = vld [vmem:[%s238 + $0x1ac0] sm:$0xff]
        %v1150 = vld [vmem:[%s238 + $0x1ac8] sm:$0xff]
        %v1151 = vld [vmem:[%s238 + $0x1ad0] sm:$0xff]
        %v1152 = vld [vmem:[%s238 + $0x1ad8] sm:$0xff]
        %v1153 = vld [vmem:[%s238 + $0x1ae0] sm:$0xff]
        %v1154 = vld [vmem:[%s238 + $0x1ae8] sm:$0xff]
        %v1155 = vld [vmem:[%s238 + $0x1af0] sm:$0xff]
        %v1156 = vld [vmem:[%s238 + $0x1af8] sm:$0xff]
        %v1157 = vld [vmem:[%s238 + $0x1b00] sm:$0xff]
        %v1158 = vld [vmem:[%s238 + $0x1b08] sm:$0xff]
        %v1159 = vld [vmem:[%s238 + $0x1b10] sm:$0xff]
        %v1160 = vld [vmem:[%s238 + $0x1b18] sm:$0xff]
        %v1161 = vld [vmem:[%s238 + $0x1b20] sm:$0xff]
        %v1162 = vld [vmem:[%s238 + $0x1b28] sm:$0xff]
        %v1163 = vld [vmem:[%s238 + $0x1b30] sm:$0xff]
        %v1164 = vld [vmem:[%s238 + $0x1b38] sm:$0xff]
        %v1165 = vld [vmem:[%s238 + $0x1b40] sm:$0xff]
        %v1166 = vld [vmem:[%s238 + $0x1b48] sm:$0xff]
        %v1167 = vld [vmem:[%s238 + $0x1b50] sm:$0xff]
        %v1168 = vld [vmem:[%s238 + $0x1b58] sm:$0xff]
        %v1169 = vld [vmem:[%s238 + $0x1b60] sm:$0xff]
        %v1170 = vld [vmem:[%s238 + $0x1b68] sm:$0xff]
        %v1171 = vld [vmem:[%s238 + $0x1b70] sm:$0xff]
        %v1172 = vld [vmem:[%s238 + $0x1b78] sm:$0xff]
        %v1173 = vld [vmem:[%s238 + $0x1b80] sm:$0xff]
        %v1174 = vld [vmem:[%s238 + $0x1b88] sm:$0xff]
        %v1175 = vld [vmem:[%s238 + $0x1b90] sm:$0xff]
        %v1176 = vld [vmem:[%s238 + $0x1b98] sm:$0xff]
        %v1177 = vld [vmem:[%s238 + $0x1ba0] sm:$0xff]
        %v1178 = vld [vmem:[%s238 + $0x1ba8] sm:$0xff]
        %v1179 = vld [vmem:[%s238 + $0x1bb0] sm:$0xff]
        %v1180 = vld [vmem:[%s238 + $0x1bb8] sm:$0xff]
        %v1181 = vld [vmem:[%s238 + $0x1bc0] sm:$0xff]
        %v1182 = vld [vmem:[%s238 + $0x1bc8] sm:$0xff]
        %v1183 = vld [vmem:[%s238 + $0x1bd0] sm:$0xff]
        %v1184 = vld [vmem:[%s238 + $0x1bd8] sm:$0xff]
        %v1185 = vld [vmem:[%s238 + $0x1be0] sm:$0xff]
        %v1186 = vld [vmem:[%s238 + $0x1be8] sm:$0xff]
        %v1187 = vld [vmem:[%s238 + $0x1bf0] sm:$0xff]
        %v1188 = vld [vmem:[%s238 + $0x1bf8] sm:$0xff]
        %v1189 = vld [vmem:[%s238 + $0x1c00] sm:$0xff]
        %v1190 = vld [vmem:[%s238 + $0x1c08] sm:$0xff]
        %v1191 = vld [vmem:[%s238 + $0x1c10] sm:$0xff]
        %v1192 = vld [vmem:[%s238 + $0x1c18] sm:$0xff]
        %v1193 = vld [vmem:[%s238 + $0x1c20] sm:$0xff]
        %v1194 = vld [vmem:[%s238 + $0x1c28] sm:$0xff]
        %v1195 = vld [vmem:[%s238 + $0x1c30] sm:$0xff]
        %v1196 = vld [vmem:[%s238 + $0x1c38] sm:$0xff]
        %v1197 = vld [vmem:[%s238 + $0x1c40] sm:$0xff]
        %v1198 = vld [vmem:[%s238 + $0x1c48] sm:$0xff]
        %v1199 = vld [vmem:[%s238 + $0x1c50] sm:$0xff]
        %v1200 = vld [vmem:[%s238 + $0x1c58] sm:$0xff]
        %v1201 = vld [vmem:[%s238 + $0x1c60] sm:$0xff]
        %v1202 = vld [vmem:[%s238 + $0x1c68] sm:$0xff]
        %v1203 = vld [vmem:[%s238 + $0x1c70] sm:$0xff]
        %v1204 = vld [vmem:[%s238 + $0x1c78] sm:$0xff]
        %v1205 = vld [vmem:[%s238 + $0x1c80] sm:$0xff]
        %v1206 = vld [vmem:[%s238 + $0x1c88] sm:$0xff]
        %v1207 = vld [vmem:[%s238 + $0x1c90] sm:$0xff]
        %v1208 = vld [vmem:[%s238 + $0x1c98] sm:$0xff]
        %v1209 = vld [vmem:[%s238 + $0x1ca0] sm:$0xff]
        %v1210 = vld [vmem:[%s238 + $0x1ca8] sm:$0xff]
        %v1211 = vld [vmem:[%s238 + $0x1cb0] sm:$0xff]
        %v1212 = vld [vmem:[%s238 + $0x1cb8] sm:$0xff]
        %v1213 = vld [vmem:[%s238 + $0x1cc0] sm:$0xff]
        %v1214 = vld [vmem:[%s238 + $0x1cc8] sm:$0xff]
        %v1215 = vld [vmem:[%s238 + $0x1cd0] sm:$0xff]
        %v1216 = vld [vmem:[%s238 + $0x1cd8] sm:$0xff]
        %v1217 = vld [vmem:[%s238 + $0x1ce0] sm:$0xff]
        %v1218 = vld [vmem:[%s238 + $0x1ce8] sm:$0xff]
        %v1219 = vld [vmem:[%s238 + $0x1cf0] sm:$0xff]
        %v1220 = vld [vmem:[%s238 + $0x1cf8] sm:$0xff]
        %v1221 = vld [vmem:[%s238 + $0x1d00] sm:$0xff]
        %v1222 = vld [vmem:[%s238 + $0x1d08] sm:$0xff]
        %v1223 = vld [vmem:[%s238 + $0x1d10] sm:$0xff]
        %v1224 = vld [vmem:[%s238 + $0x1d18] sm:$0xff]
        %v1225 = vld [vmem:[%s238 + $0x1d20] sm:$0xff]
        %v1226 = vld [vmem:[%s238 + $0x1d28] sm:$0xff]
        %v1227 = vld [vmem:[%s238 + $0x1d30] sm:$0xff]
        %v1228 = vld [vmem:[%s238 + $0x1d38] sm:$0xff]
        %v1229 = vld [vmem:[%s238 + $0x1d40] sm:$0xff]
        %v1230 = vld [vmem:[%s238 + $0x1d48] sm:$0xff]
        %v1231 = vld [vmem:[%s238 + $0x1d50] sm:$0xff]
        %v1232 = vld [vmem:[%s238 + $0x1d58] sm:$0xff]
        %v1233 = vld [vmem:[%s238 + $0x1d60] sm:$0xff]
        %v1234 = vld [vmem:[%s238 + $0x1d68] sm:$0xff]
        %v1235 = vld [vmem:[%s238 + $0x1d70] sm:$0xff]
        %v1236 = vld [vmem:[%s238 + $0x1d78] sm:$0xff]
        %v1237 = vld [vmem:[%s238 + $0x1d80] sm:$0xff]
        %v1238 = vld [vmem:[%s238 + $0x1d88] sm:$0xff]
        %v1239 = vld [vmem:[%s238 + $0x1d90] sm:$0xff]
        %v1240 = vld [vmem:[%s238 + $0x1d98] sm:$0xff]
        %v1241 = vld [vmem:[%s238 + $0x1da0] sm:$0xff]
        %v1242 = vld [vmem:[%s238 + $0x1da8] sm:$0xff]
        %v1243 = vld [vmem:[%s238 + $0x1db0] sm:$0xff]
        %v1244 = vld [vmem:[%s238 + $0x1db8] sm:$0xff]
        %v1245 = vld [vmem:[%s238 + $0x1dc0] sm:$0xff]
        %v1246 = vld [vmem:[%s238 + $0x1dc8] sm:$0xff]
        %v1247 = vld [vmem:[%s238 + $0x1dd0] sm:$0xff]
        %v1248 = vld [vmem:[%s238 + $0x1dd8] sm:$0xff]
        %v1249 = vld [vmem:[%s238 + $0x1de0] sm:$0xff]
        %v1250 = vld [vmem:[%s238 + $0x1de8] sm:$0xff]
        %v1251 = vld [vmem:[%s238 + $0x1df0] sm:$0xff]
        %v1252 = vld [vmem:[%s238 + $0x1df8] sm:$0xff]
        %v1253 = vld [vmem:[%s238 + $0x1e00] sm:$0xff]
        %v1254 = vld [vmem:[%s238 + $0x1e08] sm:$0xff]
        %v1255 = vld [vmem:[%s238 + $0x1e10] sm:$0xff]
        %v1256 = vld [vmem:[%s238 + $0x1e18] sm:$0xff]
        %v1257 = vld [vmem:[%s238 + $0x1e20] sm:$0xff]
        %v1258 = vld [vmem:[%s238 + $0x1e28] sm:$0xff]
        %v1259 = vld [vmem:[%s238 + $0x1e30] sm:$0xff]
        %v1260 = vld [vmem:[%s238 + $0x1e38] sm:$0xff]
        %v1261 = vld [vmem:[%s238 + $0x1e40] sm:$0xff]
        %v1262 = vld [vmem:[%s238 + $0x1e48] sm:$0xff]
        %v1263 = vld [vmem:[%s238 + $0x1e50] sm:$0xff]
        %v1264 = vld [vmem:[%s238 + $0x1e58] sm:$0xff]
        %v1265 = vld [vmem:[%s238 + $0x1e60] sm:$0xff]
        %v1266 = vld [vmem:[%s238 + $0x1e68] sm:$0xff]
        %v1267 = vld [vmem:[%s238 + $0x1e70] sm:$0xff]
        %v1268 = vld [vmem:[%s238 + $0x1e78] sm:$0xff]
        %v1269 = vld [vmem:[%s238 + $0x1e80] sm:$0xff]
        %v1270 = vld [vmem:[%s238 + $0x1e88] sm:$0xff]
        %v1271 = vld [vmem:[%s238 + $0x1e90] sm:$0xff]
        %v1272 = vld [vmem:[%s238 + $0x1e98] sm:$0xff]
        %v1273 = vld [vmem:[%s238 + $0x1ea0] sm:$0xff]
        %v1274 = vld [vmem:[%s238 + $0x1ea8] sm:$0xff]
        %v1275 = vld [vmem:[%s238 + $0x1eb0] sm:$0xff]
        %v1276 = vld [vmem:[%s238 + $0x1eb8] sm:$0xff]
        %v1277 = vld [vmem:[%s238 + $0x1ec0] sm:$0xff]
        %v1278 = vld [vmem:[%s238 + $0x1ec8] sm:$0xff]
        %v1279 = vld [vmem:[%s238 + $0x1ed0] sm:$0xff]
        %v1280 = vld [vmem:[%s238 + $0x1ed8] sm:$0xff]
        %v1281 = vld [vmem:[%s238 + $0x1ee0] sm:$0xff]
        %v1282 = vld [vmem:[%s238 + $0x1ee8] sm:$0xff]
        %v1283 = vld [vmem:[%s238 + $0x1ef0] sm:$0xff]
        %v1284 = vld [vmem:[%s238 + $0x1ef8] sm:$0xff]
        %v1285 = vld [vmem:[%s238 + $0x1f00] sm:$0xff]
        %v1286 = vld [vmem:[%s238 + $0x1f08] sm:$0xff]
        %v1287 = vld [vmem:[%s238 + $0x1f10] sm:$0xff]
        %v1288 = vld [vmem:[%s238 + $0x1f18] sm:$0xff]
        %v1289 = vld [vmem:[%s238 + $0x1f20] sm:$0xff]
        %v1290 = vld [vmem:[%s238 + $0x1f28] sm:$0xff]
        %v1291 = vld [vmem:[%s238 + $0x1f30] sm:$0xff]
        %v1292 = vld [vmem:[%s238 + $0x1f38] sm:$0xff]
        %v1293 = vld [vmem:[%s238 + $0x1f40] sm:$0xff]
        %v1294 = vld [vmem:[%s238 + $0x1f48] sm:$0xff]
        %v1295 = vld [vmem:[%s238 + $0x1f50] sm:$0xff]
        %v1296 = vld [vmem:[%s238 + $0x1f58] sm:$0xff]
        %v1297 = vld [vmem:[%s238 + $0x1f60] sm:$0xff]
        %v1298 = vld [vmem:[%s238 + $0x1f68] sm:$0xff]
        %v1299 = vld [vmem:[%s238 + $0x1f70] sm:$0xff]
        %v1300 = vld [vmem:[%s238 + $0x1f78] sm:$0xff]
        %v1301 = vld [vmem:[%s238 + $0x1f80] sm:$0xff]
        %v1302 = vld [vmem:[%s238 + $0x1f88] sm:$0xff]
        %v1303 = vld [vmem:[%s238 + $0x1f90] sm:$0xff]
        %v1304 = vld [vmem:[%s238 + $0x1f98] sm:$0xff]
        %v1305 = vld [vmem:[%s238 + $0x1fa0] sm:$0xff]
        %v1306 = vld [vmem:[%s238 + $0x1fa8] sm:$0xff]
        %v1307 = vld [vmem:[%s238 + $0x1fb0] sm:$0xff]
        %v1308 = vld [vmem:[%s238 + $0x1fb8] sm:$0xff]
        %v1309 = vld [vmem:[%s238 + $0x1fc0] sm:$0xff]
        %v1310 = vld [vmem:[%s238 + $0x1fc8] sm:$0xff]
        %v1311 = vld [vmem:[%s238 + $0x1fd0] sm:$0xff]
        %v1312 = vld [vmem:[%s238 + $0x1fd8] sm:$0xff]
        %v1313 = vld [vmem:[%s238 + $0x1fe0] sm:$0xff]
        %v1314 = vld [vmem:[%s238 + $0x1fe8] sm:$0xff]
        %v1315 = vld [vmem:[%s238 + $0x1ff0] sm:$0xff]
        %v1316 = vld [vmem:[%s238 + $0x1ff8] sm:$0xff]
        %v1318 = vcombine.high %v292, %v292
        %v1320 = vunpack.c.l.s4 1983009808
        %v1321 = vunpack.c.0.s8 %v1320
        %v1322 = vlaneseq
        %v1323 = vshrl.u32 %v1322, 7
        %v1324 = vsub.s32 %v1321, %v1323
        %v1325 = vrot.slane %v292, %v1324
        %v1327 = vunpack.c.l.s4 1983009808
        %v1328 = vunpack.c.0.s8 %v1327
        %v1329 = vlaneseq
        %v1330 = vshrl.u32 %v1329, 7
        %v1331 = vsub.s32 %v1328, %v1330
        %v1332 = vrot.slane %v1318, %v1331
        %v1333 = vcombine.high %v1325, %v1325
        %v1334 = vcombine.high %v1332, %v1332
        %1339 = vmatprep.subr.mxu0 %v534
        %1340 = vmatpush1.msra.mxu0 %v533
        %1341 = vmatprep.subr.mxu0 %v518
        %1342 = vmatpush1.msra.mxu0 %v517
        %1343 = vmatprep.subr.mxu0 %v502
        %1344 = vmatpush1.msra.mxu0 %v501
        %1345 = vmatprep.subr.mxu0 %v486
        %1346 = vmatpush1.msra.mxu0 %v485
        %1347 = vmatprep.subr.mxu0 %v470
        %1348 = vmatpush1.msra.mxu0 %v469
        %1349 = vmatprep.subr.mxu0 %v454
        %1350 = vmatpush1.msra.mxu0 %v453
        %1351 = vmatprep.subr.mxu0 %v438
        %1352 = vmatpush1.msra.mxu0 %v437
        %1353 = vmatprep.subr.mxu0 %v422
        %1354 = vmatpush1.msra.mxu0 %v421
        %1355 = vmatprep.subr.mxu0 %v406
        %1356 = vmatpush1.msra.mxu0 %v405
        %1357 = vmatprep.subr.mxu0 %v390
        %1358 = vmatpush1.msra.mxu0 %v389
        %1359 = vmatprep.subr.mxu0 %v374
        %1360 = vmatpush1.msra.mxu0 %v373
        %1361 = vmatprep.subr.mxu0 %v358
        %1362 = vmatpush1.msra.mxu0 %v357
        %1363 = vmatprep.subr.mxu0 %v342
        %1364 = vmatpush1.msra.mxu0 %v341
        %1365 = vmatprep.subr.mxu0 %v326
        %1366 = vmatpush1.msra.mxu0 %v325
        %1367 = vmatprep.subr.mxu0 %v310
        %1368 = vmatpush1.msra.mxu0 %v309
        %1369 = vmatprep.subr.mxu0 %v294
        %1370 = vmatpush1.msra.mxu0 %v293
        %1371 = vmatprep.subr.mxu0 %v790
        %1372 = vmatpush2.msra.mxu0 %v789
        %1373 = vmatprep.subr.mxu0 %v774
        %1374 = vmatpush2.msra.mxu0 %v773
        %1375 = vmatprep.subr.mxu0 %v758
        %1376 = vmatpush2.msra.mxu0 %v757
        %1377 = vmatprep.subr.mxu0 %v742
        %1378 = vmatpush2.msra.mxu0 %v741
        %1379 = vmatprep.subr.mxu0 %v726
        %1380 = vmatpush2.msra.mxu0 %v725
        %1381 = vmatprep.subr.mxu0 %v710
        %1382 = vmatpush2.msra.mxu0 %v709
        %1383 = vmatprep.subr.mxu0 %v694
        %1384 = vmatpush2.msra.mxu0 %v693
        %1385 = vmatprep.subr.mxu0 %v678
        %1386 = vmatpush2.msra.mxu0 %v677
        %1387 = vmatprep.subr.mxu0 %v662
        %1388 = vmatpush2.msra.mxu0 %v661
        %1389 = vmatprep.subr.mxu0 %v646
        %1390 = vmatpush2.msra.mxu0 %v645
        %1391 = vmatprep.subr.mxu0 %v630
        %1392 = vmatpush2.msra.mxu0 %v629
        %1393 = vmatprep.subr.mxu0 %v614
        %1394 = vmatpush2.msra.mxu0 %v613
        %1395 = vmatprep.subr.mxu0 %v598
        %1396 = vmatpush2.msra.mxu0 %v597
        %1397 = vmatprep.subr.mxu0 %v582
        %1398 = vmatpush2.msra.mxu0 %v581
        %1399 = vmatprep.subr.mxu0 %v566
        %1400 = vmatpush2.msra.mxu0 %v565
        %1401 = vmatprep.subr.mxu0 %v550
        %1402 = vmatpush2.msra.mxu0 %v549
        %1403 = vmatprep.mubr.f32.mxu0 %v1333
        %1404 = vmatmul.mubr.f32.gmra.mxu0 %v1325
        %v1405 = vpop.f32.mrf.mxu0
        %v1406 = vadd.f32 0.0, %v1405
        %v1407 = vpop.f32.mrf.mxu0
        %v1408 = vadd.f32 0.0, %v1407
        %1409 = vdwg.mxu0
        %1410 = vmatprep.subr.mxu0 %v1046
        %1411 = vmatpush1.msra.mxu0 %v1045
        %1412 = vmatprep.subr.mxu0 %v1030
        %1413 = vmatpush1.msra.mxu0 %v1029
        %1414 = vmatprep.subr.mxu0 %v1014
        %1415 = vmatpush1.msra.mxu0 %v1013
        %1416 = vmatprep.subr.mxu0 %v998
        %1417 = vmatpush1.msra.mxu0 %v997
        %1418 = vmatprep.subr.mxu0 %v982
        %1419 = vmatpush1.msra.mxu0 %v981
        %1420 = vmatprep.subr.mxu0 %v966
        %1421 = vmatpush1.msra.mxu0 %v965
        %1422 = vmatprep.subr.mxu0 %v950
        %1423 = vmatpush1.msra.mxu0 %v949
        %1424 = vmatprep.subr.mxu0 %v934
        %1425 = vmatpush1.msra.mxu0 %v933
        %1426 = vmatprep.subr.mxu0 %v918
        %1427 = vmatpush1.msra.mxu0 %v917
        %1428 = vmatprep.subr.mxu0 %v902
        %1429 = vmatpush1.msra.mxu0 %v901
        %1430 = vmatprep.subr.mxu0 %v886
        %1431 = vmatpush1.msra.mxu0 %v885
        %1432 = vmatprep.subr.mxu0 %v870
        %1433 = vmatpush1.msra.mxu0 %v869
        %1434 = vmatprep.subr.mxu0 %v854
        %1435 = vmatpush1.msra.mxu0 %v853
        %1436 = vmatprep.subr.mxu0 %v838
        %1437 = vmatpush1.msra.mxu0 %v837
        %1438 = vmatprep.subr.mxu0 %v822
        %1439 = vmatpush1.msra.mxu0 %v821
        %1440 = vmatprep.subr.mxu0 %v806
        %1441 = vmatpush1.msra.mxu0 %v805
        %1442 = vmatprep.subr.mxu0 %v1302
        %1443 = vmatpush2.msra.mxu0 %v1301
        %1444 = vmatprep.subr.mxu0 %v1286
        %1445 = vmatpush2.msra.mxu0 %v1285
        %1446 = vmatprep.subr.mxu0 %v1270
        %1447 = vmatpush2.msra.mxu0 %v1269
        %1448 = vmatprep.subr.mxu0 %v1254
        %1449 = vmatpush2.msra.mxu0 %v1253
        %1450 = vmatprep.subr.mxu0 %v1238
        %1451 = vmatpush2.msra.mxu0 %v1237
        %1452 = vmatprep.subr.mxu0 %v1222
        %1453 = vmatpush2.msra.mxu0 %v1221
        %1454 = vmatprep.subr.mxu0 %v1206
        %1455 = vmatpush2.msra.mxu0 %v1205
        %1456 = vmatprep.subr.mxu0 %v1190
        %1457 = vmatpush2.msra.mxu0 %v1189
        %1458 = vmatprep.subr.mxu0 %v1174
        %1459 = vmatpush2.msra.mxu0 %v1173
        %1460 = vmatprep.subr.mxu0 %v1158
        %1461 = vmatpush2.msra.mxu0 %v1157
        %1462 = vmatprep.subr.mxu0 %v1142
        %1463 = vmatpush2.msra.mxu0 %v1141
        %1464 = vmatprep.subr.mxu0 %v1126
        %1465 = vmatpush2.msra.mxu0 %v1125
        %1466 = vmatprep.subr.mxu0 %v1110
        %1467 = vmatpush2.msra.mxu0 %v1109
        %1468 = vmatprep.subr.mxu0 %v1094
        %1469 = vmatpush2.msra.mxu0 %v1093
        %1470 = vmatprep.subr.mxu0 %v1078
        %1471 = vmatpush2.msra.mxu0 %v1077
        %1472 = vmatprep.subr.mxu0 %v1062
        %1473 = vmatpush2.msra.mxu0 %v1061
        %1474 = vmatprep.mubr.f32.mxu0 %v1334
        %1475 = vmatmul.mubr.f32.gmra.mxu0 %v1332
        %v1476 = vpop.f32.mrf.mxu0
        %v1477 = vadd.f32 %v1406, %v1476
        %v1478 = vpop.f32.mrf.mxu0
        %v1479 = vadd.f32 %v1408, %v1478
        %1480 = vdwg.mxu0
        %1481 = vmatprep.subr.mxu0 %v536
        %1482 = vmatpush1.msra.mxu0 %v535
        %1483 = vmatprep.subr.mxu0 %v520
        %1484 = vmatpush1.msra.mxu0 %v519
        %1485 = vmatprep.subr.mxu0 %v504
        %1486 = vmatpush1.msra.mxu0 %v503
        %1487 = vmatprep.subr.mxu0 %v488
        %1488 = vmatpush1.msra.mxu0 %v487
        %1489 = vmatprep.subr.mxu0 %v472
        %1490 = vmatpush1.msra.mxu0 %v471
        %1491 = vmatprep.subr.mxu0 %v456
        %1492 = vmatpush1.msra.mxu0 %v455
        %1493 = vmatprep.subr.mxu0 %v440
        %1494 = vmatpush1.msra.mxu0 %v439
        %1495 = vmatprep.subr.mxu0 %v424
        %1496 = vmatpush1.msra.mxu0 %v423
        %1497 = vmatprep.subr.mxu0 %v408
        %1498 = vmatpush1.msra.mxu0 %v407
        %1499 = vmatprep.subr.mxu0 %v392
        %1500 = vmatpush1.msra.mxu0 %v391
        %1501 = vmatprep.subr.mxu0 %v376
        %1502 = vmatpush1.msra.mxu0 %v375
        %1503 = vmatprep.subr.mxu0 %v360
        %1504 = vmatpush1.msra.mxu0 %v359
        %1505 = vmatprep.subr.mxu0 %v344
        %1506 = vmatpush1.msra.mxu0 %v343
        %1507 = vmatprep.subr.mxu0 %v328
        %1508 = vmatpush1.msra.mxu0 %v327
        %1509 = vmatprep.subr.mxu0 %v312
        %1510 = vmatpush1.msra.mxu0 %v311
        %1511 = vmatprep.subr.mxu0 %v296
        %1512 = vmatpush1.msra.mxu0 %v295
        %1513 = vmatprep.subr.mxu0 %v792
        %1514 = vmatpush2.msra.mxu0 %v791
        %1515 = vmatprep.subr.mxu0 %v776
        %1516 = vmatpush2.msra.mxu0 %v775
        %1517 = vmatprep.subr.mxu0 %v760
        %1518 = vmatpush2.msra.mxu0 %v759
        %1519 = vmatprep.subr.mxu0 %v744
        %1520 = vmatpush2.msra.mxu0 %v743
        %1521 = vmatprep.subr.mxu0 %v728
        %1522 = vmatpush2.msra.mxu0 %v727
        %1523 = vmatprep.subr.mxu0 %v712
        %1524 = vmatpush2.msra.mxu0 %v711
        %1525 = vmatprep.subr.mxu0 %v696
        %1526 = vmatpush2.msra.mxu0 %v695
        %1527 = vmatprep.subr.mxu0 %v680
        %1528 = vmatpush2.msra.mxu0 %v679
        %1529 = vmatprep.subr.mxu0 %v664
        %1530 = vmatpush2.msra.mxu0 %v663
        %1531 = vmatprep.subr.mxu0 %v648
        %1532 = vmatpush2.msra.mxu0 %v647
        %1533 = vmatprep.subr.mxu0 %v632
        %1534 = vmatpush2.msra.mxu0 %v631
        %1535 = vmatprep.subr.mxu0 %v616
        %1536 = vmatpush2.msra.mxu0 %v615
        %1537 = vmatprep.subr.mxu0 %v600
        %1538 = vmatpush2.msra.mxu0 %v599
        %1539 = vmatprep.subr.mxu0 %v584
        %1540 = vmatpush2.msra.mxu0 %v583
        %1541 = vmatprep.subr.mxu0 %v568
        %1542 = vmatpush2.msra.mxu0 %v567
        %1543 = vmatprep.subr.mxu0 %v552
        %1544 = vmatpush2.msra.mxu0 %v551
        %1545 = vmatprep.mubr.f32.mxu0 %v1333
        %1546 = vmatmul.mubr.f32.gmra.mxu0 %v1325
        %v1547 = vpop.f32.mrf.mxu0
        %v1548 = vadd.f32 0.0, %v1547
        %v1549 = vpop.f32.mrf.mxu0
        %v1550 = vadd.f32 0.0, %v1549
        %1551 = vdwg.mxu0
        %1552 = vmatprep.subr.mxu0 %v1048
        %1553 = vmatpush1.msra.mxu0 %v1047
        %1554 = vmatprep.subr.mxu0 %v1032
        %1555 = vmatpush1.msra.mxu0 %v1031
        %1556 = vmatprep.subr.mxu0 %v1016
        %1557 = vmatpush1.msra.mxu0 %v1015
        %1558 = vmatprep.subr.mxu0 %v1000
        %1559 = vmatpush1.msra.mxu0 %v999
        %1560 = vmatprep.subr.mxu0 %v984
        %1561 = vmatpush1.msra.mxu0 %v983
        %1562 = vmatprep.subr.mxu0 %v968
        %1563 = vmatpush1.msra.mxu0 %v967
        %1564 = vmatprep.subr.mxu0 %v952
        %1565 = vmatpush1.msra.mxu0 %v951
        %1566 = vmatprep.subr.mxu0 %v936
        %1567 = vmatpush1.msra.mxu0 %v935
        %1568 = vmatprep.subr.mxu0 %v920
        %1569 = vmatpush1.msra.mxu0 %v919
        %1570 = vmatprep.subr.mxu0 %v904
        %1571 = vmatpush1.msra.mxu0 %v903
        %1572 = vmatprep.subr.mxu0 %v888
        %1573 = vmatpush1.msra.mxu0 %v887
        %1574 = vmatprep.subr.mxu0 %v872
        %1575 = vmatpush1.msra.mxu0 %v871
        %1576 = vmatprep.subr.mxu0 %v856
        %1577 = vmatpush1.msra.mxu0 %v855
        %1578 = vmatprep.subr.mxu0 %v840
        %1579 = vmatpush1.msra.mxu0 %v839
        %1580 = vmatprep.subr.mxu0 %v824
        %1581 = vmatpush1.msra.mxu0 %v823
        %1582 = vmatprep.subr.mxu0 %v808
        %1583 = vmatpush1.msra.mxu0 %v807
        %1584 = vmatprep.subr.mxu0 %v1304
        %1585 = vmatpush2.msra.mxu0 %v1303
        %1586 = vmatprep.subr.mxu0 %v1288
        %1587 = vmatpush2.msra.mxu0 %v1287
        %1588 = vmatprep.subr.mxu0 %v1272
        %1589 = vmatpush2.msra.mxu0 %v1271
        %1590 = vmatprep.subr.mxu0 %v1256
        %1591 = vmatpush2.msra.mxu0 %v1255
        %1592 = vmatprep.subr.mxu0 %v1240
        %1593 = vmatpush2.msra.mxu0 %v1239
        %1594 = vmatprep.subr.mxu0 %v1224
        %1595 = vmatpush2.msra.mxu0 %v1223
        %1596 = vmatprep.subr.mxu0 %v1208
        %1597 = vmatpush2.msra.mxu0 %v1207
        %1598 = vmatprep.subr.mxu0 %v1192
        %1599 = vmatpush2.msra.mxu0 %v1191
        %1600 = vmatprep.subr.mxu0 %v1176
        %1601 = vmatpush2.msra.mxu0 %v1175
        %1602 = vmatprep.subr.mxu0 %v1160
        %1603 = vmatpush2.msra.mxu0 %v1159
        %1604 = vmatprep.subr.mxu0 %v1144
        %1605 = vmatpush2.msra.mxu0 %v1143
        %1606 = vmatprep.subr.mxu0 %v1128
        %1607 = vmatpush2.msra.mxu0 %v1127
        %1608 = vmatprep.subr.mxu0 %v1112
        %1609 = vmatpush2.msra.mxu0 %v1111
        %1610 = vmatprep.subr.mxu0 %v1096
        %1611 = vmatpush2.msra.mxu0 %v1095
        %1612 = vmatprep.subr.mxu0 %v1080
        %1613 = vmatpush2.msra.mxu0 %v1079
        %1614 = vmatprep.subr.mxu0 %v1064
        %1615 = vmatpush2.msra.mxu0 %v1063
        %1616 = vmatprep.mubr.f32.mxu0 %v1334
        %1617 = vmatmul.mubr.f32.gmra.mxu0 %v1332
        %v1618 = vpop.f32.mrf.mxu0
        %v1619 = vadd.f32 %v1548, %v1618
        %v1620 = vpop.f32.mrf.mxu0
        %v1621 = vadd.f32 %v1550, %v1620
        %1622 = vdwg.mxu0
        %1623 = vmatprep.subr.mxu0 %v538
        %1624 = vmatpush1.msra.mxu0 %v537
        %1625 = vmatprep.subr.mxu0 %v522
        %1626 = vmatpush1.msra.mxu0 %v521
        %1627 = vmatprep.subr.mxu0 %v506
        %1628 = vmatpush1.msra.mxu0 %v505
        %1629 = vmatprep.subr.mxu0 %v490
        %1630 = vmatpush1.msra.mxu0 %v489
        %1631 = vmatprep.subr.mxu0 %v474
        %1632 = vmatpush1.msra.mxu0 %v473
        %1633 = vmatprep.subr.mxu0 %v458
        %1634 = vmatpush1.msra.mxu0 %v457
        %1635 = vmatprep.subr.mxu0 %v442
        %1636 = vmatpush1.msra.mxu0 %v441
        %1637 = vmatprep.subr.mxu0 %v426
        %1638 = vmatpush1.msra.mxu0 %v425
        %1639 = vmatprep.subr.mxu0 %v410
        %1640 = vmatpush1.msra.mxu0 %v409
        %1641 = vmatprep.subr.mxu0 %v394
        %1642 = vmatpush1.msra.mxu0 %v393
        %1643 = vmatprep.subr.mxu0 %v378
        %1644 = vmatpush1.msra.mxu0 %v377
        %1645 = vmatprep.subr.mxu0 %v362
        %1646 = vmatpush1.msra.mxu0 %v361
        %1647 = vmatprep.subr.mxu0 %v346
        %1648 = vmatpush1.msra.mxu0 %v345
        %1649 = vmatprep.subr.mxu0 %v330
        %1650 = vmatpush1.msra.mxu0 %v329
        %1651 = vmatprep.subr.mxu0 %v314
        %1652 = vmatpush1.msra.mxu0 %v313
        %1653 = vmatprep.subr.mxu0 %v298
        %1654 = vmatpush1.msra.mxu0 %v297
        %1655 = vmatprep.subr.mxu0 %v794
        %1656 = vmatpush2.msra.mxu0 %v793
        %1657 = vmatprep.subr.mxu0 %v778
        %1658 = vmatpush2.msra.mxu0 %v777
        %1659 = vmatprep.subr.mxu0 %v762
        %1660 = vmatpush2.msra.mxu0 %v761
        %1661 = vmatprep.subr.mxu0 %v746
        %1662 = vmatpush2.msra.mxu0 %v745
        %1663 = vmatprep.subr.mxu0 %v730
        %1664 = vmatpush2.msra.mxu0 %v729
        %1665 = vmatprep.subr.mxu0 %v714
        %1666 = vmatpush2.msra.mxu0 %v713
        %1667 = vmatprep.subr.mxu0 %v698
        %1668 = vmatpush2.msra.mxu0 %v697
        %1669 = vmatprep.subr.mxu0 %v682
        %1670 = vmatpush2.msra.mxu0 %v681
        %1671 = vmatprep.subr.mxu0 %v666
        %1672 = vmatpush2.msra.mxu0 %v665
        %1673 = vmatprep.subr.mxu0 %v650
        %1674 = vmatpush2.msra.mxu0 %v649
        %1675 = vmatprep.subr.mxu0 %v634
        %1676 = vmatpush2.msra.mxu0 %v633
        %1677 = vmatprep.subr.mxu0 %v618
        %1678 = vmatpush2.msra.mxu0 %v617
        %1679 = vmatprep.subr.mxu0 %v602
        %1680 = vmatpush2.msra.mxu0 %v601
        %1681 = vmatprep.subr.mxu0 %v586
        %1682 = vmatpush2.msra.mxu0 %v585
        %1683 = vmatprep.subr.mxu0 %v570
        %1684 = vmatpush2.msra.mxu0 %v569
        %1685 = vmatprep.subr.mxu0 %v554
        %1686 = vmatpush2.msra.mxu0 %v553
        %1687 = vmatprep.mubr.f32.mxu0 %v1333
        %1688 = vmatmul.mubr.f32.gmra.mxu0 %v1325
        %v1689 = vpop.f32.mrf.mxu0
        %v1690 = vadd.f32 0.0, %v1689
        %v1691 = vpop.f32.mrf.mxu0
        %v1692 = vadd.f32 0.0, %v1691
        %1693 = vdwg.mxu0
        %1694 = vmatprep.subr.mxu0 %v1050
        %1695 = vmatpush1.msra.mxu0 %v1049
        %1696 = vmatprep.subr.mxu0 %v1034
        %1697 = vmatpush1.msra.mxu0 %v1033
        %1698 = vmatprep.subr.mxu0 %v1018
        %1699 = vmatpush1.msra.mxu0 %v1017
        %1700 = vmatprep.subr.mxu0 %v1002
        %1701 = vmatpush1.msra.mxu0 %v1001
        %1702 = vmatprep.subr.mxu0 %v986
        %1703 = vmatpush1.msra.mxu0 %v985
        %1704 = vmatprep.subr.mxu0 %v970
        %1705 = vmatpush1.msra.mxu0 %v969
        %1706 = vmatprep.subr.mxu0 %v954
        %1707 = vmatpush1.msra.mxu0 %v953
        %1708 = vmatprep.subr.mxu0 %v938
        %1709 = vmatpush1.msra.mxu0 %v937
        %1710 = vmatprep.subr.mxu0 %v922
        %1711 = vmatpush1.msra.mxu0 %v921
        %1712 = vmatprep.subr.mxu0 %v906
        %1713 = vmatpush1.msra.mxu0 %v905
        %1714 = vmatprep.subr.mxu0 %v890
        %1715 = vmatpush1.msra.mxu0 %v889
        %1716 = vmatprep.subr.mxu0 %v874
        %1717 = vmatpush1.msra.mxu0 %v873
        %1718 = vmatprep.subr.mxu0 %v858
        %1719 = vmatpush1.msra.mxu0 %v857
        %1720 = vmatprep.subr.mxu0 %v842
        %1721 = vmatpush1.msra.mxu0 %v841
        %1722 = vmatprep.subr.mxu0 %v826
        %1723 = vmatpush1.msra.mxu0 %v825
        %1724 = vmatprep.subr.mxu0 %v810
        %1725 = vmatpush1.msra.mxu0 %v809
        %1726 = vmatprep.subr.mxu0 %v1306
        %1727 = vmatpush2.msra.mxu0 %v1305
        %1728 = vmatprep.subr.mxu0 %v1290
        %1729 = vmatpush2.msra.mxu0 %v1289
        %1730 = vmatprep.subr.mxu0 %v1274
        %1731 = vmatpush2.msra.mxu0 %v1273
        %1732 = vmatprep.subr.mxu0 %v1258
        %1733 = vmatpush2.msra.mxu0 %v1257
        %1734 = vmatprep.subr.mxu0 %v1242
        %1735 = vmatpush2.msra.mxu0 %v1241
        %1736 = vmatprep.subr.mxu0 %v1226
        %1737 = vmatpush2.msra.mxu0 %v1225
        %1738 = vmatprep.subr.mxu0 %v1210
        %1739 = vmatpush2.msra.mxu0 %v1209
        %1740 = vmatprep.subr.mxu0 %v1194
        %1741 = vmatpush2.msra.mxu0 %v1193
        %1742 = vmatprep.subr.mxu0 %v1178
        %1743 = vmatpush2.msra.mxu0 %v1177
        %1744 = vmatprep.subr.mxu0 %v1162
        %1745 = vmatpush2.msra.mxu0 %v1161
        %1746 = vmatprep.subr.mxu0 %v1146
        %1747 = vmatpush2.msra.mxu0 %v1145
        %1748 = vmatprep.subr.mxu0 %v1130
        %1749 = vmatpush2.msra.mxu0 %v1129
        %1750 = vmatprep.subr.mxu0 %v1114
        %1751 = vmatpush2.msra.mxu0 %v1113
        %1752 = vmatprep.subr.mxu0 %v1098
        %1753 = vmatpush2.msra.mxu0 %v1097
        %1754 = vmatprep.subr.mxu0 %v1082
        %1755 = vmatpush2.msra.mxu0 %v1081
        %1756 = vmatprep.subr.mxu0 %v1066
        %1757 = vmatpush2.msra.mxu0 %v1065
        %1758 = vmatprep.mubr.f32.mxu0 %v1334
        %1759 = vmatmul.mubr.f32.gmra.mxu0 %v1332
        %v1760 = vpop.f32.mrf.mxu0
        %v1761 = vadd.f32 %v1690, %v1760
        %v1762 = vpop.f32.mrf.mxu0
        %v1763 = vadd.f32 %v1692, %v1762
        %1764 = vdwg.mxu0
        %1765 = vmatprep.subr.mxu0 %v540
        %1766 = vmatpush1.msra.mxu0 %v539
        %1767 = vmatprep.subr.mxu0 %v524
        %1768 = vmatpush1.msra.mxu0 %v523
        %1769 = vmatprep.subr.mxu0 %v508
        %1770 = vmatpush1.msra.mxu0 %v507
        %1771 = vmatprep.subr.mxu0 %v492
        %1772 = vmatpush1.msra.mxu0 %v491
        %1773 = vmatprep.subr.mxu0 %v476
        %1774 = vmatpush1.msra.mxu0 %v475
        %1775 = vmatprep.subr.mxu0 %v460
        %1776 = vmatpush1.msra.mxu0 %v459
        %1777 = vmatprep.subr.mxu0 %v444
        %1778 = vmatpush1.msra.mxu0 %v443
        %1779 = vmatprep.subr.mxu0 %v428
        %1780 = vmatpush1.msra.mxu0 %v427
        %1781 = vmatprep.subr.mxu0 %v412
        %1782 = vmatpush1.msra.mxu0 %v411
        %1783 = vmatprep.subr.mxu0 %v396
        %1784 = vmatpush1.msra.mxu0 %v395
        %1785 = vmatprep.subr.mxu0 %v380
        %1786 = vmatpush1.msra.mxu0 %v379
        %1787 = vmatprep.subr.mxu0 %v364
        %1788 = vmatpush1.msra.mxu0 %v363
        %1789 = vmatprep.subr.mxu0 %v348
        %1790 = vmatpush1.msra.mxu0 %v347
        %1791 = vmatprep.subr.mxu0 %v332
        %1792 = vmatpush1.msra.mxu0 %v331
        %1793 = vmatprep.subr.mxu0 %v316
        %1794 = vmatpush1.msra.mxu0 %v315
        %1795 = vmatprep.subr.mxu0 %v300
        %1796 = vmatpush1.msra.mxu0 %v299
        %1797 = vmatprep.subr.mxu0 %v796
        %1798 = vmatpush2.msra.mxu0 %v795
        %1799 = vmatprep.subr.mxu0 %v780
        %1800 = vmatpush2.msra.mxu0 %v779
        %1801 = vmatprep.subr.mxu0 %v764
        %1802 = vmatpush2.msra.mxu0 %v763
        %1803 = vmatprep.subr.mxu0 %v748
        %1804 = vmatpush2.msra.mxu0 %v747
        %1805 = vmatprep.subr.mxu0 %v732
        %1806 = vmatpush2.msra.mxu0 %v731
        %1807 = vmatprep.subr.mxu0 %v716
        %1808 = vmatpush2.msra.mxu0 %v715
        %1809 = vmatprep.subr.mxu0 %v700
        %1810 = vmatpush2.msra.mxu0 %v699
        %1811 = vmatprep.subr.mxu0 %v684
        %1812 = vmatpush2.msra.mxu0 %v683
        %1813 = vmatprep.subr.mxu0 %v668
        %1814 = vmatpush2.msra.mxu0 %v667
        %1815 = vmatprep.subr.mxu0 %v652
        %1816 = vmatpush2.msra.mxu0 %v651
        %1817 = vmatprep.subr.mxu0 %v636
        %1818 = vmatpush2.msra.mxu0 %v635
        %1819 = vmatprep.subr.mxu0 %v620
        %1820 = vmatpush2.msra.mxu0 %v619
        %1821 = vmatprep.subr.mxu0 %v604
        %1822 = vmatpush2.msra.mxu0 %v603
        %1823 = vmatprep.subr.mxu0 %v588
        %1824 = vmatpush2.msra.mxu0 %v587
        %1825 = vmatprep.subr.mxu0 %v572
        %1826 = vmatpush2.msra.mxu0 %v571
        %1827 = vmatprep.subr.mxu0 %v556
        %1828 = vmatpush2.msra.mxu0 %v555
        %1829 = vmatprep.mubr.f32.mxu0 %v1333
        %1830 = vmatmul.mubr.f32.gmra.mxu0 %v1325
        %v1831 = vpop.f32.mrf.mxu0
        %v1832 = vadd.f32 0.0, %v1831
        %v1833 = vpop.f32.mrf.mxu0
        %v1834 = vadd.f32 0.0, %v1833
        %1835 = vdwg.mxu0
        %1836 = vmatprep.subr.mxu0 %v1052
        %1837 = vmatpush1.msra.mxu0 %v1051
        %1838 = vmatprep.subr.mxu0 %v1036
        %1839 = vmatpush1.msra.mxu0 %v1035
        %1840 = vmatprep.subr.mxu0 %v1020
        %1841 = vmatpush1.msra.mxu0 %v1019
        %1842 = vmatprep.subr.mxu0 %v1004
        %1843 = vmatpush1.msra.mxu0 %v1003
        %1844 = vmatprep.subr.mxu0 %v988
        %1845 = vmatpush1.msra.mxu0 %v987
        %1846 = vmatprep.subr.mxu0 %v972
        %1847 = vmatpush1.msra.mxu0 %v971
        %1848 = vmatprep.subr.mxu0 %v956
        %1849 = vmatpush1.msra.mxu0 %v955
        %1850 = vmatprep.subr.mxu0 %v940
        %1851 = vmatpush1.msra.mxu0 %v939
        %1852 = vmatprep.subr.mxu0 %v924
        %1853 = vmatpush1.msra.mxu0 %v923
        %1854 = vmatprep.subr.mxu0 %v908
        %1855 = vmatpush1.msra.mxu0 %v907
        %1856 = vmatprep.subr.mxu0 %v892
        %1857 = vmatpush1.msra.mxu0 %v891
        %1858 = vmatprep.subr.mxu0 %v876
        %1859 = vmatpush1.msra.mxu0 %v875
        %1860 = vmatprep.subr.mxu0 %v860
        %1861 = vmatpush1.msra.mxu0 %v859
        %1862 = vmatprep.subr.mxu0 %v844
        %1863 = vmatpush1.msra.mxu0 %v843
        %1864 = vmatprep.subr.mxu0 %v828
        %1865 = vmatpush1.msra.mxu0 %v827
        %1866 = vmatprep.subr.mxu0 %v812
        %1867 = vmatpush1.msra.mxu0 %v811
        %1868 = vmatprep.subr.mxu0 %v1308
        %1869 = vmatpush2.msra.mxu0 %v1307
        %1870 = vmatprep.subr.mxu0 %v1292
        %1871 = vmatpush2.msra.mxu0 %v1291
        %1872 = vmatprep.subr.mxu0 %v1276
        %1873 = vmatpush2.msra.mxu0 %v1275
        %1874 = vmatprep.subr.mxu0 %v1260
        %1875 = vmatpush2.msra.mxu0 %v1259
        %1876 = vmatprep.subr.mxu0 %v1244
        %1877 = vmatpush2.msra.mxu0 %v1243
        %1878 = vmatprep.subr.mxu0 %v1228
        %1879 = vmatpush2.msra.mxu0 %v1227
        %1880 = vmatprep.subr.mxu0 %v1212
        %1881 = vmatpush2.msra.mxu0 %v1211
        %1882 = vmatprep.subr.mxu0 %v1196
        %1883 = vmatpush2.msra.mxu0 %v1195
        %1884 = vmatprep.subr.mxu0 %v1180
        %1885 = vmatpush2.msra.mxu0 %v1179
        %1886 = vmatprep.subr.mxu0 %v1164
        %1887 = vmatpush2.msra.mxu0 %v1163
        %1888 = vmatprep.subr.mxu0 %v1148
        %1889 = vmatpush2.msra.mxu0 %v1147
        %1890 = vmatprep.subr.mxu0 %v1132
        %1891 = vmatpush2.msra.mxu0 %v1131
        %1892 = vmatprep.subr.mxu0 %v1116
        %1893 = vmatpush2.msra.mxu0 %v1115
        %1894 = vmatprep.subr.mxu0 %v1100
        %1895 = vmatpush2.msra.mxu0 %v1099
        %1896 = vmatprep.subr.mxu0 %v1084
        %1897 = vmatpush2.msra.mxu0 %v1083
        %1898 = vmatprep.subr.mxu0 %v1068
        %1899 = vmatpush2.msra.mxu0 %v1067
        %1900 = vmatprep.mubr.f32.mxu0 %v1334
        %1901 = vmatmul.mubr.f32.gmra.mxu0 %v1332
        %v1902 = vpop.f32.mrf.mxu0
        %v1903 = vadd.f32 %v1832, %v1902
        %v1904 = vpop.f32.mrf.mxu0
        %v1905 = vadd.f32 %v1834, %v1904
        %1906 = vdwg.mxu0
        %1907 = vmatprep.subr.mxu0 %v542
        %1908 = vmatpush1.msra.mxu0 %v541
        %1909 = vmatprep.subr.mxu0 %v526
        %1910 = vmatpush1.msra.mxu0 %v525
        %1911 = vmatprep.subr.mxu0 %v510
        %1912 = vmatpush1.msra.mxu0 %v509
        %1913 = vmatprep.subr.mxu0 %v494
        %1914 = vmatpush1.msra.mxu0 %v493
        %1915 = vmatprep.subr.mxu0 %v478
        %1916 = vmatpush1.msra.mxu0 %v477
        %1917 = vmatprep.subr.mxu0 %v462
        %1918 = vmatpush1.msra.mxu0 %v461
        %1919 = vmatprep.subr.mxu0 %v446
        %1920 = vmatpush1.msra.mxu0 %v445
        %1921 = vmatprep.subr.mxu0 %v430
        %1922 = vmatpush1.msra.mxu0 %v429
        %1923 = vmatprep.subr.mxu0 %v414
        %1924 = vmatpush1.msra.mxu0 %v413
        %1925 = vmatprep.subr.mxu0 %v398
        %1926 = vmatpush1.msra.mxu0 %v397
        %1927 = vmatprep.subr.mxu0 %v382
        %1928 = vmatpush1.msra.mxu0 %v381
        %1929 = vmatprep.subr.mxu0 %v366
        %1930 = vmatpush1.msra.mxu0 %v365
        %1931 = vmatprep.subr.mxu0 %v350
        %1932 = vmatpush1.msra.mxu0 %v349
        %1933 = vmatprep.subr.mxu0 %v334
        %1934 = vmatpush1.msra.mxu0 %v333
        %1935 = vmatprep.subr.mxu0 %v318
        %1936 = vmatpush1.msra.mxu0 %v317
        %1937 = vmatprep.subr.mxu0 %v302
        %1938 = vmatpush1.msra.mxu0 %v301
        %1939 = vmatprep.subr.mxu0 %v798
        %1940 = vmatpush2.msra.mxu0 %v797
        %1941 = vmatprep.subr.mxu0 %v782
        %1942 = vmatpush2.msra.mxu0 %v781
        %1943 = vmatprep.subr.mxu0 %v766
        %1944 = vmatpush2.msra.mxu0 %v765
        %1945 = vmatprep.subr.mxu0 %v750
        %1946 = vmatpush2.msra.mxu0 %v749
        %1947 = vmatprep.subr.mxu0 %v734
        %1948 = vmatpush2.msra.mxu0 %v733
        %1949 = vmatprep.subr.mxu0 %v718
        %1950 = vmatpush2.msra.mxu0 %v717
        %1951 = vmatprep.subr.mxu0 %v702
        %1952 = vmatpush2.msra.mxu0 %v701
        %1953 = vmatprep.subr.mxu0 %v686
        %1954 = vmatpush2.msra.mxu0 %v685
        %1955 = vmatprep.subr.mxu0 %v670
        %1956 = vmatpush2.msra.mxu0 %v669
        %1957 = vmatprep.subr.mxu0 %v654
        %1958 = vmatpush2.msra.mxu0 %v653
        %1959 = vmatprep.subr.mxu0 %v638
        %1960 = vmatpush2.msra.mxu0 %v637
        %1961 = vmatprep.subr.mxu0 %v622
        %1962 = vmatpush2.msra.mxu0 %v621
        %1963 = vmatprep.subr.mxu0 %v606
        %1964 = vmatpush2.msra.mxu0 %v605
        %1965 = vmatprep.subr.mxu0 %v590
        %1966 = vmatpush2.msra.mxu0 %v589
        %1967 = vmatprep.subr.mxu0 %v574
        %1968 = vmatpush2.msra.mxu0 %v573
        %1969 = vmatprep.subr.mxu0 %v558
        %1970 = vmatpush2.msra.mxu0 %v557
        %1971 = vmatprep.mubr.f32.mxu0 %v1333
        %1972 = vmatmul.mubr.f32.gmra.mxu0 %v1325
        %v1973 = vpop.f32.mrf.mxu0
        %v1974 = vadd.f32 0.0, %v1973
        %v1975 = vpop.f32.mrf.mxu0
        %v1976 = vadd.f32 0.0, %v1975
        %1977 = vdwg.mxu0
        %1978 = vmatprep.subr.mxu0 %v1054
        %1979 = vmatpush1.msra.mxu0 %v1053
        %1980 = vmatprep.subr.mxu0 %v1038
        %1981 = vmatpush1.msra.mxu0 %v1037
        %1982 = vmatprep.subr.mxu0 %v1022
        %1983 = vmatpush1.msra.mxu0 %v1021
        %1984 = vmatprep.subr.mxu0 %v1006
        %1985 = vmatpush1.msra.mxu0 %v1005
        %1986 = vmatprep.subr.mxu0 %v990
        %1987 = vmatpush1.msra.mxu0 %v989
        %1988 = vmatprep.subr.mxu0 %v974
        %1989 = vmatpush1.msra.mxu0 %v973
        %1990 = vmatprep.subr.mxu0 %v958
        %1991 = vmatpush1.msra.mxu0 %v957
        %1992 = vmatprep.subr.mxu0 %v942
        %1993 = vmatpush1.msra.mxu0 %v941
        %1994 = vmatprep.subr.mxu0 %v926
        %1995 = vmatpush1.msra.mxu0 %v925
        %1996 = vmatprep.subr.mxu0 %v910
        %1997 = vmatpush1.msra.mxu0 %v909
        %1998 = vmatprep.subr.mxu0 %v894
        %1999 = vmatpush1.msra.mxu0 %v893
        %2000 = vmatprep.subr.mxu0 %v878
        %2001 = vmatpush1.msra.mxu0 %v877
        %2002 = vmatprep.subr.mxu0 %v862
        %2003 = vmatpush1.msra.mxu0 %v861
        %2004 = vmatprep.subr.mxu0 %v846
        %2005 = vmatpush1.msra.mxu0 %v845
        %2006 = vmatprep.subr.mxu0 %v830
        %2007 = vmatpush1.msra.mxu0 %v829
        %2008 = vmatprep.subr.mxu0 %v814
        %2009 = vmatpush1.msra.mxu0 %v813
        %2010 = vmatprep.subr.mxu0 %v1310
        %2011 = vmatpush2.msra.mxu0 %v1309
        %2012 = vmatprep.subr.mxu0 %v1294
        %2013 = vmatpush2.msra.mxu0 %v1293
        %2014 = vmatprep.subr.mxu0 %v1278
        %2015 = vmatpush2.msra.mxu0 %v1277
        %2016 = vmatprep.subr.mxu0 %v1262
        %2017 = vmatpush2.msra.mxu0 %v1261
        %2018 = vmatprep.subr.mxu0 %v1246
        %2019 = vmatpush2.msra.mxu0 %v1245
        %2020 = vmatprep.subr.mxu0 %v1230
        %2021 = vmatpush2.msra.mxu0 %v1229
        %2022 = vmatprep.subr.mxu0 %v1214
        %2023 = vmatpush2.msra.mxu0 %v1213
        %2024 = vmatprep.subr.mxu0 %v1198
        %2025 = vmatpush2.msra.mxu0 %v1197
        %2026 = vmatprep.subr.mxu0 %v1182
        %2027 = vmatpush2.msra.mxu0 %v1181
        %2028 = vmatprep.subr.mxu0 %v1166
        %2029 = vmatpush2.msra.mxu0 %v1165
        %2030 = vmatprep.subr.mxu0 %v1150
        %2031 = vmatpush2.msra.mxu0 %v1149
        %2032 = vmatprep.subr.mxu0 %v1134
        %2033 = vmatpush2.msra.mxu0 %v1133
        %2034 = vmatprep.subr.mxu0 %v1118
        %2035 = vmatpush2.msra.mxu0 %v1117
        %2036 = vmatprep.subr.mxu0 %v1102
        %2037 = vmatpush2.msra.mxu0 %v1101
        %2038 = vmatprep.subr.mxu0 %v1086
        %2039 = vmatpush2.msra.mxu0 %v1085
        %2040 = vmatprep.subr.mxu0 %v1070
        %2041 = vmatpush2.msra.mxu0 %v1069
        %2042 = vmatprep.mubr.f32.mxu0 %v1334
        %2043 = vmatmul.mubr.f32.gmra.mxu0 %v1332
        %v2044 = vpop.f32.mrf.mxu0
        %v2045 = vadd.f32 %v1974, %v2044
        %v2046 = vpop.f32.mrf.mxu0
        %v2047 = vadd.f32 %v1976, %v2046
        %2048 = vdwg.mxu0
        %2049 = vmatprep.subr.mxu0 %v544
        %2050 = vmatpush1.msra.mxu0 %v543
        %2051 = vmatprep.subr.mxu0 %v528
        %2052 = vmatpush1.msra.mxu0 %v527
        %2053 = vmatprep.subr.mxu0 %v512
        %2054 = vmatpush1.msra.mxu0 %v511
        %2055 = vmatprep.subr.mxu0 %v496
        %2056 = vmatpush1.msra.mxu0 %v495
        %2057 = vmatprep.subr.mxu0 %v480
        %2058 = vmatpush1.msra.mxu0 %v479
        %2059 = vmatprep.subr.mxu0 %v464
        %2060 = vmatpush1.msra.mxu0 %v463
        %2061 = vmatprep.subr.mxu0 %v448
        %2062 = vmatpush1.msra.mxu0 %v447
        %2063 = vmatprep.subr.mxu0 %v432
        %2064 = vmatpush1.msra.mxu0 %v431
        %2065 = vmatprep.subr.mxu0 %v416
        %2066 = vmatpush1.msra.mxu0 %v415
        %2067 = vmatprep.subr.mxu0 %v400
        %2068 = vmatpush1.msra.mxu0 %v399
        %2069 = vmatprep.subr.mxu0 %v384
        %2070 = vmatpush1.msra.mxu0 %v383
        %2071 = vmatprep.subr.mxu0 %v368
        %2072 = vmatpush1.msra.mxu0 %v367
        %2073 = vmatprep.subr.mxu0 %v352
        %2074 = vmatpush1.msra.mxu0 %v351
        %2075 = vmatprep.subr.mxu0 %v336
        %2076 = vmatpush1.msra.mxu0 %v335
        %2077 = vmatprep.subr.mxu0 %v320
        %2078 = vmatpush1.msra.mxu0 %v319
        %2079 = vmatprep.subr.mxu0 %v304
        %2080 = vmatpush1.msra.mxu0 %v303
        %2081 = vmatprep.subr.mxu0 %v800
        %2082 = vmatpush2.msra.mxu0 %v799
        %2083 = vmatprep.subr.mxu0 %v784
        %2084 = vmatpush2.msra.mxu0 %v783
        %2085 = vmatprep.subr.mxu0 %v768
        %2086 = vmatpush2.msra.mxu0 %v767
        %2087 = vmatprep.subr.mxu0 %v752
        %2088 = vmatpush2.msra.mxu0 %v751
        %2089 = vmatprep.subr.mxu0 %v736
        %2090 = vmatpush2.msra.mxu0 %v735
        %2091 = vmatprep.subr.mxu0 %v720
        %2092 = vmatpush2.msra.mxu0 %v719
        %2093 = vmatprep.subr.mxu0 %v704
        %2094 = vmatpush2.msra.mxu0 %v703
        %2095 = vmatprep.subr.mxu0 %v688
        %2096 = vmatpush2.msra.mxu0 %v687
        %2097 = vmatprep.subr.mxu0 %v672
        %2098 = vmatpush2.msra.mxu0 %v671
        %2099 = vmatprep.subr.mxu0 %v656
        %2100 = vmatpush2.msra.mxu0 %v655
        %2101 = vmatprep.subr.mxu0 %v640
        %2102 = vmatpush2.msra.mxu0 %v639
        %2103 = vmatprep.subr.mxu0 %v624
        %2104 = vmatpush2.msra.mxu0 %v623
        %2105 = vmatprep.subr.mxu0 %v608
        %2106 = vmatpush2.msra.mxu0 %v607
        %2107 = vmatprep.subr.mxu0 %v592
        %2108 = vmatpush2.msra.mxu0 %v591
        %2109 = vmatprep.subr.mxu0 %v576
        %2110 = vmatpush2.msra.mxu0 %v575
        %2111 = vmatprep.subr.mxu0 %v560
        %2112 = vmatpush2.msra.mxu0 %v559
        %2113 = vmatprep.mubr.f32.mxu0 %v1333
        %2114 = vmatmul.mubr.f32.gmra.mxu0 %v1325
        %v2115 = vpop.f32.mrf.mxu0
        %v2116 = vadd.f32 0.0, %v2115
        %v2117 = vpop.f32.mrf.mxu0
        %v2118 = vadd.f32 0.0, %v2117
        %2119 = vdwg.mxu0
        %2120 = vmatprep.subr.mxu0 %v1056
        %2121 = vmatpush1.msra.mxu0 %v1055
        %2122 = vmatprep.subr.mxu0 %v1040
        %2123 = vmatpush1.msra.mxu0 %v1039
        %2124 = vmatprep.subr.mxu0 %v1024
        %2125 = vmatpush1.msra.mxu0 %v1023
        %2126 = vmatprep.subr.mxu0 %v1008
        %2127 = vmatpush1.msra.mxu0 %v1007
        %2128 = vmatprep.subr.mxu0 %v992
        %2129 = vmatpush1.msra.mxu0 %v991
        %2130 = vmatprep.subr.mxu0 %v976
        %2131 = vmatpush1.msra.mxu0 %v975
        %2132 = vmatprep.subr.mxu0 %v960
        %2133 = vmatpush1.msra.mxu0 %v959
        %2134 = vmatprep.subr.mxu0 %v944
        %2135 = vmatpush1.msra.mxu0 %v943
        %2136 = vmatprep.subr.mxu0 %v928
        %2137 = vmatpush1.msra.mxu0 %v927
        %2138 = vmatprep.subr.mxu0 %v912
        %2139 = vmatpush1.msra.mxu0 %v911
        %2140 = vmatprep.subr.mxu0 %v896
        %2141 = vmatpush1.msra.mxu0 %v895
        %2142 = vmatprep.subr.mxu0 %v880
        %2143 = vmatpush1.msra.mxu0 %v879
        %2144 = vmatprep.subr.mxu0 %v864
        %2145 = vmatpush1.msra.mxu0 %v863
        %2146 = vmatprep.subr.mxu0 %v848
        %2147 = vmatpush1.msra.mxu0 %v847
        %2148 = vmatprep.subr.mxu0 %v832
        %2149 = vmatpush1.msra.mxu0 %v831
        %2150 = vmatprep.subr.mxu0 %v816
        %2151 = vmatpush1.msra.mxu0 %v815
        %2152 = vmatprep.subr.mxu0 %v1312
        %2153 = vmatpush2.msra.mxu0 %v1311
        %2154 = vmatprep.subr.mxu0 %v1296
        %2155 = vmatpush2.msra.mxu0 %v1295
        %2156 = vmatprep.subr.mxu0 %v1280
        %2157 = vmatpush2.msra.mxu0 %v1279
        %2158 = vmatprep.subr.mxu0 %v1264
        %2159 = vmatpush2.msra.mxu0 %v1263
        %2160 = vmatprep.subr.mxu0 %v1248
        %2161 = vmatpush2.msra.mxu0 %v1247
        %2162 = vmatprep.subr.mxu0 %v1232
        %2163 = vmatpush2.msra.mxu0 %v1231
        %2164 = vmatprep.subr.mxu0 %v1216
        %2165 = vmatpush2.msra.mxu0 %v1215
        %2166 = vmatprep.subr.mxu0 %v1200
        %2167 = vmatpush2.msra.mxu0 %v1199
        %2168 = vmatprep.subr.mxu0 %v1184
        %2169 = vmatpush2.msra.mxu0 %v1183
        %2170 = vmatprep.subr.mxu0 %v1168
        %2171 = vmatpush2.msra.mxu0 %v1167
        %2172 = vmatprep.subr.mxu0 %v1152
        %2173 = vmatpush2.msra.mxu0 %v1151
        %2174 = vmatprep.subr.mxu0 %v1136
        %2175 = vmatpush2.msra.mxu0 %v1135
        %2176 = vmatprep.subr.mxu0 %v1120
        %2177 = vmatpush2.msra.mxu0 %v1119
        %2178 = vmatprep.subr.mxu0 %v1104
        %2179 = vmatpush2.msra.mxu0 %v1103
        %2180 = vmatprep.subr.mxu0 %v1088
        %2181 = vmatpush2.msra.mxu0 %v1087
        %2182 = vmatprep.subr.mxu0 %v1072
        %2183 = vmatpush2.msra.mxu0 %v1071
        %2184 = vmatprep.mubr.f32.mxu0 %v1334
        %2185 = vmatmul.mubr.f32.gmra.mxu0 %v1332
        %v2186 = vpop.f32.mrf.mxu0
        %v2187 = vadd.f32 %v2116, %v2186
        %v2188 = vpop.f32.mrf.mxu0
        %v2189 = vadd.f32 %v2118, %v2188
        %2190 = vdwg.mxu0
        %2191 = vmatprep.subr.mxu0 %v546
        %2192 = vmatpush1.msra.mxu0 %v545
        %2193 = vmatprep.subr.mxu0 %v530
        %2194 = vmatpush1.msra.mxu0 %v529
        %2195 = vmatprep.subr.mxu0 %v514
        %2196 = vmatpush1.msra.mxu0 %v513
        %2197 = vmatprep.subr.mxu0 %v498
        %2198 = vmatpush1.msra.mxu0 %v497
        %2199 = vmatprep.subr.mxu0 %v482
        %2200 = vmatpush1.msra.mxu0 %v481
        %2201 = vmatprep.subr.mxu0 %v466
        %2202 = vmatpush1.msra.mxu0 %v465
        %2203 = vmatprep.subr.mxu0 %v450
        %2204 = vmatpush1.msra.mxu0 %v449
        %2205 = vmatprep.subr.mxu0 %v434
        %2206 = vmatpush1.msra.mxu0 %v433
        %2207 = vmatprep.subr.mxu0 %v418
        %2208 = vmatpush1.msra.mxu0 %v417
        %2209 = vmatprep.subr.mxu0 %v402
        %2210 = vmatpush1.msra.mxu0 %v401
        %2211 = vmatprep.subr.mxu0 %v386
        %2212 = vmatpush1.msra.mxu0 %v385
        %2213 = vmatprep.subr.mxu0 %v370
        %2214 = vmatpush1.msra.mxu0 %v369
        %2215 = vmatprep.subr.mxu0 %v354
        %2216 = vmatpush1.msra.mxu0 %v353
        %2217 = vmatprep.subr.mxu0 %v338
        %2218 = vmatpush1.msra.mxu0 %v337
        %2219 = vmatprep.subr.mxu0 %v322
        %2220 = vmatpush1.msra.mxu0 %v321
        %2221 = vmatprep.subr.mxu0 %v306
        %2222 = vmatpush1.msra.mxu0 %v305
        %2223 = vmatprep.subr.mxu0 %v802
        %2224 = vmatpush2.msra.mxu0 %v801
        %2225 = vmatprep.subr.mxu0 %v786
        %2226 = vmatpush2.msra.mxu0 %v785
        %2227 = vmatprep.subr.mxu0 %v770
        %2228 = vmatpush2.msra.mxu0 %v769
        %2229 = vmatprep.subr.mxu0 %v754
        %2230 = vmatpush2.msra.mxu0 %v753
        %2231 = vmatprep.subr.mxu0 %v738
        %2232 = vmatpush2.msra.mxu0 %v737
        %2233 = vmatprep.subr.mxu0 %v722
        %2234 = vmatpush2.msra.mxu0 %v721
        %2235 = vmatprep.subr.mxu0 %v706
        %2236 = vmatpush2.msra.mxu0 %v705
        %2237 = vmatprep.subr.mxu0 %v690
        %2238 = vmatpush2.msra.mxu0 %v689
        %2239 = vmatprep.subr.mxu0 %v674
        %2240 = vmatpush2.msra.mxu0 %v673
        %2241 = vmatprep.subr.mxu0 %v658
        %2242 = vmatpush2.msra.mxu0 %v657
        %2243 = vmatprep.subr.mxu0 %v642
        %2244 = vmatpush2.msra.mxu0 %v641
        %2245 = vmatprep.subr.mxu0 %v626
        %2246 = vmatpush2.msra.mxu0 %v625
        %2247 = vmatprep.subr.mxu0 %v610
        %2248 = vmatpush2.msra.mxu0 %v609
        %2249 = vmatprep.subr.mxu0 %v594
        %2250 = vmatpush2.msra.mxu0 %v593
        %2251 = vmatprep.subr.mxu0 %v578
        %2252 = vmatpush2.msra.mxu0 %v577
        %2253 = vmatprep.subr.mxu0 %v562
        %2254 = vmatpush2.msra.mxu0 %v561
        %2255 = vmatprep.mubr.f32.mxu0 %v1333
        %2256 = vmatmul.mubr.f32.gmra.mxu0 %v1325
        %v2257 = vpop.f32.mrf.mxu0
        %v2258 = vadd.f32 0.0, %v2257
        %v2259 = vpop.f32.mrf.mxu0
        %v2260 = vadd.f32 0.0, %v2259
        %2261 = vdwg.mxu0
        %2262 = vmatprep.subr.mxu0 %v1058
        %2263 = vmatpush1.msra.mxu0 %v1057
        %2264 = vmatprep.subr.mxu0 %v1042
        %2265 = vmatpush1.msra.mxu0 %v1041
        %2266 = vmatprep.subr.mxu0 %v1026
        %2267 = vmatpush1.msra.mxu0 %v1025
        %2268 = vmatprep.subr.mxu0 %v1010
        %2269 = vmatpush1.msra.mxu0 %v1009
        %2270 = vmatprep.subr.mxu0 %v994
        %2271 = vmatpush1.msra.mxu0 %v993
        %2272 = vmatprep.subr.mxu0 %v978
        %2273 = vmatpush1.msra.mxu0 %v977
        %2274 = vmatprep.subr.mxu0 %v962
        %2275 = vmatpush1.msra.mxu0 %v961
        %2276 = vmatprep.subr.mxu0 %v946
        %2277 = vmatpush1.msra.mxu0 %v945
        %2278 = vmatprep.subr.mxu0 %v930
        %2279 = vmatpush1.msra.mxu0 %v929
        %2280 = vmatprep.subr.mxu0 %v914
        %2281 = vmatpush1.msra.mxu0 %v913
        %2282 = vmatprep.subr.mxu0 %v898
        %2283 = vmatpush1.msra.mxu0 %v897
        %2284 = vmatprep.subr.mxu0 %v882
        %2285 = vmatpush1.msra.mxu0 %v881
        %2286 = vmatprep.subr.mxu0 %v866
        %2287 = vmatpush1.msra.mxu0 %v865
        %2288 = vmatprep.subr.mxu0 %v850
        %2289 = vmatpush1.msra.mxu0 %v849
        %2290 = vmatprep.subr.mxu0 %v834
        %2291 = vmatpush1.msra.mxu0 %v833
        %2292 = vmatprep.subr.mxu0 %v818
        %2293 = vmatpush1.msra.mxu0 %v817
        %2294 = vmatprep.subr.mxu0 %v1314
        %2295 = vmatpush2.msra.mxu0 %v1313
        %2296 = vmatprep.subr.mxu0 %v1298
        %2297 = vmatpush2.msra.mxu0 %v1297
        %2298 = vmatprep.subr.mxu0 %v1282
        %2299 = vmatpush2.msra.mxu0 %v1281
        %2300 = vmatprep.subr.mxu0 %v1266
        %2301 = vmatpush2.msra.mxu0 %v1265
        %2302 = vmatprep.subr.mxu0 %v1250
        %2303 = vmatpush2.msra.mxu0 %v1249
        %2304 = vmatprep.subr.mxu0 %v1234
        %2305 = vmatpush2.msra.mxu0 %v1233
        %2306 = vmatprep.subr.mxu0 %v1218
        %2307 = vmatpush2.msra.mxu0 %v1217
        %2308 = vmatprep.subr.mxu0 %v1202
        %2309 = vmatpush2.msra.mxu0 %v1201
        %2310 = vmatprep.subr.mxu0 %v1186
        %2311 = vmatpush2.msra.mxu0 %v1185
        %2312 = vmatprep.subr.mxu0 %v1170
        %2313 = vmatpush2.msra.mxu0 %v1169
        %2314 = vmatprep.subr.mxu0 %v1154
        %2315 = vmatpush2.msra.mxu0 %v1153
        %2316 = vmatprep.subr.mxu0 %v1138
        %2317 = vmatpush2.msra.mxu0 %v1137
        %2318 = vmatprep.subr.mxu0 %v1122
        %2319 = vmatpush2.msra.mxu0 %v1121
        %2320 = vmatprep.subr.mxu0 %v1106
        %2321 = vmatpush2.msra.mxu0 %v1105
        %2322 = vmatprep.subr.mxu0 %v1090
        %2323 = vmatpush2.msra.mxu0 %v1089
        %2324 = vmatprep.subr.mxu0 %v1074
        %2325 = vmatpush2.msra.mxu0 %v1073
        %2326 = vmatprep.mubr.f32.mxu0 %v1334
        %2327 = vmatmul.mubr.f32.gmra.mxu0 %v1332
        %v2328 = vpop.f32.mrf.mxu0
        %v2329 = vadd.f32 %v2258, %v2328
        %v2330 = vpop.f32.mrf.mxu0
        %v2331 = vadd.f32 %v2260, %v2330
        %2332 = vdwg.mxu0
        %2333 = vmatprep.subr.mxu0 %v548
        %2334 = vmatpush1.msra.mxu0 %v547
        %2335 = vmatprep.subr.mxu0 %v532
        %2336 = vmatpush1.msra.mxu0 %v531
        %2337 = vmatprep.subr.mxu0 %v516
        %2338 = vmatpush1.msra.mxu0 %v515
        %2339 = vmatprep.subr.mxu0 %v500
        %2340 = vmatpush1.msra.mxu0 %v499
        %2341 = vmatprep.subr.mxu0 %v484
        %2342 = vmatpush1.msra.mxu0 %v483
        %2343 = vmatprep.subr.mxu0 %v468
        %2344 = vmatpush1.msra.mxu0 %v467
        %2345 = vmatprep.subr.mxu0 %v452
        %2346 = vmatpush1.msra.mxu0 %v451
        %2347 = vmatprep.subr.mxu0 %v436
        %2348 = vmatpush1.msra.mxu0 %v435
        %2349 = vmatprep.subr.mxu0 %v420
        %2350 = vmatpush1.msra.mxu0 %v419
        %2351 = vmatprep.subr.mxu0 %v404
        %2352 = vmatpush1.msra.mxu0 %v403
        %2353 = vmatprep.subr.mxu0 %v388
        %2354 = vmatpush1.msra.mxu0 %v387
        %2355 = vmatprep.subr.mxu0 %v372
        %2356 = vmatpush1.msra.mxu0 %v371
        %2357 = vmatprep.subr.mxu0 %v356
        %2358 = vmatpush1.msra.mxu0 %v355
        %2359 = vmatprep.subr.mxu0 %v340
        %2360 = vmatpush1.msra.mxu0 %v339
        %2361 = vmatprep.subr.mxu0 %v324
        %2362 = vmatpush1.msra.mxu0 %v323
        %2363 = vmatprep.subr.mxu0 %v308
        %2364 = vmatpush1.msra.mxu0 %v307
        %2365 = vmatprep.subr.mxu0 %v804
        %2366 = vmatpush2.msra.mxu0 %v803
        %2367 = vmatprep.subr.mxu0 %v788
        %2368 = vmatpush2.msra.mxu0 %v787
        %2369 = vmatprep.subr.mxu0 %v772
        %2370 = vmatpush2.msra.mxu0 %v771
        %2371 = vmatprep.subr.mxu0 %v756
        %2372 = vmatpush2.msra.mxu0 %v755
        %2373 = vmatprep.subr.mxu0 %v740
        %2374 = vmatpush2.msra.mxu0 %v739
        %2375 = vmatprep.subr.mxu0 %v724
        %2376 = vmatpush2.msra.mxu0 %v723
        %2377 = vmatprep.subr.mxu0 %v708
        %2378 = vmatpush2.msra.mxu0 %v707
        %2379 = vmatprep.subr.mxu0 %v692
        %2380 = vmatpush2.msra.mxu0 %v691
        %2381 = vmatprep.subr.mxu0 %v676
        %2382 = vmatpush2.msra.mxu0 %v675
        %2383 = vmatprep.subr.mxu0 %v660
        %2384 = vmatpush2.msra.mxu0 %v659
        %2385 = vmatprep.subr.mxu0 %v644
        %2386 = vmatpush2.msra.mxu0 %v643
        %2387 = vmatprep.subr.mxu0 %v628
        %2388 = vmatpush2.msra.mxu0 %v627
        %2389 = vmatprep.subr.mxu0 %v612
        %2390 = vmatpush2.msra.mxu0 %v611
        %2391 = vmatprep.subr.mxu0 %v596
        %2392 = vmatpush2.msra.mxu0 %v595
        %2393 = vmatprep.subr.mxu0 %v580
        %2394 = vmatpush2.msra.mxu0 %v579
        %2395 = vmatprep.subr.mxu0 %v564
        %2396 = vmatpush2.msra.mxu0 %v563
        %2397 = vmatprep.mubr.f32.mxu0 %v1333
        %2398 = vmatmul.mubr.f32.gmra.mxu0 %v1325
        %v2399 = vpop.f32.mrf.mxu0
        %v2400 = vadd.f32 0.0, %v2399
        %v2401 = vpop.f32.mrf.mxu0
        %v2402 = vadd.f32 0.0, %v2401
        %2403 = vdwg.mxu0
        %2404 = vmatprep.subr.mxu0 %v1060
        %2405 = vmatpush1.msra.mxu0 %v1059
        %2406 = vmatprep.subr.mxu0 %v1044
        %2407 = vmatpush1.msra.mxu0 %v1043
        %2408 = vmatprep.subr.mxu0 %v1028
        %2409 = vmatpush1.msra.mxu0 %v1027
        %2410 = vmatprep.subr.mxu0 %v1012
        %2411 = vmatpush1.msra.mxu0 %v1011
        %2412 = vmatprep.subr.mxu0 %v996
        %2413 = vmatpush1.msra.mxu0 %v995
        %2414 = vmatprep.subr.mxu0 %v980
        %2415 = vmatpush1.msra.mxu0 %v979
        %2416 = vmatprep.subr.mxu0 %v964
        %2417 = vmatpush1.msra.mxu0 %v963
        %2418 = vmatprep.subr.mxu0 %v948
        %2419 = vmatpush1.msra.mxu0 %v947
        %2420 = vmatprep.subr.mxu0 %v932
        %2421 = vmatpush1.msra.mxu0 %v931
        %2422 = vmatprep.subr.mxu0 %v916
        %2423 = vmatpush1.msra.mxu0 %v915
        %2424 = vmatprep.subr.mxu0 %v900
        %2425 = vmatpush1.msra.mxu0 %v899
        %2426 = vmatprep.subr.mxu0 %v884
        %2427 = vmatpush1.msra.mxu0 %v883
        %2428 = vmatprep.subr.mxu0 %v868
        %2429 = vmatpush1.msra.mxu0 %v867
        %2430 = vmatprep.subr.mxu0 %v852
        %2431 = vmatpush1.msra.mxu0 %v851
        %2432 = vmatprep.subr.mxu0 %v836
        %2433 = vmatpush1.msra.mxu0 %v835
        %2434 = vmatprep.subr.mxu0 %v820
        %2435 = vmatpush1.msra.mxu0 %v819
        %2436 = vmatprep.subr.mxu0 %v1316
        %2437 = vmatpush2.msra.mxu0 %v1315
        %2438 = vmatprep.subr.mxu0 %v1300
        %2439 = vmatpush2.msra.mxu0 %v1299
        %2440 = vmatprep.subr.mxu0 %v1284
        %2441 = vmatpush2.msra.mxu0 %v1283
        %2442 = vmatprep.subr.mxu0 %v1268
        %2443 = vmatpush2.msra.mxu0 %v1267
        %2444 = vmatprep.subr.mxu0 %v1252
        %2445 = vmatpush2.msra.mxu0 %v1251
        %2446 = vmatprep.subr.mxu0 %v1236
        %2447 = vmatpush2.msra.mxu0 %v1235
        %2448 = vmatprep.subr.mxu0 %v1220
        %2449 = vmatpush2.msra.mxu0 %v1219
        %2450 = vmatprep.subr.mxu0 %v1204
        %2451 = vmatpush2.msra.mxu0 %v1203
        %2452 = vmatprep.subr.mxu0 %v1188
        %2453 = vmatpush2.msra.mxu0 %v1187
        %2454 = vmatprep.subr.mxu0 %v1172
        %2455 = vmatpush2.msra.mxu0 %v1171
        %2456 = vmatprep.subr.mxu0 %v1156
        %2457 = vmatpush2.msra.mxu0 %v1155
        %2458 = vmatprep.subr.mxu0 %v1140
        %2459 = vmatpush2.msra.mxu0 %v1139
        %2460 = vmatprep.subr.mxu0 %v1124
        %2461 = vmatpush2.msra.mxu0 %v1123
        %2462 = vmatprep.subr.mxu0 %v1108
        %2463 = vmatpush2.msra.mxu0 %v1107
        %2464 = vmatprep.subr.mxu0 %v1092
        %2465 = vmatpush2.msra.mxu0 %v1091
        %2466 = vmatprep.subr.mxu0 %v1076
        %2467 = vmatpush2.msra.mxu0 %v1075
        %2468 = vmatprep.mubr.f32.mxu0 %v1334
        %2469 = vmatmul.mubr.f32.gmra.mxu0 %v1332
        %v2470 = vpop.f32.mrf.mxu0
        %v2471 = vadd.f32 %v2400, %v2470
        %v2472 = vpop.f32.mrf.mxu0
        %v2473 = vadd.f32 %v2402, %v2472
        %2474 = vdwg.mxu0
        %v2491 = vcombine.low %v1477, %v1479
        %v2492 = vcombine.low %v1619, %v1621
        %v2494 = vunpack.c.l.s4 1983009808
        %v2495 = vunpack.c.0.s8 %v2494
        %v2496 = vlaneseq
        %v2497 = vshrl.u32 %v2496, 7
        %v2498 = vsub.s32 %v2495, %v2497
        %v2499 = vrot.slane %v2491, %v2498
        %v2501 = vunpack.c.l.s4 1983009808
        %v2502 = vunpack.c.0.s8 %v2501
        %v2503 = vlaneseq
        %v2504 = vshrl.u32 %v2503, 7
        %v2505 = vsub.s32 %v2502, %v2504
        %v2506 = vrot.slane %v2492, %v2505
        %v2507 = vcombine.low %v2499, %v2506
        %v2508 = vcombine.low %v1761, %v1763
        %v2509 = vcombine.low %v1903, %v1905
        %v2511 = vunpack.c.l.s4 1983009808
        %v2512 = vunpack.c.0.s8 %v2511
        %v2513 = vlaneseq
        %v2514 = vshrl.u32 %v2513, 7
        %v2515 = vsub.s32 %v2512, %v2514
        %v2516 = vrot.slane %v2508, %v2515
        %v2518 = vunpack.c.l.s4 1983009808
        %v2519 = vunpack.c.0.s8 %v2518
        %v2520 = vlaneseq
        %v2521 = vshrl.u32 %v2520, 7
        %v2522 = vsub.s32 %v2519, %v2521
        %v2523 = vrot.slane %v2509, %v2522
        %v2524 = vcombine.low %v2516, %v2523
        %v2525 = vcombine.low %v2045, %v2047
        %v2526 = vcombine.low %v2187, %v2189
        %v2528 = vunpack.c.l.s4 1983009808
        %v2529 = vunpack.c.0.s8 %v2528
        %v2530 = vlaneseq
        %v2531 = vshrl.u32 %v2530, 7
        %v2532 = vsub.s32 %v2529, %v2531
        %v2533 = vrot.slane %v2525, %v2532
        %v2535 = vunpack.c.l.s4 1983009808
        %v2536 = vunpack.c.0.s8 %v2535
        %v2537 = vlaneseq
        %v2538 = vshrl.u32 %v2537, 7
        %v2539 = vsub.s32 %v2536, %v2538
        %v2540 = vrot.slane %v2526, %v2539
        %v2541 = vcombine.low %v2533, %v2540
        %v2542 = vcombine.low %v2329, %v2331
        %v2543 = vcombine.low %v2471, %v2473
        %v2545 = vunpack.c.l.s4 1983009808
        %v2546 = vunpack.c.0.s8 %v2545
        %v2547 = vlaneseq
        %v2548 = vshrl.u32 %v2547, 7
        %v2549 = vsub.s32 %v2546, %v2548
        %v2550 = vrot.slane %v2542, %v2549
        %v2552 = vunpack.c.l.s4 1983009808
        %v2553 = vunpack.c.0.s8 %v2552
        %v2554 = vlaneseq
        %v2555 = vshrl.u32 %v2554, 7
        %v2556 = vsub.s32 %v2553, %v2555
        %v2557 = vrot.slane %v2543, %v2556
        %v2558 = vcombine.low %v2550, %v2557
        %v2563 = vadd.f32 %v288, %v2507
        %v2564 = vadd.f32 %v289, %v2524
        %v2565 = vadd.f32 %v290, %v2541
        %v2566 = vadd.f32 %v291, %v2558
        %2567 = vst [vmem:[#allocation2] sm:$0xff] %v2563
        %2568 = vst [vmem:[#allocation2 + $0x8] sm:$0xff] %v2564
        %2569 = vst [vmem:[#allocation2 + $0x10] sm:$0xff] %v2565
        %2570 = vst [vmem:[#allocation2 + $0x18] sm:$0xff] %v2566
        %p2571 = scmp.eq.s32.totalorder %s21, 7
        // Predicated region
        $region57: #{convnet10_forward.3} parent=39 // pred_check
          %p2572 = pneg %p2571
        $region58: #{convnet10_forward.3} parent=39 // pred_check_branch
          %2574 = sbr.rel (%p2572) target = $region60
        $region59: #{convnet10_forward.3} parent=39 // pred_region
          %v2575 = vld [vmem:[#allocation2] sm:$0xff]
          %v2576 = vld [vmem:[#allocation2 + $0x8] sm:$0xff]
          %v2577 = vld [vmem:[#allocation2 + $0x10] sm:$0xff]
          %v2578 = vld [vmem:[#allocation2 + $0x18] sm:$0xff]
          %v2579 = vld [vmem:[#allocation6] sm:$0xff]
          %v2580 = vld [vmem:[#allocation6 + $0x8] sm:$0xff]
          %v2583 = vlaneseq
          %v2584 = vshrl.u32 %v2583, 7
          %v2585 = vsub.s32 0, %v2584
          %v2586 = vrot.slane %v2579, %v2585
          %v2587 = vlaneseq
          %v2588 = vshrl.u32 %v2587, 7
          %v2589 = vsub.s32 1, %v2588
          %v2590 = vrot.slane %v2579, %v2589
          %v2591 = vlaneseq
          %v2592 = vshrl.u32 %v2591, 7
          %v2593 = vsub.s32 2, %v2592
          %v2594 = vrot.slane %v2579, %v2593
          %v2595 = vlaneseq
          %v2596 = vshrl.u32 %v2595, 7
          %v2597 = vsub.s32 3, %v2596
          %v2598 = vrot.slane %v2579, %v2597
          %v2599 = vlaneseq
          %v2600 = vshrl.u32 %v2599, 7
          %v2601 = vsub.s32 4, %v2600
          %v2602 = vrot.slane %v2579, %v2601
          %v2603 = vlaneseq
          %v2604 = vshrl.u32 %v2603, 7
          %v2605 = vsub.s32 5, %v2604
          %v2606 = vrot.slane %v2579, %v2605
          %v2607 = vlaneseq
          %v2608 = vshrl.u32 %v2607, 7
          %v2609 = vsub.s32 6, %v2608
          %v2610 = vrot.slane %v2579, %v2609
          %v2611 = vlaneseq
          %v2612 = vshrl.u32 %v2611, 7
          %v2613 = vsub.s32 7, %v2612
          %v2614 = vrot.slane %v2579, %v2613
          %v2615 = vlaneseq
          %v2616 = vshrl.u32 %v2615, 7
          %v2617 = vsub.s32 0, %v2616
          %v2618 = vrot.slane %v2580, %v2617
          %v2619 = vlaneseq
          %v2620 = vshrl.u32 %v2619, 7
          %v2621 = vsub.s32 1, %v2620
          %v2622 = vrot.slane %v2580, %v2621
          %v2623 = vlaneseq
          %v2624 = vshrl.u32 %v2623, 7
          %v2625 = vsub.s32 2, %v2624
          %v2626 = vrot.slane %v2580, %v2625
          %v2627 = vlaneseq
          %v2628 = vshrl.u32 %v2627, 7
          %v2629 = vsub.s32 3, %v2628
          %v2630 = vrot.slane %v2580, %v2629
          %v2631 = vlaneseq
          %v2632 = vshrl.u32 %v2631, 7
          %v2633 = vsub.s32 4, %v2632
          %v2634 = vrot.slane %v2580, %v2633
          %v2635 = vlaneseq
          %v2636 = vshrl.u32 %v2635, 7
          %v2637 = vsub.s32 5, %v2636
          %v2638 = vrot.slane %v2580, %v2637
          %v2639 = vlaneseq
          %v2640 = vshrl.u32 %v2639, 7
          %v2641 = vsub.s32 6, %v2640
          %v2642 = vrot.slane %v2580, %v2641
          %v2643 = vlaneseq
          %v2644 = vshrl.u32 %v2643, 7
          %v2645 = vsub.s32 7, %v2644
          %v2646 = vrot.slane %v2580, %v2645
          %v2647 = vcombine.low %v2586, %v2590
          %v2648 = vcombine.low %v2594, %v2598
          %v2650 = vunpack.c.l.s4 1983009808
          %v2651 = vunpack.c.0.s8 %v2650
          %v2652 = vlaneseq
          %v2653 = vshrl.u32 %v2652, 7
          %v2654 = vsub.s32 %v2651, %v2653
          %v2655 = vrot.slane %v2647, %v2654
          %v2657 = vunpack.c.l.s4 1983009808
          %v2658 = vunpack.c.0.s8 %v2657
          %v2659 = vlaneseq
          %v2660 = vshrl.u32 %v2659, 7
          %v2661 = vsub.s32 %v2658, %v2660
          %v2662 = vrot.slane %v2648, %v2661
          %v2663 = vcombine.low %v2655, %v2662
          %v2664 = vcombine.low %v2602, %v2606
          %v2665 = vcombine.low %v2610, %v2614
          %v2667 = vunpack.c.l.s4 1983009808
          %v2668 = vunpack.c.0.s8 %v2667
          %v2669 = vlaneseq
          %v2670 = vshrl.u32 %v2669, 7
          %v2671 = vsub.s32 %v2668, %v2670
          %v2672 = vrot.slane %v2664, %v2671
          %v2674 = vunpack.c.l.s4 1983009808
          %v2675 = vunpack.c.0.s8 %v2674
          %v2676 = vlaneseq
          %v2677 = vshrl.u32 %v2676, 7
          %v2678 = vsub.s32 %v2675, %v2677
          %v2679 = vrot.slane %v2665, %v2678
          %v2680 = vcombine.low %v2672, %v2679
          %v2681 = vcombine.low %v2618, %v2622
          %v2682 = vcombine.low %v2626, %v2630
          %v2684 = vunpack.c.l.s4 1983009808
          %v2685 = vunpack.c.0.s8 %v2684
          %v2686 = vlaneseq
          %v2687 = vshrl.u32 %v2686, 7
          %v2688 = vsub.s32 %v2685, %v2687
          %v2689 = vrot.slane %v2681, %v2688
          %v2691 = vunpack.c.l.s4 1983009808
          %v2692 = vunpack.c.0.s8 %v2691
          %v2693 = vlaneseq
          %v2694 = vshrl.u32 %v2693, 7
          %v2695 = vsub.s32 %v2692, %v2694
          %v2696 = vrot.slane %v2682, %v2695
          %v2697 = vcombine.low %v2689, %v2696
          %v2698 = vcombine.low %v2634, %v2638
          %v2699 = vcombine.low %v2642, %v2646
          %v2701 = vunpack.c.l.s4 1983009808
          %v2702 = vunpack.c.0.s8 %v2701
          %v2703 = vlaneseq
          %v2704 = vshrl.u32 %v2703, 7
          %v2705 = vsub.s32 %v2702, %v2704
          %v2706 = vrot.slane %v2698, %v2705
          %v2708 = vunpack.c.l.s4 1983009808
          %v2709 = vunpack.c.0.s8 %v2708
          %v2710 = vlaneseq
          %v2711 = vshrl.u32 %v2710, 7
          %v2712 = vsub.s32 %v2709, %v2711
          %v2713 = vrot.slane %v2699, %v2712
          %v2714 = vcombine.low %v2706, %v2713
          %v2719 = vadd.f32 %v2575, %v2663
          %v2720 = vadd.f32 %v2576, %v2680
          %v2721 = vadd.f32 %v2577, %v2697
          %v2722 = vadd.f32 %v2578, %v2714
          %v2723 = vmax.f32 %v2719, 0.0
          %v2724 = vmax.f32 %v2720, 0.0
          %v2725 = vmax.f32 %v2721, 0.0
          %v2726 = vmax.f32 %v2722, 0.0
          %v2727 = vld [vmem:[%s3] sm:$0xff]
          %v2728 = vld [vmem:[%s3 + $0x8] sm:$0xff]
          %v2729 = vld [vmem:[%s3 + $0x10] sm:$0xff]
          %v2730 = vld [vmem:[%s3 + $0x18] sm:$0xff]
          %v2731 = vld [vmem:[%s3 + $0x20] sm:$0xff]
          %v2732 = vld [vmem:[%s3 + $0x28] sm:$0xff]
          %v2733 = vld [vmem:[%s3 + $0x30] sm:$0xff]
          %v2734 = vld [vmem:[%s3 + $0x38] sm:$0xff]
          %v2735 = vld [vmem:[%s3 + $0x40] sm:$0xff]
          %v2736 = vld [vmem:[%s3 + $0x48] sm:$0xff]
          %v2737 = vld [vmem:[%s3 + $0x50] sm:$0xff]
          %v2738 = vld [vmem:[%s3 + $0x58] sm:$0xff]
          %v2739 = vld [vmem:[%s3 + $0x60] sm:$0xff]
          %v2740 = vld [vmem:[%s3 + $0x68] sm:$0xff]
          %v2741 = vld [vmem:[%s3 + $0x70] sm:$0xff]
          %v2742 = vld [vmem:[%s3 + $0x78] sm:$0xff]
          %v2743 = vld [vmem:[%s3 + $0x80] sm:$0xff]
          %v2744 = vld [vmem:[%s3 + $0x88] sm:$0xff]
          %v2745 = vld [vmem:[%s3 + $0x90] sm:$0xff]
          %v2746 = vld [vmem:[%s3 + $0x98] sm:$0xff]
          %v2747 = vld [vmem:[%s3 + $0xa0] sm:$0xff]
          %v2748 = vld [vmem:[%s3 + $0xa8] sm:$0xff]
          %v2749 = vld [vmem:[%s3 + $0xb0] sm:$0xff]
          %v2750 = vld [vmem:[%s3 + $0xb8] sm:$0xff]
          %v2751 = vld [vmem:[%s3 + $0xc0] sm:$0xff]
          %v2752 = vld [vmem:[%s3 + $0xc8] sm:$0xff]
          %v2753 = vld [vmem:[%s3 + $0xd0] sm:$0xff]
          %v2754 = vld [vmem:[%s3 + $0xd8] sm:$0xff]
          %v2755 = vld [vmem:[%s3 + $0xe0] sm:$0xff]
          %v2756 = vld [vmem:[%s3 + $0xe8] sm:$0xff]
          %v2757 = vld [vmem:[%s3 + $0xf0] sm:$0xff]
          %v2758 = vld [vmem:[%s3 + $0xf8] sm:$0xff]
          %v2759 = vld [vmem:[%s3 + $0x100] sm:$0xff]
          %v2760 = vld [vmem:[%s3 + $0x108] sm:$0xff]
          %v2761 = vld [vmem:[%s3 + $0x110] sm:$0xff]
          %v2762 = vld [vmem:[%s3 + $0x118] sm:$0xff]
          %v2763 = vld [vmem:[%s3 + $0x120] sm:$0xff]
          %v2764 = vld [vmem:[%s3 + $0x128] sm:$0xff]
          %v2765 = vld [vmem:[%s3 + $0x130] sm:$0xff]
          %v2766 = vld [vmem:[%s3 + $0x138] sm:$0xff]
          %v2767 = vld [vmem:[%s3 + $0x140] sm:$0xff]
          %v2768 = vld [vmem:[%s3 + $0x148] sm:$0xff]
          %v2769 = vld [vmem:[%s3 + $0x150] sm:$0xff]
          %v2770 = vld [vmem:[%s3 + $0x158] sm:$0xff]
          %v2771 = vld [vmem:[%s3 + $0x160] sm:$0xff]
          %v2772 = vld [vmem:[%s3 + $0x168] sm:$0xff]
          %v2773 = vld [vmem:[%s3 + $0x170] sm:$0xff]
          %v2774 = vld [vmem:[%s3 + $0x178] sm:$0xff]
          %v2775 = vld [vmem:[%s3 + $0x180] sm:$0xff]
          %v2776 = vld [vmem:[%s3 + $0x188] sm:$0xff]
          %v2777 = vld [vmem:[%s3 + $0x190] sm:$0xff]
          %v2778 = vld [vmem:[%s3 + $0x198] sm:$0xff]
          %v2779 = vld [vmem:[%s3 + $0x1a0] sm:$0xff]
          %v2780 = vld [vmem:[%s3 + $0x1a8] sm:$0xff]
          %v2781 = vld [vmem:[%s3 + $0x1b0] sm:$0xff]
          %v2782 = vld [vmem:[%s3 + $0x1b8] sm:$0xff]
          %v2783 = vld [vmem:[%s3 + $0x1c0] sm:$0xff]
          %v2784 = vld [vmem:[%s3 + $0x1c8] sm:$0xff]
          %v2785 = vld [vmem:[%s3 + $0x1d0] sm:$0xff]
          %v2786 = vld [vmem:[%s3 + $0x1d8] sm:$0xff]
          %v2787 = vld [vmem:[%s3 + $0x1e0] sm:$0xff]
          %v2788 = vld [vmem:[%s3 + $0x1e8] sm:$0xff]
          %v2789 = vld [vmem:[%s3 + $0x1f0] sm:$0xff]
          %v2790 = vld [vmem:[%s3 + $0x1f8] sm:$0xff]
          %v2791 = vld [vmem:[%s3 + $0x200] sm:$0xff]
          %v2792 = vld [vmem:[%s3 + $0x208] sm:$0xff]
          %v2793 = vld [vmem:[%s3 + $0x210] sm:$0xff]
          %v2794 = vld [vmem:[%s3 + $0x218] sm:$0xff]
          %v2795 = vld [vmem:[%s3 + $0x220] sm:$0xff]
          %v2796 = vld [vmem:[%s3 + $0x228] sm:$0xff]
          %v2797 = vld [vmem:[%s3 + $0x230] sm:$0xff]
          %v2798 = vld [vmem:[%s3 + $0x238] sm:$0xff]
          %v2799 = vld [vmem:[%s3 + $0x240] sm:$0xff]
          %v2800 = vld [vmem:[%s3 + $0x248] sm:$0xff]
          %v2801 = vld [vmem:[%s3 + $0x250] sm:$0xff]
          %v2802 = vld [vmem:[%s3 + $0x258] sm:$0xff]
          %v2803 = vld [vmem:[%s3 + $0x260] sm:$0xff]
          %v2804 = vld [vmem:[%s3 + $0x268] sm:$0xff]
          %v2805 = vld [vmem:[%s3 + $0x270] sm:$0xff]
          %v2806 = vld [vmem:[%s3 + $0x278] sm:$0xff]
          %v2807 = vld [vmem:[%s3 + $0x280] sm:$0xff]
          %v2808 = vld [vmem:[%s3 + $0x288] sm:$0xff]
          %v2809 = vld [vmem:[%s3 + $0x290] sm:$0xff]
          %v2810 = vld [vmem:[%s3 + $0x298] sm:$0xff]
          %v2811 = vld [vmem:[%s3 + $0x2a0] sm:$0xff]
          %v2812 = vld [vmem:[%s3 + $0x2a8] sm:$0xff]
          %v2813 = vld [vmem:[%s3 + $0x2b0] sm:$0xff]
          %v2814 = vld [vmem:[%s3 + $0x2b8] sm:$0xff]
          %v2815 = vld [vmem:[%s3 + $0x2c0] sm:$0xff]
          %v2816 = vld [vmem:[%s3 + $0x2c8] sm:$0xff]
          %v2817 = vld [vmem:[%s3 + $0x2d0] sm:$0xff]
          %v2818 = vld [vmem:[%s3 + $0x2d8] sm:$0xff]
          %v2819 = vld [vmem:[%s3 + $0x2e0] sm:$0xff]
          %v2820 = vld [vmem:[%s3 + $0x2e8] sm:$0xff]
          %v2821 = vld [vmem:[%s3 + $0x2f0] sm:$0xff]
          %v2822 = vld [vmem:[%s3 + $0x2f8] sm:$0xff]
          %v2823 = vld [vmem:[%s3 + $0x300] sm:$0xff]
          %v2824 = vld [vmem:[%s3 + $0x308] sm:$0xff]
          %v2825 = vld [vmem:[%s3 + $0x310] sm:$0xff]
          %v2826 = vld [vmem:[%s3 + $0x318] sm:$0xff]
          %v2827 = vld [vmem:[%s3 + $0x320] sm:$0xff]
          %v2828 = vld [vmem:[%s3 + $0x328] sm:$0xff]
          %v2829 = vld [vmem:[%s3 + $0x330] sm:$0xff]
          %v2830 = vld [vmem:[%s3 + $0x338] sm:$0xff]
          %v2831 = vld [vmem:[%s3 + $0x340] sm:$0xff]
          %v2832 = vld [vmem:[%s3 + $0x348] sm:$0xff]
          %v2833 = vld [vmem:[%s3 + $0x350] sm:$0xff]
          %v2834 = vld [vmem:[%s3 + $0x358] sm:$0xff]
          %v2835 = vld [vmem:[%s3 + $0x360] sm:$0xff]
          %v2836 = vld [vmem:[%s3 + $0x368] sm:$0xff]
          %v2837 = vld [vmem:[%s3 + $0x370] sm:$0xff]
          %v2838 = vld [vmem:[%s3 + $0x378] sm:$0xff]
          %v2839 = vld [vmem:[%s3 + $0x380] sm:$0xff]
          %v2840 = vld [vmem:[%s3 + $0x388] sm:$0xff]
          %v2841 = vld [vmem:[%s3 + $0x390] sm:$0xff]
          %v2842 = vld [vmem:[%s3 + $0x398] sm:$0xff]
          %v2843 = vld [vmem:[%s3 + $0x3a0] sm:$0xff]
          %v2844 = vld [vmem:[%s3 + $0x3a8] sm:$0xff]
          %v2845 = vld [vmem:[%s3 + $0x3b0] sm:$0xff]
          %v2846 = vld [vmem:[%s3 + $0x3b8] sm:$0xff]
          %v2847 = vld [vmem:[%s3 + $0x3c0] sm:$0xff]
          %v2848 = vld [vmem:[%s3 + $0x3c8] sm:$0xff]
          %v2849 = vld [vmem:[%s3 + $0x3d0] sm:$0xff]
          %v2850 = vld [vmem:[%s3 + $0x3d8] sm:$0xff]
          %v2851 = vld [vmem:[%s3 + $0x3e0] sm:$0xff]
          %v2852 = vld [vmem:[%s3 + $0x3e8] sm:$0xff]
          %v2853 = vld [vmem:[%s3 + $0x3f0] sm:$0xff]
          %v2854 = vld [vmem:[%s3 + $0x3f8] sm:$0xff]
          %v2855 = vld [vmem:[%s3 + $0x400] sm:$0xff]
          %v2856 = vld [vmem:[%s3 + $0x408] sm:$0xff]
          %v2857 = vld [vmem:[%s3 + $0x410] sm:$0xff]
          %v2858 = vld [vmem:[%s3 + $0x418] sm:$0xff]
          %v2859 = vld [vmem:[%s3 + $0x420] sm:$0xff]
          %v2860 = vld [vmem:[%s3 + $0x428] sm:$0xff]
          %v2861 = vld [vmem:[%s3 + $0x430] sm:$0xff]
          %v2862 = vld [vmem:[%s3 + $0x438] sm:$0xff]
          %v2863 = vld [vmem:[%s3 + $0x440] sm:$0xff]
          %v2864 = vld [vmem:[%s3 + $0x448] sm:$0xff]
          %v2865 = vld [vmem:[%s3 + $0x450] sm:$0xff]
          %v2866 = vld [vmem:[%s3 + $0x458] sm:$0xff]
          %v2867 = vld [vmem:[%s3 + $0x460] sm:$0xff]
          %v2868 = vld [vmem:[%s3 + $0x468] sm:$0xff]
          %v2869 = vld [vmem:[%s3 + $0x470] sm:$0xff]
          %v2870 = vld [vmem:[%s3 + $0x478] sm:$0xff]
          %v2871 = vld [vmem:[%s3 + $0x480] sm:$0xff]
          %v2872 = vld [vmem:[%s3 + $0x488] sm:$0xff]
          %v2873 = vld [vmem:[%s3 + $0x490] sm:$0xff]
          %v2874 = vld [vmem:[%s3 + $0x498] sm:$0xff]
          %v2875 = vld [vmem:[%s3 + $0x4a0] sm:$0xff]
          %v2876 = vld [vmem:[%s3 + $0x4a8] sm:$0xff]
          %v2877 = vld [vmem:[%s3 + $0x4b0] sm:$0xff]
          %v2878 = vld [vmem:[%s3 + $0x4b8] sm:$0xff]
          %v2879 = vld [vmem:[%s3 + $0x4c0] sm:$0xff]
          %v2880 = vld [vmem:[%s3 + $0x4c8] sm:$0xff]
          %v2881 = vld [vmem:[%s3 + $0x4d0] sm:$0xff]
          %v2882 = vld [vmem:[%s3 + $0x4d8] sm:$0xff]
          %v2883 = vld [vmem:[%s3 + $0x4e0] sm:$0xff]
          %v2884 = vld [vmem:[%s3 + $0x4e8] sm:$0xff]
          %v2885 = vld [vmem:[%s3 + $0x4f0] sm:$0xff]
          %v2886 = vld [vmem:[%s3 + $0x4f8] sm:$0xff]
          %v2887 = vld [vmem:[%s3 + $0x500] sm:$0xff]
          %v2888 = vld [vmem:[%s3 + $0x508] sm:$0xff]
          %v2889 = vld [vmem:[%s3 + $0x510] sm:$0xff]
          %v2890 = vld [vmem:[%s3 + $0x518] sm:$0xff]
          %v2891 = vld [vmem:[%s3 + $0x520] sm:$0xff]
          %v2892 = vld [vmem:[%s3 + $0x528] sm:$0xff]
          %v2893 = vld [vmem:[%s3 + $0x530] sm:$0xff]
          %v2894 = vld [vmem:[%s3 + $0x538] sm:$0xff]
          %v2895 = vld [vmem:[%s3 + $0x540] sm:$0xff]
          %v2896 = vld [vmem:[%s3 + $0x548] sm:$0xff]
          %v2897 = vld [vmem:[%s3 + $0x550] sm:$0xff]
          %v2898 = vld [vmem:[%s3 + $0x558] sm:$0xff]
          %v2899 = vld [vmem:[%s3 + $0x560] sm:$0xff]
          %v2900 = vld [vmem:[%s3 + $0x568] sm:$0xff]
          %v2901 = vld [vmem:[%s3 + $0x570] sm:$0xff]
          %v2902 = vld [vmem:[%s3 + $0x578] sm:$0xff]
          %v2903 = vld [vmem:[%s3 + $0x580] sm:$0xff]
          %v2904 = vld [vmem:[%s3 + $0x588] sm:$0xff]
          %v2905 = vld [vmem:[%s3 + $0x590] sm:$0xff]
          %v2906 = vld [vmem:[%s3 + $0x598] sm:$0xff]
          %v2907 = vld [vmem:[%s3 + $0x5a0] sm:$0xff]
          %v2908 = vld [vmem:[%s3 + $0x5a8] sm:$0xff]
          %v2909 = vld [vmem:[%s3 + $0x5b0] sm:$0xff]
          %v2910 = vld [vmem:[%s3 + $0x5b8] sm:$0xff]
          %v2911 = vld [vmem:[%s3 + $0x5c0] sm:$0xff]
          %v2912 = vld [vmem:[%s3 + $0x5c8] sm:$0xff]
          %v2913 = vld [vmem:[%s3 + $0x5d0] sm:$0xff]
          %v2914 = vld [vmem:[%s3 + $0x5d8] sm:$0xff]
          %v2915 = vld [vmem:[%s3 + $0x5e0] sm:$0xff]
          %v2916 = vld [vmem:[%s3 + $0x5e8] sm:$0xff]
          %v2917 = vld [vmem:[%s3 + $0x5f0] sm:$0xff]
          %v2918 = vld [vmem:[%s3 + $0x5f8] sm:$0xff]
          %v2919 = vld [vmem:[%s3 + $0x600] sm:$0xff]
          %v2920 = vld [vmem:[%s3 + $0x608] sm:$0xff]
          %v2921 = vld [vmem:[%s3 + $0x610] sm:$0xff]
          %v2922 = vld [vmem:[%s3 + $0x618] sm:$0xff]
          %v2923 = vld [vmem:[%s3 + $0x620] sm:$0xff]
          %v2924 = vld [vmem:[%s3 + $0x628] sm:$0xff]
          %v2925 = vld [vmem:[%s3 + $0x630] sm:$0xff]
          %v2926 = vld [vmem:[%s3 + $0x638] sm:$0xff]
          %v2927 = vld [vmem:[%s3 + $0x640] sm:$0xff]
          %v2928 = vld [vmem:[%s3 + $0x648] sm:$0xff]
          %v2929 = vld [vmem:[%s3 + $0x650] sm:$0xff]
          %v2930 = vld [vmem:[%s3 + $0x658] sm:$0xff]
          %v2931 = vld [vmem:[%s3 + $0x660] sm:$0xff]
          %v2932 = vld [vmem:[%s3 + $0x668] sm:$0xff]
          %v2933 = vld [vmem:[%s3 + $0x670] sm:$0xff]
          %v2934 = vld [vmem:[%s3 + $0x678] sm:$0xff]
          %v2935 = vld [vmem:[%s3 + $0x680] sm:$0xff]
          %v2936 = vld [vmem:[%s3 + $0x688] sm:$0xff]
          %v2937 = vld [vmem:[%s3 + $0x690] sm:$0xff]
          %v2938 = vld [vmem:[%s3 + $0x698] sm:$0xff]
          %v2939 = vld [vmem:[%s3 + $0x6a0] sm:$0xff]
          %v2940 = vld [vmem:[%s3 + $0x6a8] sm:$0xff]
          %v2941 = vld [vmem:[%s3 + $0x6b0] sm:$0xff]
          %v2942 = vld [vmem:[%s3 + $0x6b8] sm:$0xff]
          %v2943 = vld [vmem:[%s3 + $0x6c0] sm:$0xff]
          %v2944 = vld [vmem:[%s3 + $0x6c8] sm:$0xff]
          %v2945 = vld [vmem:[%s3 + $0x6d0] sm:$0xff]
          %v2946 = vld [vmem:[%s3 + $0x6d8] sm:$0xff]
          %v2947 = vld [vmem:[%s3 + $0x6e0] sm:$0xff]
          %v2948 = vld [vmem:[%s3 + $0x6e8] sm:$0xff]
          %v2949 = vld [vmem:[%s3 + $0x6f0] sm:$0xff]
          %v2950 = vld [vmem:[%s3 + $0x6f8] sm:$0xff]
          %v2951 = vld [vmem:[%s3 + $0x700] sm:$0xff]
          %v2952 = vld [vmem:[%s3 + $0x708] sm:$0xff]
          %v2953 = vld [vmem:[%s3 + $0x710] sm:$0xff]
          %v2954 = vld [vmem:[%s3 + $0x718] sm:$0xff]
          %v2955 = vld [vmem:[%s3 + $0x720] sm:$0xff]
          %v2956 = vld [vmem:[%s3 + $0x728] sm:$0xff]
          %v2957 = vld [vmem:[%s3 + $0x730] sm:$0xff]
          %v2958 = vld [vmem:[%s3 + $0x738] sm:$0xff]
          %v2959 = vld [vmem:[%s3 + $0x740] sm:$0xff]
          %v2960 = vld [vmem:[%s3 + $0x748] sm:$0xff]
          %v2961 = vld [vmem:[%s3 + $0x750] sm:$0xff]
          %v2962 = vld [vmem:[%s3 + $0x758] sm:$0xff]
          %v2963 = vld [vmem:[%s3 + $0x760] sm:$0xff]
          %v2964 = vld [vmem:[%s3 + $0x768] sm:$0xff]
          %v2965 = vld [vmem:[%s3 + $0x770] sm:$0xff]
          %v2966 = vld [vmem:[%s3 + $0x778] sm:$0xff]
          %v2967 = vld [vmem:[%s3 + $0x780] sm:$0xff]
          %v2968 = vld [vmem:[%s3 + $0x788] sm:$0xff]
          %v2969 = vld [vmem:[%s3 + $0x790] sm:$0xff]
          %v2970 = vld [vmem:[%s3 + $0x798] sm:$0xff]
          %v2971 = vld [vmem:[%s3 + $0x7a0] sm:$0xff]
          %v2972 = vld [vmem:[%s3 + $0x7a8] sm:$0xff]
          %v2973 = vld [vmem:[%s3 + $0x7b0] sm:$0xff]
          %v2974 = vld [vmem:[%s3 + $0x7b8] sm:$0xff]
          %v2975 = vld [vmem:[%s3 + $0x7c0] sm:$0xff]
          %v2976 = vld [vmem:[%s3 + $0x7c8] sm:$0xff]
          %v2977 = vld [vmem:[%s3 + $0x7d0] sm:$0xff]
          %v2978 = vld [vmem:[%s3 + $0x7d8] sm:$0xff]
          %v2979 = vld [vmem:[%s3 + $0x7e0] sm:$0xff]
          %v2980 = vld [vmem:[%s3 + $0x7e8] sm:$0xff]
          %v2981 = vld [vmem:[%s3 + $0x7f0] sm:$0xff]
          %v2982 = vld [vmem:[%s3 + $0x7f8] sm:$0xff]
          %v2983 = vld [vmem:[#allocation8] sm:$0x1]
          %v2985 = vlaneseq
          %v2986 = vshrl.u32 %v2985, 7
          %v2987 = vsub.s32 0, %v2986
          %v2988 = vrot.slane %v2983, %v2987
          %v2994 = vcombine.high %v2723, %v2723
          %v2996 = vunpack.c.l.s4 1983009808
          %v2997 = vunpack.c.0.s8 %v2996
          %v2998 = vlaneseq
          %v2999 = vshrl.u32 %v2998, 7
          %v3000 = vsub.s32 %v2997, %v2999
          %v3001 = vrot.slane %v2723, %v3000
          %v3003 = vunpack.c.l.s4 1983009808
          %v3004 = vunpack.c.0.s8 %v3003
          %v3005 = vlaneseq
          %v3006 = vshrl.u32 %v3005, 7
          %v3007 = vsub.s32 %v3004, %v3006
          %v3008 = vrot.slane %v2994, %v3007
          %v3009 = vcombine.high %v3001, %v3001
          %v3010 = vcombine.high %v3008, %v3008
          %v3011 = vcombine.high %v2724, %v2724
          %v3013 = vunpack.c.l.s4 1983009808
          %v3014 = vunpack.c.0.s8 %v3013
          %v3015 = vlaneseq
          %v3016 = vshrl.u32 %v3015, 7
          %v3017 = vsub.s32 %v3014, %v3016
          %v3018 = vrot.slane %v2724, %v3017
          %v3020 = vunpack.c.l.s4 1983009808
          %v3021 = vunpack.c.0.s8 %v3020
          %v3022 = vlaneseq
          %v3023 = vshrl.u32 %v3022, 7
          %v3024 = vsub.s32 %v3021, %v3023
          %v3025 = vrot.slane %v3011, %v3024
          %v3026 = vcombine.high %v3018, %v3018
          %v3027 = vcombine.high %v3025, %v3025
          %v3028 = vcombine.high %v2725, %v2725
          %v3030 = vunpack.c.l.s4 1983009808
          %v3031 = vunpack.c.0.s8 %v3030
          %v3032 = vlaneseq
          %v3033 = vshrl.u32 %v3032, 7
          %v3034 = vsub.s32 %v3031, %v3033
          %v3035 = vrot.slane %v2725, %v3034
          %v3037 = vunpack.c.l.s4 1983009808
          %v3038 = vunpack.c.0.s8 %v3037
          %v3039 = vlaneseq
          %v3040 = vshrl.u32 %v3039, 7
          %v3041 = vsub.s32 %v3038, %v3040
          %v3042 = vrot.slane %v3028, %v3041
          %v3043 = vcombine.high %v3035, %v3035
          %v3044 = vcombine.high %v3042, %v3042
          %v3045 = vcombine.high %v2726, %v2726
          %v3047 = vunpack.c.l.s4 1983009808
          %v3048 = vunpack.c.0.s8 %v3047
          %v3049 = vlaneseq
          %v3050 = vshrl.u32 %v3049, 7
          %v3051 = vsub.s32 %v3048, %v3050
          %v3052 = vrot.slane %v2726, %v3051
          %v3054 = vunpack.c.l.s4 1983009808
          %v3055 = vunpack.c.0.s8 %v3054
          %v3056 = vlaneseq
          %v3057 = vshrl.u32 %v3056, 7
          %v3058 = vsub.s32 %v3055, %v3057
          %v3059 = vrot.slane %v3045, %v3058
          %v3060 = vcombine.high %v3052, %v3052
          %v3061 = vcombine.high %v3059, %v3059
          %3078 = vmatprep.subr.mxu0 0.0
          %3079 = vmatpush1.msra.mxu0 %v2742
          %3080 = vmatprep.subr.mxu0 0.0
          %3081 = vmatpush1.msra.mxu0 %v2741
          %3082 = vmatprep.subr.mxu0 0.0
          %3083 = vmatpush1.msra.mxu0 %v2740
          %3084 = vmatprep.subr.mxu0 0.0
          %3085 = vmatpush1.msra.mxu0 %v2739
          %3086 = vmatprep.subr.mxu0 0.0
          %3087 = vmatpush1.msra.mxu0 %v2738
          %3088 = vmatprep.subr.mxu0 0.0
          %3089 = vmatpush1.msra.mxu0 %v2737
          %3090 = vmatprep.subr.mxu0 0.0
          %3091 = vmatpush1.msra.mxu0 %v2736
          %3092 = vmatprep.subr.mxu0 0.0
          %3093 = vmatpush1.msra.mxu0 %v2735
          %3094 = vmatprep.subr.mxu0 0.0
          %3095 = vmatpush1.msra.mxu0 %v2734
          %3096 = vmatprep.subr.mxu0 0.0
          %3097 = vmatpush1.msra.mxu0 %v2733
          %3098 = vmatprep.subr.mxu0 0.0
          %3099 = vmatpush1.msra.mxu0 %v2732
          %3100 = vmatprep.subr.mxu0 0.0
          %3101 = vmatpush1.msra.mxu0 %v2731
          %3102 = vmatprep.subr.mxu0 0.0
          %3103 = vmatpush1.msra.mxu0 %v2730
          %3104 = vmatprep.subr.mxu0 0.0
          %3105 = vmatpush1.msra.mxu0 %v2729
          %3106 = vmatprep.subr.mxu0 0.0
          %3107 = vmatpush1.msra.mxu0 %v2728
          %3108 = vmatprep.subr.mxu0 0.0
          %3109 = vmatpush1.msra.mxu0 %v2727
          %3110 = vmatprep.subr.mxu0 0.0
          %3111 = vmatpush2.msra.mxu0 %v2758
          %3112 = vmatprep.subr.mxu0 0.0
          %3113 = vmatpush2.msra.mxu0 %v2757
          %3114 = vmatprep.subr.mxu0 0.0
          %3115 = vmatpush2.msra.mxu0 %v2756
          %3116 = vmatprep.subr.mxu0 0.0
          %3117 = vmatpush2.msra.mxu0 %v2755
          %3118 = vmatprep.subr.mxu0 0.0
          %3119 = vmatpush2.msra.mxu0 %v2754
          %3120 = vmatprep.subr.mxu0 0.0
          %3121 = vmatpush2.msra.mxu0 %v2753
          %3122 = vmatprep.subr.mxu0 0.0
          %3123 = vmatpush2.msra.mxu0 %v2752
          %3124 = vmatprep.subr.mxu0 0.0
          %3125 = vmatpush2.msra.mxu0 %v2751
          %3126 = vmatprep.subr.mxu0 0.0
          %3127 = vmatpush2.msra.mxu0 %v2750
          %3128 = vmatprep.subr.mxu0 0.0
          %3129 = vmatpush2.msra.mxu0 %v2749
          %3130 = vmatprep.subr.mxu0 0.0
          %3131 = vmatpush2.msra.mxu0 %v2748
          %3132 = vmatprep.subr.mxu0 0.0
          %3133 = vmatpush2.msra.mxu0 %v2747
          %3134 = vmatprep.subr.mxu0 0.0
          %3135 = vmatpush2.msra.mxu0 %v2746
          %3136 = vmatprep.subr.mxu0 0.0
          %3137 = vmatpush2.msra.mxu0 %v2745
          %3138 = vmatprep.subr.mxu0 0.0
          %3139 = vmatpush2.msra.mxu0 %v2744
          %3140 = vmatprep.subr.mxu0 0.0
          %3141 = vmatpush2.msra.mxu0 %v2743
          %3142 = vmatprep.mubr.f32.mxu0 %v3009
          %3143 = vmatmul.mubr.f32.gmra.mxu0 %v3001
          %v3144 = vpop.f32.mrf.mxu0
          %v3145 = vadd.f32 %v2988, %v3144
          %v3146 = vpop.f32.mrf.mxu0
          %3147 = vdwg.mxu0
          %3148 = vmatprep.subr.mxu0 0.0
          %3149 = vmatpush1.msra.mxu0 %v2774
          %3150 = vmatprep.subr.mxu0 0.0
          %3151 = vmatpush1.msra.mxu0 %v2773
          %3152 = vmatprep.subr.mxu0 0.0
          %3153 = vmatpush1.msra.mxu0 %v2772
          %3154 = vmatprep.subr.mxu0 0.0
          %3155 = vmatpush1.msra.mxu0 %v2771
          %3156 = vmatprep.subr.mxu0 0.0
          %3157 = vmatpush1.msra.mxu0 %v2770
          %3158 = vmatprep.subr.mxu0 0.0
          %3159 = vmatpush1.msra.mxu0 %v2769
          %3160 = vmatprep.subr.mxu0 0.0
          %3161 = vmatpush1.msra.mxu0 %v2768
          %3162 = vmatprep.subr.mxu0 0.0
          %3163 = vmatpush1.msra.mxu0 %v2767
          %3164 = vmatprep.subr.mxu0 0.0
          %3165 = vmatpush1.msra.mxu0 %v2766
          %3166 = vmatprep.subr.mxu0 0.0
          %3167 = vmatpush1.msra.mxu0 %v2765
          %3168 = vmatprep.subr.mxu0 0.0
          %3169 = vmatpush1.msra.mxu0 %v2764
          %3170 = vmatprep.subr.mxu0 0.0
          %3171 = vmatpush1.msra.mxu0 %v2763
          %3172 = vmatprep.subr.mxu0 0.0
          %3173 = vmatpush1.msra.mxu0 %v2762
          %3174 = vmatprep.subr.mxu0 0.0
          %3175 = vmatpush1.msra.mxu0 %v2761
          %3176 = vmatprep.subr.mxu0 0.0
          %3177 = vmatpush1.msra.mxu0 %v2760
          %3178 = vmatprep.subr.mxu0 0.0
          %3179 = vmatpush1.msra.mxu0 %v2759
          %3180 = vmatprep.subr.mxu0 0.0
          %3181 = vmatpush2.msra.mxu0 %v2790
          %3182 = vmatprep.subr.mxu0 0.0
          %3183 = vmatpush2.msra.mxu0 %v2789
          %3184 = vmatprep.subr.mxu0 0.0
          %3185 = vmatpush2.msra.mxu0 %v2788
          %3186 = vmatprep.subr.mxu0 0.0
          %3187 = vmatpush2.msra.mxu0 %v2787
          %3188 = vmatprep.subr.mxu0 0.0
          %3189 = vmatpush2.msra.mxu0 %v2786
          %3190 = vmatprep.subr.mxu0 0.0
          %3191 = vmatpush2.msra.mxu0 %v2785
          %3192 = vmatprep.subr.mxu0 0.0
          %3193 = vmatpush2.msra.mxu0 %v2784
          %3194 = vmatprep.subr.mxu0 0.0
          %3195 = vmatpush2.msra.mxu0 %v2783
          %3196 = vmatprep.subr.mxu0 0.0
          %3197 = vmatpush2.msra.mxu0 %v2782
          %3198 = vmatprep.subr.mxu0 0.0
          %3199 = vmatpush2.msra.mxu0 %v2781
          %3200 = vmatprep.subr.mxu0 0.0
          %3201 = vmatpush2.msra.mxu0 %v2780
          %3202 = vmatprep.subr.mxu0 0.0
          %3203 = vmatpush2.msra.mxu0 %v2779
          %3204 = vmatprep.subr.mxu0 0.0
          %3205 = vmatpush2.msra.mxu0 %v2778
          %3206 = vmatprep.subr.mxu0 0.0
          %3207 = vmatpush2.msra.mxu0 %v2777
          %3208 = vmatprep.subr.mxu0 0.0
          %3209 = vmatpush2.msra.mxu0 %v2776
          %3210 = vmatprep.subr.mxu0 0.0
          %3211 = vmatpush2.msra.mxu0 %v2775
          %3212 = vmatprep.mubr.f32.mxu0 %v3010
          %3213 = vmatmul.mubr.f32.gmra.mxu0 %v3008
          %v3214 = vpop.f32.mrf.mxu0
          %v3215 = vadd.f32 %v3145, %v3214
          %v3216 = vpop.f32.mrf.mxu0
          %3217 = vdwg.mxu0
          %3218 = vmatprep.subr.mxu0 0.0
          %3219 = vmatpush1.msra.mxu0 %v2806
          %3220 = vmatprep.subr.mxu0 0.0
          %3221 = vmatpush1.msra.mxu0 %v2805
          %3222 = vmatprep.subr.mxu0 0.0
          %3223 = vmatpush1.msra.mxu0 %v2804
          %3224 = vmatprep.subr.mxu0 0.0
          %3225 = vmatpush1.msra.mxu0 %v2803
          %3226 = vmatprep.subr.mxu0 0.0
          %3227 = vmatpush1.msra.mxu0 %v2802
          %3228 = vmatprep.subr.mxu0 0.0
          %3229 = vmatpush1.msra.mxu0 %v2801
          %3230 = vmatprep.subr.mxu0 0.0
          %3231 = vmatpush1.msra.mxu0 %v2800
          %3232 = vmatprep.subr.mxu0 0.0
          %3233 = vmatpush1.msra.mxu0 %v2799
          %3234 = vmatprep.subr.mxu0 0.0
          %3235 = vmatpush1.msra.mxu0 %v2798
          %3236 = vmatprep.subr.mxu0 0.0
          %3237 = vmatpush1.msra.mxu0 %v2797
          %3238 = vmatprep.subr.mxu0 0.0
          %3239 = vmatpush1.msra.mxu0 %v2796
          %3240 = vmatprep.subr.mxu0 0.0
          %3241 = vmatpush1.msra.mxu0 %v2795
          %3242 = vmatprep.subr.mxu0 0.0
          %3243 = vmatpush1.msra.mxu0 %v2794
          %3244 = vmatprep.subr.mxu0 0.0
          %3245 = vmatpush1.msra.mxu0 %v2793
          %3246 = vmatprep.subr.mxu0 0.0
          %3247 = vmatpush1.msra.mxu0 %v2792
          %3248 = vmatprep.subr.mxu0 0.0
          %3249 = vmatpush1.msra.mxu0 %v2791
          %3250 = vmatprep.subr.mxu0 0.0
          %3251 = vmatpush2.msra.mxu0 %v2822
          %3252 = vmatprep.subr.mxu0 0.0
          %3253 = vmatpush2.msra.mxu0 %v2821
          %3254 = vmatprep.subr.mxu0 0.0
          %3255 = vmatpush2.msra.mxu0 %v2820
          %3256 = vmatprep.subr.mxu0 0.0
          %3257 = vmatpush2.msra.mxu0 %v2819
          %3258 = vmatprep.subr.mxu0 0.0
          %3259 = vmatpush2.msra.mxu0 %v2818
          %3260 = vmatprep.subr.mxu0 0.0
          %3261 = vmatpush2.msra.mxu0 %v2817
          %3262 = vmatprep.subr.mxu0 0.0
          %3263 = vmatpush2.msra.mxu0 %v2816
          %3264 = vmatprep.subr.mxu0 0.0
          %3265 = vmatpush2.msra.mxu0 %v2815
          %3266 = vmatprep.subr.mxu0 0.0
          %3267 = vmatpush2.msra.mxu0 %v2814
          %3268 = vmatprep.subr.mxu0 0.0
          %3269 = vmatpush2.msra.mxu0 %v2813
          %3270 = vmatprep.subr.mxu0 0.0
          %3271 = vmatpush2.msra.mxu0 %v2812
          %3272 = vmatprep.subr.mxu0 0.0
          %3273 = vmatpush2.msra.mxu0 %v2811
          %3274 = vmatprep.subr.mxu0 0.0
          %3275 = vmatpush2.msra.mxu0 %v2810
          %3276 = vmatprep.subr.mxu0 0.0
          %3277 = vmatpush2.msra.mxu0 %v2809
          %3278 = vmatprep.subr.mxu0 0.0
          %3279 = vmatpush2.msra.mxu0 %v2808
          %3280 = vmatprep.subr.mxu0 0.0
          %3281 = vmatpush2.msra.mxu0 %v2807
          %3282 = vmatprep.mubr.f32.mxu0 %v3026
          %3283 = vmatmul.mubr.f32.gmra.mxu0 %v3018
          %v3284 = vpop.f32.mrf.mxu0
          %v3285 = vadd.f32 %v3215, %v3284
          %v3286 = vpop.f32.mrf.mxu0
          %3287 = vdwg.mxu0
          %3288 = vmatprep.subr.mxu0 0.0
          %3289 = vmatpush1.msra.mxu0 %v2838
          %3290 = vmatprep.subr.mxu0 0.0
          %3291 = vmatpush1.msra.mxu0 %v2837
          %3292 = vmatprep.subr.mxu0 0.0
          %3293 = vmatpush1.msra.mxu0 %v2836
          %3294 = vmatprep.subr.mxu0 0.0
          %3295 = vmatpush1.msra.mxu0 %v2835
          %3296 = vmatprep.subr.mxu0 0.0
          %3297 = vmatpush1.msra.mxu0 %v2834
          %3298 = vmatprep.subr.mxu0 0.0
          %3299 = vmatpush1.msra.mxu0 %v2833
          %3300 = vmatprep.subr.mxu0 0.0
          %3301 = vmatpush1.msra.mxu0 %v2832
          %3302 = vmatprep.subr.mxu0 0.0
          %3303 = vmatpush1.msra.mxu0 %v2831
          %3304 = vmatprep.subr.mxu0 0.0
          %3305 = vmatpush1.msra.mxu0 %v2830
          %3306 = vmatprep.subr.mxu0 0.0
          %3307 = vmatpush1.msra.mxu0 %v2829
          %3308 = vmatprep.subr.mxu0 0.0
          %3309 = vmatpush1.msra.mxu0 %v2828
          %3310 = vmatprep.subr.mxu0 0.0
          %3311 = vmatpush1.msra.mxu0 %v2827
          %3312 = vmatprep.subr.mxu0 0.0
          %3313 = vmatpush1.msra.mxu0 %v2826
          %3314 = vmatprep.subr.mxu0 0.0
          %3315 = vmatpush1.msra.mxu0 %v2825
          %3316 = vmatprep.subr.mxu0 0.0
          %3317 = vmatpush1.msra.mxu0 %v2824
          %3318 = vmatprep.subr.mxu0 0.0
          %3319 = vmatpush1.msra.mxu0 %v2823
          %3320 = vmatprep.subr.mxu0 0.0
          %3321 = vmatpush2.msra.mxu0 %v2854
          %3322 = vmatprep.subr.mxu0 0.0
          %3323 = vmatpush2.msra.mxu0 %v2853
          %3324 = vmatprep.subr.mxu0 0.0
          %3325 = vmatpush2.msra.mxu0 %v2852
          %3326 = vmatprep.subr.mxu0 0.0
          %3327 = vmatpush2.msra.mxu0 %v2851
          %3328 = vmatprep.subr.mxu0 0.0
          %3329 = vmatpush2.msra.mxu0 %v2850
          %3330 = vmatprep.subr.mxu0 0.0
          %3331 = vmatpush2.msra.mxu0 %v2849
          %3332 = vmatprep.subr.mxu0 0.0
          %3333 = vmatpush2.msra.mxu0 %v2848
          %3334 = vmatprep.subr.mxu0 0.0
          %3335 = vmatpush2.msra.mxu0 %v2847
          %3336 = vmatprep.subr.mxu0 0.0
          %3337 = vmatpush2.msra.mxu0 %v2846
          %3338 = vmatprep.subr.mxu0 0.0
          %3339 = vmatpush2.msra.mxu0 %v2845
          %3340 = vmatprep.subr.mxu0 0.0
          %3341 = vmatpush2.msra.mxu0 %v2844
          %3342 = vmatprep.subr.mxu0 0.0
          %3343 = vmatpush2.msra.mxu0 %v2843
          %3344 = vmatprep.subr.mxu0 0.0
          %3345 = vmatpush2.msra.mxu0 %v2842
          %3346 = vmatprep.subr.mxu0 0.0
          %3347 = vmatpush2.msra.mxu0 %v2841
          %3348 = vmatprep.subr.mxu0 0.0
          %3349 = vmatpush2.msra.mxu0 %v2840
          %3350 = vmatprep.subr.mxu0 0.0
          %3351 = vmatpush2.msra.mxu0 %v2839
          %3352 = vmatprep.mubr.f32.mxu0 %v3027
          %3353 = vmatmul.mubr.f32.gmra.mxu0 %v3025
          %v3354 = vpop.f32.mrf.mxu0
          %v3355 = vadd.f32 %v3285, %v3354
          %v3356 = vpop.f32.mrf.mxu0
          %3357 = vdwg.mxu0
          %3358 = vmatprep.subr.mxu0 0.0
          %3359 = vmatpush1.msra.mxu0 %v2870
          %3360 = vmatprep.subr.mxu0 0.0
          %3361 = vmatpush1.msra.mxu0 %v2869
          %3362 = vmatprep.subr.mxu0 0.0
          %3363 = vmatpush1.msra.mxu0 %v2868
          %3364 = vmatprep.subr.mxu0 0.0
          %3365 = vmatpush1.msra.mxu0 %v2867
          %3366 = vmatprep.subr.mxu0 0.0
          %3367 = vmatpush1.msra.mxu0 %v2866
          %3368 = vmatprep.subr.mxu0 0.0
          %3369 = vmatpush1.msra.mxu0 %v2865
          %3370 = vmatprep.subr.mxu0 0.0
          %3371 = vmatpush1.msra.mxu0 %v2864
          %3372 = vmatprep.subr.mxu0 0.0
          %3373 = vmatpush1.msra.mxu0 %v2863
          %3374 = vmatprep.subr.mxu0 0.0
          %3375 = vmatpush1.msra.mxu0 %v2862
          %3376 = vmatprep.subr.mxu0 0.0
          %3377 = vmatpush1.msra.mxu0 %v2861
          %3378 = vmatprep.subr.mxu0 0.0
          %3379 = vmatpush1.msra.mxu0 %v2860
          %3380 = vmatprep.subr.mxu0 0.0
          %3381 = vmatpush1.msra.mxu0 %v2859
          %3382 = vmatprep.subr.mxu0 0.0
          %3383 = vmatpush1.msra.mxu0 %v2858
          %3384 = vmatprep.subr.mxu0 0.0
          %3385 = vmatpush1.msra.mxu0 %v2857
          %3386 = vmatprep.subr.mxu0 0.0
          %3387 = vmatpush1.msra.mxu0 %v2856
          %3388 = vmatprep.subr.mxu0 0.0
          %3389 = vmatpush1.msra.mxu0 %v2855
          %3390 = vmatprep.subr.mxu0 0.0
          %3391 = vmatpush2.msra.mxu0 %v2886
          %3392 = vmatprep.subr.mxu0 0.0
          %3393 = vmatpush2.msra.mxu0 %v2885
          %3394 = vmatprep.subr.mxu0 0.0
          %3395 = vmatpush2.msra.mxu0 %v2884
          %3396 = vmatprep.subr.mxu0 0.0
          %3397 = vmatpush2.msra.mxu0 %v2883
          %3398 = vmatprep.subr.mxu0 0.0
          %3399 = vmatpush2.msra.mxu0 %v2882
          %3400 = vmatprep.subr.mxu0 0.0
          %3401 = vmatpush2.msra.mxu0 %v2881
          %3402 = vmatprep.subr.mxu0 0.0
          %3403 = vmatpush2.msra.mxu0 %v2880
          %3404 = vmatprep.subr.mxu0 0.0
          %3405 = vmatpush2.msra.mxu0 %v2879
          %3406 = vmatprep.subr.mxu0 0.0
          %3407 = vmatpush2.msra.mxu0 %v2878
          %3408 = vmatprep.subr.mxu0 0.0
          %3409 = vmatpush2.msra.mxu0 %v2877
          %3410 = vmatprep.subr.mxu0 0.0
          %3411 = vmatpush2.msra.mxu0 %v2876
          %3412 = vmatprep.subr.mxu0 0.0
          %3413 = vmatpush2.msra.mxu0 %v2875
          %3414 = vmatprep.subr.mxu0 0.0
          %3415 = vmatpush2.msra.mxu0 %v2874
          %3416 = vmatprep.subr.mxu0 0.0
          %3417 = vmatpush2.msra.mxu0 %v2873
          %3418 = vmatprep.subr.mxu0 0.0
          %3419 = vmatpush2.msra.mxu0 %v2872
          %3420 = vmatprep.subr.mxu0 0.0
          %3421 = vmatpush2.msra.mxu0 %v2871
          %3422 = vmatprep.mubr.f32.mxu0 %v3043
          %3423 = vmatmul.mubr.f32.gmra.mxu0 %v3035
          %v3424 = vpop.f32.mrf.mxu0
          %v3425 = vadd.f32 %v3355, %v3424
          %v3426 = vpop.f32.mrf.mxu0
          %3427 = vdwg.mxu0
          %3428 = vmatprep.subr.mxu0 0.0
          %3429 = vmatpush1.msra.mxu0 %v2902
          %3430 = vmatprep.subr.mxu0 0.0
          %3431 = vmatpush1.msra.mxu0 %v2901
          %3432 = vmatprep.subr.mxu0 0.0
          %3433 = vmatpush1.msra.mxu0 %v2900
          %3434 = vmatprep.subr.mxu0 0.0
          %3435 = vmatpush1.msra.mxu0 %v2899
          %3436 = vmatprep.subr.mxu0 0.0
          %3437 = vmatpush1.msra.mxu0 %v2898
          %3438 = vmatprep.subr.mxu0 0.0
          %3439 = vmatpush1.msra.mxu0 %v2897
          %3440 = vmatprep.subr.mxu0 0.0
          %3441 = vmatpush1.msra.mxu0 %v2896
          %3442 = vmatprep.subr.mxu0 0.0
          %3443 = vmatpush1.msra.mxu0 %v2895
          %3444 = vmatprep.subr.mxu0 0.0
          %3445 = vmatpush1.msra.mxu0 %v2894
          %3446 = vmatprep.subr.mxu0 0.0
          %3447 = vmatpush1.msra.mxu0 %v2893
          %3448 = vmatprep.subr.mxu0 0.0
          %3449 = vmatpush1.msra.mxu0 %v2892
          %3450 = vmatprep.subr.mxu0 0.0
          %3451 = vmatpush1.msra.mxu0 %v2891
          %3452 = vmatprep.subr.mxu0 0.0
          %3453 = vmatpush1.msra.mxu0 %v2890
          %3454 = vmatprep.subr.mxu0 0.0
          %3455 = vmatpush1.msra.mxu0 %v2889
          %3456 = vmatprep.subr.mxu0 0.0
          %3457 = vmatpush1.msra.mxu0 %v2888
          %3458 = vmatprep.subr.mxu0 0.0
          %3459 = vmatpush1.msra.mxu0 %v2887
          %3460 = vmatprep.subr.mxu0 0.0
          %3461 = vmatpush2.msra.mxu0 %v2918
          %3462 = vmatprep.subr.mxu0 0.0
          %3463 = vmatpush2.msra.mxu0 %v2917
          %3464 = vmatprep.subr.mxu0 0.0
          %3465 = vmatpush2.msra.mxu0 %v2916
          %3466 = vmatprep.subr.mxu0 0.0
          %3467 = vmatpush2.msra.mxu0 %v2915
          %3468 = vmatprep.subr.mxu0 0.0
          %3469 = vmatpush2.msra.mxu0 %v2914
          %3470 = vmatprep.subr.mxu0 0.0
          %3471 = vmatpush2.msra.mxu0 %v2913
          %3472 = vmatprep.subr.mxu0 0.0
          %3473 = vmatpush2.msra.mxu0 %v2912
          %3474 = vmatprep.subr.mxu0 0.0
          %3475 = vmatpush2.msra.mxu0 %v2911
          %3476 = vmatprep.subr.mxu0 0.0
          %3477 = vmatpush2.msra.mxu0 %v2910
          %3478 = vmatprep.subr.mxu0 0.0
          %3479 = vmatpush2.msra.mxu0 %v2909
          %3480 = vmatprep.subr.mxu0 0.0
          %3481 = vmatpush2.msra.mxu0 %v2908
          %3482 = vmatprep.subr.mxu0 0.0
          %3483 = vmatpush2.msra.mxu0 %v2907
          %3484 = vmatprep.subr.mxu0 0.0
          %3485 = vmatpush2.msra.mxu0 %v2906
          %3486 = vmatprep.subr.mxu0 0.0
          %3487 = vmatpush2.msra.mxu0 %v2905
          %3488 = vmatprep.subr.mxu0 0.0
          %3489 = vmatpush2.msra.mxu0 %v2904
          %3490 = vmatprep.subr.mxu0 0.0
          %3491 = vmatpush2.msra.mxu0 %v2903
          %3492 = vmatprep.mubr.f32.mxu0 %v3044
          %3493 = vmatmul.mubr.f32.gmra.mxu0 %v3042
          %v3494 = vpop.f32.mrf.mxu0
          %v3495 = vadd.f32 %v3425, %v3494
          %v3496 = vpop.f32.mrf.mxu0
          %3497 = vdwg.mxu0
          %3498 = vmatprep.subr.mxu0 0.0
          %3499 = vmatpush1.msra.mxu0 %v2934
          %3500 = vmatprep.subr.mxu0 0.0
          %3501 = vmatpush1.msra.mxu0 %v2933
          %3502 = vmatprep.subr.mxu0 0.0
          %3503 = vmatpush1.msra.mxu0 %v2932
          %3504 = vmatprep.subr.mxu0 0.0
          %3505 = vmatpush1.msra.mxu0 %v2931
          %3506 = vmatprep.subr.mxu0 0.0
          %3507 = vmatpush1.msra.mxu0 %v2930
          %3508 = vmatprep.subr.mxu0 0.0
          %3509 = vmatpush1.msra.mxu0 %v2929
          %3510 = vmatprep.subr.mxu0 0.0
          %3511 = vmatpush1.msra.mxu0 %v2928
          %3512 = vmatprep.subr.mxu0 0.0
          %3513 = vmatpush1.msra.mxu0 %v2927
          %3514 = vmatprep.subr.mxu0 0.0
          %3515 = vmatpush1.msra.mxu0 %v2926
          %3516 = vmatprep.subr.mxu0 0.0
          %3517 = vmatpush1.msra.mxu0 %v2925
          %3518 = vmatprep.subr.mxu0 0.0
          %3519 = vmatpush1.msra.mxu0 %v2924
          %3520 = vmatprep.subr.mxu0 0.0
          %3521 = vmatpush1.msra.mxu0 %v2923
          %3522 = vmatprep.subr.mxu0 0.0
          %3523 = vmatpush1.msra.mxu0 %v2922
          %3524 = vmatprep.subr.mxu0 0.0
          %3525 = vmatpush1.msra.mxu0 %v2921
          %3526 = vmatprep.subr.mxu0 0.0
          %3527 = vmatpush1.msra.mxu0 %v2920
          %3528 = vmatprep.subr.mxu0 0.0
          %3529 = vmatpush1.msra.mxu0 %v2919
          %3530 = vmatprep.subr.mxu0 0.0
          %3531 = vmatpush2.msra.mxu0 %v2950
          %3532 = vmatprep.subr.mxu0 0.0
          %3533 = vmatpush2.msra.mxu0 %v2949
          %3534 = vmatprep.subr.mxu0 0.0
          %3535 = vmatpush2.msra.mxu0 %v2948
          %3536 = vmatprep.subr.mxu0 0.0
          %3537 = vmatpush2.msra.mxu0 %v2947
          %3538 = vmatprep.subr.mxu0 0.0
          %3539 = vmatpush2.msra.mxu0 %v2946
          %3540 = vmatprep.subr.mxu0 0.0
          %3541 = vmatpush2.msra.mxu0 %v2945
          %3542 = vmatprep.subr.mxu0 0.0
          %3543 = vmatpush2.msra.mxu0 %v2944
          %3544 = vmatprep.subr.mxu0 0.0
          %3545 = vmatpush2.msra.mxu0 %v2943
          %3546 = vmatprep.subr.mxu0 0.0
          %3547 = vmatpush2.msra.mxu0 %v2942
          %3548 = vmatprep.subr.mxu0 0.0
          %3549 = vmatpush2.msra.mxu0 %v2941
          %3550 = vmatprep.subr.mxu0 0.0
          %3551 = vmatpush2.msra.mxu0 %v2940
          %3552 = vmatprep.subr.mxu0 0.0
          %3553 = vmatpush2.msra.mxu0 %v2939
          %3554 = vmatprep.subr.mxu0 0.0
          %3555 = vmatpush2.msra.mxu0 %v2938
          %3556 = vmatprep.subr.mxu0 0.0
          %3557 = vmatpush2.msra.mxu0 %v2937
          %3558 = vmatprep.subr.mxu0 0.0
          %3559 = vmatpush2.msra.mxu0 %v2936
          %3560 = vmatprep.subr.mxu0 0.0
          %3561 = vmatpush2.msra.mxu0 %v2935
          %3562 = vmatprep.mubr.f32.mxu0 %v3060
          %3563 = vmatmul.mubr.f32.gmra.mxu0 %v3052
          %v3564 = vpop.f32.mrf.mxu0
          %v3565 = vadd.f32 %v3495, %v3564
          %v3566 = vpop.f32.mrf.mxu0
          %3567 = vdwg.mxu0
          %3568 = vmatprep.subr.mxu0 0.0
          %3569 = vmatpush1.msra.mxu0 %v2966
          %3570 = vmatprep.subr.mxu0 0.0
          %3571 = vmatpush1.msra.mxu0 %v2965
          %3572 = vmatprep.subr.mxu0 0.0
          %3573 = vmatpush1.msra.mxu0 %v2964
          %3574 = vmatprep.subr.mxu0 0.0
          %3575 = vmatpush1.msra.mxu0 %v2963
          %3576 = vmatprep.subr.mxu0 0.0
          %3577 = vmatpush1.msra.mxu0 %v2962
          %3578 = vmatprep.subr.mxu0 0.0
          %3579 = vmatpush1.msra.mxu0 %v2961
          %3580 = vmatprep.subr.mxu0 0.0
          %3581 = vmatpush1.msra.mxu0 %v2960
          %3582 = vmatprep.subr.mxu0 0.0
          %3583 = vmatpush1.msra.mxu0 %v2959
          %3584 = vmatprep.subr.mxu0 0.0
          %3585 = vmatpush1.msra.mxu0 %v2958
          %3586 = vmatprep.subr.mxu0 0.0
          %3587 = vmatpush1.msra.mxu0 %v2957
          %3588 = vmatprep.subr.mxu0 0.0
          %3589 = vmatpush1.msra.mxu0 %v2956
          %3590 = vmatprep.subr.mxu0 0.0
          %3591 = vmatpush1.msra.mxu0 %v2955
          %3592 = vmatprep.subr.mxu0 0.0
          %3593 = vmatpush1.msra.mxu0 %v2954
          %3594 = vmatprep.subr.mxu0 0.0
          %3595 = vmatpush1.msra.mxu0 %v2953
          %3596 = vmatprep.subr.mxu0 0.0
          %3597 = vmatpush1.msra.mxu0 %v2952
          %3598 = vmatprep.subr.mxu0 0.0
          %3599 = vmatpush1.msra.mxu0 %v2951
          %3600 = vmatprep.subr.mxu0 0.0
          %3601 = vmatpush2.msra.mxu0 %v2982
          %3602 = vmatprep.subr.mxu0 0.0
          %3603 = vmatpush2.msra.mxu0 %v2981
          %3604 = vmatprep.subr.mxu0 0.0
          %3605 = vmatpush2.msra.mxu0 %v2980
          %3606 = vmatprep.subr.mxu0 0.0
          %3607 = vmatpush2.msra.mxu0 %v2979
          %3608 = vmatprep.subr.mxu0 0.0
          %3609 = vmatpush2.msra.mxu0 %v2978
          %3610 = vmatprep.subr.mxu0 0.0
          %3611 = vmatpush2.msra.mxu0 %v2977
          %3612 = vmatprep.subr.mxu0 0.0
          %3613 = vmatpush2.msra.mxu0 %v2976
          %3614 = vmatprep.subr.mxu0 0.0
          %3615 = vmatpush2.msra.mxu0 %v2975
          %3616 = vmatprep.subr.mxu0 0.0
          %3617 = vmatpush2.msra.mxu0 %v2974
          %3618 = vmatprep.subr.mxu0 0.0
          %3619 = vmatpush2.msra.mxu0 %v2973
          %3620 = vmatprep.subr.mxu0 0.0
          %3621 = vmatpush2.msra.mxu0 %v2972
          %3622 = vmatprep.subr.mxu0 0.0
          %3623 = vmatpush2.msra.mxu0 %v2971
          %3624 = vmatprep.subr.mxu0 0.0
          %3625 = vmatpush2.msra.mxu0 %v2970
          %3626 = vmatprep.subr.mxu0 0.0
          %3627 = vmatpush2.msra.mxu0 %v2969
          %3628 = vmatprep.subr.mxu0 0.0
          %3629 = vmatpush2.msra.mxu0 %v2968
          %3630 = vmatprep.subr.mxu0 0.0
          %3631 = vmatpush2.msra.mxu0 %v2967
          %3632 = vmatprep.mubr.f32.mxu0 %v3061
          %3633 = vmatmul.mubr.f32.gmra.mxu0 %v3059
          %v3634 = vpop.f32.mrf.mxu0
          %v3635 = vadd.f32 %v3565, %v3634
          %v3636 = vpop.f32.mrf.mxu0
          %3637 = vdwg.mxu0
          %v3638 = vmax.f32 %v3635, 0.0
          %vm3639 = vcmask 254976
          %3640 = vst.msk [vmem:[#allocation9] sm:$0x3] %vm3639, %v3638
        $region60: #{convnet10_forward.3} parent=39 // pred_fallthru
          _
        // Predicated region
        $region61: #{convnet10_forward.3} parent=39 // pred_check
          %p3641 = pneg %p149
        $region62: #{convnet10_forward.3} parent=39 // pred_check_branch
          %3643 = sbr.rel (%p3641) target = $region64
        $region63: #{convnet10_forward.3} parent=39 // pred_region
          %s3645 = ssub.s32 32, 32
          %3646 = vsyncadd [#allocation5], %s3645
          %s3648 = sshll.u32 [#allocation9], 4
          %s3649 = int_to_ptr.vmem [resolvable:$true] %s3648
          %3651 = dma.vmem_to_hbm [thread:$0]  %s3649, 32, %s5, [#allocation5]
        $region64: #{convnet10_forward.3} parent=39 // pred_fallthru
          _
        // Predicated region
        $region65: #{convnet10_forward.3} parent=39 // pred_check
          %p3652 = pneg %p149
        $region66: #{convnet10_forward.3} parent=39 // pred_check_branch
          %3654 = sbr.rel (%p3652) target = $region68
        $region67: #{convnet10_forward.3} parent=39 // pred_region
          %3655 = dma.done [#allocation5], 32
        $region68: #{convnet10_forward.3} parent=39 // pred_fallthru
          _
      $region40: #{convnet10_forward.3} parent=5 // pred_fallthru
        _
      %p3656 = scmp.le.s32.totalorder 2, %s16
      // Predicated region
      $region69: #{convnet10_forward.3} parent=5 // pred_check
        %p3657 = pneg %p3656
      $region70: #{convnet10_forward.3} parent=5 // pred_check_branch
        %3659 = sbr.rel (%p3657) target = $region72
      $region71: #{convnet10_forward.3} parent=5 // pred_region
        %s3660 = ssub.s32 %s16, 2
      $region72: #{convnet10_forward.3} parent=5 // pred_fallthru
        _
    $region6: #{convnet10_forward.3} parent=1 // loop_footer
      %s20 = sadd.s32 1, %s16
    $region7: #{convnet10_forward.3} parent=1 // loop_footer_branch
      %15 = sbr.rel target = $region3
    $region8: #{convnet10_forward.3} parent=1 // loop_exit
      _
    %3661 = vsyncpa [#allocation4], 1
    %s3662 = scalar_lea.sflag [#allocation4], 1
    %3663 = vsyncpa %s3662, 1
    %3664 = vsyncpa [#allocation7], 1
    %3665 = vsyncpa [#allocation5], 1
    %s3666 = scalar_lea.sflag [#allocation5], 1
    %3667 = vsyncpa %s3666, 1

</llo_original>
